<compile_context>
chip_gen: v5e
topology: v5e:2x2
jax: 0.10.0
libtpu: 0.0.40
codegen_flags: <defaults>
</compile_context>

<pallas_src>
import functools
import math

import jax
import jax.numpy as jnp
from jax.experimental import pallas as pl
from jax.experimental.pallas import tpu as pltpu


# ---------------------------------------------------------------------------
# in-kernel helpers (operate on values already loaded from VMEM refs)
# ---------------------------------------------------------------------------
def _swap_halves_neg_first(x, hd):
    """[a | b] (last dim = 2*hd)  ->  [-b | a]."""
    return jnp.concatenate([-x[..., hd:], x[..., :hd]], axis=-1)


def _spectral_layernorm(x2, gamma_ref, beta_ref, D, eps=1e-5):
    """Per-token whitening of the (real, imag) pair across features.

    x2 is the stacked (rows, 2D) [real | imag] plane; returns (yr, yi).
    """
    xr = x2[:, :D]
    xi = x2[:, D:]
    mr = jnp.mean(xr, axis=-1, keepdims=True)
    mi = jnp.mean(xi, axis=-1, keepdims=True)
    cr = xr - mr
    ci = xi - mi
    inv_dof = 1.0 / float(D - 1)
    a = jnp.sum(cr * cr, axis=-1, keepdims=True) * inv_dof + eps
    b = jnp.sum(cr * ci, axis=-1, keepdims=True) * inv_dof
    c = jnp.sum(ci * ci, axis=-1, keepdims=True) * inv_dof + eps
    # closed-form inverse sqrt of the 2x2 SPD matrix [[a, b], [b, c]]
    s = jnp.sqrt(a * c - b * b)
    t = jnp.sqrt(a + c + 2.0 * s)
    inv_st = 1.0 / (s * t)                        # per-row scalar, then multiplies
    i00 = (c + s) * inv_st
    i01 = -b * inv_st
    i11 = (a + s) * inv_st
    wr = i00 * cr + i01 * ci
    wi = i01 * cr + i11 * ci
    g0 = gamma_ref[0:1, :]
    g1 = gamma_ref[1:2, :]
    g2 = gamma_ref[2:3, :]
    yr = g0 * wr + g1 * wi + beta_ref[0:1, :]
    yi = g1 * wr + g2 * wi + beta_ref[1:2, :]
    return yr, yi


def _spectral_softplus(x, beta=8.0, threshold=1.0):
    # torch.nn.Softplus(beta, threshold) on the stacked [real | imag] plane.
    xb = x * beta                                  # computed once (review micro-opt)
    z = jnp.minimum(xb, threshold)                 # clamp exp arg -> stable
    return jnp.where(xb > threshold, x, jnp.log1p(jnp.exp(z)) * (1.0 / beta))


# ---------------------------------------------------------------------------
# the kernel: one full encoder block step per B_TILE batch block
# ---------------------------------------------------------------------------
def _encoder_block_kernel(
    x_ref,
    wqkv_ref, bqkv_ref, wo_ref, bo_ref,
    g1_ref, be1_ref,
    wf1_ref, bf1_ref, wf2_ref, bf2_ref,
    g2_ref, be2_ref,
    o_ref,
    *, BT, S, H, D):
    hd = D // H
    rows = BT * S

    x2 = x_ref[...].reshape(rows, 2 * D)           # (BT*S, 2D) f32, [real | imag]

    # --- fused complex q/k/v projection: one bf16 matmul, f32 accumulate ---
    # column layout (wrapper-permuted, per head): [q_r|q_i|k_r|k_i|v_r|v_i];
    # the 1/sqrt(hd) attention scale is pre-folded into the q columns.
    qkv = jnp.dot(x2.astype(jnp.bfloat16), wqkv_ref[...],
                  preferred_element_type=jnp.float32) + bqkv_ref[...]   # (rows, 6D)
    qkvb = qkv.reshape(BT, S, 6 * D).astype(jnp.bfloat16)

    heads = []
    for h in range(H):                             # H static & small (see TODO)
        base = h * 6 * hd
        q2 = qkvb[:, :, base           : base + 2 * hd]   # [qr | qi]  (BT, S, 2hd)
        k2 = qkvb[:, :, base + 2 * hd  : base + 4 * hd]   # [kr | ki]
        v2 = qkvb[:, :, base + 4 * hd  : base + 6 * hd]   # [vr | vi]
        k2s = _swap_halves_neg_first(k2, hd)               # [-ki | kr]
        v2s = _swap_halves_neg_first(v2, hd)               # [-vi | vr]

        # scores = q @ conj(k)^T, batched over the B_TILE axis
        ar = jnp.einsum('bqc,bkc->bqk', q2, k2,
                        preferred_element_type=jnp.float32)   # qr.kr + qi.ki
        ai = jnp.einsum('bqc,bkc->bqk', q2, k2s,
                        preferred_element_type=jnp.float32)   # qi.kr - qr.ki

        # complex "softmax": exp(attn - max(Re attn)), normalized by its complex sum
        m = jnp.max(ar, axis=-1, keepdims=True)
        mag = jnp.exp(ar - m)
        er = mag * jnp.cos(ai)
        ei = mag * jnp.sin(ai)
        sr = jnp.sum(er, axis=-1, keepdims=True)
        si = jnp.sum(ei, axis=-1, keepdims=True)
        inv_den = 1.0 / (sr * sr + si * si + 1e-12)           # eps guard (review)
        atr = ((er * sr + ei * si) * inv_den).astype(jnp.bfloat16)
        ati = ((ei * sr - er * si) * inv_den).astype(jnp.bfloat16)

        # out = attn @ v (complex):  [or | oi] = atr@[vr|vi] + ati@[-vi|vr]
        oh = (jnp.einsum('bqk,bkc->bqc', atr, v2,
                         preferred_element_type=jnp.float32) +
              jnp.einsum('bqk,bkc->bqc', ati, v2s,
                         preferred_element_type=jnp.float32))  # (BT, S, 2hd)
        heads.append(oh)

    # head-major lane concat; wo rows were permuted in the wrapper to match.
    attn2 = jnp.concatenate(heads, axis=-1).reshape(rows, 2 * D)

    # --- output projection + residual, norm1 ---
    ao2 = jnp.dot(attn2.astype(jnp.bfloat16), wo_ref[...],
                  preferred_element_type=jnp.float32) + bo_ref[...]
    x1 = x2 + ao2
    n1r, n1i = _spectral_layernorm(x1, g1_ref, be1_ref, D)
    n1 = jnp.concatenate([n1r, n1i], axis=1)

    # --- complex feed-forward with SpectralSoftplus, residual, norm2 ---
    f1 = jnp.dot(n1.astype(jnp.bfloat16), wf1_ref[...],
                 preferred_element_type=jnp.float32) + bf1_ref[...]
    f1 = _spectral_softplus(f1)                    # acts on real & imag halves
    f2 = jnp.dot(f1.astype(jnp.bfloat16), wf2_ref[...],
                 preferred_element_type=jnp.float32) + bf2_ref[...]
    xb = n1 + f2
    yr, yi = _spectral_layernorm(xb, g2_ref, be2_ref, D)

    # write the two halves straight into the output ref (no concat before store)
    o_ref[:, :, :D] = yr.reshape(BT, S, D)
    o_ref[:, :, D:] = yi.reshape(BT, S, D)


# ---------------------------------------------------------------------------
# wrapper
# ---------------------------------------------------------------------------
def _make_qkv_col_perm(D, H):
    """New head-major column order for the packed (2D, 6D) fused QKV weight."""
    hd = D // H
    perm = []
    for h in range(H):
        for blk in (0, 3, 1, 4, 2, 5):             # q_r, q_i, k_r, k_i, v_r, v_i
            start = blk * D + h * hd
            perm.extend(range(start, start + hd))
    return jnp.asarray(perm, dtype=jnp.int32)


def _make_attn_row_perm(D, H):
    """Row order of wo matching the kernel's head-major [h_r | h_i] attn output."""
    hd = D // H
    perm = []
    for h in range(H):
        perm.extend(range(h * hd, (h + 1) * hd))           # real features, head h
        perm.extend(range(D + h * hd, D + (h + 1) * hd))    # imag features, head h
    return jnp.asarray(perm, dtype=jnp.int32)


def spectral_encoder_block(x_stacked, params, *, B, S, H, D, b_tile=None):
    """x_stacked: (B, S, 2D) float32 with [real | imag] stacked along the last axis."""
    if b_tile is None:
        # Target an MXU-friendly M dimension (~256 rows on v6e/v7x; v5e's 128x128
        # MXU is filled from 128 rows).  Keep b_tile a divisor of B.
        target_rows = 256
        b_tile = max(1, min(B, max(1, target_rows // S)))
        while B % b_tile:
            b_tile -= 1

    kernel = functools.partial(_encoder_block_kernel, BT=b_tile, S=S, H=H, D=D)

    def resident(arr):      # weights/biases: constant block index -> resident in VMEM
        nd = arr.ndim
        return pl.BlockSpec(arr.shape, lambda i, _nd=nd: (0,) * _nd)

    act_spec = pl.BlockSpec((b_tile, S, 2 * D), lambda i: (i, 0, 0))

    # Generation-aware VMEM budget (v7x: 64 MiB/TC, v5e/v6e: 128 MiB).
    try:
        vmem_cap = pltpu.get_tpu_info().vmem_capacity_bytes
    except Exception:
        vmem_cap = 64 * 1024 * 1024
    vmem_limit = int(vmem_cap) * 3 // 4

    return pl.pallas_call(
        kernel,
        out_shape=jax.ShapeDtypeStruct((B, S, 2 * D), jnp.float32),
        grid_spec=pltpu.PrefetchScalarGridSpec(
            num_scalar_prefetch=0,
            grid=(B // b_tile,),
            in_specs=[act_spec] + [resident(p) for p in params],
            out_specs=act_spec),
        compiler_params=pltpu.CompilerParams(
            dimension_semantics=("parallel",),     # megacore / v7x dual-TC split
            vmem_limit_bytes=vmem_limit),
    )(x_stacked, *params)


# ---------------------------------------------------------------------------
# pure-JAX complex reference (for correctness check)
# ---------------------------------------------------------------------------
def _ref_softplus(x, beta=8.0, threshold=1.0):
    return jnp.where(x * beta > threshold, x,
                     jnp.log1p(jnp.exp(jnp.minimum(x * beta, threshold))) / beta)


def _ref_sln(z, g0, g1, g2, beta, eps=1e-5):
    D = z.shape[-1]
    zr = z.real - z.real.mean(-1, keepdims=True)
    zi = z.imag - z.imag.mean(-1, keepdims=True)
    a = (zr * zr).sum(-1, keepdims=True) / (D - 1) + eps
    b = (zr * zi).sum(-1, keepdims=True) / (D - 1)
    c = (zi * zi).sum(-1, keepdims=True) / (D - 1) + eps
    s = jnp.sqrt(a * c - b * b)
    t = jnp.sqrt(a + c + 2.0 * s)
    i00, i01, i11 = (c + s) / (s * t), -b / (s * t), (a + s) / (s * t)
    wr = i00 * zr + i01 * zi
    wi = i01 * zr + i11 * zi
    yr = g0 * wr + g1 * wi
    yi = g1 * wr + g2 * wi
    return (yr + 1j * yi).astype(jnp.complex64) + beta


def _ref_forward(x, p, H):
    B, S, D = x.shape
    hd = D // H
    scale = math.sqrt(hd)

    def clin(z, w, b):
        return z @ w + b

    q = clin(x, p['wq'], p['bq']).reshape(B, S, H, hd).transpose(0, 2, 1, 3)
    k = clin(x, p['wk'], p['bk']).reshape(B, S, H, hd).transpose(0, 2, 1, 3)
    v = clin(x, p['wv'], p['bv']).reshape(B, S, H, hd).transpose(0, 2, 1, 3)
    att = jnp.einsum('bhqd,bhkd->bhqk', q, jnp.conj(k)) / scale
    att = jnp.exp(att - jnp.max(att.real, axis=-1, keepdims=True))
    att = att / jnp.sum(att, axis=-1, keepdims=True)
    res = jnp.einsum('bhqk,bhkd->bhqd', att, v).transpose(0, 2, 1, 3).reshape(B, S, D)
    x = x + clin(res, p['wo'], p['bo'])
    x = _ref_sln(x, p['g0_1'], p['g1_1'], p['g2_1'], p['beta1'])
    ff = clin(x, p['wf1'], p['bf1'])
    ff = _ref_softplus(ff.real) + 1j * _ref_softplus(ff.imag)
    ff = clin(ff.astype(jnp.complex64), p['wf2'], p['bf2'])
    x = x + ff
    return _ref_sln(x, p['g0_2'], p['g1_2'], p['g2_2'], p['beta2'])


# ---------------------------------------------------------------------------
# main
# ---------------------------------------------------------------------------
if __name__ == "__main__":
    # D=64 so the stacked feature dim 2D=128 is lane-dense; hd=16 per head.
    B, S, D, H, DFF = 4, 8, 64, 4, 128
    hd = D // H
    key = jax.random.PRNGKey(0)
    k_x, k_p = jax.random.split(key)

    # input
    kxr, kxi = jax.random.split(k_x)
    x_real = jax.random.normal(kxr, (B, S, D), jnp.float32)
    x_imag = jax.random.normal(kxi, (B, S, D), jnp.float32)
    x_c = (x_real + 1j * x_imag).astype(jnp.complex64)
    x_stacked = jnp.concatenate([x_real, x_imag], axis=-1)           # (B, S, 2D)

    # deterministic synthetic parameters
    def make_clinear(k, din, dout):
        k1, k2, k3, k4 = jax.random.split(k, 4)
        scl = 0.1 / math.sqrt(din)
        wr = jax.random.normal(k1, (din, dout), jnp.float32) * scl
        wi = jax.random.normal(k2, (din, dout), jnp.float32) * scl
        br = jax.random.normal(k3, (dout,), jnp.float32) * scl
        bi = jax.random.normal(k4, (dout,), jnp.float32) * scl
        return wr, wi, br, bi

    def pack_clinear(wr, wi, br, bi):
        # stacked real|imag form: [xr|xi] @ [[Wr, Wi], [-Wi, Wr]] + [br|bi]
        w2 = jnp.concatenate(
            [jnp.concatenate([wr, wi], axis=1),
             jnp.concatenate([-wi, wr], axis=1)], axis=0)            # (2Din, 2Dout)
        b2 = jnp.concatenate([br, bi])[None, :]                      # (1, 2Dout)
        return w2, b2

    keys = jax.random.split(k_p, 6)
    wq_r, wq_i, bq_r, bq_i = make_clinear(keys[0], D, D)
    wk_r, wk_i, bk_r, bk_i = make_clinear(keys[1], D, D)
    wv_r, wv_i, bv_r, bv_i = make_clinear(keys[2], D, D)
    wo_r, wo_i, bo_r, bo_i = make_clinear(keys[3], D, D)
    wf1_r, wf1_i, bf1_r, bf1_i = make_clinear(keys[4], D, DFF)
    wf2_r, wf2_i, bf2_r, bf2_i = make_clinear(keys[5], DFF, D)

    # fused QKV with the 1/sqrt(hd) attention scale folded into the q columns
    inv_scale = 1.0 / math.sqrt(hd)
    wqkv_r = jnp.concatenate([wq_r * inv_scale, wk_r, wv_r], axis=1)
    wqkv_i = jnp.concatenate([wq_i * inv_scale, wk_i, wv_i], axis=1)
    bqkv_r = jnp.concatenate([bq_r * inv_scale, bk_r, bv_r])
    bqkv_i = jnp.concatenate([bq_i * inv_scale, bk_i, bv_i])

    wqkv2, bqkv2 = pack_clinear(wqkv_r, wqkv_i, bqkv_r, bqkv_i)      # (2D, 6D), (1, 6D)
    wo2, bo2 = pack_clinear(wo_r, wo_i, bo_r, bo_i)                  # (2D, 2D)
    wf12, bf12 = pack_clinear(wf1_r, wf1_i, bf1_r, bf1_i)            # (2D, 2DFF)
    wf22, bf22 = pack_clinear(wf2_r, wf2_i, bf2_r, bf2_i)            # (2DFF, 2D)

    # head-major QKV column permutation + matching output-projection row permutation
    # (compile-time; removes in-kernel per-head concats / reordering).
    qkv_perm = _make_qkv_col_perm(D, H)
    row_perm = _make_attn_row_perm(D, H)
    wqkv2 = wqkv2[:, qkv_perm]
    bqkv2 = bqkv2[:, qkv_perm]
    wo2 = wo2[row_perm, :]

    # bf16 MXU operands (kernel accumulates in f32 via preferred_element_type)
    wqkv2b = wqkv2.astype(jnp.bfloat16)
    wo2b = wo2.astype(jnp.bfloat16)
    wf12b = wf12.astype(jnp.bfloat16)
    wf22b = wf22.astype(jnp.bfloat16)

    # SpectralLayerNorm params at their __init__ values
    g0v, g1v, g2v = 1.0 / math.sqrt(2.0), 0.0, 1.0 / math.sqrt(2.0)
    gamma_packed = jnp.stack([jnp.full((D,), g0v, jnp.float32),
                              jnp.full((D,), g1v, jnp.float32),
                              jnp.full((D,), g2v, jnp.float32)])     # (3, D)
    beta_packed = jnp.zeros((2, D), jnp.float32)                     # (2, D)

    kernel_params = [
        wqkv2b, bqkv2, wo2b, bo2,
        gamma_packed, beta_packed,
        wf12b, bf12, wf22b, bf22,
        gamma_packed, beta_packed,
    ]

    out2 = jax.block_until_ready(
        spectral_encoder_block(x_stacked, kernel_params, B=B, S=S, H=H, D=D))
    out_c = (out2[..., :D] + 1j * out2[..., D:]).astype(jnp.complex64)

    # reference (full complex64 math)
    ref_params = dict(
        wq=(wq_r + 1j * wq_i).astype(jnp.complex64), bq=(bq_r + 1j * bq_i).astype(jnp.complex64),
        wk=(wk_r + 1j * wk_i).astype(jnp.complex64), bk=(bk_r + 1j * bk_i).astype(jnp.complex64),
        wv=(wv_r + 1j * wv_i).astype(jnp.complex64), bv=(bv_r + 1j * bv_i).astype(jnp.complex64),
        wo=(wo_r + 1j * wo_i).astype(jnp.complex64), bo=(bo_r + 1j * bo_i).astype(jnp.complex64),
        wf1=(wf1_r + 1j * wf1_i).astype(jnp.complex64), bf1=(bf1_r + 1j * bf1_i).astype(jnp.complex64),
        wf2=(wf2_r + 1j * wf2_i).astype(jnp.complex64), bf2=(bf2_r + 1j * bf2_i).astype(jnp.complex64),
        g0_1=jnp.full((D,), g0v), g1_1=jnp.full((D,), g1v), g2_1=jnp.full((D,), g2v),
        beta1=jnp.zeros((D,), jnp.complex64),
        g0_2=jnp.full((D,), g0v), g1_2=jnp.full((D,), g1v), g2_2=jnp.full((D,), g2v),
        beta2=jnp.zeros((D,), jnp.complex64),
    )
    ref = jax.block_until_ready(_ref_forward(x_c, ref_params, H))

    # tolerance relaxed vs the f32 variant (1e-3) because MXU operands are bf16
    max_err = float(jnp.max(jnp.abs(out_c - ref.astype(jnp.complex64))))
    assert max_err < 2e-2, f"mismatch vs reference: {max_err}"
    print("KERNEL_OK")
</pallas_src>

<mosaic_0001>
module attributes {stable_mosaic.version = 11 : i64} {
  func.func @_encoder_block_kernel(%arg0: i32, %arg1: memref<4x8x128xf32, #tpu.memory_space<vmem>>, %arg2: memref<128x384xbf16, #tpu.memory_space<vmem>>, %arg3: memref<1x384xf32, #tpu.memory_space<vmem>>, %arg4: memref<128x128xbf16, #tpu.memory_space<vmem>>, %arg5: memref<1x128xf32, #tpu.memory_space<vmem>>, %arg6: memref<3x64xf32, #tpu.memory_space<vmem>>, %arg7: memref<2x64xf32, #tpu.memory_space<vmem>>, %arg8: memref<128x256xbf16, #tpu.memory_space<vmem>>, %arg9: memref<1x256xf32, #tpu.memory_space<vmem>>, %arg10: memref<256x128xbf16, #tpu.memory_space<vmem>>, %arg11: memref<1x128xf32, #tpu.memory_space<vmem>>, %arg12: memref<3x64xf32, #tpu.memory_space<vmem>>, %arg13: memref<2x64xf32, #tpu.memory_space<vmem>>, %arg14: memref<4x8x128xf32, #tpu.memory_space<vmem>>) attributes {dimension_semantics = [#tpu.dimension_semantics<parallel>], iteration_bounds = array<i64: 1>, scalar_prefetch = 0 : i64, scratch_operands = 0 : i64, tpu.core_type = #tpu.core_type<tc>, window_params = [{transform_indices = @transform_0, window_bounds = array<i64: 4, 8, 128>}, {pipeline_mode = #tpu.pipeline_mode<synchronous>, transform_indices = @transform_1, window_bounds = array<i64: 128, 384>}, {pipeline_mode = #tpu.pipeline_mode<synchronous>, transform_indices = @transform_2, window_bounds = array<i64: 1, 384>}, {pipeline_mode = #tpu.pipeline_mode<synchronous>, transform_indices = @transform_3, window_bounds = array<i64: 128, 128>}, {pipeline_mode = #tpu.pipeline_mode<synchronous>, transform_indices = @transform_4, window_bounds = array<i64: 1, 128>}, {pipeline_mode = #tpu.pipeline_mode<synchronous>, transform_indices = @transform_5, window_bounds = array<i64: 3, 64>}, {pipeline_mode = #tpu.pipeline_mode<synchronous>, transform_indices = @transform_6, window_bounds = array<i64: 2, 64>}, {pipeline_mode = #tpu.pipeline_mode<synchronous>, transform_indices = @transform_7, window_bounds = array<i64: 128, 256>}, {pipeline_mode = #tpu.pipeline_mode<synchronous>, transform_indices = @transform_8, window_bounds = array<i64: 1, 256>}, {pipeline_mode = #tpu.pipeline_mode<synchronous>, transform_indices = @transform_9, window_bounds = array<i64: 256, 128>}, {pipeline_mode = #tpu.pipeline_mode<synchronous>, transform_indices = @transform_10, window_bounds = array<i64: 1, 128>}, {pipeline_mode = #tpu.pipeline_mode<synchronous>, transform_indices = @transform_11, window_bounds = array<i64: 3, 64>}, {pipeline_mode = #tpu.pipeline_mode<synchronous>, transform_indices = @transform_12, window_bounds = array<i64: 2, 64>}, {transform_indices = @transform_13, window_bounds = array<i64: 4, 8, 128>}]} {
    %c0 = arith.constant 0 : index
    %c0_0 = arith.constant 0 : index
    %c0_1 = arith.constant 0 : index
    %0 = vector.load %arg1[%c0, %c0_0, %c0_1] : memref<4x8x128xf32, #tpu.memory_space<vmem>>, vector<4x8x128xf32>
    %1 = vector.shape_cast %0 : vector<4x8x128xf32> to vector<32x128xf32>
    %2 = arith.truncf %1 : vector<32x128xf32> to vector<32x128xbf16>
    %c0_2 = arith.constant 0 : index
    %c0_3 = arith.constant 0 : index
    %3 = vector.load %arg2[%c0_2, %c0_3] : memref<128x384xbf16, #tpu.memory_space<vmem>>, vector<128x384xbf16>
    %cst = arith.constant dense<0.000000e+00> : vector<32x384xf32>
    %4 = tpu.matmul %2, %3, %cst {dimension_numbers = #tpu.dot_dimension_numbers<[1], [0], [0], [1], [0, 0, 1, 1], [], []>} : vector<32x128xbf16>, vector<128x384xbf16>, vector<32x384xf32> -> vector<32x384xf32>
    %c0_4 = arith.constant 0 : index
    %c0_5 = arith.constant 0 : index
    %5 = vector.load %arg3[%c0_4, %c0_5] : memref<1x384xf32, #tpu.memory_space<vmem>>, vector<1x384xf32>
    %6 = vector.broadcast %5 : vector<1x384xf32> to vector<32x384xf32>
    %7 = arith.addf %4, %6 : vector<32x384xf32>
    %8 = vector.shape_cast %7 : vector<32x384xf32> to vector<4x8x384xf32>
    %9 = arith.truncf %8 : vector<4x8x384xf32> to vector<4x8x384xbf16>
    %10 = vector.extract_strided_slice %9 {offsets = [0, 0, 0], sizes = [4, 8, 32], strides = [1, 1, 1]} : vector<4x8x384xbf16> to vector<4x8x32xbf16>
    %11 = vector.extract_strided_slice %9 {offsets = [0, 0, 32], sizes = [4, 8, 32], strides = [1, 1, 1]} : vector<4x8x384xbf16> to vector<4x8x32xbf16>
    %12 = vector.extract_strided_slice %9 {offsets = [0, 0, 64], sizes = [4, 8, 32], strides = [1, 1, 1]} : vector<4x8x384xbf16> to vector<4x8x32xbf16>
    %13 = vector.extract_strided_slice %11 {offsets = [0, 0, 16], sizes = [4, 8, 16], strides = [1, 1, 1]} : vector<4x8x32xbf16> to vector<4x8x16xbf16>
    %cst_6 = arith.constant 0.000000e+00 : bf16
    %14 = vector.broadcast %cst_6 : bf16 to vector<4x8x16xbf16>
    %15 = arith.subf %14, %13 : vector<4x8x16xbf16>
    %16 = vector.extract_strided_slice %11 {offsets = [0, 0, 0], sizes = [4, 8, 16], strides = [1, 1, 1]} : vector<4x8x32xbf16> to vector<4x8x16xbf16>
    %17 = tpu.concatenate %15, %16 in 2 : vector<4x8x16xbf16>, vector<4x8x16xbf16> -> vector<4x8x32xbf16>
    %18 = vector.extract_strided_slice %12 {offsets = [0, 0, 16], sizes = [4, 8, 16], strides = [1, 1, 1]} : vector<4x8x32xbf16> to vector<4x8x16xbf16>
    %cst_7 = arith.constant 0.000000e+00 : bf16
    %19 = vector.broadcast %cst_7 : bf16 to vector<4x8x16xbf16>
    %20 = arith.subf %19, %18 : vector<4x8x16xbf16>
    %21 = vector.extract_strided_slice %12 {offsets = [0, 0, 0], sizes = [4, 8, 16], strides = [1, 1, 1]} : vector<4x8x32xbf16> to vector<4x8x16xbf16>
    %22 = tpu.concatenate %20, %21 in 2 : vector<4x8x16xbf16>, vector<4x8x16xbf16> -> vector<4x8x32xbf16>
    "tpu.trace_start"() <{level = 10 : i32, message = "bqc,bkc->bqk"}> : () -> ()
    %cst_8 = arith.constant dense<0.000000e+00> : vector<4x8x8xf32>
    %23 = tpu.matmul %10, %11, %cst_8 {dimension_numbers = #tpu.dot_dimension_numbers<[2], [2], [1], [1], [0, 0, 0, 1, 1, 1], [0], [0]>} : vector<4x8x32xbf16>, vector<4x8x32xbf16>, vector<4x8x8xf32> -> vector<4x8x8xf32>
    %cst_9 = arith.constant dense<0.000000e+00> : vector<4x8x8xf32>
    %24 = tpu.matmul %10, %17, %cst_9 {dimension_numbers = #tpu.dot_dimension_numbers<[2], [2], [1], [1], [0, 0, 0, 1, 1, 1], [0], [0]>} : vector<4x8x32xbf16>, vector<4x8x32xbf16>, vector<4x8x8xf32> -> vector<4x8x8xf32>
    "tpu.trace_stop"() : () -> ()
    %cst_10 = arith.constant dense<0xFF800000> : vector<4x8xf32>
    %25 = vector.multi_reduction <maximumf>, %23, %cst_10 [2] : vector<4x8x8xf32> to vector<4x8xf32>
    %26 = vector.shape_cast %25 : vector<4x8xf32> to vector<4x8x1xf32>
    %27 = vector.broadcast %26 : vector<4x8x1xf32> to vector<4x8x8xf32>
    %28 = arith.subf %23, %27 : vector<4x8x8xf32>
    %29 = math.exp %28 : vector<4x8x8xf32>
    %30 = math.cos %24 : vector<4x8x8xf32>
    %31 = arith.mulf %29, %30 : vector<4x8x8xf32>
    %32 = math.sin %24 : vector<4x8x8xf32>
    %33 = arith.mulf %29, %32 : vector<4x8x8xf32>
    %cst_11 = arith.constant dense<0.000000e+00> : vector<4x8xf32>
    %34 = vector.multi_reduction <add>, %31, %cst_11 [2] : vector<4x8x8xf32> to vector<4x8xf32>
    %35 = vector.shape_cast %34 : vector<4x8xf32> to vector<4x8x1xf32>
    %cst_12 = arith.constant dense<0.000000e+00> : vector<4x8xf32>
    %36 = vector.multi_reduction <add>, %33, %cst_12 [2] : vector<4x8x8xf32> to vector<4x8xf32>
    %37 = vector.shape_cast %36 : vector<4x8xf32> to vector<4x8x1xf32>
    %38 = arith.mulf %35, %35 : vector<4x8x1xf32>
    %39 = arith.mulf %37, %37 : vector<4x8x1xf32>
    %40 = arith.addf %38, %39 : vector<4x8x1xf32>
    %cst_13 = arith.constant 9.99999996E-13 : f32
    %41 = vector.broadcast %cst_13 : f32 to vector<4x8x1xf32>
    %42 = arith.addf %40, %41 : vector<4x8x1xf32>
    %cst_14 = arith.constant 1.000000e+00 : f32
    %43 = vector.broadcast %cst_14 : f32 to vector<4x8x1xf32>
    %44 = arith.divf %43, %42 : vector<4x8x1xf32>
    %45 = vector.broadcast %35 : vector<4x8x1xf32> to vector<4x8x8xf32>
    %46 = arith.mulf %31, %45 : vector<4x8x8xf32>
    %47 = vector.broadcast %37 : vector<4x8x1xf32> to vector<4x8x8xf32>
    %48 = arith.mulf %33, %47 : vector<4x8x8xf32>
    %49 = arith.addf %46, %48 : vector<4x8x8xf32>
    %50 = vector.broadcast %44 : vector<4x8x1xf32> to vector<4x8x8xf32>
    %51 = arith.mulf %49, %50 : vector<4x8x8xf32>
    %52 = arith.truncf %51 : vector<4x8x8xf32> to vector<4x8x8xbf16>
    %53 = vector.broadcast %35 : vector<4x8x1xf32> to vector<4x8x8xf32>
    %54 = arith.mulf %33, %53 : vector<4x8x8xf32>
    %55 = vector.broadcast %37 : vector<4x8x1xf32> to vector<4x8x8xf32>
    %56 = arith.mulf %31, %55 : vector<4x8x8xf32>
    %57 = arith.subf %54, %56 : vector<4x8x8xf32>
    %58 = vector.broadcast %44 : vector<4x8x1xf32> to vector<4x8x8xf32>
    %59 = arith.mulf %57, %58 : vector<4x8x8xf32>
    %60 = arith.truncf %59 : vector<4x8x8xf32> to vector<4x8x8xbf16>
    "tpu.trace_start"() <{level = 10 : i32, message = "bqk,bkc->bqc"}> : () -> ()
    %cst_15 = arith.constant dense<0.000000e+00> : vector<4x8x32xf32>
    %61 = tpu.matmul %52, %12, %cst_15 {dimension_numbers = #tpu.dot_dimension_numbers<[2], [1], [1], [2], [0, 0, 0, 1, 1, 2], [0], [0]>} : vector<4x8x8xbf16>, vector<4x8x32xbf16>, vector<4x8x32xf32> -> vector<4x8x32xf32>
    %cst_16 = arith.constant dense<0.000000e+00> : vector<4x8x32xf32>
    %62 = tpu.matmul %60, %22, %cst_16 {dimension_numbers = #tpu.dot_dimension_numbers<[2], [1], [1], [2], [0, 0, 0, 1, 1, 2], [0], [0]>} : vector<4x8x8xbf16>, vector<4x8x32xbf16>, vector<4x8x32xf32> -> vector<4x8x32xf32>
    "tpu.trace_stop"() : () -> ()
    %63 = arith.addf %61, %62 : vector<4x8x32xf32>
    %64 = vector.extract_strided_slice %9 {offsets = [0, 0, 96], sizes = [4, 8, 32], strides = [1, 1, 1]} : vector<4x8x384xbf16> to vector<4x8x32xbf16>
    %65 = vector.extract_strided_slice %9 {offsets = [0, 0, 128], sizes = [4, 8, 32], strides = [1, 1, 1]} : vector<4x8x384xbf16> to vector<4x8x32xbf16>
    %66 = vector.extract_strided_slice %9 {offsets = [0, 0, 160], sizes = [4, 8, 32], strides = [1, 1, 1]} : vector<4x8x384xbf16> to vector<4x8x32xbf16>
    %67 = vector.extract_strided_slice %65 {offsets = [0, 0, 16], sizes = [4, 8, 16], strides = [1, 1, 1]} : vector<4x8x32xbf16> to vector<4x8x16xbf16>
    %cst_17 = arith.constant 0.000000e+00 : bf16
    %68 = vector.broadcast %cst_17 : bf16 to vector<4x8x16xbf16>
    %69 = arith.subf %68, %67 : vector<4x8x16xbf16>
    %70 = vector.extract_strided_slice %65 {offsets = [0, 0, 0], sizes = [4, 8, 16], strides = [1, 1, 1]} : vector<4x8x32xbf16> to vector<4x8x16xbf16>
    %71 = tpu.concatenate %69, %70 in 2 : vector<4x8x16xbf16>, vector<4x8x16xbf16> -> vector<4x8x32xbf16>
    %72 = vector.extract_strided_slice %66 {offsets = [0, 0, 16], sizes = [4, 8, 16], strides = [1, 1, 1]} : vector<4x8x32xbf16> to vector<4x8x16xbf16>
    %cst_18 = arith.constant 0.000000e+00 : bf16
    %73 = vector.broadcast %cst_18 : bf16 to vector<4x8x16xbf16>
    %74 = arith.subf %73, %72 : vector<4x8x16xbf16>
    %75 = vector.extract_strided_slice %66 {offsets = [0, 0, 0], sizes = [4, 8, 16], strides = [1, 1, 1]} : vector<4x8x32xbf16> to vector<4x8x16xbf16>
    %76 = tpu.concatenate %74, %75 in 2 : vector<4x8x16xbf16>, vector<4x8x16xbf16> -> vector<4x8x32xbf16>
    "tpu.trace_start"() <{level = 10 : i32, message = "bqc,bkc->bqk"}> : () -> ()
    %cst_19 = arith.constant dense<0.000000e+00> : vector<4x8x8xf32>
    %77 = tpu.matmul %64, %65, %cst_19 {dimension_numbers = #tpu.dot_dimension_numbers<[2], [2], [1], [1], [0, 0, 0, 1, 1, 1], [0], [0]>} : vector<4x8x32xbf16>, vector<4x8x32xbf16>, vector<4x8x8xf32> -> vector<4x8x8xf32>
    %cst_20 = arith.constant dense<0.000000e+00> : vector<4x8x8xf32>
    %78 = tpu.matmul %64, %71, %cst_20 {dimension_numbers = #tpu.dot_dimension_numbers<[2], [2], [1], [1], [0, 0, 0, 1, 1, 1], [0], [0]>} : vector<4x8x32xbf16>, vector<4x8x32xbf16>, vector<4x8x8xf32> -> vector<4x8x8xf32>
    "tpu.trace_stop"() : () -> ()
    %cst_21 = arith.constant dense<0xFF800000> : vector<4x8xf32>
    %79 = vector.multi_reduction <maximumf>, %77, %cst_21 [2] : vector<4x8x8xf32> to vector<4x8xf32>
    %80 = vector.shape_cast %79 : vector<4x8xf32> to vector<4x8x1xf32>
    %81 = vector.broadcast %80 : vector<4x8x1xf32> to vector<4x8x8xf32>
    %82 = arith.subf %77, %81 : vector<4x8x8xf32>
    %83 = math.exp %82 : vector<4x8x8xf32>
    %84 = math.cos %78 : vector<4x8x8xf32>
    %85 = arith.mulf %83, %84 : vector<4x8x8xf32>
    %86 = math.sin %78 : vector<4x8x8xf32>
    %87 = arith.mulf %83, %86 : vector<4x8x8xf32>
    %cst_22 = arith.constant dense<0.000000e+00> : vector<4x8xf32>
    %88 = vector.multi_reduction <add>, %85, %cst_22 [2] : vector<4x8x8xf32> to vector<4x8xf32>
    %89 = vector.shape_cast %88 : vector<4x8xf32> to vector<4x8x1xf32>
    %cst_23 = arith.constant dense<0.000000e+00> : vector<4x8xf32>
    %90 = vector.multi_reduction <add>, %87, %cst_23 [2] : vector<4x8x8xf32> to vector<4x8xf32>
    %91 = vector.shape_cast %90 : vector<4x8xf32> to vector<4x8x1xf32>
    %92 = arith.mulf %89, %89 : vector<4x8x1xf32>
    %93 = arith.mulf %91, %91 : vector<4x8x1xf32>
    %94 = arith.addf %92, %93 : vector<4x8x1xf32>
    %cst_24 = arith.constant 9.99999996E-13 : f32
    %95 = vector.broadcast %cst_24 : f32 to vector<4x8x1xf32>
    %96 = arith.addf %94, %95 : vector<4x8x1xf32>
    %cst_25 = arith.constant 1.000000e+00 : f32
    %97 = vector.broadcast %cst_25 : f32 to vector<4x8x1xf32>
    %98 = arith.divf %97, %96 : vector<4x8x1xf32>
    %99 = vector.broadcast %89 : vector<4x8x1xf32> to vector<4x8x8xf32>
    %100 = arith.mulf %85, %99 : vector<4x8x8xf32>
    %101 = vector.broadcast %91 : vector<4x8x1xf32> to vector<4x8x8xf32>
    %102 = arith.mulf %87, %101 : vector<4x8x8xf32>
    %103 = arith.addf %100, %102 : vector<4x8x8xf32>
    %104 = vector.broadcast %98 : vector<4x8x1xf32> to vector<4x8x8xf32>
    %105 = arith.mulf %103, %104 : vector<4x8x8xf32>
    %106 = arith.truncf %105 : vector<4x8x8xf32> to vector<4x8x8xbf16>
    %107 = vector.broadcast %89 : vector<4x8x1xf32> to vector<4x8x8xf32>
    %108 = arith.mulf %87, %107 : vector<4x8x8xf32>
    %109 = vector.broadcast %91 : vector<4x8x1xf32> to vector<4x8x8xf32>
    %110 = arith.mulf %85, %109 : vector<4x8x8xf32>
    %111 = arith.subf %108, %110 : vector<4x8x8xf32>
    %112 = vector.broadcast %98 : vector<4x8x1xf32> to vector<4x8x8xf32>
    %113 = arith.mulf %111, %112 : vector<4x8x8xf32>
    %114 = arith.truncf %113 : vector<4x8x8xf32> to vector<4x8x8xbf16>
    "tpu.trace_start"() <{level = 10 : i32, message = "bqk,bkc->bqc"}> : () -> ()
    %cst_26 = arith.constant dense<0.000000e+00> : vector<4x8x32xf32>
    %115 = tpu.matmul %106, %66, %cst_26 {dimension_numbers = #tpu.dot_dimension_numbers<[2], [1], [1], [2], [0, 0, 0, 1, 1, 2], [0], [0]>} : vector<4x8x8xbf16>, vector<4x8x32xbf16>, vector<4x8x32xf32> -> vector<4x8x32xf32>
    %cst_27 = arith.constant dense<0.000000e+00> : vector<4x8x32xf32>
    %116 = tpu.matmul %114, %76, %cst_27 {dimension_numbers = #tpu.dot_dimension_numbers<[2], [1], [1], [2], [0, 0, 0, 1, 1, 2], [0], [0]>} : vector<4x8x8xbf16>, vector<4x8x32xbf16>, vector<4x8x32xf32> -> vector<4x8x32xf32>
    "tpu.trace_stop"() : () -> ()
    %117 = arith.addf %115, %116 : vector<4x8x32xf32>
    %118 = vector.extract_strided_slice %9 {offsets = [0, 0, 192], sizes = [4, 8, 32], strides = [1, 1, 1]} : vector<4x8x384xbf16> to vector<4x8x32xbf16>
    %119 = vector.extract_strided_slice %9 {offsets = [0, 0, 224], sizes = [4, 8, 32], strides = [1, 1, 1]} : vector<4x8x384xbf16> to vector<4x8x32xbf16>
    %120 = vector.extract_strided_slice %9 {offsets = [0, 0, 256], sizes = [4, 8, 32], strides = [1, 1, 1]} : vector<4x8x384xbf16> to vector<4x8x32xbf16>
    %121 = vector.extract_strided_slice %119 {offsets = [0, 0, 16], sizes = [4, 8, 16], strides = [1, 1, 1]} : vector<4x8x32xbf16> to vector<4x8x16xbf16>
    %cst_28 = arith.constant 0.000000e+00 : bf16
    %122 = vector.broadcast %cst_28 : bf16 to vector<4x8x16xbf16>
    %123 = arith.subf %122, %121 : vector<4x8x16xbf16>
    %124 = vector.extract_strided_slice %119 {offsets = [0, 0, 0], sizes = [4, 8, 16], strides = [1, 1, 1]} : vector<4x8x32xbf16> to vector<4x8x16xbf16>
    %125 = tpu.concatenate %123, %124 in 2 : vector<4x8x16xbf16>, vector<4x8x16xbf16> -> vector<4x8x32xbf16>
    %126 = vector.extract_strided_slice %120 {offsets = [0, 0, 16], sizes = [4, 8, 16], strides = [1, 1, 1]} : vector<4x8x32xbf16> to vector<4x8x16xbf16>
    %cst_29 = arith.constant 0.000000e+00 : bf16
    %127 = vector.broadcast %cst_29 : bf16 to vector<4x8x16xbf16>
    %128 = arith.subf %127, %126 : vector<4x8x16xbf16>
    %129 = vector.extract_strided_slice %120 {offsets = [0, 0, 0], sizes = [4, 8, 16], strides = [1, 1, 1]} : vector<4x8x32xbf16> to vector<4x8x16xbf16>
    %130 = tpu.concatenate %128, %129 in 2 : vector<4x8x16xbf16>, vector<4x8x16xbf16> -> vector<4x8x32xbf16>
    "tpu.trace_start"() <{level = 10 : i32, message = "bqc,bkc->bqk"}> : () -> ()
    %cst_30 = arith.constant dense<0.000000e+00> : vector<4x8x8xf32>
    %131 = tpu.matmul %118, %119, %cst_30 {dimension_numbers = #tpu.dot_dimension_numbers<[2], [2], [1], [1], [0, 0, 0, 1, 1, 1], [0], [0]>} : vector<4x8x32xbf16>, vector<4x8x32xbf16>, vector<4x8x8xf32> -> vector<4x8x8xf32>
    %cst_31 = arith.constant dense<0.000000e+00> : vector<4x8x8xf32>
    %132 = tpu.matmul %118, %125, %cst_31 {dimension_numbers = #tpu.dot_dimension_numbers<[2], [2], [1], [1], [0, 0, 0, 1, 1, 1], [0], [0]>} : vector<4x8x32xbf16>, vector<4x8x32xbf16>, vector<4x8x8xf32> -> vector<4x8x8xf32>
    "tpu.trace_stop"() : () -> ()
    %cst_32 = arith.constant dense<0xFF800000> : vector<4x8xf32>
    %133 = vector.multi_reduction <maximumf>, %131, %cst_32 [2] : vector<4x8x8xf32> to vector<4x8xf32>
    %134 = vector.shape_cast %133 : vector<4x8xf32> to vector<4x8x1xf32>
    %135 = vector.broadcast %134 : vector<4x8x1xf32> to vector<4x8x8xf32>
    %136 = arith.subf %131, %135 : vector<4x8x8xf32>
    %137 = math.exp %136 : vector<4x8x8xf32>
    %138 = math.cos %132 : vector<4x8x8xf32>
    %139 = arith.mulf %137, %138 : vector<4x8x8xf32>
    %140 = math.sin %132 : vector<4x8x8xf32>
    %141 = arith.mulf %137, %140 : vector<4x8x8xf32>
    %cst_33 = arith.constant dense<0.000000e+00> : vector<4x8xf32>
    %142 = vector.multi_reduction <add>, %139, %cst_33 [2] : vector<4x8x8xf32> to vector<4x8xf32>
    %143 = vector.shape_cast %142 : vector<4x8xf32> to vector<4x8x1xf32>
    %cst_34 = arith.constant dense<0.000000e+00> : vector<4x8xf32>
    %144 = vector.multi_reduction <add>, %141, %cst_34 [2] : vector<4x8x8xf32> to vector<4x8xf32>
    %145 = vector.shape_cast %144 : vector<4x8xf32> to vector<4x8x1xf32>
    %146 = arith.mulf %143, %143 : vector<4x8x1xf32>
    %147 = arith.mulf %145, %145 : vector<4x8x1xf32>
    %148 = arith.addf %146, %147 : vector<4x8x1xf32>
    %cst_35 = arith.constant 9.99999996E-13 : f32
    %149 = vector.broadcast %cst_35 : f32 to vector<4x8x1xf32>
    %150 = arith.addf %148, %149 : vector<4x8x1xf32>
    %cst_36 = arith.constant 1.000000e+00 : f32
    %151 = vector.broadcast %cst_36 : f32 to vector<4x8x1xf32>
    %152 = arith.divf %151, %150 : vector<4x8x1xf32>
    %153 = vector.broadcast %143 : vector<4x8x1xf32> to vector<4x8x8xf32>
    %154 = arith.mulf %139, %153 : vector<4x8x8xf32>
    %155 = vector.broadcast %145 : vector<4x8x1xf32> to vector<4x8x8xf32>
    %156 = arith.mulf %141, %155 : vector<4x8x8xf32>
    %157 = arith.addf %154, %156 : vector<4x8x8xf32>
    %158 = vector.broadcast %152 : vector<4x8x1xf32> to vector<4x8x8xf32>
    %159 = arith.mulf %157, %158 : vector<4x8x8xf32>
    %160 = arith.truncf %159 : vector<4x8x8xf32> to vector<4x8x8xbf16>
    %161 = vector.broadcast %143 : vector<4x8x1xf32> to vector<4x8x8xf32>
    %162 = arith.mulf %141, %161 : vector<4x8x8xf32>
    %163 = vector.broadcast %145 : vector<4x8x1xf32> to vector<4x8x8xf32>
    %164 = arith.mulf %139, %163 : vector<4x8x8xf32>
    %165 = arith.subf %162, %164 : vector<4x8x8xf32>
    %166 = vector.broadcast %152 : vector<4x8x1xf32> to vector<4x8x8xf32>
    %167 = arith.mulf %165, %166 : vector<4x8x8xf32>
    %168 = arith.truncf %167 : vector<4x8x8xf32> to vector<4x8x8xbf16>
    "tpu.trace_start"() <{level = 10 : i32, message = "bqk,bkc->bqc"}> : () -> ()
    %cst_37 = arith.constant dense<0.000000e+00> : vector<4x8x32xf32>
    %169 = tpu.matmul %160, %120, %cst_37 {dimension_numbers = #tpu.dot_dimension_numbers<[2], [1], [1], [2], [0, 0, 0, 1, 1, 2], [0], [0]>} : vector<4x8x8xbf16>, vector<4x8x32xbf16>, vector<4x8x32xf32> -> vector<4x8x32xf32>
    %cst_38 = arith.constant dense<0.000000e+00> : vector<4x8x32xf32>
    %170 = tpu.matmul %168, %130, %cst_38 {dimension_numbers = #tpu.dot_dimension_numbers<[2], [1], [1], [2], [0, 0, 0, 1, 1, 2], [0], [0]>} : vector<4x8x8xbf16>, vector<4x8x32xbf16>, vector<4x8x32xf32> -> vector<4x8x32xf32>
    "tpu.trace_stop"() : () -> ()
    %171 = arith.addf %169, %170 : vector<4x8x32xf32>
    %172 = vector.extract_strided_slice %9 {offsets = [0, 0, 288], sizes = [4, 8, 32], strides = [1, 1, 1]} : vector<4x8x384xbf16> to vector<4x8x32xbf16>
    %173 = vector.extract_strided_slice %9 {offsets = [0, 0, 320], sizes = [4, 8, 32], strides = [1, 1, 1]} : vector<4x8x384xbf16> to vector<4x8x32xbf16>
    %174 = vector.extract_strided_slice %9 {offsets = [0, 0, 352], sizes = [4, 8, 32], strides = [1, 1, 1]} : vector<4x8x384xbf16> to vector<4x8x32xbf16>
    %175 = vector.extract_strided_slice %173 {offsets = [0, 0, 16], sizes = [4, 8, 16], strides = [1, 1, 1]} : vector<4x8x32xbf16> to vector<4x8x16xbf16>
    %cst_39 = arith.constant 0.000000e+00 : bf16
    %176 = vector.broadcast %cst_39 : bf16 to vector<4x8x16xbf16>
    %177 = arith.subf %176, %175 : vector<4x8x16xbf16>
    %178 = vector.extract_strided_slice %173 {offsets = [0, 0, 0], sizes = [4, 8, 16], strides = [1, 1, 1]} : vector<4x8x32xbf16> to vector<4x8x16xbf16>
    %179 = tpu.concatenate %177, %178 in 2 : vector<4x8x16xbf16>, vector<4x8x16xbf16> -> vector<4x8x32xbf16>
    %180 = vector.extract_strided_slice %174 {offsets = [0, 0, 16], sizes = [4, 8, 16], strides = [1, 1, 1]} : vector<4x8x32xbf16> to vector<4x8x16xbf16>
    %cst_40 = arith.constant 0.000000e+00 : bf16
    %181 = vector.broadcast %cst_40 : bf16 to vector<4x8x16xbf16>
    %182 = arith.subf %181, %180 : vector<4x8x16xbf16>
    %183 = vector.extract_strided_slice %174 {offsets = [0, 0, 0], sizes = [4, 8, 16], strides = [1, 1, 1]} : vector<4x8x32xbf16> to vector<4x8x16xbf16>
    %184 = tpu.concatenate %182, %183 in 2 : vector<4x8x16xbf16>, vector<4x8x16xbf16> -> vector<4x8x32xbf16>
    "tpu.trace_start"() <{level = 10 : i32, message = "bqc,bkc->bqk"}> : () -> ()
    %cst_41 = arith.constant dense<0.000000e+00> : vector<4x8x8xf32>
    %185 = tpu.matmul %172, %173, %cst_41 {dimension_numbers = #tpu.dot_dimension_numbers<[2], [2], [1], [1], [0, 0, 0, 1, 1, 1], [0], [0]>} : vector<4x8x32xbf16>, vector<4x8x32xbf16>, vector<4x8x8xf32> -> vector<4x8x8xf32>
    %cst_42 = arith.constant dense<0.000000e+00> : vector<4x8x8xf32>
    %186 = tpu.matmul %172, %179, %cst_42 {dimension_numbers = #tpu.dot_dimension_numbers<[2], [2], [1], [1], [0, 0, 0, 1, 1, 1], [0], [0]>} : vector<4x8x32xbf16>, vector<4x8x32xbf16>, vector<4x8x8xf32> -> vector<4x8x8xf32>
    "tpu.trace_stop"() : () -> ()
    %cst_43 = arith.constant dense<0xFF800000> : vector<4x8xf32>
    %187 = vector.multi_reduction <maximumf>, %185, %cst_43 [2] : vector<4x8x8xf32> to vector<4x8xf32>
    %188 = vector.shape_cast %187 : vector<4x8xf32> to vector<4x8x1xf32>
    %189 = vector.broadcast %188 : vector<4x8x1xf32> to vector<4x8x8xf32>
    %190 = arith.subf %185, %189 : vector<4x8x8xf32>
    %191 = math.exp %190 : vector<4x8x8xf32>
    %192 = math.cos %186 : vector<4x8x8xf32>
    %193 = arith.mulf %191, %192 : vector<4x8x8xf32>
    %194 = math.sin %186 : vector<4x8x8xf32>
    %195 = arith.mulf %191, %194 : vector<4x8x8xf32>
    %cst_44 = arith.constant dense<0.000000e+00> : vector<4x8xf32>
    %196 = vector.multi_reduction <add>, %193, %cst_44 [2] : vector<4x8x8xf32> to vector<4x8xf32>
    %197 = vector.shape_cast %196 : vector<4x8xf32> to vector<4x8x1xf32>
    %cst_45 = arith.constant dense<0.000000e+00> : vector<4x8xf32>
    %198 = vector.multi_reduction <add>, %195, %cst_45 [2] : vector<4x8x8xf32> to vector<4x8xf32>
    %199 = vector.shape_cast %198 : vector<4x8xf32> to vector<4x8x1xf32>
    %200 = arith.mulf %197, %197 : vector<4x8x1xf32>
    %201 = arith.mulf %199, %199 : vector<4x8x1xf32>
    %202 = arith.addf %200, %201 : vector<4x8x1xf32>
    %cst_46 = arith.constant 9.99999996E-13 : f32
    %203 = vector.broadcast %cst_46 : f32 to vector<4x8x1xf32>
    %204 = arith.addf %202, %203 : vector<4x8x1xf32>
    %cst_47 = arith.constant 1.000000e+00 : f32
    %205 = vector.broadcast %cst_47 : f32 to vector<4x8x1xf32>
    %206 = arith.divf %205, %204 : vector<4x8x1xf32>
    %207 = vector.broadcast %197 : vector<4x8x1xf32> to vector<4x8x8xf32>
    %208 = arith.mulf %193, %207 : vector<4x8x8xf32>
    %209 = vector.broadcast %199 : vector<4x8x1xf32> to vector<4x8x8xf32>
    %210 = arith.mulf %195, %209 : vector<4x8x8xf32>
    %211 = arith.addf %208, %210 : vector<4x8x8xf32>
    %212 = vector.broadcast %206 : vector<4x8x1xf32> to vector<4x8x8xf32>
    %213 = arith.mulf %211, %212 : vector<4x8x8xf32>
    %214 = arith.truncf %213 : vector<4x8x8xf32> to vector<4x8x8xbf16>
    %215 = vector.broadcast %197 : vector<4x8x1xf32> to vector<4x8x8xf32>
    %216 = arith.mulf %195, %215 : vector<4x8x8xf32>
    %217 = vector.broadcast %199 : vector<4x8x1xf32> to vector<4x8x8xf32>
    %218 = arith.mulf %193, %217 : vector<4x8x8xf32>
    %219 = arith.subf %216, %218 : vector<4x8x8xf32>
    %220 = vector.broadcast %206 : vector<4x8x1xf32> to vector<4x8x8xf32>
    %221 = arith.mulf %219, %220 : vector<4x8x8xf32>
    %222 = arith.truncf %221 : vector<4x8x8xf32> to vector<4x8x8xbf16>
    "tpu.trace_start"() <{level = 10 : i32, message = "bqk,bkc->bqc"}> : () -> ()
    %cst_48 = arith.constant dense<0.000000e+00> : vector<4x8x32xf32>
    %223 = tpu.matmul %214, %174, %cst_48 {dimension_numbers = #tpu.dot_dimension_numbers<[2], [1], [1], [2], [0, 0, 0, 1, 1, 2], [0], [0]>} : vector<4x8x8xbf16>, vector<4x8x32xbf16>, vector<4x8x32xf32> -> vector<4x8x32xf32>
    %cst_49 = arith.constant dense<0.000000e+00> : vector<4x8x32xf32>
    %224 = tpu.matmul %222, %184, %cst_49 {dimension_numbers = #tpu.dot_dimension_numbers<[2], [1], [1], [2], [0, 0, 0, 1, 1, 2], [0], [0]>} : vector<4x8x8xbf16>, vector<4x8x32xbf16>, vector<4x8x32xf32> -> vector<4x8x32xf32>
    "tpu.trace_stop"() : () -> ()
    %225 = arith.addf %223, %224 : vector<4x8x32xf32>
    %226 = tpu.concatenate %63, %117, %171, %225 in 2 : vector<4x8x32xf32>, vector<4x8x32xf32>, vector<4x8x32xf32>, vector<4x8x32xf32> -> vector<4x8x128xf32>
    %227 = vector.shape_cast %226 : vector<4x8x128xf32> to vector<32x128xf32>
    %228 = arith.truncf %227 : vector<32x128xf32> to vector<32x128xbf16>
    %c0_50 = arith.constant 0 : index
    %c0_51 = arith.constant 0 : index
    %229 = vector.load %arg4[%c0_50, %c0_51] : memref<128x128xbf16, #tpu.memory_space<vmem>>, vector<128x128xbf16>
    %cst_52 = arith.constant dense<0.000000e+00> : vector<32x128xf32>
    %230 = tpu.matmul %228, %229, %cst_52 {dimension_numbers = #tpu.dot_dimension_numbers<[1], [0], [0], [1], [0, 0, 1, 1], [], []>} : vector<32x128xbf16>, vector<128x128xbf16>, vector<32x128xf32> -> vector<32x128xf32>
    %c0_53 = arith.constant 0 : index
    %c0_54 = arith.constant 0 : index
    %231 = vector.load %arg5[%c0_53, %c0_54] : memref<1x128xf32, #tpu.memory_space<vmem>>, vector<1x128xf32>
    %232 = vector.broadcast %231 : vector<1x128xf32> to vector<32x128xf32>
    %233 = arith.addf %230, %232 : vector<32x128xf32>
    %234 = arith.addf %1, %233 : vector<32x128xf32>
    %235 = vector.extract_strided_slice %234 {offsets = [0, 0], sizes = [32, 64], strides = [1, 1]} : vector<32x128xf32> to vector<32x64xf32>
    %236 = vector.extract_strided_slice %234 {offsets = [0, 64], sizes = [32, 64], strides = [1, 1]} : vector<32x128xf32> to vector<32x64xf32>
    %cst_55 = arith.constant dense<0.000000e+00> : vector<32xf32>
    %237 = vector.multi_reduction <add>, %235, %cst_55 [1] : vector<32x64xf32> to vector<32xf32>
    %238 = vector.shape_cast %237 : vector<32xf32> to vector<32x1xf32>
    %cst_56 = arith.constant 6.400000e+01 : f32
    %239 = vector.broadcast %cst_56 : f32 to vector<32x1xf32>
    %240 = arith.divf %238, %239 : vector<32x1xf32>
    %cst_57 = arith.constant dense<0.000000e+00> : vector<32xf32>
    %241 = vector.multi_reduction <add>, %236, %cst_57 [1] : vector<32x64xf32> to vector<32xf32>
    %242 = vector.shape_cast %241 : vector<32xf32> to vector<32x1xf32>
    %cst_58 = arith.constant 6.400000e+01 : f32
    %243 = vector.broadcast %cst_58 : f32 to vector<32x1xf32>
    %244 = arith.divf %242, %243 : vector<32x1xf32>
    %245 = vector.broadcast %240 : vector<32x1xf32> to vector<32x64xf32>
    %246 = arith.subf %235, %245 : vector<32x64xf32>
    %247 = vector.broadcast %244 : vector<32x1xf32> to vector<32x64xf32>
    %248 = arith.subf %236, %247 : vector<32x64xf32>
    %249 = arith.mulf %246, %246 : vector<32x64xf32>
    %cst_59 = arith.constant dense<0.000000e+00> : vector<32xf32>
    %250 = vector.multi_reduction <add>, %249, %cst_59 [1] : vector<32x64xf32> to vector<32xf32>
    %251 = vector.shape_cast %250 : vector<32xf32> to vector<32x1xf32>
    %cst_60 = arith.constant 0.0158730168 : f32
    %252 = vector.broadcast %cst_60 : f32 to vector<32x1xf32>
    %253 = arith.mulf %251, %252 : vector<32x1xf32>
    %cst_61 = arith.constant 9.99999974E-6 : f32
    %254 = vector.broadcast %cst_61 : f32 to vector<32x1xf32>
    %255 = arith.addf %253, %254 : vector<32x1xf32>
    %256 = arith.mulf %246, %248 : vector<32x64xf32>
    %cst_62 = arith.constant dense<0.000000e+00> : vector<32xf32>
    %257 = vector.multi_reduction <add>, %256, %cst_62 [1] : vector<32x64xf32> to vector<32xf32>
    %258 = vector.shape_cast %257 : vector<32xf32> to vector<32x1xf32>
    %cst_63 = arith.constant 0.0158730168 : f32
    %259 = vector.broadcast %cst_63 : f32 to vector<32x1xf32>
    %260 = arith.mulf %258, %259 : vector<32x1xf32>
    %261 = arith.mulf %248, %248 : vector<32x64xf32>
    %cst_64 = arith.constant dense<0.000000e+00> : vector<32xf32>
    %262 = vector.multi_reduction <add>, %261, %cst_64 [1] : vector<32x64xf32> to vector<32xf32>
    %263 = vector.shape_cast %262 : vector<32xf32> to vector<32x1xf32>
    %cst_65 = arith.constant 0.0158730168 : f32
    %264 = vector.broadcast %cst_65 : f32 to vector<32x1xf32>
    %265 = arith.mulf %263, %264 : vector<32x1xf32>
    %cst_66 = arith.constant 9.99999974E-6 : f32
    %266 = vector.broadcast %cst_66 : f32 to vector<32x1xf32>
    %267 = arith.addf %265, %266 : vector<32x1xf32>
    %268 = arith.mulf %255, %267 : vector<32x1xf32>
    %269 = arith.mulf %260, %260 : vector<32x1xf32>
    %270 = arith.subf %268, %269 : vector<32x1xf32>
    %271 = math.sqrt %270 : vector<32x1xf32>
    %272 = arith.addf %255, %267 : vector<32x1xf32>
    %cst_67 = arith.constant 2.000000e+00 : f32
    %273 = vector.broadcast %cst_67 : f32 to vector<32x1xf32>
    %274 = arith.mulf %273, %271 : vector<32x1xf32>
    %275 = arith.addf %272, %274 : vector<32x1xf32>
    %276 = math.sqrt %275 : vector<32x1xf32>
    %277 = arith.mulf %271, %276 : vector<32x1xf32>
    %cst_68 = arith.constant 1.000000e+00 : f32
    %278 = vector.broadcast %cst_68 : f32 to vector<32x1xf32>
    %279 = arith.divf %278, %277 : vector<32x1xf32>
    %280 = arith.addf %267, %271 : vector<32x1xf32>
    %281 = arith.mulf %280, %279 : vector<32x1xf32>
    %cst_69 = arith.constant 0.000000e+00 : f32
    %282 = vector.broadcast %cst_69 : f32 to vector<32x1xf32>
    %283 = arith.subf %282, %260 : vector<32x1xf32>
    %284 = arith.mulf %283, %279 : vector<32x1xf32>
    %285 = arith.addf %255, %271 : vector<32x1xf32>
    %286 = arith.mulf %285, %279 : vector<32x1xf32>
    %287 = vector.broadcast %281 : vector<32x1xf32> to vector<32x64xf32>
    %288 = arith.mulf %287, %246 : vector<32x64xf32>
    %289 = vector.broadcast %284 : vector<32x1xf32> to vector<32x64xf32>
    %290 = arith.mulf %289, %248 : vector<32x64xf32>
    %291 = arith.addf %288, %290 : vector<32x64xf32>
    %292 = vector.broadcast %284 : vector<32x1xf32> to vector<32x64xf32>
    %293 = arith.mulf %292, %246 : vector<32x64xf32>
    %294 = vector.broadcast %286 : vector<32x1xf32> to vector<32x64xf32>
    %295 = arith.mulf %294, %248 : vector<32x64xf32>
    %296 = arith.addf %293, %295 : vector<32x64xf32>
    %c0_70 = arith.constant 0 : index
    %c0_71 = arith.constant 0 : index
    %297 = vector.load %arg6[%c0_70, %c0_71] : memref<3x64xf32, #tpu.memory_space<vmem>>, vector<1x64xf32>
    %c1 = arith.constant 1 : index
    %c0_72 = arith.constant 0 : index
    %298 = vector.load %arg6[%c1, %c0_72] : memref<3x64xf32, #tpu.memory_space<vmem>>, vector<1x64xf32>
    %c2 = arith.constant 2 : index
    %c0_73 = arith.constant 0 : index
    %299 = vector.load %arg6[%c2, %c0_73] : memref<3x64xf32, #tpu.memory_space<vmem>>, vector<1x64xf32>
    %300 = vector.broadcast %297 : vector<1x64xf32> to vector<32x64xf32>
    %301 = arith.mulf %300, %291 : vector<32x64xf32>
    %302 = vector.broadcast %298 : vector<1x64xf32> to vector<32x64xf32>
    %303 = arith.mulf %302, %296 : vector<32x64xf32>
    %304 = arith.addf %301, %303 : vector<32x64xf32>
    %c0_74 = arith.constant 0 : index
    %c0_75 = arith.constant 0 : index
    %305 = vector.load %arg7[%c0_74, %c0_75] : memref<2x64xf32, #tpu.memory_space<vmem>>, vector<1x64xf32>
    %306 = vector.broadcast %305 : vector<1x64xf32> to vector<32x64xf32>
    %307 = arith.addf %304, %306 : vector<32x64xf32>
    %308 = vector.broadcast %298 : vector<1x64xf32> to vector<32x64xf32>
    %309 = arith.mulf %308, %291 : vector<32x64xf32>
    %310 = vector.broadcast %299 : vector<1x64xf32> to vector<32x64xf32>
    %311 = arith.mulf %310, %296 : vector<32x64xf32>
    %312 = arith.addf %309, %311 : vector<32x64xf32>
    %c1_76 = arith.constant 1 : index
    %c0_77 = arith.constant 0 : index
    %313 = vector.load %arg7[%c1_76, %c0_77] : memref<2x64xf32, #tpu.memory_space<vmem>>, vector<1x64xf32>
    %314 = vector.broadcast %313 : vector<1x64xf32> to vector<32x64xf32>
    %315 = arith.addf %312, %314 : vector<32x64xf32>
    %316 = tpu.concatenate %307, %315 in 1 : vector<32x64xf32>, vector<32x64xf32> -> vector<32x128xf32>
    %317 = arith.truncf %316 : vector<32x128xf32> to vector<32x128xbf16>
    %c0_78 = arith.constant 0 : index
    %c0_79 = arith.constant 0 : index
    %318 = vector.load %arg8[%c0_78, %c0_79] : memref<128x256xbf16, #tpu.memory_space<vmem>>, vector<128x256xbf16>
    %cst_80 = arith.constant dense<0.000000e+00> : vector<32x256xf32>
    %319 = tpu.matmul %317, %318, %cst_80 {dimension_numbers = #tpu.dot_dimension_numbers<[1], [0], [0], [1], [0, 0, 1, 1], [], []>} : vector<32x128xbf16>, vector<128x256xbf16>, vector<32x256xf32> -> vector<32x256xf32>
    %c0_81 = arith.constant 0 : index
    %c0_82 = arith.constant 0 : index
    %320 = vector.load %arg9[%c0_81, %c0_82] : memref<1x256xf32, #tpu.memory_space<vmem>>, vector<1x256xf32>
    %321 = vector.broadcast %320 : vector<1x256xf32> to vector<32x256xf32>
    %322 = arith.addf %319, %321 : vector<32x256xf32>
    %cst_83 = arith.constant 8.000000e+00 : f32
    %323 = vector.broadcast %cst_83 : f32 to vector<32x256xf32>
    %324 = arith.mulf %322, %323 : vector<32x256xf32>
    %cst_84 = arith.constant 1.000000e+00 : f32
    %325 = vector.broadcast %cst_84 : f32 to vector<32x256xf32>
    %326 = arith.minimumf %324, %325 : vector<32x256xf32>
    %cst_85 = arith.constant 1.000000e+00 : f32
    %327 = vector.broadcast %cst_85 : f32 to vector<32x256xf32>
    %328 = arith.cmpf ogt, %324, %327 : vector<32x256xf32>
    %329 = math.exp %326 : vector<32x256xf32>
    %330 = math.log1p %329 : vector<32x256xf32>
    %cst_86 = arith.constant 1.250000e-01 : f32
    %331 = vector.broadcast %cst_86 : f32 to vector<32x256xf32>
    %332 = arith.mulf %330, %331 : vector<32x256xf32>
    %333 = arith.select %328, %322, %332 : vector<32x256xi1>, vector<32x256xf32>
    %334 = arith.truncf %333 : vector<32x256xf32> to vector<32x256xbf16>
    %c0_87 = arith.constant 0 : index
    %c0_88 = arith.constant 0 : index
    %335 = vector.load %arg10[%c0_87, %c0_88] : memref<256x128xbf16, #tpu.memory_space<vmem>>, vector<256x128xbf16>
    %cst_89 = arith.constant dense<0.000000e+00> : vector<32x128xf32>
    %336 = tpu.matmul %334, %335, %cst_89 {dimension_numbers = #tpu.dot_dimension_numbers<[1], [0], [0], [1], [0, 0, 1, 1], [], []>} : vector<32x256xbf16>, vector<256x128xbf16>, vector<32x128xf32> -> vector<32x128xf32>
    %c0_90 = arith.constant 0 : index
    %c0_91 = arith.constant 0 : index
    %337 = vector.load %arg11[%c0_90, %c0_91] : memref<1x128xf32, #tpu.memory_space<vmem>>, vector<1x128xf32>
    %338 = vector.broadcast %337 : vector<1x128xf32> to vector<32x128xf32>
    %339 = arith.addf %336, %338 : vector<32x128xf32>
    %340 = arith.addf %316, %339 : vector<32x128xf32>
    %341 = vector.extract_strided_slice %340 {offsets = [0, 0], sizes = [32, 64], strides = [1, 1]} : vector<32x128xf32> to vector<32x64xf32>
    %342 = vector.extract_strided_slice %340 {offsets = [0, 64], sizes = [32, 64], strides = [1, 1]} : vector<32x128xf32> to vector<32x64xf32>
    %cst_92 = arith.constant dense<0.000000e+00> : vector<32xf32>
    %343 = vector.multi_reduction <add>, %341, %cst_92 [1] : vector<32x64xf32> to vector<32xf32>
    %344 = vector.shape_cast %343 : vector<32xf32> to vector<32x1xf32>
    %cst_93 = arith.constant 6.400000e+01 : f32
    %345 = vector.broadcast %cst_93 : f32 to vector<32x1xf32>
    %346 = arith.divf %344, %345 : vector<32x1xf32>
    %cst_94 = arith.constant dense<0.000000e+00> : vector<32xf32>
    %347 = vector.multi_reduction <add>, %342, %cst_94 [1] : vector<32x64xf32> to vector<32xf32>
    %348 = vector.shape_cast %347 : vector<32xf32> to vector<32x1xf32>
    %cst_95 = arith.constant 6.400000e+01 : f32
    %349 = vector.broadcast %cst_95 : f32 to vector<32x1xf32>
    %350 = arith.divf %348, %349 : vector<32x1xf32>
    %351 = vector.broadcast %346 : vector<32x1xf32> to vector<32x64xf32>
    %352 = arith.subf %341, %351 : vector<32x64xf32>
    %353 = vector.broadcast %350 : vector<32x1xf32> to vector<32x64xf32>
    %354 = arith.subf %342, %353 : vector<32x64xf32>
    %355 = arith.mulf %352, %352 : vector<32x64xf32>
    %cst_96 = arith.constant dense<0.000000e+00> : vector<32xf32>
    %356 = vector.multi_reduction <add>, %355, %cst_96 [1] : vector<32x64xf32> to vector<32xf32>
    %357 = vector.shape_cast %356 : vector<32xf32> to vector<32x1xf32>
    %cst_97 = arith.constant 0.0158730168 : f32
    %358 = vector.broadcast %cst_97 : f32 to vector<32x1xf32>
    %359 = arith.mulf %357, %358 : vector<32x1xf32>
    %cst_98 = arith.constant 9.99999974E-6 : f32
    %360 = vector.broadcast %cst_98 : f32 to vector<32x1xf32>
    %361 = arith.addf %359, %360 : vector<32x1xf32>
    %362 = arith.mulf %352, %354 : vector<32x64xf32>
    %cst_99 = arith.constant dense<0.000000e+00> : vector<32xf32>
    %363 = vector.multi_reduction <add>, %362, %cst_99 [1] : vector<32x64xf32> to vector<32xf32>
    %364 = vector.shape_cast %363 : vector<32xf32> to vector<32x1xf32>
    %cst_100 = arith.constant 0.0158730168 : f32
    %365 = vector.broadcast %cst_100 : f32 to vector<32x1xf32>
    %366 = arith.mulf %364, %365 : vector<32x1xf32>
    %367 = arith.mulf %354, %354 : vector<32x64xf32>
    %cst_101 = arith.constant dense<0.000000e+00> : vector<32xf32>
    %368 = vector.multi_reduction <add>, %367, %cst_101 [1] : vector<32x64xf32> to vector<32xf32>
    %369 = vector.shape_cast %368 : vector<32xf32> to vector<32x1xf32>
    %cst_102 = arith.constant 0.0158730168 : f32
    %370 = vector.broadcast %cst_102 : f32 to vector<32x1xf32>
    %371 = arith.mulf %369, %370 : vector<32x1xf32>
    %cst_103 = arith.constant 9.99999974E-6 : f32
    %372 = vector.broadcast %cst_103 : f32 to vector<32x1xf32>
    %373 = arith.addf %371, %372 : vector<32x1xf32>
    %374 = arith.mulf %361, %373 : vector<32x1xf32>
    %375 = arith.mulf %366, %366 : vector<32x1xf32>
    %376 = arith.subf %374, %375 : vector<32x1xf32>
    %377 = math.sqrt %376 : vector<32x1xf32>
    %378 = arith.addf %361, %373 : vector<32x1xf32>
    %cst_104 = arith.constant 2.000000e+00 : f32
    %379 = vector.broadcast %cst_104 : f32 to vector<32x1xf32>
    %380 = arith.mulf %379, %377 : vector<32x1xf32>
    %381 = arith.addf %378, %380 : vector<32x1xf32>
    %382 = math.sqrt %381 : vector<32x1xf32>
    %383 = arith.mulf %377, %382 : vector<32x1xf32>
    %cst_105 = arith.constant 1.000000e+00 : f32
    %384 = vector.broadcast %cst_105 : f32 to vector<32x1xf32>
    %385 = arith.divf %384, %383 : vector<32x1xf32>
    %386 = arith.addf %373, %377 : vector<32x1xf32>
    %387 = arith.mulf %386, %385 : vector<32x1xf32>
    %cst_106 = arith.constant 0.000000e+00 : f32
    %388 = vector.broadcast %cst_106 : f32 to vector<32x1xf32>
    %389 = arith.subf %388, %366 : vector<32x1xf32>
    %390 = arith.mulf %389, %385 : vector<32x1xf32>
    %391 = arith.addf %361, %377 : vector<32x1xf32>
    %392 = arith.mulf %391, %385 : vector<32x1xf32>
    %393 = vector.broadcast %387 : vector<32x1xf32> to vector<32x64xf32>
    %394 = arith.mulf %393, %352 : vector<32x64xf32>
    %395 = vector.broadcast %390 : vector<32x1xf32> to vector<32x64xf32>
    %396 = arith.mulf %395, %354 : vector<32x64xf32>
    %397 = arith.addf %394, %396 : vector<32x64xf32>
    %398 = vector.broadcast %390 : vector<32x1xf32> to vector<32x64xf32>
    %399 = arith.mulf %398, %352 : vector<32x64xf32>
    %400 = vector.broadcast %392 : vector<32x1xf32> to vector<32x64xf32>
    %401 = arith.mulf %400, %354 : vector<32x64xf32>
    %402 = arith.addf %399, %401 : vector<32x64xf32>
    %c0_107 = arith.constant 0 : index
    %c0_108 = arith.constant 0 : index
    %403 = vector.load %arg12[%c0_107, %c0_108] : memref<3x64xf32, #tpu.memory_space<vmem>>, vector<1x64xf32>
    %c1_109 = arith.constant 1 : index
    %c0_110 = arith.constant 0 : index
    %404 = vector.load %arg12[%c1_109, %c0_110] : memref<3x64xf32, #tpu.memory_space<vmem>>, vector<1x64xf32>
    %c2_111 = arith.constant 2 : index
    %c0_112 = arith.constant 0 : index
    %405 = vector.load %arg12[%c2_111, %c0_112] : memref<3x64xf32, #tpu.memory_space<vmem>>, vector<1x64xf32>
    %406 = vector.broadcast %403 : vector<1x64xf32> to vector<32x64xf32>
    %407 = arith.mulf %406, %397 : vector<32x64xf32>
    %408 = vector.broadcast %404 : vector<1x64xf32> to vector<32x64xf32>
    %409 = arith.mulf %408, %402 : vector<32x64xf32>
    %410 = arith.addf %407, %409 : vector<32x64xf32>
    %c0_113 = arith.constant 0 : index
    %c0_114 = arith.constant 0 : index
    %411 = vector.load %arg13[%c0_113, %c0_114] : memref<2x64xf32, #tpu.memory_space<vmem>>, vector<1x64xf32>
    %412 = vector.broadcast %411 : vector<1x64xf32> to vector<32x64xf32>
    %413 = arith.addf %410, %412 : vector<32x64xf32>
    %414 = vector.broadcast %404 : vector<1x64xf32> to vector<32x64xf32>
    %415 = arith.mulf %414, %397 : vector<32x64xf32>
    %416 = vector.broadcast %405 : vector<1x64xf32> to vector<32x64xf32>
    %417 = arith.mulf %416, %402 : vector<32x64xf32>
    %418 = arith.addf %415, %417 : vector<32x64xf32>
    %c1_115 = arith.constant 1 : index
    %c0_116 = arith.constant 0 : index
    %419 = vector.load %arg13[%c1_115, %c0_116] : memref<2x64xf32, #tpu.memory_space<vmem>>, vector<1x64xf32>
    %420 = vector.broadcast %419 : vector<1x64xf32> to vector<32x64xf32>
    %421 = arith.addf %418, %420 : vector<32x64xf32>
    %422 = vector.shape_cast %413 : vector<32x64xf32> to vector<4x8x64xf32>
    %c0_117 = arith.constant 0 : index
    %c0_118 = arith.constant 0 : index
    %c0_119 = arith.constant 0 : index
    %423 = vector.load %arg14[%c0_117, %c0_118, %c0_119] : memref<4x8x128xf32, #tpu.memory_space<vmem>>, vector<4x8x64xf32>
    tpu.vector_store %arg14[%c0_117, %c0_118, %c0_119], %422 {strides = array<i32>} : memref<4x8x128xf32, #tpu.memory_space<vmem>>, vector<4x8x64xf32>,
    %424 = vector.shape_cast %421 : vector<32x64xf32> to vector<4x8x64xf32>
    %c0_120 = arith.constant 0 : index
    %c0_121 = arith.constant 0 : index
    %c64 = arith.constant 64 : index
    %425 = vector.load %arg14[%c0_120, %c0_121, %c64] : memref<4x8x128xf32, #tpu.memory_space<vmem>>, vector<4x8x64xf32>
    tpu.vector_store %arg14[%c0_120, %c0_121, %c64], %424 {strides = array<i32>} : memref<4x8x128xf32, #tpu.memory_space<vmem>>, vector<4x8x64xf32>,
    return
  }
  func.func @transform_0(%arg0: i32) -> (i32, i32, i32) {
    %c0_i32 = arith.constant 0 : i32
    %c0_i32_0 = arith.constant 0 : i32
    %c0_i32_1 = arith.constant 0 : i32
    return %arg0, %c0_i32, %c0_i32_0 : i32, i32, i32
  }
  func.func @transform_1(%arg0: i32) -> (i32, i32) {
    %c0_i32 = arith.constant 0 : i32
    %c0_i32_0 = arith.constant 0 : i32
    %c0_i32_1 = arith.constant 0 : i32
    return %c0_i32, %c0_i32_0 : i32, i32
  }
  func.func @transform_2(%arg0: i32) -> (i32, i32) {
    %c0_i32 = arith.constant 0 : i32
    %c0_i32_0 = arith.constant 0 : i32
    %c0_i32_1 = arith.constant 0 : i32
    return %c0_i32, %c0_i32_0 : i32, i32
  }
  func.func @transform_3(%arg0: i32) -> (i32, i32) {
    %c0_i32 = arith.constant 0 : i32
    %c0_i32_0 = arith.constant 0 : i32
    %c0_i32_1 = arith.constant 0 : i32
    return %c0_i32, %c0_i32_0 : i32, i32
  }
  func.func @transform_4(%arg0: i32) -> (i32, i32) {
    %c0_i32 = arith.constant 0 : i32
    %c0_i32_0 = arith.constant 0 : i32
    %c0_i32_1 = arith.constant 0 : i32
    return %c0_i32, %c0_i32_0 : i32, i32
  }
  func.func @transform_5(%arg0: i32) -> (i32, i32) {
    %c0_i32 = arith.constant 0 : i32
    %c0_i32_0 = arith.constant 0 : i32
    %c0_i32_1 = arith.constant 0 : i32
    return %c0_i32, %c0_i32_0 : i32, i32
  }
  func.func @transform_6(%arg0: i32) -> (i32, i32) {
    %c0_i32 = arith.constant 0 : i32
    %c0_i32_0 = arith.constant 0 : i32
    %c0_i32_1 = arith.constant 0 : i32
    return %c0_i32, %c0_i32_0 : i32, i32
  }
  func.func @transform_7(%arg0: i32) -> (i32, i32) {
    %c0_i32 = arith.constant 0 : i32
    %c0_i32_0 = arith.constant 0 : i32
    %c0_i32_1 = arith.constant 0 : i32
    return %c0_i32, %c0_i32_0 : i32, i32
  }
  func.func @transform_8(%arg0: i32) -> (i32, i32) {
    %c0_i32 = arith.constant 0 : i32
    %c0_i32_0 = arith.constant 0 : i32
    %c0_i32_1 = arith.constant 0 : i32
    return %c0_i32, %c0_i32_0 : i32, i32
  }
  func.func @transform_9(%arg0: i32) -> (i32, i32) {
    %c0_i32 = arith.constant 0 : i32
    %c0_i32_0 = arith.constant 0 : i32
    %c0_i32_1 = arith.constant 0 : i32
    return %c0_i32, %c0_i32_0 : i32, i32
  }
  func.func @transform_10(%arg0: i32) -> (i32, i32) {
    %c0_i32 = arith.constant 0 : i32
    %c0_i32_0 = arith.constant 0 : i32
    %c0_i32_1 = arith.constant 0 : i32
    return %c0_i32, %c0_i32_0 : i32, i32
  }
  func.func @transform_11(%arg0: i32) -> (i32, i32) {
    %c0_i32 = arith.constant 0 : i32
    %c0_i32_0 = arith.constant 0 : i32
    %c0_i32_1 = arith.constant 0 : i32
    return %c0_i32, %c0_i32_0 : i32, i32
  }
  func.func @transform_12(%arg0: i32) -> (i32, i32) {
    %c0_i32 = arith.constant 0 : i32
    %c0_i32_0 = arith.constant 0 : i32
    %c0_i32_1 = arith.constant 0 : i32
    return %c0_i32, %c0_i32_0 : i32, i32
  }
  func.func @transform_13(%arg0: i32) -> (i32, i32, i32) {
    %c0_i32 = arith.constant 0 : i32
    %c0_i32_0 = arith.constant 0 : i32
    %c0_i32_1 = arith.constant 0 : i32
    return %arg0, %c0_i32, %c0_i32_0 : i32, i32, i32
  }
}

</mosaic_0001>

<llo_original>
// kernel: tpu_custom_call.1
$region0: #{tpu_custom_call.1}
  #allocation0 [shape = 'u32[]', space=smem, size = 0x4, offset = 0x4, fixed_abs, tag = 'smem constant byte address 0x4 - core index']
  #allocation1 [shape = 'u32[72,128]{1,0:T(1,128)}', space=vmem, size = 0x9000, scoped, tag = 'internal scratch']
  %s0 = inlined_call_operand.hbm [shape: f32[4,8,128], index: 0, kind: input, shape index: {}]
  %s1 = inlined_call_operand.hbm [shape: bf16[128,384], index: 1, kind: input, shape index: {}]
  %s2 = inlined_call_operand.hbm [shape: f32[1,384], index: 2, kind: input, shape index: {}]
  %s3 = inlined_call_operand.hbm [shape: bf16[128,128], index: 3, kind: input, shape index: {}]
  %s4 = inlined_call_operand.hbm [shape: f32[1,128], index: 4, kind: input, shape index: {}]
  %s5 = inlined_call_operand.vmem [shape: f32[3,64], index: 5, kind: input, shape index: {}]
  %s6 = inlined_call_operand.hbm [shape: f32[2,64], index: 6, kind: input, shape index: {}]
  %s7 = inlined_call_operand.hbm [shape: bf16[128,256], index: 7, kind: input, shape index: {}]
  %s8 = inlined_call_operand.hbm [shape: f32[1,256], index: 8, kind: input, shape index: {}]
  %s9 = inlined_call_operand.hbm [shape: bf16[256,128], index: 9, kind: input, shape index: {}]
  %s10 = inlined_call_operand.hbm [shape: f32[1,128], index: 10, kind: input, shape index: {}]
  %s11 = inlined_call_operand.vmem [shape: f32[3,64], index: 11, kind: input, shape index: {}]
  %s12 = inlined_call_operand.vmem [shape: f32[2,64], index: 12, kind: input, shape index: {}]
  %s13 = inlined_call_operand.hbm [shape: f32[4,8,128], index: 13, kind: output, shape index: {}]
  %s14 = sld [smem:[#allocation0]]
  $region102: #{tpu_custom_call.1} parent=0
    _
  %s16 = ssub.s32 1, %s14
  %s17 = scalar_select 0, %s16, %s14
  $region1: #{tpu_custom_call.1} parent=0
    #allocation2 [shape = 'u8[16384]{0}', space=vmem, size = 0x4000, scoped, tag = 'input window, operand 0, single buffered']
    #allocation3 [shape = 's32[1]{0}', space=sflag, size = 0x4, scoped, tag = 'scoped memory for tpu_custom_call.1']
    #allocation4 [shape = 's32[1]{0}', space=sflag, size = 0x4, scoped, tag = 'scoped memory for tpu_custom_call.1']
    #allocation5 [shape = 'u8[98304]{0}', space=vmem, size = 0x18000, scoped, tag = 'input window, operand 1, single buffered']
    #allocation6 [shape = 's32[1]{0}', space=sflag, size = 0x4, scoped, tag = 'scoped memory for tpu_custom_call.1']
    #allocation7 [shape = 'u8[1536]{0}', space=vmem, size = 0x800, scoped, tag = 'input window, operand 2, single buffered']
    #allocation8 [shape = 'u8[32768]{0}', space=vmem, size = 0x8000, scoped, tag = 'input window, operand 3, single buffered']
    #allocation9 [shape = 's32[1]{0}', space=sflag, size = 0x4, scoped, tag = 'scoped memory for tpu_custom_call.1']
    #allocation10 [shape = 'u8[512]{0}', space=vmem, size = 0x400, scoped, tag = 'input window, operand 4, single buffered']
    #allocation11 [shape = 'u8[1024]{0}', space=vmem, size = 0x400, scoped, tag = 'input window, operand 6, single buffered']
    #allocation12 [shape = 's32[1]{0}', space=sflag, size = 0x4, scoped, tag = 'scoped memory for tpu_custom_call.1']
    #allocation13 [shape = 'u8[65536]{0}', space=vmem, size = 0x10000, scoped, tag = 'input window, operand 7, single buffered']
    #allocation14 [shape = 'u8[1024]{0}', space=vmem, size = 0x400, scoped, tag = 'input window, operand 8, single buffered']
    #allocation15 [shape = 's32[1]{0}', space=sflag, size = 0x4, scoped, tag = 'scoped memory for tpu_custom_call.1']
    #allocation16 [shape = 'u8[65536]{0}', space=vmem, size = 0x10000, scoped, tag = 'input window, operand 9, single buffered']
    #allocation17 [shape = 'u8[512]{0}', space=vmem, size = 0x400, scoped, tag = 'input window, operand 10, single buffered']
    #allocation18 [shape = 's32[1]{0}', space=sflag, size = 0x4, scoped, tag = 'scoped memory for tpu_custom_call.1']
    #allocation19 [shape = 'u8[16384]{0}', space=vmem, size = 0x4000, scoped, tag = 'output window, operand 0, single buffered']
    %18 = vsyncpa [#allocation3], 0
    %19 = vsyncpa [#allocation6], 0
    %20 = vsyncpa [#allocation9], 0
    %21 = vsyncpa [#allocation12], 0
    %22 = vsyncpa [#allocation15], 0
    %23 = vsyncpa [#allocation18], 0
    %24 = vsyncpa [#allocation4], 0
    // Predicated region
    $region2: #{tpu_custom_call.1} parent=1 // pred_check
      _
    $region3: #{tpu_custom_call.1} parent=1 // pred_check_branch
      %26 = sbr.rel (0) target = $region5
    $region4: #{tpu_custom_call.1} parent=1 // pred_region
      %28 = vsyncadd [#allocation3], 0
      %s29 = sshll.u32 %s0, 4
      %s30 = int_to_ptr.hbm [resolvable:$true] %s29
      %s31 = sshll.u32 [#allocation2], 4
      %s32 = int_to_ptr.vmem [resolvable:$true] %s31
      %37 = dma.hbm_to_vmem [thread:$0]  %s30, 512, %s32, [#allocation3], 128, 128, 8
    $region5: #{tpu_custom_call.1} parent=1 // pred_fallthru
      _
    // Predicated region
    $region6: #{tpu_custom_call.1} parent=1 // pred_check
      _
    $region7: #{tpu_custom_call.1} parent=1 // pred_check_branch
      %39 = sbr.rel (0) target = $region9
    $region8: #{tpu_custom_call.1} parent=1 // pred_region
      %41 = vsyncadd [#allocation6], 0
      %s42 = sshll.u32 %s1, 4
      %s43 = int_to_ptr.hbm [resolvable:$true] %s42
      %s44 = sshll.u32 [#allocation5], 4
      %s45 = int_to_ptr.vmem [resolvable:$true] %s44
      %50 = dma.hbm_to_vmem [thread:$0]  %s43, 3072, %s45, [#allocation6], 192, 192, 12
    $region9: #{tpu_custom_call.1} parent=1 // pred_fallthru
      _
    // Predicated region
    $region10: #{tpu_custom_call.1} parent=1 // pred_check
      _
    $region11: #{tpu_custom_call.1} parent=1 // pred_check_branch
      %52 = sbr.rel (0) target = $region13
    $region12: #{tpu_custom_call.1} parent=1 // pred_region
      %54 = vsyncadd [#allocation6], 0
      %s56 = sshll.u32 %s2, 4
      %s57 = int_to_ptr.hbm [resolvable:$true] %s56
      %s58 = sshll.u32 [#allocation7], 4
      %s59 = int_to_ptr.vmem [resolvable:$true] %s58
      %61 = dma.hbm_to_vmem [thread:$0]  %s57, 48, %s59, [#allocation6]
    $region13: #{tpu_custom_call.1} parent=1 // pred_fallthru
      _
    // Predicated region
    $region14: #{tpu_custom_call.1} parent=1 // pred_check
      _
    $region15: #{tpu_custom_call.1} parent=1 // pred_check_branch
      %63 = sbr.rel (0) target = $region17
    $region16: #{tpu_custom_call.1} parent=1 // pred_region
      %65 = vsyncadd [#allocation9], 0
      %s66 = sshll.u32 %s3, 4
      %s67 = int_to_ptr.hbm [resolvable:$true] %s66
      %s68 = sshll.u32 [#allocation8], 4
      %s69 = int_to_ptr.vmem [resolvable:$true] %s68
      %74 = dma.hbm_to_vmem [thread:$0]  %s67, 1024, %s69, [#allocation9], 64, 64, 4
    $region17: #{tpu_custom_call.1} parent=1 // pred_fallthru
      _
    // Predicated region
    $region18: #{tpu_custom_call.1} parent=1 // pred_check
      _
    $region19: #{tpu_custom_call.1} parent=1 // pred_check_branch
      %76 = sbr.rel (0) target = $region21
    $region20: #{tpu_custom_call.1} parent=1 // pred_region
      %78 = vsyncadd [#allocation9], 0
      %s80 = sshll.u32 %s4, 4
      %s81 = int_to_ptr.hbm [resolvable:$true] %s80
      %s82 = sshll.u32 [#allocation10], 4
      %s83 = int_to_ptr.vmem [resolvable:$true] %s82
      %85 = dma.hbm_to_vmem [thread:$0]  %s81, 16, %s83, [#allocation9]
    $region21: #{tpu_custom_call.1} parent=1 // pred_fallthru
      _
    // Predicated region
    $region22: #{tpu_custom_call.1} parent=1 // pred_check
      _
    $region23: #{tpu_custom_call.1} parent=1 // pred_check_branch
      %87 = sbr.rel (0) target = $region25
    $region24: #{tpu_custom_call.1} parent=1 // pred_region
      _
    $region25: #{tpu_custom_call.1} parent=1 // pred_fallthru
      _
    // Predicated region
    $region26: #{tpu_custom_call.1} parent=1 // pred_check
      _
    $region27: #{tpu_custom_call.1} parent=1 // pred_check_branch
      %89 = sbr.rel (0) target = $region29
    $region28: #{tpu_custom_call.1} parent=1 // pred_region
      %91 = vsyncadd [#allocation12], 0
      %s93 = sshll.u32 %s6, 4
      %s94 = int_to_ptr.hbm [resolvable:$true] %s93
      %s95 = sshll.u32 [#allocation11], 4
      %s96 = int_to_ptr.vmem [resolvable:$true] %s95
      %98 = dma.hbm_to_vmem [thread:$0]  %s94, 32, %s96, [#allocation12]
    $region29: #{tpu_custom_call.1} parent=1 // pred_fallthru
      _
    // Predicated region
    $region30: #{tpu_custom_call.1} parent=1 // pred_check
      _
    $region31: #{tpu_custom_call.1} parent=1 // pred_check_branch
      %100 = sbr.rel (0) target = $region33
    $region32: #{tpu_custom_call.1} parent=1 // pred_region
      %102 = vsyncadd [#allocation12], 0
      %s103 = sshll.u32 %s7, 4
      %s104 = int_to_ptr.hbm [resolvable:$true] %s103
      %s105 = sshll.u32 [#allocation13], 4
      %s106 = int_to_ptr.vmem [resolvable:$true] %s105
      %111 = dma.hbm_to_vmem [thread:$0]  %s104, 2048, %s106, [#allocation12], 128, 128, 8
    $region33: #{tpu_custom_call.1} parent=1 // pred_fallthru
      _
    // Predicated region
    $region34: #{tpu_custom_call.1} parent=1 // pred_check
      _
    $region35: #{tpu_custom_call.1} parent=1 // pred_check_branch
      %113 = sbr.rel (0) target = $region37
    $region36: #{tpu_custom_call.1} parent=1 // pred_region
      %115 = vsyncadd [#allocation15], 0
      %s117 = sshll.u32 %s8, 4
      %s118 = int_to_ptr.hbm [resolvable:$true] %s117
      %s119 = sshll.u32 [#allocation14], 4
      %s120 = int_to_ptr.vmem [resolvable:$true] %s119
      %122 = dma.hbm_to_vmem [thread:$0]  %s118, 32, %s120, [#allocation15]
    $region37: #{tpu_custom_call.1} parent=1 // pred_fallthru
      _
    // Predicated region
    $region38: #{tpu_custom_call.1} parent=1 // pred_check
      _
    $region39: #{tpu_custom_call.1} parent=1 // pred_check_branch
      %124 = sbr.rel (0) target = $region41
    $region40: #{tpu_custom_call.1} parent=1 // pred_region
      %126 = vsyncadd [#allocation15], 0
      %s127 = sshll.u32 %s9, 4
      %s128 = int_to_ptr.hbm [resolvable:$true] %s127
      %s129 = sshll.u32 [#allocation16], 4
      %s130 = int_to_ptr.vmem [resolvable:$true] %s129
      %135 = dma.hbm_to_vmem [thread:$0]  %s128, 2048, %s130, [#allocation15], 64, 64, 4
    $region41: #{tpu_custom_call.1} parent=1 // pred_fallthru
      _
    // Predicated region
    $region42: #{tpu_custom_call.1} parent=1 // pred_check
      _
    $region43: #{tpu_custom_call.1} parent=1 // pred_check_branch
      %137 = sbr.rel (0) target = $region45
    $region44: #{tpu_custom_call.1} parent=1 // pred_region
      %139 = vsyncadd [#allocation18], 0
      %s141 = sshll.u32 %s10, 4
      %s142 = int_to_ptr.hbm [resolvable:$true] %s141
      %s143 = sshll.u32 [#allocation17], 4
      %s144 = int_to_ptr.vmem [resolvable:$true] %s143
      %146 = dma.hbm_to_vmem [thread:$0]  %s142, 16, %s144, [#allocation18]
    $region45: #{tpu_custom_call.1} parent=1 // pred_fallthru
      _
    // Predicated region
    $region46: #{tpu_custom_call.1} parent=1 // pred_check
      _
    $region47: #{tpu_custom_call.1} parent=1 // pred_check_branch
      %148 = sbr.rel (0) target = $region49
    $region48: #{tpu_custom_call.1} parent=1 // pred_region
      _
    $region49: #{tpu_custom_call.1} parent=1 // pred_fallthru
      _
    // Predicated region
    $region50: #{tpu_custom_call.1} parent=1 // pred_check
      _
    $region51: #{tpu_custom_call.1} parent=1 // pred_check_branch
      %150 = sbr.rel (0) target = $region53
    $region52: #{tpu_custom_call.1} parent=1 // pred_region
      _
    $region53: #{tpu_custom_call.1} parent=1 // pred_fallthru
      _
    // Predicated region
    $region54: #{tpu_custom_call.1} parent=1 // pred_check
      _
    $region55: #{tpu_custom_call.1} parent=1 // pred_check_branch
      %152 = sbr.rel (0) target = $region57
    $region56: #{tpu_custom_call.1} parent=1 // pred_region
      %154 = dma.done [#allocation3], 512
    $region57: #{tpu_custom_call.1} parent=1 // pred_fallthru
      _
    // Predicated region
    $region58: #{tpu_custom_call.1} parent=1 // pred_check
      _
    $region59: #{tpu_custom_call.1} parent=1 // pred_check_branch
      %156 = sbr.rel (0) target = $region61
    $region60: #{tpu_custom_call.1} parent=1 // pred_region
      %158 = dma.done [#allocation6], 3072
    $region61: #{tpu_custom_call.1} parent=1 // pred_fallthru
      _
    // Predicated region
    $region62: #{tpu_custom_call.1} parent=1 // pred_check
      _
    $region63: #{tpu_custom_call.1} parent=1 // pred_check_branch
      %160 = sbr.rel (0) target = $region65
    $region64: #{tpu_custom_call.1} parent=1 // pred_region
      %162 = dma.done [#allocation6], 48
    $region65: #{tpu_custom_call.1} parent=1 // pred_fallthru
      _
    // Predicated region
    $region66: #{tpu_custom_call.1} parent=1 // pred_check
      _
    $region67: #{tpu_custom_call.1} parent=1 // pred_check_branch
      %164 = sbr.rel (0) target = $region69
    $region68: #{tpu_custom_call.1} parent=1 // pred_region
      %166 = dma.done [#allocation9], 1024
    $region69: #{tpu_custom_call.1} parent=1 // pred_fallthru
      _
    // Predicated region
    $region70: #{tpu_custom_call.1} parent=1 // pred_check
      _
    $region71: #{tpu_custom_call.1} parent=1 // pred_check_branch
      %168 = sbr.rel (0) target = $region73
    $region72: #{tpu_custom_call.1} parent=1 // pred_region
      %170 = dma.done [#allocation9], 16
    $region73: #{tpu_custom_call.1} parent=1 // pred_fallthru
      _
    // Predicated region
    $region74: #{tpu_custom_call.1} parent=1 // pred_check
      _
    $region75: #{tpu_custom_call.1} parent=1 // pred_check_branch
      %172 = sbr.rel (0) target = $region77
    $region76: #{tpu_custom_call.1} parent=1 // pred_region
      %174 = dma.done [#allocation12], 32
    $region77: #{tpu_custom_call.1} parent=1 // pred_fallthru
      _
    // Predicated region
    $region78: #{tpu_custom_call.1} parent=1 // pred_check
      _
    $region79: #{tpu_custom_call.1} parent=1 // pred_check_branch
      %176 = sbr.rel (0) target = $region81
    $region80: #{tpu_custom_call.1} parent=1 // pred_region
      %178 = dma.done [#allocation12], 2048
    $region81: #{tpu_custom_call.1} parent=1 // pred_fallthru
      _
    // Predicated region
    $region82: #{tpu_custom_call.1} parent=1 // pred_check
      _
    $region83: #{tpu_custom_call.1} parent=1 // pred_check_branch
      %180 = sbr.rel (0) target = $region85
    $region84: #{tpu_custom_call.1} parent=1 // pred_region
      %182 = dma.done [#allocation15], 32
    $region85: #{tpu_custom_call.1} parent=1 // pred_fallthru
      _
    // Predicated region
    $region86: #{tpu_custom_call.1} parent=1 // pred_check
      _
    $region87: #{tpu_custom_call.1} parent=1 // pred_check_branch
      %184 = sbr.rel (0) target = $region89
    $region88: #{tpu_custom_call.1} parent=1 // pred_region
      %186 = dma.done [#allocation15], 2048
    $region89: #{tpu_custom_call.1} parent=1 // pred_fallthru
      _
    // Predicated region
    $region90: #{tpu_custom_call.1} parent=1 // pred_check
      _
    $region91: #{tpu_custom_call.1} parent=1 // pred_check_branch
      %188 = sbr.rel (0) target = $region93
    $region92: #{tpu_custom_call.1} parent=1 // pred_region
      %190 = dma.done [#allocation18], 16
    $region93: #{tpu_custom_call.1} parent=1 // pred_fallthru
      _
    %v192 = vld [vmem:[#allocation2] sm:$0xff]
    %v193 = vld [vmem:[#allocation2 + $0x8] sm:$0xff]
    %v194 = vld [vmem:[#allocation2 + $0x10] sm:$0xff]
    %v195 = vld [vmem:[#allocation2 + $0x18] sm:$0xff]
    %v196 = vpack.c.bf16 %v193, %v192
    %v197 = vpack.c.bf16 %v195, %v194
    %v198 = vld [vmem:[#allocation5] sm:$0xff]
    %v199 = vld [vmem:[#allocation5 + $0x8] sm:$0xf]
    %v200 = vld [vmem:[#allocation5 + $0xc] sm:$0xff]
    %v201 = vld [vmem:[#allocation5 + $0x14] sm:$0xf]
    %v202 = vld [vmem:[#allocation5 + $0x18] sm:$0xff]
    %v203 = vld [vmem:[#allocation5 + $0x20] sm:$0xf]
    %v204 = vld [vmem:[#allocation5 + $0x24] sm:$0xff]
    %v205 = vld [vmem:[#allocation5 + $0x2c] sm:$0xf]
    %v206 = vld [vmem:[#allocation5 + $0x30] sm:$0xff]
    %v207 = vld [vmem:[#allocation5 + $0x38] sm:$0xf]
    %v208 = vld [vmem:[#allocation5 + $0x3c] sm:$0xff]
    %v209 = vld [vmem:[#allocation5 + $0x44] sm:$0xf]
    %v210 = vld [vmem:[#allocation5 + $0x48] sm:$0xff]
    %v211 = vld [vmem:[#allocation5 + $0x50] sm:$0xf]
    %v212 = vld [vmem:[#allocation5 + $0x54] sm:$0xff]
    %v213 = vld [vmem:[#allocation5 + $0x5c] sm:$0xf]
    %v214 = vld [vmem:[#allocation5 + $0x60] sm:$0xff]
    %v215 = vld [vmem:[#allocation5 + $0x68] sm:$0xf]
    %v216 = vld [vmem:[#allocation5 + $0x6c] sm:$0xff]
    %v217 = vld [vmem:[#allocation5 + $0x74] sm:$0xf]
    %v218 = vld [vmem:[#allocation5 + $0x78] sm:$0xff]
    %v219 = vld [vmem:[#allocation5 + $0x80] sm:$0xf]
    %v220 = vld [vmem:[#allocation5 + $0x84] sm:$0xff]
    %v221 = vld [vmem:[#allocation5 + $0x8c] sm:$0xf]
    %v222 = vld [vmem:[#allocation5 + $0x90] sm:$0xff]
    %v223 = vld [vmem:[#allocation5 + $0x98] sm:$0xf]
    %v224 = vld [vmem:[#allocation5 + $0x9c] sm:$0xff]
    %v225 = vld [vmem:[#allocation5 + $0xa4] sm:$0xf]
    %v226 = vld [vmem:[#allocation5 + $0xa8] sm:$0xff]
    %v227 = vld [vmem:[#allocation5 + $0xb0] sm:$0xf]
    %v228 = vld [vmem:[#allocation5 + $0xb4] sm:$0xff]
    %v229 = vld [vmem:[#allocation5 + $0xbc] sm:$0xf]
    %v230 = vld [vmem:[#allocation7] sm:$0x7]
    %v232 = vperm.slane %v230, 0
    %v233 = vperm.slane %v230, 1
    %v234 = vperm.slane %v230, 2
    %v270 = vunpack.c.l.b16 %v198
    %v271 = vunpack.c.h.b16 %v198
    %v272 = vunpack.c.l.b16 %v199
    %v273 = vunpack.c.l.b16 %v200
    %v274 = vunpack.c.h.b16 %v200
    %v275 = vunpack.c.l.b16 %v201
    %v276 = vunpack.c.l.b16 %v202
    %v277 = vunpack.c.h.b16 %v202
    %v278 = vunpack.c.l.b16 %v203
    %v279 = vunpack.c.l.b16 %v204
    %v280 = vunpack.c.h.b16 %v204
    %v281 = vunpack.c.l.b16 %v205
    %v282 = vunpack.c.l.b16 %v206
    %v283 = vunpack.c.h.b16 %v206
    %v284 = vunpack.c.l.b16 %v207
    %v285 = vunpack.c.l.b16 %v208
    %v286 = vunpack.c.h.b16 %v208
    %v287 = vunpack.c.l.b16 %v209
    %v288 = vunpack.c.l.b16 %v210
    %v289 = vunpack.c.h.b16 %v210
    %v290 = vunpack.c.l.b16 %v211
    %v291 = vunpack.c.l.b16 %v212
    %v292 = vunpack.c.h.b16 %v212
    %v293 = vunpack.c.l.b16 %v213
    %v294 = vunpack.c.l.b16 %v214
    %v295 = vunpack.c.h.b16 %v214
    %v296 = vunpack.c.l.b16 %v215
    %v297 = vunpack.c.l.b16 %v216
    %v298 = vunpack.c.h.b16 %v216
    %v299 = vunpack.c.l.b16 %v217
    %v300 = vunpack.c.l.b16 %v218
    %v301 = vunpack.c.h.b16 %v218
    %v302 = vunpack.c.l.b16 %v219
    %v303 = vunpack.c.l.b16 %v220
    %v304 = vunpack.c.h.b16 %v220
    %v305 = vunpack.c.l.b16 %v221
    %v306 = vunpack.c.l.b16 %v222
    %v307 = vunpack.c.h.b16 %v222
    %v308 = vunpack.c.l.b16 %v223
    %v309 = vunpack.c.l.b16 %v224
    %v310 = vunpack.c.h.b16 %v224
    %v311 = vunpack.c.l.b16 %v225
    %v312 = vunpack.c.l.b16 %v226
    %v313 = vunpack.c.h.b16 %v226
    %v314 = vunpack.c.l.b16 %v227
    %v315 = vunpack.c.l.b16 %v228
    %v316 = vunpack.c.h.b16 %v228
    %v317 = vunpack.c.l.b16 %v229
    %v318 = vpack.c.b16 %v273, %v270
    %v319 = vpack.c.b16 %v274, %v271
    %v320 = vpack.c.b16 %v275, %v272
    %v321 = vpack.c.b16 %v279, %v276
    %v322 = vpack.c.b16 %v280, %v277
    %v323 = vpack.c.b16 %v281, %v278
    %v324 = vpack.c.b16 %v285, %v282
    %v325 = vpack.c.b16 %v286, %v283
    %v326 = vpack.c.b16 %v287, %v284
    %v327 = vpack.c.b16 %v291, %v288
    %v328 = vpack.c.b16 %v292, %v289
    %v329 = vpack.c.b16 %v293, %v290
    %v330 = vpack.c.b16 %v297, %v294
    %v331 = vpack.c.b16 %v298, %v295
    %v332 = vpack.c.b16 %v299, %v296
    %v333 = vpack.c.b16 %v303, %v300
    %v334 = vpack.c.b16 %v304, %v301
    %v335 = vpack.c.b16 %v305, %v302
    %v336 = vpack.c.b16 %v309, %v306
    %v337 = vpack.c.b16 %v310, %v307
    %v338 = vpack.c.b16 %v311, %v308
    %v339 = vpack.c.b16 %v315, %v312
    %v340 = vpack.c.b16 %v316, %v313
    %v341 = vpack.c.b16 %v317, %v314
    %366 = vmatpush.bf16.msra.mxu0 %v339
    %367 = vmatpush.bf16.msra.mxu0 %v336
    %368 = vmatpush.bf16.msra.mxu0 %v333
    %369 = vmatpush.bf16.msra.mxu0 %v330
    %370 = vmatpush.bf16.msra.mxu0 %v327
    %371 = vmatpush.bf16.msra.mxu0 %v324
    %372 = vmatpush.bf16.msra.mxu0 %v321
    %373 = vmatpush.bf16.msra.mxu0 %v318
    %374 = vmatmul.bf16.gmra.mxu0 %v196
    %v375 = vpop.f32.mrf.mxu0
    %v376 = vadd.f32 %v232, %v375
    %v377 = vpop.f32.mrf.mxu0
    %v378 = vadd.f32 %v232, %v377
    %379 = vmatmul.bf16.gmra.mxu0 %v197
    %v380 = vpop.f32.mrf.mxu0
    %v381 = vadd.f32 %v232, %v380
    %v382 = vpop.f32.mrf.mxu0
    %v383 = vadd.f32 %v232, %v382
    %384 = vdwg.mxu0
    %385 = vmatpush.bf16.msra.mxu0 %v340
    %386 = vmatpush.bf16.msra.mxu0 %v337
    %387 = vmatpush.bf16.msra.mxu0 %v334
    %388 = vmatpush.bf16.msra.mxu0 %v331
    %389 = vmatpush.bf16.msra.mxu0 %v328
    %390 = vmatpush.bf16.msra.mxu0 %v325
    %391 = vmatpush.bf16.msra.mxu0 %v322
    %392 = vmatpush.bf16.msra.mxu0 %v319
    %393 = vmatmul.bf16.gmra.mxu0 %v196
    %v394 = vpop.f32.mrf.mxu0
    %v395 = vadd.f32 %v233, %v394
    %v396 = vpop.f32.mrf.mxu0
    %v397 = vadd.f32 %v233, %v396
    %398 = vmatmul.bf16.gmra.mxu0 %v197
    %v399 = vpop.f32.mrf.mxu0
    %v400 = vadd.f32 %v233, %v399
    %v401 = vpop.f32.mrf.mxu0
    %v402 = vadd.f32 %v233, %v401
    %403 = vdwg.mxu0
    %404 = vmatpush.bf16.msra.mxu0 %v341
    %405 = vmatpush.bf16.msra.mxu0 %v338
    %406 = vmatpush.bf16.msra.mxu0 %v335
    %407 = vmatpush.bf16.msra.mxu0 %v332
    %408 = vmatpush.bf16.msra.mxu0 %v329
    %409 = vmatpush.bf16.msra.mxu0 %v326
    %410 = vmatpush.bf16.msra.mxu0 %v323
    %411 = vmatpush.bf16.msra.mxu0 %v320
    %412 = vmatmul.bf16.gmra.mxu0 %v196
    %v413 = vpop.f32.mrf.mxu0
    %v414 = vadd.f32 %v234, %v413
    %v415 = vpop.f32.mrf.mxu0
    %v416 = vadd.f32 %v234, %v415
    %417 = vmatmul.bf16.gmra.mxu0 %v197
    %v418 = vpop.f32.mrf.mxu0
    %v419 = vadd.f32 %v234, %v418
    %v420 = vpop.f32.mrf.mxu0
    %v421 = vadd.f32 %v234, %v420
    %422 = vdwg.mxu0
    %v423 = vpack.c.bf16 %v395, %v376
    %v424 = vpack.c.bf16 %v414, %v414
    %v425 = vpack.c.bf16 %v397, %v378
    %v426 = vpack.c.bf16 %v416, %v416
    %v427 = vpack.c.bf16 %v400, %v381
    %v428 = vpack.c.bf16 %v419, %v419
    %v429 = vpack.c.bf16 %v402, %v383
    %v430 = vpack.c.bf16 %v421, %v421
    %v431 = vunpack.c.l.bf16 %v423
    %v432 = vunpack.c.l.bf16 %v425
    %v433 = vunpack.c.l.bf16 %v427
    %v434 = vunpack.c.l.bf16 %v429
    %v435 = vsub.f32 0.0, %v431
    %v436 = vsub.f32 0.0, %v432
    %v437 = vsub.f32 0.0, %v433
    %v438 = vsub.f32 0.0, %v434
    %v439 = vpack.c.bf16 %v435, %v435
    %v440 = vpack.c.bf16 %v436, %v436
    %v441 = vpack.c.bf16 %v437, %v437
    %v442 = vpack.c.bf16 %v438, %v438
    %v447 = vunpack.c.l.b16 %v439
    %v448 = vunpack.c.l.b16 %v440
    %v449 = vunpack.c.l.b16 %v441
    %v450 = vunpack.c.l.b16 %v442
    %v451 = vpack.c.b16 %v447, %v447
    %v452 = vpack.c.b16 %v448, %v448
    %v453 = vpack.c.b16 %v449, %v449
    %v454 = vpack.c.b16 %v450, %v450
    %455 = vrot.lane.b32.xlu0 %v451, 80
    %v456 = vpop.permute.xlu0 %455
    %457 = vrot.lane.b32.xlu0 %v452, 80
    %v458 = vpop.permute.xlu0 %457
    %459 = vrot.lane.b32.xlu0 %v453, 80
    %v460 = vpop.permute.xlu0 %459
    %461 = vrot.lane.b32.xlu0 %v454, 80
    %v462 = vpop.permute.xlu0 %461
    %v467 = vunpack.c.l.b16 %v423
    %v468 = vunpack.c.l.b16 %v425
    %v469 = vunpack.c.l.b16 %v427
    %v470 = vunpack.c.l.b16 %v429
    %v471 = vpack.c.b16 %v467, %v467
    %v472 = vpack.c.b16 %v468, %v468
    %v473 = vpack.c.b16 %v469, %v469
    %v474 = vpack.c.b16 %v470, %v470
    %475 = vrot.lane.b32.xlu0 %v471, 112
    %v476 = vpop.permute.xlu0 %475
    %477 = vrot.lane.b32.xlu0 %v472, 112
    %v478 = vpop.permute.xlu0 %477
    %479 = vrot.lane.b32.xlu0 %v473, 112
    %v480 = vpop.permute.xlu0 %479
    %481 = vrot.lane.b32.xlu0 %v474, 112
    %v482 = vpop.permute.xlu0 %481
    %vm483 = vcmask 130048
    %v486 = vsel %vm483, %v456, %v476
    %v489 = vsel %vm483, %v458, %v478
    %v492 = vsel %vm483, %v460, %v480
    %v495 = vsel %vm483, %v462, %v482
    %496 = vrot.lane.b32.xlu0 %v451, 48
    %v497 = vpop.permute.xlu0 %496
    %498 = vrot.lane.b32.xlu0 %v452, 48
    %v499 = vpop.permute.xlu0 %498
    %500 = vrot.lane.b32.xlu0 %v453, 48
    %v501 = vpop.permute.xlu0 %500
    %502 = vrot.lane.b32.xlu0 %v454, 48
    %v503 = vpop.permute.xlu0 %502
    %504 = vrot.lane.b32.xlu0 %v471, 80
    %v505 = vpop.permute.xlu0 %504
    %506 = vrot.lane.b32.xlu0 %v472, 80
    %v507 = vpop.permute.xlu0 %506
    %508 = vrot.lane.b32.xlu0 %v473, 80
    %v509 = vpop.permute.xlu0 %508
    %510 = vrot.lane.b32.xlu0 %v474, 80
    %v511 = vpop.permute.xlu0 %510
    %v514 = vsel %vm483, %v497, %v505
    %v517 = vsel %vm483, %v499, %v507
    %v520 = vsel %vm483, %v501, %v509
    %v523 = vsel %vm483, %v503, %v511
    %524 = vrot.lane.b32.xlu0 %v471, 96
    %v525 = vpop.permute.xlu0 %524
    %vm526 = vcmask 261120
    %v528 = vsel %vm526, %v423, 0
    %v531 = vsel %vm526, %v525, 0
    %533 = vmatpush.bf16.xpose.msra.mxu0 0
    %534 = vmatpush.bf16.xpose.msra.mxu0 0
    %535 = vmatpush.bf16.xpose.msra.mxu0 0
    %536 = vmatpush.bf16.xpose.msra.mxu0 0
    %537 = vmatpush.bf16.xpose.msra.mxu0 0
    %538 = vmatpush.bf16.xpose.msra.mxu0 0
    %539 = vmatpush.bf16.xpose.msra.mxu0 0
    %540 = vmatpush.bf16.xpose.msra.mxu0 %v531
    %541 = vmatmul.bf16.gmra.mxu0 %v528
    %v542 = vpop.f32.mrf.mxu0
    %v543 = vadd.f32 0.0, %v542
    %v544 = vpop.f32.mrf.mxu0
    %545 = vdwg.mxu0
    %546 = vrot.lane.b32.xlu0 %v472, 96
    %v547 = vpop.permute.xlu0 %546
    %v549 = vsel %vm526, %v425, 0
    %v552 = vsel %vm526, %v547, 0
    %554 = vmatpush.bf16.xpose.msra.mxu0 0
    %555 = vmatpush.bf16.xpose.msra.mxu0 0
    %556 = vmatpush.bf16.xpose.msra.mxu0 0
    %557 = vmatpush.bf16.xpose.msra.mxu0 0
    %558 = vmatpush.bf16.xpose.msra.mxu0 0
    %559 = vmatpush.bf16.xpose.msra.mxu0 0
    %560 = vmatpush.bf16.xpose.msra.mxu0 0
    %561 = vmatpush.bf16.xpose.msra.mxu0 %v552
    %562 = vmatmul.bf16.gmra.mxu0 %v549
    %v563 = vpop.f32.mrf.mxu0
    %v564 = vadd.f32 0.0, %v563
    %v565 = vpop.f32.mrf.mxu0
    %566 = vdwg.mxu0
    %567 = vrot.lane.b32.xlu0 %v473, 96
    %v568 = vpop.permute.xlu0 %567
    %v570 = vsel %vm526, %v427, 0
    %v573 = vsel %vm526, %v568, 0
    %575 = vmatpush.bf16.xpose.msra.mxu0 0
    %576 = vmatpush.bf16.xpose.msra.mxu0 0
    %577 = vmatpush.bf16.xpose.msra.mxu0 0
    %578 = vmatpush.bf16.xpose.msra.mxu0 0
    %579 = vmatpush.bf16.xpose.msra.mxu0 0
    %580 = vmatpush.bf16.xpose.msra.mxu0 0
    %581 = vmatpush.bf16.xpose.msra.mxu0 0
    %582 = vmatpush.bf16.xpose.msra.mxu0 %v573
    %583 = vmatmul.bf16.gmra.mxu0 %v570
    %v584 = vpop.f32.mrf.mxu0
    %v585 = vadd.f32 0.0, %v584
    %v586 = vpop.f32.mrf.mxu0
    %587 = vdwg.mxu0
    %588 = vrot.lane.b32.xlu0 %v474, 96
    %v589 = vpop.permute.xlu0 %588
    %v591 = vsel %vm526, %v429, 0
    %v594 = vsel %vm526, %v589, 0
    %596 = vmatpush.bf16.xpose.msra.mxu0 0
    %597 = vmatpush.bf16.xpose.msra.mxu0 0
    %598 = vmatpush.bf16.xpose.msra.mxu0 0
    %599 = vmatpush.bf16.xpose.msra.mxu0 0
    %600 = vmatpush.bf16.xpose.msra.mxu0 0
    %601 = vmatpush.bf16.xpose.msra.mxu0 0
    %602 = vmatpush.bf16.xpose.msra.mxu0 0
    %603 = vmatpush.bf16.xpose.msra.mxu0 %v594
    %604 = vmatmul.bf16.gmra.mxu0 %v591
    %v605 = vpop.f32.mrf.mxu0
    %v606 = vadd.f32 0.0, %v605
    %v607 = vpop.f32.mrf.mxu0
    %608 = vdwg.mxu0
    %v609 = vsel %vm526, %v486, 0
    %611 = vmatpush.bf16.xpose.msra.mxu0 0
    %612 = vmatpush.bf16.xpose.msra.mxu0 0
    %613 = vmatpush.bf16.xpose.msra.mxu0 0
    %614 = vmatpush.bf16.xpose.msra.mxu0 0
    %615 = vmatpush.bf16.xpose.msra.mxu0 0
    %616 = vmatpush.bf16.xpose.msra.mxu0 0
    %617 = vmatpush.bf16.xpose.msra.mxu0 0
    %618 = vmatpush.bf16.xpose.msra.mxu0 %v609
    %619 = vmatmul.bf16.gmra.mxu0 %v528
    %v620 = vpop.f32.mrf.mxu0
    %v621 = vadd.f32 0.0, %v620
    %v622 = vpop.f32.mrf.mxu0
    %623 = vdwg.mxu0
    %v624 = vsel %vm526, %v489, 0
    %626 = vmatpush.bf16.xpose.msra.mxu0 0
    %627 = vmatpush.bf16.xpose.msra.mxu0 0
    %628 = vmatpush.bf16.xpose.msra.mxu0 0
    %629 = vmatpush.bf16.xpose.msra.mxu0 0
    %630 = vmatpush.bf16.xpose.msra.mxu0 0
    %631 = vmatpush.bf16.xpose.msra.mxu0 0
    %632 = vmatpush.bf16.xpose.msra.mxu0 0
    %633 = vmatpush.bf16.xpose.msra.mxu0 %v624
    %634 = vmatmul.bf16.gmra.mxu0 %v549
    %v635 = vpop.f32.mrf.mxu0
    %v636 = vadd.f32 0.0, %v635
    %v637 = vpop.f32.mrf.mxu0
    %638 = vdwg.mxu0
    %v639 = vsel %vm526, %v492, 0
    %641 = vmatpush.bf16.xpose.msra.mxu0 0
    %642 = vmatpush.bf16.xpose.msra.mxu0 0
    %643 = vmatpush.bf16.xpose.msra.mxu0 0
    %644 = vmatpush.bf16.xpose.msra.mxu0 0
    %645 = vmatpush.bf16.xpose.msra.mxu0 0
    %646 = vmatpush.bf16.xpose.msra.mxu0 0
    %647 = vmatpush.bf16.xpose.msra.mxu0 0
    %648 = vmatpush.bf16.xpose.msra.mxu0 %v639
    %649 = vmatmul.bf16.gmra.mxu0 %v570
    %v650 = vpop.f32.mrf.mxu0
    %v651 = vadd.f32 0.0, %v650
    %v652 = vpop.f32.mrf.mxu0
    %653 = vdwg.mxu0
    %v654 = vsel %vm526, %v495, 0
    %656 = vmatpush.bf16.xpose.msra.mxu0 0
    %657 = vmatpush.bf16.xpose.msra.mxu0 0
    %658 = vmatpush.bf16.xpose.msra.mxu0 0
    %659 = vmatpush.bf16.xpose.msra.mxu0 0
    %660 = vmatpush.bf16.xpose.msra.mxu0 0
    %661 = vmatpush.bf16.xpose.msra.mxu0 0
    %662 = vmatpush.bf16.xpose.msra.mxu0 0
    %663 = vmatpush.bf16.xpose.msra.mxu0 %v654
    %664 = vmatmul.bf16.gmra.mxu0 %v591
    %v665 = vpop.f32.mrf.mxu0
    %v666 = vadd.f32 0.0, %v665
    %v667 = vpop.f32.mrf.mxu0
    %668 = vdwg.mxu0
    %vm669 = vcmask 64512
    %v670 = vsel %vm669, %v543, -inf
    %671 = vmax.xlane.f32.xlu0 %v670
    %v672 = vpop.xlane.xlu0 %671
    %v673 = vsel %vm669, %v564, -inf
    %674 = vmax.xlane.f32.xlu0 %v673
    %v675 = vpop.xlane.xlu0 %674
    %v676 = vsel %vm669, %v585, -inf
    %677 = vmax.xlane.f32.xlu0 %v676
    %v678 = vpop.xlane.xlu0 %677
    %v679 = vsel %vm669, %v606, -inf
    %680 = vmax.xlane.f32.xlu0 %v679
    %v681 = vpop.xlane.xlu0 %680
    %v682 = vsub.f32 %v543, %v672
    %v683 = vsub.f32 %v564, %v675
    %v684 = vsub.f32 %v585, %v678
    %v685 = vsub.f32 %v606, %v681
    %v686 = vmul.f32 %v682, 1.442695
    %v687 = vpow.pop %v686
    %v688 = vmul.f32 %v683, 1.442695
    %v689 = vpow.pop %v688
    %v690 = vmul.f32 %v684, 1.442695
    %v691 = vpow.pop %v690
    %v692 = vmul.f32 %v685, 1.442695
    %v693 = vpow.pop %v692
    %v694 = vand.u32 2147483647, %v621
    %vm695 = vcmp.le.f32.partialorder %v694, 0.7853982
    %vm696 = vcmp.lt.s32.totalorder %v621, 0
    %v697 = vand.u32 %v621, 2139095040
    %v698 = vshrl.u32 %v697, 23
    %v699 = vsub.s32 %v698, 127
    %v700 = vand.u32 2147483647, %v621
    %v701 = vand.u32 %v700, 8388607
    %v702 = vor.u32 %v701, 8388608
    %v703 = vsub.s32 0, %v702
    %v704 = vadd.s32 %v699, 1
    %vm705 = vcmp.gt.s32.totalorder %v704, 0
    %v706 = vsel %vm705, %v704, 0
    %v707 = vshrl.u32 %v706, 5
    %v708 = vand.u32 %v706, 31
    %v709 = vsub.s32 32, %v708
    %v710 = vshrl.u32 683565275, %v709
    %v711 = vshll.u32 683565275, %v708
    %v712 = vshrl.u32 2475754826, %v709
    %v713 = vor.u32 %v711, %v712
    %v714 = vshll.u32 2475754826, %v708
    %v715 = vshrl.u32 2131351028, %v709
    %v716 = vor.u32 %v714, %v715
    %v717 = vshll.u32 2131351028, %v708
    %v718 = vshrl.u32 2102212464, %v709
    %v719 = vor.u32 %v717, %v718
    %v720 = vshll.u32 2102212464, %v708
    %v721 = vshrl.u32 920167782, %v709
    %v722 = vor.u32 %v720, %v721
    %v723 = vshll.u32 920167782, %v708
    %v724 = vshrl.u32 1326507024, %v709
    %v725 = vor.u32 %v723, %v724
    %vm726 = vcmp.lt.s32.totalorder %v707, 1
    %vm727 = vcmp.lt.s32.totalorder %v707, 2
    %vm728 = vcmp.lt.s32.totalorder %v707, 3
    %vm729 = vcmp.lt.s32.totalorder %v707, 4
    %v730 = vsel %vm726, %v710, %v713
    %v731 = vsel %vm729, %v719, 2102212464
    %v732 = vsel %vm728, %v716, %v731
    %v733 = vsel %vm727, %v730, %v732
    %v734 = vsel %vm726, %v713, %v716
    %v735 = vsel %vm729, %v722, 920167782
    %v736 = vsel %vm728, %v719, %v735
    %v737 = vsel %vm727, %v734, %v736
    %v738 = vsel %vm726, %v716, %v719
    %v739 = vsel %vm729, %v725, 1326507024
    %v740 = vsel %vm728, %v722, %v739
    %v741 = vsel %vm727, %v738, %v740
    %v742 = vshll.u32 %v702, 8
    %v743 = vand.u32 %v742, 65535
    %v744 = vshrl.u32 %v742, 16
    %v745 = vand.u32 %v741, 65535
    %v746 = vshrl.u32 %v741, 16
    %v747 = vmul.u32 %v743, %v745
    %v748 = vmul.u32 %v743, %v746
    %v749 = vmul.u32 %v744, %v745
    %v750 = vmul.u32 %v744, %v746
    %v751 = vshll.u32 %v748, 16
    %v752 = vshrl.u32 %v748, 16
    %v753 = vshll.u32 %v749, 16
    %v754 = vshrl.u32 %v749, 16
    %vm755 = vc.u32 %v747, %v751
    %v756 = vsel %vm755, 1, 0
    %v757 = vadd.s32 %v747, %v751
    %v758 = vadd.s32 %v750, %v756
    %vm759 = vc.u32 %v757, %v753
    %v760 = vsel %vm759, 1, 0
    %v761 = vadd.s32 %v757, %v753
    %v762 = vadd.s32 %v758, %v760
    %v763 = vadd.s32 %v762, %v752
    %v764 = vadd.s32 %v763, %v754
    %v765 = vand.u32 %v742, 65535
    %v766 = vshrl.u32 %v742, 16
    %v767 = vand.u32 %v737, 65535
    %v768 = vshrl.u32 %v737, 16
    %v769 = vmul.u32 %v765, %v767
    %v770 = vmul.u32 %v765, %v768
    %v771 = vmul.u32 %v766, %v767
    %v772 = vmul.u32 %v766, %v768
    %v773 = vshll.u32 %v770, 16
    %v774 = vshrl.u32 %v770, 16
    %v775 = vshll.u32 %v771, 16
    %v776 = vshrl.u32 %v771, 16
    %vm777 = vc.u32 %v769, %v773
    %v778 = vsel %vm777, 1, 0
    %v779 = vadd.s32 %v769, %v773
    %v780 = vadd.s32 %v772, %v778
    %vm781 = vc.u32 %v779, %v775
    %v782 = vsel %vm781, 1, 0
    %v783 = vadd.s32 %v779, %v775
    %v784 = vadd.s32 %v780, %v782
    %v785 = vadd.s32 %v784, %v774
    %v786 = vadd.s32 %v785, %v776
    %v787 = vmul.u32 %v742, %v733
    %v788 = vadd.s32 %v764, %v783
    %vm789 = vc.u32 %v764, %v783
    %v790 = vadd.s32 %v786, 1
    %v791 = vsel %vm789, %v790, %v786
    %v792 = vadd.s32 %v787, %v791
    %v793 = vadd.s32 %v792, 536870912
    %v794 = vshrl.u32 %v793, 30
    %v795 = vshll.u32 %v794, 30
    %v796 = vsub.s32 %v792, %v795
    %vm797 = vcmp.lt.s32.totalorder %v796, 0
    %v798 = vsub.s32 0, %v796
    %v799 = vsel %vm797, %v798, %v796
    %v800 = vclz %v799
    %v801 = vsub.s32 %v800, 2
    %vm802 = vcmp.gt.s32.totalorder 0, %v801
    %v803 = vsel %vm802, 0, %v801
    %v804 = vsub.s32 32, %v803
    %v805 = vshll.u32 %v796, %v803
    %v806 = vshrl.u32 %v788, %v804
    %v807 = vor.u32 %v805, %v806
    %v808 = vsub.s32 4294967266, %v803
    %v809 = vadd.s32 %v808, 127
    %v810 = vshll.u32 %v809, 23
    %v811 = vor.u32 4788187, %v810
    %v812 = vand.u32 2147483647, %v811
    %v814 = vcvt.s32.f32 %v807
    %v815 = vmul.f32 %v814, %v812
    %v816 = vxor.u32 %v815, 2147483648
    %v817 = vsel %vm696, %v816, %v815
    %v818 = vsub.s32 4, %v794
    %v819 = vsel %vm696, %v818, %v794
    %v820 = vsel %vm695, %v621, %v817
    %v821 = vsel %vm695, 0, %v819
    %v822 = vmul.f32 %v820, %v820
    %v823 = vmul.f32 %v822, -0.001358992
    %v824 = vadd.f32 %v823, 0.041655596
    %v825 = vmul.f32 %v822, %v824
    %v826 = vadd.f32 %v825, -0.4999988
    %v827 = vmul.f32 %v822, %v826
    %v828 = vadd.f32 1.0, %v827
    %v829 = vmul.f32 %v820, %v820
    %v830 = vmul.f32 %v829, -0.00019511016
    %v831 = vadd.f32 %v830, 0.008332121
    %v832 = vmul.f32 %v829, %v831
    %v833 = vadd.f32 %v832, -0.16666654
    %v834 = vmul.f32 %v829, %v833
    %v835 = vadd.f32 %v834, 1.0
    %v836 = vmul.f32 %v835, %v820
    %vm837 = vweird.f32 %v621
    %v838 = vand.u32 %v821, 3
    %vm839 = vcmp.lt.s32.totalorder %v838, 2
    %vm840 = vcmp.eq.s32.totalorder %v838, 0
    %v841 = vxor.u32 %v836, 2147483648
    %v842 = vsel %vm840, %v828, %v841
    %vm843 = vcmp.eq.s32.totalorder %v838, 2
    %v844 = vxor.u32 %v828, 2147483648
    %v845 = vsel %vm843, %v844, %v836
    %v846 = vsel %vm839, %v842, %v845
    %v847 = vsel %vm837, nan, %v846
    %v848 = vand.u32 2147483647, %v636
    %vm849 = vcmp.le.f32.partialorder %v848, 0.7853982
    %vm850 = vcmp.lt.s32.totalorder %v636, 0
    %v851 = vand.u32 %v636, 2139095040
    %v852 = vshrl.u32 %v851, 23
    %v853 = vsub.s32 %v852, 127
    %v854 = vand.u32 2147483647, %v636
    %v855 = vand.u32 %v854, 8388607
    %v856 = vor.u32 %v855, 8388608
    %v857 = vsub.s32 0, %v856
    %v858 = vadd.s32 %v853, 1
    %vm859 = vcmp.gt.s32.totalorder %v858, 0
    %v860 = vsel %vm859, %v858, 0
    %v861 = vshrl.u32 %v860, 5
    %v862 = vand.u32 %v860, 31
    %v863 = vsub.s32 32, %v862
    %v864 = vshrl.u32 683565275, %v863
    %v865 = vshll.u32 683565275, %v862
    %v866 = vshrl.u32 2475754826, %v863
    %v867 = vor.u32 %v865, %v866
    %v868 = vshll.u32 2475754826, %v862
    %v869 = vshrl.u32 2131351028, %v863
    %v870 = vor.u32 %v868, %v869
    %v871 = vshll.u32 2131351028, %v862
    %v872 = vshrl.u32 2102212464, %v863
    %v873 = vor.u32 %v871, %v872
    %v874 = vshll.u32 2102212464, %v862
    %v875 = vshrl.u32 920167782, %v863
    %v876 = vor.u32 %v874, %v875
    %v877 = vshll.u32 920167782, %v862
    %v878 = vshrl.u32 1326507024, %v863
    %v879 = vor.u32 %v877, %v878
    %vm880 = vcmp.lt.s32.totalorder %v861, 1
    %vm881 = vcmp.lt.s32.totalorder %v861, 2
    %vm882 = vcmp.lt.s32.totalorder %v861, 3
    %vm883 = vcmp.lt.s32.totalorder %v861, 4
    %v884 = vsel %vm880, %v864, %v867
    %v885 = vsel %vm883, %v873, 2102212464
    %v886 = vsel %vm882, %v870, %v885
    %v887 = vsel %vm881, %v884, %v886
    %v888 = vsel %vm880, %v867, %v870
    %v889 = vsel %vm883, %v876, 920167782
    %v890 = vsel %vm882, %v873, %v889
    %v891 = vsel %vm881, %v888, %v890
    %v892 = vsel %vm880, %v870, %v873
    %v893 = vsel %vm883, %v879, 1326507024
    %v894 = vsel %vm882, %v876, %v893
    %v895 = vsel %vm881, %v892, %v894
    %v896 = vshll.u32 %v856, 8
    %v897 = vand.u32 %v896, 65535
    %v898 = vshrl.u32 %v896, 16
    %v899 = vand.u32 %v895, 65535
    %v900 = vshrl.u32 %v895, 16
    %v901 = vmul.u32 %v897, %v899
    %v902 = vmul.u32 %v897, %v900
    %v903 = vmul.u32 %v898, %v899
    %v904 = vmul.u32 %v898, %v900
    %v905 = vshll.u32 %v902, 16
    %v906 = vshrl.u32 %v902, 16
    %v907 = vshll.u32 %v903, 16
    %v908 = vshrl.u32 %v903, 16
    %vm909 = vc.u32 %v901, %v905
    %v910 = vsel %vm909, 1, 0
    %v911 = vadd.s32 %v901, %v905
    %v912 = vadd.s32 %v904, %v910
    %vm913 = vc.u32 %v911, %v907
    %v914 = vsel %vm913, 1, 0
    %v915 = vadd.s32 %v911, %v907
    %v916 = vadd.s32 %v912, %v914
    %v917 = vadd.s32 %v916, %v906
    %v918 = vadd.s32 %v917, %v908
    %v919 = vand.u32 %v896, 65535
    %v920 = vshrl.u32 %v896, 16
    %v921 = vand.u32 %v891, 65535
    %v922 = vshrl.u32 %v891, 16
    %v923 = vmul.u32 %v919, %v921
    %v924 = vmul.u32 %v919, %v922
    %v925 = vmul.u32 %v920, %v921
    %v926 = vmul.u32 %v920, %v922
    %v927 = vshll.u32 %v924, 16
    %v928 = vshrl.u32 %v924, 16
    %v929 = vshll.u32 %v925, 16
    %v930 = vshrl.u32 %v925, 16
    %vm931 = vc.u32 %v923, %v927
    %v932 = vsel %vm931, 1, 0
    %v933 = vadd.s32 %v923, %v927
    %v934 = vadd.s32 %v926, %v932
    %vm935 = vc.u32 %v933, %v929
    %v936 = vsel %vm935, 1, 0
    %v937 = vadd.s32 %v933, %v929
    %v938 = vadd.s32 %v934, %v936
    %v939 = vadd.s32 %v938, %v928
    %v940 = vadd.s32 %v939, %v930
    %v941 = vmul.u32 %v896, %v887
    %v942 = vadd.s32 %v918, %v937
    %vm943 = vc.u32 %v918, %v937
    %v944 = vadd.s32 %v940, 1
    %v945 = vsel %vm943, %v944, %v940
    %v946 = vadd.s32 %v941, %v945
    %v947 = vadd.s32 %v946, 536870912
    %v948 = vshrl.u32 %v947, 30
    %v949 = vshll.u32 %v948, 30
    %v950 = vsub.s32 %v946, %v949
    %vm951 = vcmp.lt.s32.totalorder %v950, 0
    %v952 = vsub.s32 0, %v950
    %v953 = vsel %vm951, %v952, %v950
    %v954 = vclz %v953
    %v955 = vsub.s32 %v954, 2
    %vm956 = vcmp.gt.s32.totalorder 0, %v955
    %v957 = vsel %vm956, 0, %v955
    %v958 = vsub.s32 32, %v957
    %v959 = vshll.u32 %v950, %v957
    %v960 = vshrl.u32 %v942, %v958
    %v961 = vor.u32 %v959, %v960
    %v962 = vsub.s32 4294967266, %v957
    %v963 = vadd.s32 %v962, 127
    %v964 = vshll.u32 %v963, 23
    %v965 = vor.u32 4788187, %v964
    %v966 = vand.u32 2147483647, %v965
    %v968 = vcvt.s32.f32 %v961
    %v969 = vmul.f32 %v968, %v966
    %v970 = vxor.u32 %v969, 2147483648
    %v971 = vsel %vm850, %v970, %v969
    %v972 = vsub.s32 4, %v948
    %v973 = vsel %vm850, %v972, %v948
    %v974 = vsel %vm849, %v636, %v971
    %v975 = vsel %vm849, 0, %v973
    %v976 = vmul.f32 %v974, %v974
    %v977 = vmul.f32 %v976, -0.001358992
    %v978 = vadd.f32 %v977, 0.041655596
    %v979 = vmul.f32 %v976, %v978
    %v980 = vadd.f32 %v979, -0.4999988
    %v981 = vmul.f32 %v976, %v980
    %v982 = vadd.f32 1.0, %v981
    %v983 = vmul.f32 %v974, %v974
    %v984 = vmul.f32 %v983, -0.00019511016
    %v985 = vadd.f32 %v984, 0.008332121
    %v986 = vmul.f32 %v983, %v985
    %v987 = vadd.f32 %v986, -0.16666654
    %v988 = vmul.f32 %v983, %v987
    %v989 = vadd.f32 %v988, 1.0
    %v990 = vmul.f32 %v989, %v974
    %vm991 = vweird.f32 %v636
    %v992 = vand.u32 %v975, 3
    %vm993 = vcmp.lt.s32.totalorder %v992, 2
    %vm994 = vcmp.eq.s32.totalorder %v992, 0
    %v995 = vxor.u32 %v990, 2147483648
    %v996 = vsel %vm994, %v982, %v995
    %vm997 = vcmp.eq.s32.totalorder %v992, 2
    %v998 = vxor.u32 %v982, 2147483648
    %v999 = vsel %vm997, %v998, %v990
    %v1000 = vsel %vm993, %v996, %v999
    %v1001 = vsel %vm991, nan, %v1000
    %v1002 = vand.u32 2147483647, %v651
    %vm1003 = vcmp.le.f32.partialorder %v1002, 0.7853982
    %vm1004 = vcmp.lt.s32.totalorder %v651, 0
    %v1005 = vand.u32 %v651, 2139095040
    %v1006 = vshrl.u32 %v1005, 23
    %v1007 = vsub.s32 %v1006, 127
    %v1008 = vand.u32 2147483647, %v651
    %v1009 = vand.u32 %v1008, 8388607
    %v1010 = vor.u32 %v1009, 8388608
    %v1011 = vsub.s32 0, %v1010
    %v1012 = vadd.s32 %v1007, 1
    %vm1013 = vcmp.gt.s32.totalorder %v1012, 0
    %v1014 = vsel %vm1013, %v1012, 0
    %v1015 = vshrl.u32 %v1014, 5
    %v1016 = vand.u32 %v1014, 31
    %v1017 = vsub.s32 32, %v1016
    %v1018 = vshrl.u32 683565275, %v1017
    %v1019 = vshll.u32 683565275, %v1016
    %v1020 = vshrl.u32 2475754826, %v1017
    %v1021 = vor.u32 %v1019, %v1020
    %v1022 = vshll.u32 2475754826, %v1016
    %v1023 = vshrl.u32 2131351028, %v1017
    %v1024 = vor.u32 %v1022, %v1023
    %v1025 = vshll.u32 2131351028, %v1016
    %v1026 = vshrl.u32 2102212464, %v1017
    %v1027 = vor.u32 %v1025, %v1026
    %v1028 = vshll.u32 2102212464, %v1016
    %v1029 = vshrl.u32 920167782, %v1017
    %v1030 = vor.u32 %v1028, %v1029
    %v1031 = vshll.u32 920167782, %v1016
    %v1032 = vshrl.u32 1326507024, %v1017
    %v1033 = vor.u32 %v1031, %v1032
    %vm1034 = vcmp.lt.s32.totalorder %v1015, 1
    %vm1035 = vcmp.lt.s32.totalorder %v1015, 2
    %vm1036 = vcmp.lt.s32.totalorder %v1015, 3
    %vm1037 = vcmp.lt.s32.totalorder %v1015, 4
    %v1038 = vsel %vm1034, %v1018, %v1021
    %v1039 = vsel %vm1037, %v1027, 2102212464
    %v1040 = vsel %vm1036, %v1024, %v1039
    %v1041 = vsel %vm1035, %v1038, %v1040
    %v1042 = vsel %vm1034, %v1021, %v1024
    %v1043 = vsel %vm1037, %v1030, 920167782
    %v1044 = vsel %vm1036, %v1027, %v1043
    %v1045 = vsel %vm1035, %v1042, %v1044
    %v1046 = vsel %vm1034, %v1024, %v1027
    %v1047 = vsel %vm1037, %v1033, 1326507024
    %v1048 = vsel %vm1036, %v1030, %v1047
    %v1049 = vsel %vm1035, %v1046, %v1048
    %v1050 = vshll.u32 %v1010, 8
    %v1051 = vand.u32 %v1050, 65535
    %v1052 = vshrl.u32 %v1050, 16
    %v1053 = vand.u32 %v1049, 65535
    %v1054 = vshrl.u32 %v1049, 16
    %v1055 = vmul.u32 %v1051, %v1053
    %v1056 = vmul.u32 %v1051, %v1054
    %v1057 = vmul.u32 %v1052, %v1053
    %v1058 = vmul.u32 %v1052, %v1054
    %v1059 = vshll.u32 %v1056, 16
    %v1060 = vshrl.u32 %v1056, 16
    %v1061 = vshll.u32 %v1057, 16
    %v1062 = vshrl.u32 %v1057, 16
    %vm1063 = vc.u32 %v1055, %v1059
    %v1064 = vsel %vm1063, 1, 0
    %v1065 = vadd.s32 %v1055, %v1059
    %v1066 = vadd.s32 %v1058, %v1064
    %vm1067 = vc.u32 %v1065, %v1061
    %v1068 = vsel %vm1067, 1, 0
    %v1069 = vadd.s32 %v1065, %v1061
    %v1070 = vadd.s32 %v1066, %v1068
    %v1071 = vadd.s32 %v1070, %v1060
    %v1072 = vadd.s32 %v1071, %v1062
    %v1073 = vand.u32 %v1050, 65535
    %v1074 = vshrl.u32 %v1050, 16
    %v1075 = vand.u32 %v1045, 65535
    %v1076 = vshrl.u32 %v1045, 16
    %v1077 = vmul.u32 %v1073, %v1075
    %v1078 = vmul.u32 %v1073, %v1076
    %v1079 = vmul.u32 %v1074, %v1075
    %v1080 = vmul.u32 %v1074, %v1076
    %v1081 = vshll.u32 %v1078, 16
    %v1082 = vshrl.u32 %v1078, 16
    %v1083 = vshll.u32 %v1079, 16
    %v1084 = vshrl.u32 %v1079, 16
    %vm1085 = vc.u32 %v1077, %v1081
    %v1086 = vsel %vm1085, 1, 0
    %v1087 = vadd.s32 %v1077, %v1081
    %v1088 = vadd.s32 %v1080, %v1086
    %vm1089 = vc.u32 %v1087, %v1083
    %v1090 = vsel %vm1089, 1, 0
    %v1091 = vadd.s32 %v1087, %v1083
    %v1092 = vadd.s32 %v1088, %v1090
    %v1093 = vadd.s32 %v1092, %v1082
    %v1094 = vadd.s32 %v1093, %v1084
    %v1095 = vmul.u32 %v1050, %v1041
    %v1096 = vadd.s32 %v1072, %v1091
    %vm1097 = vc.u32 %v1072, %v1091
    %v1098 = vadd.s32 %v1094, 1
    %v1099 = vsel %vm1097, %v1098, %v1094
    %v1100 = vadd.s32 %v1095, %v1099
    %v1101 = vadd.s32 %v1100, 536870912
    %v1102 = vshrl.u32 %v1101, 30
    %v1103 = vshll.u32 %v1102, 30
    %v1104 = vsub.s32 %v1100, %v1103
    %vm1105 = vcmp.lt.s32.totalorder %v1104, 0
    %v1106 = vsub.s32 0, %v1104
    %v1107 = vsel %vm1105, %v1106, %v1104
    %v1108 = vclz %v1107
    %v1109 = vsub.s32 %v1108, 2
    %vm1110 = vcmp.gt.s32.totalorder 0, %v1109
    %v1111 = vsel %vm1110, 0, %v1109
    %v1112 = vsub.s32 32, %v1111
    %v1113 = vshll.u32 %v1104, %v1111
    %v1114 = vshrl.u32 %v1096, %v1112
    %v1115 = vor.u32 %v1113, %v1114
    %v1116 = vsub.s32 4294967266, %v1111
    %v1117 = vadd.s32 %v1116, 127
    %v1118 = vshll.u32 %v1117, 23
    %v1119 = vor.u32 4788187, %v1118
    %v1120 = vand.u32 2147483647, %v1119
    %v1122 = vcvt.s32.f32 %v1115
    %v1123 = vmul.f32 %v1122, %v1120
    %v1124 = vxor.u32 %v1123, 2147483648
    %v1125 = vsel %vm1004, %v1124, %v1123
    %v1126 = vsub.s32 4, %v1102
    %v1127 = vsel %vm1004, %v1126, %v1102
    %v1128 = vsel %vm1003, %v651, %v1125
    %v1129 = vsel %vm1003, 0, %v1127
    %v1130 = vmul.f32 %v1128, %v1128
    %v1131 = vmul.f32 %v1130, -0.001358992
    %v1132 = vadd.f32 %v1131, 0.041655596
    %v1133 = vmul.f32 %v1130, %v1132
    %v1134 = vadd.f32 %v1133, -0.4999988
    %v1135 = vmul.f32 %v1130, %v1134
    %v1136 = vadd.f32 1.0, %v1135
    %v1137 = vmul.f32 %v1128, %v1128
    %v1138 = vmul.f32 %v1137, -0.00019511016
    %v1139 = vadd.f32 %v1138, 0.008332121
    %v1140 = vmul.f32 %v1137, %v1139
    %v1141 = vadd.f32 %v1140, -0.16666654
    %v1142 = vmul.f32 %v1137, %v1141
    %v1143 = vadd.f32 %v1142, 1.0
    %v1144 = vmul.f32 %v1143, %v1128
    %vm1145 = vweird.f32 %v651
    %v1146 = vand.u32 %v1129, 3
    %vm1147 = vcmp.lt.s32.totalorder %v1146, 2
    %vm1148 = vcmp.eq.s32.totalorder %v1146, 0
    %v1149 = vxor.u32 %v1144, 2147483648
    %v1150 = vsel %vm1148, %v1136, %v1149
    %vm1151 = vcmp.eq.s32.totalorder %v1146, 2
    %v1152 = vxor.u32 %v1136, 2147483648
    %v1153 = vsel %vm1151, %v1152, %v1144
    %v1154 = vsel %vm1147, %v1150, %v1153
    %v1155 = vsel %vm1145, nan, %v1154
    %v1156 = vand.u32 2147483647, %v666
    %vm1157 = vcmp.le.f32.partialorder %v1156, 0.7853982
    %vm1158 = vcmp.lt.s32.totalorder %v666, 0
    %v1159 = vand.u32 %v666, 2139095040
    %v1160 = vshrl.u32 %v1159, 23
    %v1161 = vsub.s32 %v1160, 127
    %v1162 = vand.u32 2147483647, %v666
    %v1163 = vand.u32 %v1162, 8388607
    %v1164 = vor.u32 %v1163, 8388608
    %v1165 = vsub.s32 0, %v1164
    %v1166 = vadd.s32 %v1161, 1
    %vm1167 = vcmp.gt.s32.totalorder %v1166, 0
    %v1168 = vsel %vm1167, %v1166, 0
    %v1169 = vshrl.u32 %v1168, 5
    %v1170 = vand.u32 %v1168, 31
    %v1171 = vsub.s32 32, %v1170
    %v1172 = vshrl.u32 683565275, %v1171
    %v1173 = vshll.u32 683565275, %v1170
    %v1174 = vshrl.u32 2475754826, %v1171
    %v1175 = vor.u32 %v1173, %v1174
    %v1176 = vshll.u32 2475754826, %v1170
    %v1177 = vshrl.u32 2131351028, %v1171
    %v1178 = vor.u32 %v1176, %v1177
    %v1179 = vshll.u32 2131351028, %v1170
    %v1180 = vshrl.u32 2102212464, %v1171
    %v1181 = vor.u32 %v1179, %v1180
    %v1182 = vshll.u32 2102212464, %v1170
    %v1183 = vshrl.u32 920167782, %v1171
    %v1184 = vor.u32 %v1182, %v1183
    %v1185 = vshll.u32 920167782, %v1170
    %v1186 = vshrl.u32 1326507024, %v1171
    %v1187 = vor.u32 %v1185, %v1186
    %vm1188 = vcmp.lt.s32.totalorder %v1169, 1
    %vm1189 = vcmp.lt.s32.totalorder %v1169, 2
    %vm1190 = vcmp.lt.s32.totalorder %v1169, 3
    %vm1191 = vcmp.lt.s32.totalorder %v1169, 4
    %v1192 = vsel %vm1188, %v1172, %v1175
    %v1193 = vsel %vm1191, %v1181, 2102212464
    %v1194 = vsel %vm1190, %v1178, %v1193
    %v1195 = vsel %vm1189, %v1192, %v1194
    %v1196 = vsel %vm1188, %v1175, %v1178
    %v1197 = vsel %vm1191, %v1184, 920167782
    %v1198 = vsel %vm1190, %v1181, %v1197
    %v1199 = vsel %vm1189, %v1196, %v1198
    %v1200 = vsel %vm1188, %v1178, %v1181
    %v1201 = vsel %vm1191, %v1187, 1326507024
    %v1202 = vsel %vm1190, %v1184, %v1201
    %v1203 = vsel %vm1189, %v1200, %v1202
    %v1204 = vshll.u32 %v1164, 8
    %v1205 = vand.u32 %v1204, 65535
    %v1206 = vshrl.u32 %v1204, 16
    %v1207 = vand.u32 %v1203, 65535
    %v1208 = vshrl.u32 %v1203, 16
    %v1209 = vmul.u32 %v1205, %v1207
    %v1210 = vmul.u32 %v1205, %v1208
    %v1211 = vmul.u32 %v1206, %v1207
    %v1212 = vmul.u32 %v1206, %v1208
    %v1213 = vshll.u32 %v1210, 16
    %v1214 = vshrl.u32 %v1210, 16
    %v1215 = vshll.u32 %v1211, 16
    %v1216 = vshrl.u32 %v1211, 16
    %vm1217 = vc.u32 %v1209, %v1213
    %v1218 = vsel %vm1217, 1, 0
    %v1219 = vadd.s32 %v1209, %v1213
    %v1220 = vadd.s32 %v1212, %v1218
    %vm1221 = vc.u32 %v1219, %v1215
    %v1222 = vsel %vm1221, 1, 0
    %v1223 = vadd.s32 %v1219, %v1215
    %v1224 = vadd.s32 %v1220, %v1222
    %v1225 = vadd.s32 %v1224, %v1214
    %v1226 = vadd.s32 %v1225, %v1216
    %v1227 = vand.u32 %v1204, 65535
    %v1228 = vshrl.u32 %v1204, 16
    %v1229 = vand.u32 %v1199, 65535
    %v1230 = vshrl.u32 %v1199, 16
    %v1231 = vmul.u32 %v1227, %v1229
    %v1232 = vmul.u32 %v1227, %v1230
    %v1233 = vmul.u32 %v1228, %v1229
    %v1234 = vmul.u32 %v1228, %v1230
    %v1235 = vshll.u32 %v1232, 16
    %v1236 = vshrl.u32 %v1232, 16
    %v1237 = vshll.u32 %v1233, 16
    %v1238 = vshrl.u32 %v1233, 16
    %vm1239 = vc.u32 %v1231, %v1235
    %v1240 = vsel %vm1239, 1, 0
    %v1241 = vadd.s32 %v1231, %v1235
    %v1242 = vadd.s32 %v1234, %v1240
    %vm1243 = vc.u32 %v1241, %v1237
    %v1244 = vsel %vm1243, 1, 0
    %v1245 = vadd.s32 %v1241, %v1237
    %v1246 = vadd.s32 %v1242, %v1244
    %v1247 = vadd.s32 %v1246, %v1236
    %v1248 = vadd.s32 %v1247, %v1238
    %v1249 = vmul.u32 %v1204, %v1195
    %v1250 = vadd.s32 %v1226, %v1245
    %vm1251 = vc.u32 %v1226, %v1245
    %v1252 = vadd.s32 %v1248, 1
    %v1253 = vsel %vm1251, %v1252, %v1248
    %v1254 = vadd.s32 %v1249, %v1253
    %v1255 = vadd.s32 %v1254, 536870912
    %v1256 = vshrl.u32 %v1255, 30
    %v1257 = vshll.u32 %v1256, 30
    %v1258 = vsub.s32 %v1254, %v1257
    %vm1259 = vcmp.lt.s32.totalorder %v1258, 0
    %v1260 = vsub.s32 0, %v1258
    %v1261 = vsel %vm1259, %v1260, %v1258
    %v1262 = vclz %v1261
    %v1263 = vsub.s32 %v1262, 2
    %vm1264 = vcmp.gt.s32.totalorder 0, %v1263
    %v1265 = vsel %vm1264, 0, %v1263
    %v1266 = vsub.s32 32, %v1265
    %v1267 = vshll.u32 %v1258, %v1265
    %v1268 = vshrl.u32 %v1250, %v1266
    %v1269 = vor.u32 %v1267, %v1268
    %v1270 = vsub.s32 4294967266, %v1265
    %v1271 = vadd.s32 %v1270, 127
    %v1272 = vshll.u32 %v1271, 23
    %v1273 = vor.u32 4788187, %v1272
    %v1274 = vand.u32 2147483647, %v1273
    %v1276 = vcvt.s32.f32 %v1269
    %v1277 = vmul.f32 %v1276, %v1274
    %v1278 = vxor.u32 %v1277, 2147483648
    %v1279 = vsel %vm1158, %v1278, %v1277
    %v1280 = vsub.s32 4, %v1256
    %v1281 = vsel %vm1158, %v1280, %v1256
    %v1282 = vsel %vm1157, %v666, %v1279
    %v1283 = vsel %vm1157, 0, %v1281
    %v1284 = vmul.f32 %v1282, %v1282
    %v1285 = vmul.f32 %v1284, -0.001358992
    %v1286 = vadd.f32 %v1285, 0.041655596
    %v1287 = vmul.f32 %v1284, %v1286
    %v1288 = vadd.f32 %v1287, -0.4999988
    %v1289 = vmul.f32 %v1284, %v1288
    %v1290 = vadd.f32 1.0, %v1289
    %v1291 = vmul.f32 %v1282, %v1282
    %v1292 = vmul.f32 %v1291, -0.00019511016
    %v1293 = vadd.f32 %v1292, 0.008332121
    %v1294 = vmul.f32 %v1291, %v1293
    %v1295 = vadd.f32 %v1294, -0.16666654
    %v1296 = vmul.f32 %v1291, %v1295
    %v1297 = vadd.f32 %v1296, 1.0
    %v1298 = vmul.f32 %v1297, %v1282
    %vm1299 = vweird.f32 %v666
    %v1300 = vand.u32 %v1283, 3
    %vm1301 = vcmp.lt.s32.totalorder %v1300, 2
    %vm1302 = vcmp.eq.s32.totalorder %v1300, 0
    %v1303 = vxor.u32 %v1298, 2147483648
    %v1304 = vsel %vm1302, %v1290, %v1303
    %vm1305 = vcmp.eq.s32.totalorder %v1300, 2
    %v1306 = vxor.u32 %v1290, 2147483648
    %v1307 = vsel %vm1305, %v1306, %v1298
    %v1308 = vsel %vm1301, %v1304, %v1307
    %v1309 = vsel %vm1299, nan, %v1308
    %v1310 = vmul.f32 %v687, %v847
    %v1311 = vmul.f32 %v689, %v1001
    %v1312 = vmul.f32 %v691, %v1155
    %v1313 = vmul.f32 %v693, %v1309
    %v1314 = vand.u32 2147483647, %v621
    %vm1315 = vcmp.le.f32.partialorder %v1314, 0.7853982
    %vm1316 = vcmp.lt.s32.totalorder %v621, 0
    %v1317 = vand.u32 %v621, 2139095040
    %v1318 = vshrl.u32 %v1317, 23
    %v1319 = vsub.s32 %v1318, 127
    %v1320 = vand.u32 2147483647, %v621
    %v1321 = vand.u32 %v1320, 8388607
    %v1322 = vor.u32 %v1321, 8388608
    %v1323 = vsub.s32 0, %v1322
    %v1324 = vadd.s32 %v1319, 1
    %vm1325 = vcmp.gt.s32.totalorder %v1324, 0
    %v1326 = vsel %vm1325, %v1324, 0
    %v1327 = vshrl.u32 %v1326, 5
    %v1328 = vand.u32 %v1326, 31
    %v1329 = vsub.s32 32, %v1328
    %v1330 = vshrl.u32 683565275, %v1329
    %v1331 = vshll.u32 683565275, %v1328
    %v1332 = vshrl.u32 2475754826, %v1329
    %v1333 = vor.u32 %v1331, %v1332
    %v1334 = vshll.u32 2475754826, %v1328
    %v1335 = vshrl.u32 2131351028, %v1329
    %v1336 = vor.u32 %v1334, %v1335
    %v1337 = vshll.u32 2131351028, %v1328
    %v1338 = vshrl.u32 2102212464, %v1329
    %v1339 = vor.u32 %v1337, %v1338
    %v1340 = vshll.u32 2102212464, %v1328
    %v1341 = vshrl.u32 920167782, %v1329
    %v1342 = vor.u32 %v1340, %v1341
    %v1343 = vshll.u32 920167782, %v1328
    %v1344 = vshrl.u32 1326507024, %v1329
    %v1345 = vor.u32 %v1343, %v1344
    %vm1346 = vcmp.lt.s32.totalorder %v1327, 1
    %vm1347 = vcmp.lt.s32.totalorder %v1327, 2
    %vm1348 = vcmp.lt.s32.totalorder %v1327, 3
    %vm1349 = vcmp.lt.s32.totalorder %v1327, 4
    %v1350 = vsel %vm1346, %v1330, %v1333
    %v1351 = vsel %vm1349, %v1339, 2102212464
    %v1352 = vsel %vm1348, %v1336, %v1351
    %v1353 = vsel %vm1347, %v1350, %v1352
    %v1354 = vsel %vm1346, %v1333, %v1336
    %v1355 = vsel %vm1349, %v1342, 920167782
    %v1356 = vsel %vm1348, %v1339, %v1355
    %v1357 = vsel %vm1347, %v1354, %v1356
    %v1358 = vsel %vm1346, %v1336, %v1339
    %v1359 = vsel %vm1349, %v1345, 1326507024
    %v1360 = vsel %vm1348, %v1342, %v1359
    %v1361 = vsel %vm1347, %v1358, %v1360
    %v1362 = vshll.u32 %v1322, 8
    %v1363 = vand.u32 %v1362, 65535
    %v1364 = vshrl.u32 %v1362, 16
    %v1365 = vand.u32 %v1361, 65535
    %v1366 = vshrl.u32 %v1361, 16
    %v1367 = vmul.u32 %v1363, %v1365
    %v1368 = vmul.u32 %v1363, %v1366
    %v1369 = vmul.u32 %v1364, %v1365
    %v1370 = vmul.u32 %v1364, %v1366
    %v1371 = vshll.u32 %v1368, 16
    %v1372 = vshrl.u32 %v1368, 16
    %v1373 = vshll.u32 %v1369, 16
    %v1374 = vshrl.u32 %v1369, 16
    %vm1375 = vc.u32 %v1367, %v1371
    %v1376 = vsel %vm1375, 1, 0
    %v1377 = vadd.s32 %v1367, %v1371
    %v1378 = vadd.s32 %v1370, %v1376
    %vm1379 = vc.u32 %v1377, %v1373
    %v1380 = vsel %vm1379, 1, 0
    %v1381 = vadd.s32 %v1377, %v1373
    %v1382 = vadd.s32 %v1378, %v1380
    %v1383 = vadd.s32 %v1382, %v1372
    %v1384 = vadd.s32 %v1383, %v1374
    %v1385 = vand.u32 %v1362, 65535
    %v1386 = vshrl.u32 %v1362, 16
    %v1387 = vand.u32 %v1357, 65535
    %v1388 = vshrl.u32 %v1357, 16
    %v1389 = vmul.u32 %v1385, %v1387
    %v1390 = vmul.u32 %v1385, %v1388
    %v1391 = vmul.u32 %v1386, %v1387
    %v1392 = vmul.u32 %v1386, %v1388
    %v1393 = vshll.u32 %v1390, 16
    %v1394 = vshrl.u32 %v1390, 16
    %v1395 = vshll.u32 %v1391, 16
    %v1396 = vshrl.u32 %v1391, 16
    %vm1397 = vc.u32 %v1389, %v1393
    %v1398 = vsel %vm1397, 1, 0
    %v1399 = vadd.s32 %v1389, %v1393
    %v1400 = vadd.s32 %v1392, %v1398
    %vm1401 = vc.u32 %v1399, %v1395
    %v1402 = vsel %vm1401, 1, 0
    %v1403 = vadd.s32 %v1399, %v1395
    %v1404 = vadd.s32 %v1400, %v1402
    %v1405 = vadd.s32 %v1404, %v1394
    %v1406 = vadd.s32 %v1405, %v1396
    %v1407 = vmul.u32 %v1362, %v1353
    %v1408 = vadd.s32 %v1384, %v1403
    %vm1409 = vc.u32 %v1384, %v1403
    %v1410 = vadd.s32 %v1406, 1
    %v1411 = vsel %vm1409, %v1410, %v1406
    %v1412 = vadd.s32 %v1407, %v1411
    %v1413 = vadd.s32 %v1412, 536870912
    %v1414 = vshrl.u32 %v1413, 30
    %v1415 = vshll.u32 %v1414, 30
    %v1416 = vsub.s32 %v1412, %v1415
    %vm1417 = vcmp.lt.s32.totalorder %v1416, 0
    %v1418 = vsub.s32 0, %v1416
    %v1419 = vsel %vm1417, %v1418, %v1416
    %v1420 = vclz %v1419
    %v1421 = vsub.s32 %v1420, 2
    %vm1422 = vcmp.gt.s32.totalorder 0, %v1421
    %v1423 = vsel %vm1422, 0, %v1421
    %v1424 = vsub.s32 32, %v1423
    %v1425 = vshll.u32 %v1416, %v1423
    %v1426 = vshrl.u32 %v1408, %v1424
    %v1427 = vor.u32 %v1425, %v1426
    %v1428 = vsub.s32 4294967266, %v1423
    %v1429 = vadd.s32 %v1428, 127
    %v1430 = vshll.u32 %v1429, 23
    %v1431 = vor.u32 4788187, %v1430
    %v1432 = vand.u32 2147483647, %v1431
    %v1434 = vcvt.s32.f32 %v1427
    %v1435 = vmul.f32 %v1434, %v1432
    %v1436 = vxor.u32 %v1435, 2147483648
    %v1437 = vsel %vm1316, %v1436, %v1435
    %v1438 = vsub.s32 4, %v1414
    %v1439 = vsel %vm1316, %v1438, %v1414
    %v1440 = vsel %vm1315, %v621, %v1437
    %v1441 = vsel %vm1315, 0, %v1439
    %v1442 = vmul.f32 %v1440, %v1440
    %v1443 = vmul.f32 %v1442, -0.001358992
    %v1444 = vadd.f32 %v1443, 0.041655596
    %v1445 = vmul.f32 %v1442, %v1444
    %v1446 = vadd.f32 %v1445, -0.4999988
    %v1447 = vmul.f32 %v1442, %v1446
    %v1448 = vadd.f32 1.0, %v1447
    %v1449 = vmul.f32 %v1440, %v1440
    %v1450 = vmul.f32 %v1449, -0.00019511016
    %v1451 = vadd.f32 %v1450, 0.008332121
    %v1452 = vmul.f32 %v1449, %v1451
    %v1453 = vadd.f32 %v1452, -0.16666654
    %v1454 = vmul.f32 %v1449, %v1453
    %v1455 = vadd.f32 %v1454, 1.0
    %v1456 = vmul.f32 %v1455, %v1440
    %vm1457 = vweird.f32 %v621
    %v1458 = vadd.s32 %v1441, 3
    %v1459 = vand.u32 %v1458, 3
    %vm1460 = vcmp.lt.s32.totalorder %v1459, 2
    %vm1461 = vcmp.eq.s32.totalorder %v1459, 0
    %v1462 = vxor.u32 %v1456, 2147483648
    %v1463 = vsel %vm1461, %v1448, %v1462
    %vm1464 = vcmp.eq.s32.totalorder %v1459, 2
    %v1465 = vxor.u32 %v1448, 2147483648
    %v1466 = vsel %vm1464, %v1465, %v1456
    %v1467 = vsel %vm1460, %v1463, %v1466
    %v1468 = vsel %vm1457, nan, %v1467
    %v1469 = vand.u32 2147483647, %v636
    %vm1470 = vcmp.le.f32.partialorder %v1469, 0.7853982
    %vm1471 = vcmp.lt.s32.totalorder %v636, 0
    %v1472 = vand.u32 %v636, 2139095040
    %v1473 = vshrl.u32 %v1472, 23
    %v1474 = vsub.s32 %v1473, 127
    %v1475 = vand.u32 2147483647, %v636
    %v1476 = vand.u32 %v1475, 8388607
    %v1477 = vor.u32 %v1476, 8388608
    %v1478 = vsub.s32 0, %v1477
    %v1479 = vadd.s32 %v1474, 1
    %vm1480 = vcmp.gt.s32.totalorder %v1479, 0
    %v1481 = vsel %vm1480, %v1479, 0
    %v1482 = vshrl.u32 %v1481, 5
    %v1483 = vand.u32 %v1481, 31
    %v1484 = vsub.s32 32, %v1483
    %v1485 = vshrl.u32 683565275, %v1484
    %v1486 = vshll.u32 683565275, %v1483
    %v1487 = vshrl.u32 2475754826, %v1484
    %v1488 = vor.u32 %v1486, %v1487
    %v1489 = vshll.u32 2475754826, %v1483
    %v1490 = vshrl.u32 2131351028, %v1484
    %v1491 = vor.u32 %v1489, %v1490
    %v1492 = vshll.u32 2131351028, %v1483
    %v1493 = vshrl.u32 2102212464, %v1484
    %v1494 = vor.u32 %v1492, %v1493
    %v1495 = vshll.u32 2102212464, %v1483
    %v1496 = vshrl.u32 920167782, %v1484
    %v1497 = vor.u32 %v1495, %v1496
    %v1498 = vshll.u32 920167782, %v1483
    %v1499 = vshrl.u32 1326507024, %v1484
    %v1500 = vor.u32 %v1498, %v1499
    %vm1501 = vcmp.lt.s32.totalorder %v1482, 1
    %vm1502 = vcmp.lt.s32.totalorder %v1482, 2
    %vm1503 = vcmp.lt.s32.totalorder %v1482, 3
    %vm1504 = vcmp.lt.s32.totalorder %v1482, 4
    %v1505 = vsel %vm1501, %v1485, %v1488
    %v1506 = vsel %vm1504, %v1494, 2102212464
    %v1507 = vsel %vm1503, %v1491, %v1506
    %v1508 = vsel %vm1502, %v1505, %v1507
    %v1509 = vsel %vm1501, %v1488, %v1491
    %v1510 = vsel %vm1504, %v1497, 920167782
    %v1511 = vsel %vm1503, %v1494, %v1510
    %v1512 = vsel %vm1502, %v1509, %v1511
    %v1513 = vsel %vm1501, %v1491, %v1494
    %v1514 = vsel %vm1504, %v1500, 1326507024
    %v1515 = vsel %vm1503, %v1497, %v1514
    %v1516 = vsel %vm1502, %v1513, %v1515
    %v1517 = vshll.u32 %v1477, 8
    %v1518 = vand.u32 %v1517, 65535
    %v1519 = vshrl.u32 %v1517, 16
    %v1520 = vand.u32 %v1516, 65535
    %v1521 = vshrl.u32 %v1516, 16
    %v1522 = vmul.u32 %v1518, %v1520
    %v1523 = vmul.u32 %v1518, %v1521
    %v1524 = vmul.u32 %v1519, %v1520
    %v1525 = vmul.u32 %v1519, %v1521
    %v1526 = vshll.u32 %v1523, 16
    %v1527 = vshrl.u32 %v1523, 16
    %v1528 = vshll.u32 %v1524, 16
    %v1529 = vshrl.u32 %v1524, 16
    %vm1530 = vc.u32 %v1522, %v1526
    %v1531 = vsel %vm1530, 1, 0
    %v1532 = vadd.s32 %v1522, %v1526
    %v1533 = vadd.s32 %v1525, %v1531
    %vm1534 = vc.u32 %v1532, %v1528
    %v1535 = vsel %vm1534, 1, 0
    %v1536 = vadd.s32 %v1532, %v1528
    %v1537 = vadd.s32 %v1533, %v1535
    %v1538 = vadd.s32 %v1537, %v1527
    %v1539 = vadd.s32 %v1538, %v1529
    %v1540 = vand.u32 %v1517, 65535
    %v1541 = vshrl.u32 %v1517, 16
    %v1542 = vand.u32 %v1512, 65535
    %v1543 = vshrl.u32 %v1512, 16
    %v1544 = vmul.u32 %v1540, %v1542
    %v1545 = vmul.u32 %v1540, %v1543
    %v1546 = vmul.u32 %v1541, %v1542
    %v1547 = vmul.u32 %v1541, %v1543
    %v1548 = vshll.u32 %v1545, 16
    %v1549 = vshrl.u32 %v1545, 16
    %v1550 = vshll.u32 %v1546, 16
    %v1551 = vshrl.u32 %v1546, 16
    %vm1552 = vc.u32 %v1544, %v1548
    %v1553 = vsel %vm1552, 1, 0
    %v1554 = vadd.s32 %v1544, %v1548
    %v1555 = vadd.s32 %v1547, %v1553
    %vm1556 = vc.u32 %v1554, %v1550
    %v1557 = vsel %vm1556, 1, 0
    %v1558 = vadd.s32 %v1554, %v1550
    %v1559 = vadd.s32 %v1555, %v1557
    %v1560 = vadd.s32 %v1559, %v1549
    %v1561 = vadd.s32 %v1560, %v1551
    %v1562 = vmul.u32 %v1517, %v1508
    %v1563 = vadd.s32 %v1539, %v1558
    %vm1564 = vc.u32 %v1539, %v1558
    %v1565 = vadd.s32 %v1561, 1
    %v1566 = vsel %vm1564, %v1565, %v1561
    %v1567 = vadd.s32 %v1562, %v1566
    %v1568 = vadd.s32 %v1567, 536870912
    %v1569 = vshrl.u32 %v1568, 30
    %v1570 = vshll.u32 %v1569, 30
    %v1571 = vsub.s32 %v1567, %v1570
    %vm1572 = vcmp.lt.s32.totalorder %v1571, 0
    %v1573 = vsub.s32 0, %v1571
    %v1574 = vsel %vm1572, %v1573, %v1571
    %v1575 = vclz %v1574
    %v1576 = vsub.s32 %v1575, 2
    %vm1577 = vcmp.gt.s32.totalorder 0, %v1576
    %v1578 = vsel %vm1577, 0, %v1576
    %v1579 = vsub.s32 32, %v1578
    %v1580 = vshll.u32 %v1571, %v1578
    %v1581 = vshrl.u32 %v1563, %v1579
    %v1582 = vor.u32 %v1580, %v1581
    %v1583 = vsub.s32 4294967266, %v1578
    %v1584 = vadd.s32 %v1583, 127
    %v1585 = vshll.u32 %v1584, 23
    %v1586 = vor.u32 4788187, %v1585
    %v1587 = vand.u32 2147483647, %v1586
    %v1589 = vcvt.s32.f32 %v1582
    %v1590 = vmul.f32 %v1589, %v1587
    %v1591 = vxor.u32 %v1590, 2147483648
    %v1592 = vsel %vm1471, %v1591, %v1590
    %v1593 = vsub.s32 4, %v1569
    %v1594 = vsel %vm1471, %v1593, %v1569
    %v1595 = vsel %vm1470, %v636, %v1592
    %v1596 = vsel %vm1470, 0, %v1594
    %v1597 = vmul.f32 %v1595, %v1595
    %v1598 = vmul.f32 %v1597, -0.001358992
    %v1599 = vadd.f32 %v1598, 0.041655596
    %v1600 = vmul.f32 %v1597, %v1599
    %v1601 = vadd.f32 %v1600, -0.4999988
    %v1602 = vmul.f32 %v1597, %v1601
    %v1603 = vadd.f32 1.0, %v1602
    %v1604 = vmul.f32 %v1595, %v1595
    %v1605 = vmul.f32 %v1604, -0.00019511016
    %v1606 = vadd.f32 %v1605, 0.008332121
    %v1607 = vmul.f32 %v1604, %v1606
    %v1608 = vadd.f32 %v1607, -0.16666654
    %v1609 = vmul.f32 %v1604, %v1608
    %v1610 = vadd.f32 %v1609, 1.0
    %v1611 = vmul.f32 %v1610, %v1595
    %vm1612 = vweird.f32 %v636
    %v1613 = vadd.s32 %v1596, 3
    %v1614 = vand.u32 %v1613, 3
    %vm1615 = vcmp.lt.s32.totalorder %v1614, 2
    %vm1616 = vcmp.eq.s32.totalorder %v1614, 0
    %v1617 = vxor.u32 %v1611, 2147483648
    %v1618 = vsel %vm1616, %v1603, %v1617
    %vm1619 = vcmp.eq.s32.totalorder %v1614, 2
    %v1620 = vxor.u32 %v1603, 2147483648
    %v1621 = vsel %vm1619, %v1620, %v1611
    %v1622 = vsel %vm1615, %v1618, %v1621
    %v1623 = vsel %vm1612, nan, %v1622
    %v1624 = vand.u32 2147483647, %v651
    %vm1625 = vcmp.le.f32.partialorder %v1624, 0.7853982
    %vm1626 = vcmp.lt.s32.totalorder %v651, 0
    %v1627 = vand.u32 %v651, 2139095040
    %v1628 = vshrl.u32 %v1627, 23
    %v1629 = vsub.s32 %v1628, 127
    %v1630 = vand.u32 2147483647, %v651
    %v1631 = vand.u32 %v1630, 8388607
    %v1632 = vor.u32 %v1631, 8388608
    %v1633 = vsub.s32 0, %v1632
    %v1634 = vadd.s32 %v1629, 1
    %vm1635 = vcmp.gt.s32.totalorder %v1634, 0
    %v1636 = vsel %vm1635, %v1634, 0
    %v1637 = vshrl.u32 %v1636, 5
    %v1638 = vand.u32 %v1636, 31
    %v1639 = vsub.s32 32, %v1638
    %v1640 = vshrl.u32 683565275, %v1639
    %v1641 = vshll.u32 683565275, %v1638
    %v1642 = vshrl.u32 2475754826, %v1639
    %v1643 = vor.u32 %v1641, %v1642
    %v1644 = vshll.u32 2475754826, %v1638
    %v1645 = vshrl.u32 2131351028, %v1639
    %v1646 = vor.u32 %v1644, %v1645
    %v1647 = vshll.u32 2131351028, %v1638
    %v1648 = vshrl.u32 2102212464, %v1639
    %v1649 = vor.u32 %v1647, %v1648
    %v1650 = vshll.u32 2102212464, %v1638
    %v1651 = vshrl.u32 920167782, %v1639
    %v1652 = vor.u32 %v1650, %v1651
    %v1653 = vshll.u32 920167782, %v1638
    %v1654 = vshrl.u32 1326507024, %v1639
    %v1655 = vor.u32 %v1653, %v1654
    %vm1656 = vcmp.lt.s32.totalorder %v1637, 1
    %vm1657 = vcmp.lt.s32.totalorder %v1637, 2
    %vm1658 = vcmp.lt.s32.totalorder %v1637, 3
    %vm1659 = vcmp.lt.s32.totalorder %v1637, 4
    %v1660 = vsel %vm1656, %v1640, %v1643
    %v1661 = vsel %vm1659, %v1649, 2102212464
    %v1662 = vsel %vm1658, %v1646, %v1661
    %v1663 = vsel %vm1657, %v1660, %v1662
    %v1664 = vsel %vm1656, %v1643, %v1646
    %v1665 = vsel %vm1659, %v1652, 920167782
    %v1666 = vsel %vm1658, %v1649, %v1665
    %v1667 = vsel %vm1657, %v1664, %v1666
    %v1668 = vsel %vm1656, %v1646, %v1649
    %v1669 = vsel %vm1659, %v1655, 1326507024
    %v1670 = vsel %vm1658, %v1652, %v1669
    %v1671 = vsel %vm1657, %v1668, %v1670
    %v1672 = vshll.u32 %v1632, 8
    %v1673 = vand.u32 %v1672, 65535
    %v1674 = vshrl.u32 %v1672, 16
    %v1675 = vand.u32 %v1671, 65535
    %v1676 = vshrl.u32 %v1671, 16
    %v1677 = vmul.u32 %v1673, %v1675
    %v1678 = vmul.u32 %v1673, %v1676
    %v1679 = vmul.u32 %v1674, %v1675
    %v1680 = vmul.u32 %v1674, %v1676
    %v1681 = vshll.u32 %v1678, 16
    %v1682 = vshrl.u32 %v1678, 16
    %v1683 = vshll.u32 %v1679, 16
    %v1684 = vshrl.u32 %v1679, 16
    %vm1685 = vc.u32 %v1677, %v1681
    %v1686 = vsel %vm1685, 1, 0
    %v1687 = vadd.s32 %v1677, %v1681
    %v1688 = vadd.s32 %v1680, %v1686
    %vm1689 = vc.u32 %v1687, %v1683
    %v1690 = vsel %vm1689, 1, 0
    %v1691 = vadd.s32 %v1687, %v1683
    %v1692 = vadd.s32 %v1688, %v1690
    %v1693 = vadd.s32 %v1692, %v1682
    %v1694 = vadd.s32 %v1693, %v1684
    %v1695 = vand.u32 %v1672, 65535
    %v1696 = vshrl.u32 %v1672, 16
    %v1697 = vand.u32 %v1667, 65535
    %v1698 = vshrl.u32 %v1667, 16
    %v1699 = vmul.u32 %v1695, %v1697
    %v1700 = vmul.u32 %v1695, %v1698
    %v1701 = vmul.u32 %v1696, %v1697
    %v1702 = vmul.u32 %v1696, %v1698
    %v1703 = vshll.u32 %v1700, 16
    %v1704 = vshrl.u32 %v1700, 16
    %v1705 = vshll.u32 %v1701, 16
    %v1706 = vshrl.u32 %v1701, 16
    %vm1707 = vc.u32 %v1699, %v1703
    %v1708 = vsel %vm1707, 1, 0
    %v1709 = vadd.s32 %v1699, %v1703
    %v1710 = vadd.s32 %v1702, %v1708
    %vm1711 = vc.u32 %v1709, %v1705
    %v1712 = vsel %vm1711, 1, 0
    %v1713 = vadd.s32 %v1709, %v1705
    %v1714 = vadd.s32 %v1710, %v1712
    %v1715 = vadd.s32 %v1714, %v1704
    %v1716 = vadd.s32 %v1715, %v1706
    %v1717 = vmul.u32 %v1672, %v1663
    %v1718 = vadd.s32 %v1694, %v1713
    %vm1719 = vc.u32 %v1694, %v1713
    %v1720 = vadd.s32 %v1716, 1
    %v1721 = vsel %vm1719, %v1720, %v1716
    %v1722 = vadd.s32 %v1717, %v1721
    %v1723 = vadd.s32 %v1722, 536870912
    %v1724 = vshrl.u32 %v1723, 30
    %v1725 = vshll.u32 %v1724, 30
    %v1726 = vsub.s32 %v1722, %v1725
    %vm1727 = vcmp.lt.s32.totalorder %v1726, 0
    %v1728 = vsub.s32 0, %v1726
    %v1729 = vsel %vm1727, %v1728, %v1726
    %v1730 = vclz %v1729
    %v1731 = vsub.s32 %v1730, 2
    %vm1732 = vcmp.gt.s32.totalorder 0, %v1731
    %v1733 = vsel %vm1732, 0, %v1731
    %v1734 = vsub.s32 32, %v1733
    %v1735 = vshll.u32 %v1726, %v1733
    %v1736 = vshrl.u32 %v1718, %v1734
    %v1737 = vor.u32 %v1735, %v1736
    %v1738 = vsub.s32 4294967266, %v1733
    %v1739 = vadd.s32 %v1738, 127
    %v1740 = vshll.u32 %v1739, 23
    %v1741 = vor.u32 4788187, %v1740
    %v1742 = vand.u32 2147483647, %v1741
    %v1744 = vcvt.s32.f32 %v1737
    %v1745 = vmul.f32 %v1744, %v1742
    %v1746 = vxor.u32 %v1745, 2147483648
    %v1747 = vsel %vm1626, %v1746, %v1745
    %v1748 = vsub.s32 4, %v1724
    %v1749 = vsel %vm1626, %v1748, %v1724
    %v1750 = vsel %vm1625, %v651, %v1747
    %v1751 = vsel %vm1625, 0, %v1749
    %v1752 = vmul.f32 %v1750, %v1750
    %v1753 = vmul.f32 %v1752, -0.001358992
    %v1754 = vadd.f32 %v1753, 0.041655596
    %v1755 = vmul.f32 %v1752, %v1754
    %v1756 = vadd.f32 %v1755, -0.4999988
    %v1757 = vmul.f32 %v1752, %v1756
    %v1758 = vadd.f32 1.0, %v1757
    %v1759 = vmul.f32 %v1750, %v1750
    %v1760 = vmul.f32 %v1759, -0.00019511016
    %v1761 = vadd.f32 %v1760, 0.008332121
    %v1762 = vmul.f32 %v1759, %v1761
    %v1763 = vadd.f32 %v1762, -0.16666654
    %v1764 = vmul.f32 %v1759, %v1763
    %v1765 = vadd.f32 %v1764, 1.0
    %v1766 = vmul.f32 %v1765, %v1750
    %vm1767 = vweird.f32 %v651
    %v1768 = vadd.s32 %v1751, 3
    %v1769 = vand.u32 %v1768, 3
    %vm1770 = vcmp.lt.s32.totalorder %v1769, 2
    %vm1771 = vcmp.eq.s32.totalorder %v1769, 0
    %v1772 = vxor.u32 %v1766, 2147483648
    %v1773 = vsel %vm1771, %v1758, %v1772
    %vm1774 = vcmp.eq.s32.totalorder %v1769, 2
    %v1775 = vxor.u32 %v1758, 2147483648
    %v1776 = vsel %vm1774, %v1775, %v1766
    %v1777 = vsel %vm1770, %v1773, %v1776
    %v1778 = vsel %vm1767, nan, %v1777
    %v1779 = vand.u32 2147483647, %v666
    %vm1780 = vcmp.le.f32.partialorder %v1779, 0.7853982
    %vm1781 = vcmp.lt.s32.totalorder %v666, 0
    %v1782 = vand.u32 %v666, 2139095040
    %v1783 = vshrl.u32 %v1782, 23
    %v1784 = vsub.s32 %v1783, 127
    %v1785 = vand.u32 2147483647, %v666
    %v1786 = vand.u32 %v1785, 8388607
    %v1787 = vor.u32 %v1786, 8388608
    %v1788 = vsub.s32 0, %v1787
    %v1789 = vadd.s32 %v1784, 1
    %vm1790 = vcmp.gt.s32.totalorder %v1789, 0
    %v1791 = vsel %vm1790, %v1789, 0
    %v1792 = vshrl.u32 %v1791, 5
    %v1793 = vand.u32 %v1791, 31
    %v1794 = vsub.s32 32, %v1793
    %v1795 = vshrl.u32 683565275, %v1794
    %v1796 = vshll.u32 683565275, %v1793
    %v1797 = vshrl.u32 2475754826, %v1794
    %v1798 = vor.u32 %v1796, %v1797
    %v1799 = vshll.u32 2475754826, %v1793
    %v1800 = vshrl.u32 2131351028, %v1794
    %v1801 = vor.u32 %v1799, %v1800
    %v1802 = vshll.u32 2131351028, %v1793
    %v1803 = vshrl.u32 2102212464, %v1794
    %v1804 = vor.u32 %v1802, %v1803
    %v1805 = vshll.u32 2102212464, %v1793
    %v1806 = vshrl.u32 920167782, %v1794
    %v1807 = vor.u32 %v1805, %v1806
    %v1808 = vshll.u32 920167782, %v1793
    %v1809 = vshrl.u32 1326507024, %v1794
    %v1810 = vor.u32 %v1808, %v1809
    %vm1811 = vcmp.lt.s32.totalorder %v1792, 1
    %vm1812 = vcmp.lt.s32.totalorder %v1792, 2
    %vm1813 = vcmp.lt.s32.totalorder %v1792, 3
    %vm1814 = vcmp.lt.s32.totalorder %v1792, 4
    %v1815 = vsel %vm1811, %v1795, %v1798
    %v1816 = vsel %vm1814, %v1804, 2102212464
    %v1817 = vsel %vm1813, %v1801, %v1816
    %v1818 = vsel %vm1812, %v1815, %v1817
    %v1819 = vsel %vm1811, %v1798, %v1801
    %v1820 = vsel %vm1814, %v1807, 920167782
    %v1821 = vsel %vm1813, %v1804, %v1820
    %v1822 = vsel %vm1812, %v1819, %v1821
    %v1823 = vsel %vm1811, %v1801, %v1804
    %v1824 = vsel %vm1814, %v1810, 1326507024
    %v1825 = vsel %vm1813, %v1807, %v1824
    %v1826 = vsel %vm1812, %v1823, %v1825
    %v1827 = vshll.u32 %v1787, 8
    %v1828 = vand.u32 %v1827, 65535
    %v1829 = vshrl.u32 %v1827, 16
    %v1830 = vand.u32 %v1826, 65535
    %v1831 = vshrl.u32 %v1826, 16
    %v1832 = vmul.u32 %v1828, %v1830
    %v1833 = vmul.u32 %v1828, %v1831
    %v1834 = vmul.u32 %v1829, %v1830
    %v1835 = vmul.u32 %v1829, %v1831
    %v1836 = vshll.u32 %v1833, 16
    %v1837 = vshrl.u32 %v1833, 16
    %v1838 = vshll.u32 %v1834, 16
    %v1839 = vshrl.u32 %v1834, 16
    %vm1840 = vc.u32 %v1832, %v1836
    %v1841 = vsel %vm1840, 1, 0
    %v1842 = vadd.s32 %v1832, %v1836
    %v1843 = vadd.s32 %v1835, %v1841
    %vm1844 = vc.u32 %v1842, %v1838
    %v1845 = vsel %vm1844, 1, 0
    %v1846 = vadd.s32 %v1842, %v1838
    %v1847 = vadd.s32 %v1843, %v1845
    %v1848 = vadd.s32 %v1847, %v1837
    %v1849 = vadd.s32 %v1848, %v1839
    %v1850 = vand.u32 %v1827, 65535
    %v1851 = vshrl.u32 %v1827, 16
    %v1852 = vand.u32 %v1822, 65535
    %v1853 = vshrl.u32 %v1822, 16
    %v1854 = vmul.u32 %v1850, %v1852
    %v1855 = vmul.u32 %v1850, %v1853
    %v1856 = vmul.u32 %v1851, %v1852
    %v1857 = vmul.u32 %v1851, %v1853
    %v1858 = vshll.u32 %v1855, 16
    %v1859 = vshrl.u32 %v1855, 16
    %v1860 = vshll.u32 %v1856, 16
    %v1861 = vshrl.u32 %v1856, 16
    %vm1862 = vc.u32 %v1854, %v1858
    %v1863 = vsel %vm1862, 1, 0
    %v1864 = vadd.s32 %v1854, %v1858
    %v1865 = vadd.s32 %v1857, %v1863
    %vm1866 = vc.u32 %v1864, %v1860
    %v1867 = vsel %vm1866, 1, 0
    %v1868 = vadd.s32 %v1864, %v1860
    %v1869 = vadd.s32 %v1865, %v1867
    %v1870 = vadd.s32 %v1869, %v1859
    %v1871 = vadd.s32 %v1870, %v1861
    %v1872 = vmul.u32 %v1827, %v1818
    %v1873 = vadd.s32 %v1849, %v1868
    %vm1874 = vc.u32 %v1849, %v1868
    %v1875 = vadd.s32 %v1871, 1
    %v1876 = vsel %vm1874, %v1875, %v1871
    %v1877 = vadd.s32 %v1872, %v1876
    %v1878 = vadd.s32 %v1877, 536870912
    %v1879 = vshrl.u32 %v1878, 30
    %v1880 = vshll.u32 %v1879, 30
    %v1881 = vsub.s32 %v1877, %v1880
    %vm1882 = vcmp.lt.s32.totalorder %v1881, 0
    %v1883 = vsub.s32 0, %v1881
    %v1884 = vsel %vm1882, %v1883, %v1881
    %v1885 = vclz %v1884
    %v1886 = vsub.s32 %v1885, 2
    %vm1887 = vcmp.gt.s32.totalorder 0, %v1886
    %v1888 = vsel %vm1887, 0, %v1886
    %v1889 = vsub.s32 32, %v1888
    %v1890 = vshll.u32 %v1881, %v1888
    %v1891 = vshrl.u32 %v1873, %v1889
    %v1892 = vor.u32 %v1890, %v1891
    %v1893 = vsub.s32 4294967266, %v1888
    %v1894 = vadd.s32 %v1893, 127
    %v1895 = vshll.u32 %v1894, 23
    %v1896 = vor.u32 4788187, %v1895
    %v1897 = vand.u32 2147483647, %v1896
    %v1899 = vcvt.s32.f32 %v1892
    %v1900 = vmul.f32 %v1899, %v1897
    %v1901 = vxor.u32 %v1900, 2147483648
    %v1902 = vsel %vm1781, %v1901, %v1900
    %v1903 = vsub.s32 4, %v1879
    %v1904 = vsel %vm1781, %v1903, %v1879
    %v1905 = vsel %vm1780, %v666, %v1902
    %v1906 = vsel %vm1780, 0, %v1904
    %v1907 = vmul.f32 %v1905, %v1905
    %v1908 = vmul.f32 %v1907, -0.001358992
    %v1909 = vadd.f32 %v1908, 0.041655596
    %v1910 = vmul.f32 %v1907, %v1909
    %v1911 = vadd.f32 %v1910, -0.4999988
    %v1912 = vmul.f32 %v1907, %v1911
    %v1913 = vadd.f32 1.0, %v1912
    %v1914 = vmul.f32 %v1905, %v1905
    %v1915 = vmul.f32 %v1914, -0.00019511016
    %v1916 = vadd.f32 %v1915, 0.008332121
    %v1917 = vmul.f32 %v1914, %v1916
    %v1918 = vadd.f32 %v1917, -0.16666654
    %v1919 = vmul.f32 %v1914, %v1918
    %v1920 = vadd.f32 %v1919, 1.0
    %v1921 = vmul.f32 %v1920, %v1905
    %vm1922 = vweird.f32 %v666
    %v1923 = vadd.s32 %v1906, 3
    %v1924 = vand.u32 %v1923, 3
    %vm1925 = vcmp.lt.s32.totalorder %v1924, 2
    %vm1926 = vcmp.eq.s32.totalorder %v1924, 0
    %v1927 = vxor.u32 %v1921, 2147483648
    %v1928 = vsel %vm1926, %v1913, %v1927
    %vm1929 = vcmp.eq.s32.totalorder %v1924, 2
    %v1930 = vxor.u32 %v1913, 2147483648
    %v1931 = vsel %vm1929, %v1930, %v1921
    %v1932 = vsel %vm1925, %v1928, %v1931
    %v1933 = vsel %vm1922, nan, %v1932
    %v1934 = vmul.f32 %v687, %v1468
    %v1935 = vmul.f32 %v689, %v1623
    %v1936 = vmul.f32 %v691, %v1778
    %v1937 = vmul.f32 %v693, %v1933
    %v1938 = vsel %vm669, %v1310, 0.0
    %1939 = vadd.xlane.f32.xlu0 %v1938
    %v1940 = vpop.xlane.xlu0 %1939
    %v1941 = vsel %vm669, %v1311, 0.0
    %1942 = vadd.xlane.f32.xlu0 %v1941
    %v1943 = vpop.xlane.xlu0 %1942
    %v1944 = vsel %vm669, %v1312, 0.0
    %1945 = vadd.xlane.f32.xlu0 %v1944
    %v1946 = vpop.xlane.xlu0 %1945
    %v1947 = vsel %vm669, %v1313, 0.0
    %1948 = vadd.xlane.f32.xlu0 %v1947
    %v1949 = vpop.xlane.xlu0 %1948
    %v1950 = vsel %vm669, %v1934, 0.0
    %1951 = vadd.xlane.f32.xlu0 %v1950
    %v1952 = vpop.xlane.xlu0 %1951
    %v1953 = vsel %vm669, %v1935, 0.0
    %1954 = vadd.xlane.f32.xlu0 %v1953
    %v1955 = vpop.xlane.xlu0 %1954
    %v1956 = vsel %vm669, %v1936, 0.0
    %1957 = vadd.xlane.f32.xlu0 %v1956
    %v1958 = vpop.xlane.xlu0 %1957
    %v1959 = vsel %vm669, %v1937, 0.0
    %1960 = vadd.xlane.f32.xlu0 %v1959
    %v1961 = vpop.xlane.xlu0 %1960
    %v1962 = vmul.f32 %v1940, %v1940
    %v1963 = vmul.f32 %v1943, %v1943
    %v1964 = vmul.f32 %v1946, %v1946
    %v1965 = vmul.f32 %v1949, %v1949
    %v1966 = vmul.f32 %v1952, %v1952
    %v1967 = vmul.f32 %v1955, %v1955
    %v1968 = vmul.f32 %v1958, %v1958
    %v1969 = vmul.f32 %v1961, %v1961
    %v1970 = vadd.f32 %v1962, %v1966
    %v1971 = vadd.f32 %v1963, %v1967
    %v1972 = vadd.f32 %v1964, %v1968
    %v1973 = vadd.f32 %v1965, %v1969
    %v1974 = vadd.f32 %v1970, 1e-12
    %v1975 = vadd.f32 %v1971, 1e-12
    %v1976 = vadd.f32 %v1972, 1e-12
    %v1977 = vadd.f32 %v1973, 1e-12
    %v1978 = vrcp.pop %v1974
    %v1979 = vmul.f32 %v1974, %v1978
    %v1980 = vsub.f32 1.0, %v1979
    %v1981 = vmul.f32 %v1978, %v1980
    %v1982 = vadd.f32 %v1978, %v1981
    %vm1983 = vweird.f32 %v1974
    %vm1984 = vweird.f32 %v1978
    %vm1985 = vmor %vm1983, %vm1984
    %v1986 = vsel %vm1985, %v1978, %v1982
    %v1987 = vand.u32 2147483647, %v1974
    %vm1988 = vcmp.eq.f32.partialorder %v1987, 8.507059e+37
    %v1989 = vand.u32 %v1974, 2147483648
    %v1990 = vor.u32 1.1754944e-38, %v1989
    %v1991 = vsel %vm1988, %v1990, %v1986
    %v1992 = vmul.f32 1.0, %v1991
    %v1993 = vrcp.pop %v1975
    %v1994 = vmul.f32 %v1975, %v1993
    %v1995 = vsub.f32 1.0, %v1994
    %v1996 = vmul.f32 %v1993, %v1995
    %v1997 = vadd.f32 %v1993, %v1996
    %vm1998 = vweird.f32 %v1975
    %vm1999 = vweird.f32 %v1993
    %vm2000 = vmor %vm1998, %vm1999
    %v2001 = vsel %vm2000, %v1993, %v1997
    %v2002 = vand.u32 2147483647, %v1975
    %vm2003 = vcmp.eq.f32.partialorder %v2002, 8.507059e+37
    %v2004 = vand.u32 %v1975, 2147483648
    %v2005 = vor.u32 1.1754944e-38, %v2004
    %v2006 = vsel %vm2003, %v2005, %v2001
    %v2007 = vmul.f32 1.0, %v2006
    %v2008 = vrcp.pop %v1976
    %v2009 = vmul.f32 %v1976, %v2008
    %v2010 = vsub.f32 1.0, %v2009
    %v2011 = vmul.f32 %v2008, %v2010
    %v2012 = vadd.f32 %v2008, %v2011
    %vm2013 = vweird.f32 %v1976
    %vm2014 = vweird.f32 %v2008
    %vm2015 = vmor %vm2013, %vm2014
    %v2016 = vsel %vm2015, %v2008, %v2012
    %v2017 = vand.u32 2147483647, %v1976
    %vm2018 = vcmp.eq.f32.partialorder %v2017, 8.507059e+37
    %v2019 = vand.u32 %v1976, 2147483648
    %v2020 = vor.u32 1.1754944e-38, %v2019
    %v2021 = vsel %vm2018, %v2020, %v2016
    %v2022 = vmul.f32 1.0, %v2021
    %v2023 = vrcp.pop %v1977
    %v2024 = vmul.f32 %v1977, %v2023
    %v2025 = vsub.f32 1.0, %v2024
    %v2026 = vmul.f32 %v2023, %v2025
    %v2027 = vadd.f32 %v2023, %v2026
    %vm2028 = vweird.f32 %v1977
    %vm2029 = vweird.f32 %v2023
    %vm2030 = vmor %vm2028, %vm2029
    %v2031 = vsel %vm2030, %v2023, %v2027
    %v2032 = vand.u32 2147483647, %v1977
    %vm2033 = vcmp.eq.f32.partialorder %v2032, 8.507059e+37
    %v2034 = vand.u32 %v1977, 2147483648
    %v2035 = vor.u32 1.1754944e-38, %v2034
    %v2036 = vsel %vm2033, %v2035, %v2031
    %v2037 = vmul.f32 1.0, %v2036
    %v2038 = vmul.f32 %v1310, %v1940
    %v2039 = vmul.f32 %v1311, %v1943
    %v2040 = vmul.f32 %v1312, %v1946
    %v2041 = vmul.f32 %v1313, %v1949
    %v2042 = vmul.f32 %v1934, %v1952
    %v2043 = vmul.f32 %v1935, %v1955
    %v2044 = vmul.f32 %v1936, %v1958
    %v2045 = vmul.f32 %v1937, %v1961
    %v2046 = vadd.f32 %v2038, %v2042
    %v2047 = vadd.f32 %v2039, %v2043
    %v2048 = vadd.f32 %v2040, %v2044
    %v2049 = vadd.f32 %v2041, %v2045
    %v2050 = vmul.f32 %v2046, %v1992
    %v2051 = vmul.f32 %v2047, %v2007
    %v2052 = vmul.f32 %v2048, %v2022
    %v2053 = vmul.f32 %v2049, %v2037
    %v2054 = vpack.c.bf16 %v2050, %v2050
    %v2055 = vpack.c.bf16 %v2051, %v2051
    %v2056 = vpack.c.bf16 %v2052, %v2052
    %v2057 = vpack.c.bf16 %v2053, %v2053
    %v2058 = vmul.f32 %v1934, %v1940
    %v2059 = vmul.f32 %v1935, %v1943
    %v2060 = vmul.f32 %v1936, %v1946
    %v2061 = vmul.f32 %v1937, %v1949
    %v2062 = vmul.f32 %v1310, %v1952
    %v2063 = vmul.f32 %v1311, %v1955
    %v2064 = vmul.f32 %v1312, %v1958
    %v2065 = vmul.f32 %v1313, %v1961
    %v2066 = vsub.f32 %v2058, %v2062
    %v2067 = vsub.f32 %v2059, %v2063
    %v2068 = vsub.f32 %v2060, %v2064
    %v2069 = vsub.f32 %v2061, %v2065
    %v2070 = vmul.f32 %v2066, %v1992
    %v2071 = vmul.f32 %v2067, %v2007
    %v2072 = vmul.f32 %v2068, %v2022
    %v2073 = vmul.f32 %v2069, %v2037
    %v2074 = vpack.c.bf16 %v2070, %v2070
    %v2075 = vpack.c.bf16 %v2071, %v2071
    %v2076 = vpack.c.bf16 %v2072, %v2072
    %v2077 = vpack.c.bf16 %v2073, %v2073
    %v2079 = vsel %vm669, %v2074, 0
    %vm2081 = vcmask 1043456
    %v2082 = vsel %vm2081, %v514, 0
    %2084 = vmatpush.bf16.msra.mxu0 0
    %2085 = vmatpush.bf16.msra.mxu0 0
    %2086 = vmatpush.bf16.msra.mxu0 0
    %2087 = vmatpush.bf16.msra.mxu0 0
    %2088 = vmatpush.bf16.msra.mxu0 0
    %2089 = vmatpush.bf16.msra.mxu0 0
    %2090 = vmatpush.bf16.msra.mxu0 0
    %2091 = vmatpush.bf16.msra.mxu0 %v2082
    %2092 = vmatmul.bf16.gmra.mxu0 %v2079
    %v2093 = vpop.f32.mrf.mxu0
    %v2094 = vadd.f32 0.0, %v2093
    %v2095 = vpop.f32.mrf.mxu0
    %2096 = vdwg.mxu0
    %v2098 = vsel %vm669, %v2075, 0
    %v2100 = vsel %vm2081, %v517, 0
    %2102 = vmatpush.bf16.msra.mxu0 0
    %2103 = vmatpush.bf16.msra.mxu0 0
    %2104 = vmatpush.bf16.msra.mxu0 0
    %2105 = vmatpush.bf16.msra.mxu0 0
    %2106 = vmatpush.bf16.msra.mxu0 0
    %2107 = vmatpush.bf16.msra.mxu0 0
    %2108 = vmatpush.bf16.msra.mxu0 0
    %2109 = vmatpush.bf16.msra.mxu0 %v2100
    %2110 = vmatmul.bf16.gmra.mxu0 %v2098
    %v2111 = vpop.f32.mrf.mxu0
    %v2112 = vadd.f32 0.0, %v2111
    %v2113 = vpop.f32.mrf.mxu0
    %2114 = vdwg.mxu0
    %v2116 = vsel %vm669, %v2076, 0
    %v2118 = vsel %vm2081, %v520, 0
    %2120 = vmatpush.bf16.msra.mxu0 0
    %2121 = vmatpush.bf16.msra.mxu0 0
    %2122 = vmatpush.bf16.msra.mxu0 0
    %2123 = vmatpush.bf16.msra.mxu0 0
    %2124 = vmatpush.bf16.msra.mxu0 0
    %2125 = vmatpush.bf16.msra.mxu0 0
    %2126 = vmatpush.bf16.msra.mxu0 0
    %2127 = vmatpush.bf16.msra.mxu0 %v2118
    %2128 = vmatmul.bf16.gmra.mxu0 %v2116
    %v2129 = vpop.f32.mrf.mxu0
    %v2130 = vadd.f32 0.0, %v2129
    %v2131 = vpop.f32.mrf.mxu0
    %2132 = vdwg.mxu0
    %v2134 = vsel %vm669, %v2077, 0
    %v2136 = vsel %vm2081, %v523, 0
    %2138 = vmatpush.bf16.msra.mxu0 0
    %2139 = vmatpush.bf16.msra.mxu0 0
    %2140 = vmatpush.bf16.msra.mxu0 0
    %2141 = vmatpush.bf16.msra.mxu0 0
    %2142 = vmatpush.bf16.msra.mxu0 0
    %2143 = vmatpush.bf16.msra.mxu0 0
    %2144 = vmatpush.bf16.msra.mxu0 0
    %2145 = vmatpush.bf16.msra.mxu0 %v2136
    %2146 = vmatmul.bf16.gmra.mxu0 %v2134
    %v2147 = vpop.f32.mrf.mxu0
    %v2148 = vadd.f32 0.0, %v2147
    %v2149 = vpop.f32.mrf.mxu0
    %2150 = vdwg.mxu0
    %2151 = vrot.lane.b32.xlu0 %v471, 64
    %v2152 = vpop.permute.xlu0 %2151
    %v2154 = vsel %vm669, %v2054, 0
    %v2157 = vsel %vm2081, %v2152, 0
    %2159 = vmatpush.bf16.msra.mxu0 0
    %2160 = vmatpush.bf16.msra.mxu0 0
    %2161 = vmatpush.bf16.msra.mxu0 0
    %2162 = vmatpush.bf16.msra.mxu0 0
    %2163 = vmatpush.bf16.msra.mxu0 0
    %2164 = vmatpush.bf16.msra.mxu0 0
    %2165 = vmatpush.bf16.msra.mxu0 0
    %2166 = vmatpush.bf16.msra.mxu0 %v2157
    %2167 = vmatmul.bf16.gmra.mxu0 %v2154
    %v2168 = vpop.f32.mrf.mxu0
    %v2169 = vadd.f32 %v2094, %v2168
    %v2170 = vpop.f32.mrf.mxu0
    %2171 = vdwg.mxu0
    %2172 = vrot.lane.b32.xlu0 %v472, 64
    %v2173 = vpop.permute.xlu0 %2172
    %v2175 = vsel %vm669, %v2055, 0
    %v2178 = vsel %vm2081, %v2173, 0
    %2180 = vmatpush.bf16.msra.mxu0 0
    %2181 = vmatpush.bf16.msra.mxu0 0
    %2182 = vmatpush.bf16.msra.mxu0 0
    %2183 = vmatpush.bf16.msra.mxu0 0
    %2184 = vmatpush.bf16.msra.mxu0 0
    %2185 = vmatpush.bf16.msra.mxu0 0
    %2186 = vmatpush.bf16.msra.mxu0 0
    %2187 = vmatpush.bf16.msra.mxu0 %v2178
    %2188 = vmatmul.bf16.gmra.mxu0 %v2175
    %v2189 = vpop.f32.mrf.mxu0
    %v2190 = vadd.f32 %v2112, %v2189
    %v2191 = vpop.f32.mrf.mxu0
    %2192 = vdwg.mxu0
    %2193 = vrot.lane.b32.xlu0 %v473, 64
    %v2194 = vpop.permute.xlu0 %2193
    %v2196 = vsel %vm669, %v2056, 0
    %v2199 = vsel %vm2081, %v2194, 0
    %2201 = vmatpush.bf16.msra.mxu0 0
    %2202 = vmatpush.bf16.msra.mxu0 0
    %2203 = vmatpush.bf16.msra.mxu0 0
    %2204 = vmatpush.bf16.msra.mxu0 0
    %2205 = vmatpush.bf16.msra.mxu0 0
    %2206 = vmatpush.bf16.msra.mxu0 0
    %2207 = vmatpush.bf16.msra.mxu0 0
    %2208 = vmatpush.bf16.msra.mxu0 %v2199
    %2209 = vmatmul.bf16.gmra.mxu0 %v2196
    %v2210 = vpop.f32.mrf.mxu0
    %v2211 = vadd.f32 %v2130, %v2210
    %v2212 = vpop.f32.mrf.mxu0
    %2213 = vdwg.mxu0
    %2214 = vrot.lane.b32.xlu0 %v474, 64
    %v2215 = vpop.permute.xlu0 %2214
    %v2217 = vsel %vm669, %v2057, 0
    %v2220 = vsel %vm2081, %v2215, 0
    %2222 = vmatpush.bf16.msra.mxu0 0
    %2223 = vmatpush.bf16.msra.mxu0 0
    %2224 = vmatpush.bf16.msra.mxu0 0
    %2225 = vmatpush.bf16.msra.mxu0 0
    %2226 = vmatpush.bf16.msra.mxu0 0
    %2227 = vmatpush.bf16.msra.mxu0 0
    %2228 = vmatpush.bf16.msra.mxu0 0
    %2229 = vmatpush.bf16.msra.mxu0 %v2220
    %2230 = vmatmul.bf16.gmra.mxu0 %v2217
    %v2231 = vpop.f32.mrf.mxu0
    %v2232 = vadd.f32 %v2148, %v2231
    %v2233 = vpop.f32.mrf.mxu0
    %2234 = vdwg.mxu0
    %2235 = vrot.lane.b32.xlu0 %v423, 112
    %v2236 = vpop.permute.xlu0 %2235
    %2237 = vrot.lane.b32.xlu0 %v425, 112
    %v2238 = vpop.permute.xlu0 %2237
    %2239 = vrot.lane.b32.xlu0 %v427, 112
    %v2240 = vpop.permute.xlu0 %2239
    %2241 = vrot.lane.b32.xlu0 %v429, 112
    %v2242 = vpop.permute.xlu0 %2241
    %v2243 = vrot.slane %v2236, 4
    %v2244 = vrot.slane %v2238, 4
    %v2245 = vrot.slane %v2240, 4
    %v2246 = vrot.slane %v2242, 4
    %v2251 = vunpack.c.l.bf16 %v2243
    %v2252 = vunpack.c.l.bf16 %v2244
    %v2253 = vunpack.c.l.bf16 %v2245
    %v2254 = vunpack.c.l.bf16 %v2246
    %v2255 = vsub.f32 0.0, %v2251
    %v2256 = vsub.f32 0.0, %v2252
    %v2257 = vsub.f32 0.0, %v2253
    %v2258 = vsub.f32 0.0, %v2254
    %v2259 = vpack.c.bf16 %v2255, %v2255
    %v2260 = vpack.c.bf16 %v2256, %v2256
    %v2261 = vpack.c.bf16 %v2257, %v2257
    %v2262 = vpack.c.bf16 %v2258, %v2258
    %v2263 = vunpack.c.h.b16 %v423
    %v2264 = vunpack.c.h.b16 %v425
    %v2265 = vunpack.c.h.b16 %v427
    %v2266 = vunpack.c.h.b16 %v429
    %v2267 = vpack.c.b16 %v2263, %v2263
    %v2268 = vpack.c.b16 %v2264, %v2264
    %v2269 = vpack.c.b16 %v2265, %v2265
    %v2270 = vpack.c.b16 %v2266, %v2266
    %2271 = vrot.lane.b32.xlu0 %v2267, 16
    %v2272 = vpop.permute.xlu0 %2271
    %2273 = vrot.lane.b32.xlu0 %v2268, 16
    %v2274 = vpop.permute.xlu0 %2273
    %2275 = vrot.lane.b32.xlu0 %v2269, 16
    %v2276 = vpop.permute.xlu0 %2275
    %2277 = vrot.lane.b32.xlu0 %v2270, 16
    %v2278 = vpop.permute.xlu0 %2277
    %v2281 = vsel %vm483, %v2259, %v2272
    %v2284 = vsel %vm483, %v2260, %v2274
    %v2287 = vsel %vm483, %v2261, %v2276
    %v2290 = vsel %vm483, %v2262, %v2278
    %2291 = vrot.lane.b32.xlu0 %v423, 80
    %v2292 = vpop.permute.xlu0 %2291
    %2293 = vrot.lane.b32.xlu0 %v425, 80
    %v2294 = vpop.permute.xlu0 %2293
    %2295 = vrot.lane.b32.xlu0 %v427, 80
    %v2296 = vpop.permute.xlu0 %2295
    %2297 = vrot.lane.b32.xlu0 %v429, 80
    %v2298 = vpop.permute.xlu0 %2297
    %v2299 = vrot.slane %v2292, 4
    %v2300 = vrot.slane %v2294, 4
    %v2301 = vrot.slane %v2296, 4
    %v2302 = vrot.slane %v2298, 4
    %v2307 = vunpack.c.l.bf16 %v2299
    %v2308 = vunpack.c.l.bf16 %v2300
    %v2309 = vunpack.c.l.bf16 %v2301
    %v2310 = vunpack.c.l.bf16 %v2302
    %v2311 = vsub.f32 0.0, %v2307
    %v2312 = vsub.f32 0.0, %v2308
    %v2313 = vsub.f32 0.0, %v2309
    %v2314 = vsub.f32 0.0, %v2310
    %v2315 = vpack.c.bf16 %v2311, %v2311
    %v2316 = vpack.c.bf16 %v2312, %v2312
    %v2317 = vpack.c.bf16 %v2313, %v2313
    %v2318 = vpack.c.bf16 %v2314, %v2314
    %2319 = vrot.lane.b32.xlu0 %v2267, 112
    %v2320 = vpop.permute.xlu0 %2319
    %2321 = vrot.lane.b32.xlu0 %v2268, 112
    %v2322 = vpop.permute.xlu0 %2321
    %2323 = vrot.lane.b32.xlu0 %v2269, 112
    %v2324 = vpop.permute.xlu0 %2323
    %2325 = vrot.lane.b32.xlu0 %v2270, 112
    %v2326 = vpop.permute.xlu0 %2325
    %v2329 = vsel %vm483, %v2315, %v2320
    %v2332 = vsel %vm483, %v2316, %v2322
    %v2335 = vsel %vm483, %v2317, %v2324
    %v2338 = vsel %vm483, %v2318, %v2326
    %v2339 = vrot.slane %v423, 4
    %2340 = vrot.lane.b32.xlu0 %v471, 32
    %v2341 = vpop.permute.xlu0 %2340
    %v2343 = vsel %vm526, %v2341, 0
    %v2346 = vsel %vm526, %v2339, 0
    %2348 = vmatpush.bf16.xpose.msra.mxu0 0
    %2349 = vmatpush.bf16.xpose.msra.mxu0 0
    %2350 = vmatpush.bf16.xpose.msra.mxu0 0
    %2351 = vmatpush.bf16.xpose.msra.mxu0 0
    %2352 = vmatpush.bf16.xpose.msra.mxu0 0
    %2353 = vmatpush.bf16.xpose.msra.mxu0 0
    %2354 = vmatpush.bf16.xpose.msra.mxu0 0
    %2355 = vmatpush.bf16.xpose.msra.mxu0 %v2346
    %2356 = vmatmul.bf16.gmra.mxu0 %v2343
    %v2357 = vpop.f32.mrf.mxu0
    %v2358 = vadd.f32 0.0, %v2357
    %v2359 = vpop.f32.mrf.mxu0
    %2360 = vdwg.mxu0
    %v2361 = vrot.slane %v425, 4
    %2362 = vrot.lane.b32.xlu0 %v472, 32
    %v2363 = vpop.permute.xlu0 %2362
    %v2365 = vsel %vm526, %v2363, 0
    %v2368 = vsel %vm526, %v2361, 0
    %2370 = vmatpush.bf16.xpose.msra.mxu0 0
    %2371 = vmatpush.bf16.xpose.msra.mxu0 0
    %2372 = vmatpush.bf16.xpose.msra.mxu0 0
    %2373 = vmatpush.bf16.xpose.msra.mxu0 0
    %2374 = vmatpush.bf16.xpose.msra.mxu0 0
    %2375 = vmatpush.bf16.xpose.msra.mxu0 0
    %2376 = vmatpush.bf16.xpose.msra.mxu0 0
    %2377 = vmatpush.bf16.xpose.msra.mxu0 %v2368
    %2378 = vmatmul.bf16.gmra.mxu0 %v2365
    %v2379 = vpop.f32.mrf.mxu0
    %v2380 = vadd.f32 0.0, %v2379
    %v2381 = vpop.f32.mrf.mxu0
    %2382 = vdwg.mxu0
    %v2383 = vrot.slane %v427, 4
    %2384 = vrot.lane.b32.xlu0 %v473, 32
    %v2385 = vpop.permute.xlu0 %2384
    %v2387 = vsel %vm526, %v2385, 0
    %v2390 = vsel %vm526, %v2383, 0
    %2392 = vmatpush.bf16.xpose.msra.mxu0 0
    %2393 = vmatpush.bf16.xpose.msra.mxu0 0
    %2394 = vmatpush.bf16.xpose.msra.mxu0 0
    %2395 = vmatpush.bf16.xpose.msra.mxu0 0
    %2396 = vmatpush.bf16.xpose.msra.mxu0 0
    %2397 = vmatpush.bf16.xpose.msra.mxu0 0
    %2398 = vmatpush.bf16.xpose.msra.mxu0 0
    %2399 = vmatpush.bf16.xpose.msra.mxu0 %v2390
    %2400 = vmatmul.bf16.gmra.mxu0 %v2387
    %v2401 = vpop.f32.mrf.mxu0
    %v2402 = vadd.f32 0.0, %v2401
    %v2403 = vpop.f32.mrf.mxu0
    %2404 = vdwg.mxu0
    %v2405 = vrot.slane %v429, 4
    %2406 = vrot.lane.b32.xlu0 %v474, 32
    %v2407 = vpop.permute.xlu0 %2406
    %v2409 = vsel %vm526, %v2407, 0
    %v2412 = vsel %vm526, %v2405, 0
    %2414 = vmatpush.bf16.xpose.msra.mxu0 0
    %2415 = vmatpush.bf16.xpose.msra.mxu0 0
    %2416 = vmatpush.bf16.xpose.msra.mxu0 0
    %2417 = vmatpush.bf16.xpose.msra.mxu0 0
    %2418 = vmatpush.bf16.xpose.msra.mxu0 0
    %2419 = vmatpush.bf16.xpose.msra.mxu0 0
    %2420 = vmatpush.bf16.xpose.msra.mxu0 0
    %2421 = vmatpush.bf16.xpose.msra.mxu0 %v2412
    %2422 = vmatmul.bf16.gmra.mxu0 %v2409
    %v2423 = vpop.f32.mrf.mxu0
    %v2424 = vadd.f32 0.0, %v2423
    %v2425 = vpop.f32.mrf.mxu0
    %2426 = vdwg.mxu0
    %v2427 = vsel %vm526, %v2281, 0
    %2429 = vmatpush.bf16.xpose.msra.mxu0 0
    %2430 = vmatpush.bf16.xpose.msra.mxu0 0
    %2431 = vmatpush.bf16.xpose.msra.mxu0 0
    %2432 = vmatpush.bf16.xpose.msra.mxu0 0
    %2433 = vmatpush.bf16.xpose.msra.mxu0 0
    %2434 = vmatpush.bf16.xpose.msra.mxu0 0
    %2435 = vmatpush.bf16.xpose.msra.mxu0 0
    %2436 = vmatpush.bf16.xpose.msra.mxu0 %v2427
    %2437 = vmatmul.bf16.gmra.mxu0 %v2343
    %v2438 = vpop.f32.mrf.mxu0
    %v2439 = vadd.f32 0.0, %v2438
    %v2440 = vpop.f32.mrf.mxu0
    %2441 = vdwg.mxu0
    %v2442 = vsel %vm526, %v2284, 0
    %2444 = vmatpush.bf16.xpose.msra.mxu0 0
    %2445 = vmatpush.bf16.xpose.msra.mxu0 0
    %2446 = vmatpush.bf16.xpose.msra.mxu0 0
    %2447 = vmatpush.bf16.xpose.msra.mxu0 0
    %2448 = vmatpush.bf16.xpose.msra.mxu0 0
    %2449 = vmatpush.bf16.xpose.msra.mxu0 0
    %2450 = vmatpush.bf16.xpose.msra.mxu0 0
    %2451 = vmatpush.bf16.xpose.msra.mxu0 %v2442
    %2452 = vmatmul.bf16.gmra.mxu0 %v2365
    %v2453 = vpop.f32.mrf.mxu0
    %v2454 = vadd.f32 0.0, %v2453
    %v2455 = vpop.f32.mrf.mxu0
    %2456 = vdwg.mxu0
    %v2457 = vsel %vm526, %v2287, 0
    %2459 = vmatpush.bf16.xpose.msra.mxu0 0
    %2460 = vmatpush.bf16.xpose.msra.mxu0 0
    %2461 = vmatpush.bf16.xpose.msra.mxu0 0
    %2462 = vmatpush.bf16.xpose.msra.mxu0 0
    %2463 = vmatpush.bf16.xpose.msra.mxu0 0
    %2464 = vmatpush.bf16.xpose.msra.mxu0 0
    %2465 = vmatpush.bf16.xpose.msra.mxu0 0
    %2466 = vmatpush.bf16.xpose.msra.mxu0 %v2457
    %2467 = vmatmul.bf16.gmra.mxu0 %v2387
    %v2468 = vpop.f32.mrf.mxu0
    %v2469 = vadd.f32 0.0, %v2468
    %v2470 = vpop.f32.mrf.mxu0
    %2471 = vdwg.mxu0
    %v2472 = vsel %vm526, %v2290, 0
    %2474 = vmatpush.bf16.xpose.msra.mxu0 0
    %2475 = vmatpush.bf16.xpose.msra.mxu0 0
    %2476 = vmatpush.bf16.xpose.msra.mxu0 0
    %2477 = vmatpush.bf16.xpose.msra.mxu0 0
    %2478 = vmatpush.bf16.xpose.msra.mxu0 0
    %2479 = vmatpush.bf16.xpose.msra.mxu0 0
    %2480 = vmatpush.bf16.xpose.msra.mxu0 0
    %2481 = vmatpush.bf16.xpose.msra.mxu0 %v2472
    %2482 = vmatmul.bf16.gmra.mxu0 %v2409
    %v2483 = vpop.f32.mrf.mxu0
    %v2484 = vadd.f32 0.0, %v2483
    %v2485 = vpop.f32.mrf.mxu0
    %2486 = vdwg.mxu0
    %v2487 = vsel %vm669, %v2358, -inf
    %2488 = vmax.xlane.f32.xlu0 %v2487
    %v2489 = vpop.xlane.xlu0 %2488
    %v2490 = vsel %vm669, %v2380, -inf
    %2491 = vmax.xlane.f32.xlu0 %v2490
    %v2492 = vpop.xlane.xlu0 %2491
    %v2493 = vsel %vm669, %v2402, -inf
    %2494 = vmax.xlane.f32.xlu0 %v2493
    %v2495 = vpop.xlane.xlu0 %2494
    %v2496 = vsel %vm669, %v2424, -inf
    %2497 = vmax.xlane.f32.xlu0 %v2496
    %v2498 = vpop.xlane.xlu0 %2497
    %v2499 = vsub.f32 %v2358, %v2489
    %v2500 = vsub.f32 %v2380, %v2492
    %v2501 = vsub.f32 %v2402, %v2495
    %v2502 = vsub.f32 %v2424, %v2498
    %v2503 = vmul.f32 %v2499, 1.442695
    %v2504 = vpow.pop %v2503
    %v2505 = vmul.f32 %v2500, 1.442695
    %v2506 = vpow.pop %v2505
    %v2507 = vmul.f32 %v2501, 1.442695
    %v2508 = vpow.pop %v2507
    %v2509 = vmul.f32 %v2502, 1.442695
    %v2510 = vpow.pop %v2509
    %v2511 = vand.u32 2147483647, %v2439
    %vm2512 = vcmp.le.f32.partialorder %v2511, 0.7853982
    %vm2513 = vcmp.lt.s32.totalorder %v2439, 0
    %v2514 = vand.u32 %v2439, 2139095040
    %v2515 = vshrl.u32 %v2514, 23
    %v2516 = vsub.s32 %v2515, 127
    %v2517 = vand.u32 2147483647, %v2439
    %v2518 = vand.u32 %v2517, 8388607
    %v2519 = vor.u32 %v2518, 8388608
    %v2520 = vsub.s32 0, %v2519
    %v2521 = vadd.s32 %v2516, 1
    %vm2522 = vcmp.gt.s32.totalorder %v2521, 0
    %v2523 = vsel %vm2522, %v2521, 0
    %v2524 = vshrl.u32 %v2523, 5
    %v2525 = vand.u32 %v2523, 31
    %v2526 = vsub.s32 32, %v2525
    %v2527 = vshrl.u32 683565275, %v2526
    %v2528 = vshll.u32 683565275, %v2525
    %v2529 = vshrl.u32 2475754826, %v2526
    %v2530 = vor.u32 %v2528, %v2529
    %v2531 = vshll.u32 2475754826, %v2525
    %v2532 = vshrl.u32 2131351028, %v2526
    %v2533 = vor.u32 %v2531, %v2532
    %v2534 = vshll.u32 2131351028, %v2525
    %v2535 = vshrl.u32 2102212464, %v2526
    %v2536 = vor.u32 %v2534, %v2535
    %v2537 = vshll.u32 2102212464, %v2525
    %v2538 = vshrl.u32 920167782, %v2526
    %v2539 = vor.u32 %v2537, %v2538
    %v2540 = vshll.u32 920167782, %v2525
    %v2541 = vshrl.u32 1326507024, %v2526
    %v2542 = vor.u32 %v2540, %v2541
    %vm2543 = vcmp.lt.s32.totalorder %v2524, 1
    %vm2544 = vcmp.lt.s32.totalorder %v2524, 2
    %vm2545 = vcmp.lt.s32.totalorder %v2524, 3
    %vm2546 = vcmp.lt.s32.totalorder %v2524, 4
    %v2547 = vsel %vm2543, %v2527, %v2530
    %v2548 = vsel %vm2546, %v2536, 2102212464
    %v2549 = vsel %vm2545, %v2533, %v2548
    %v2550 = vsel %vm2544, %v2547, %v2549
    %v2551 = vsel %vm2543, %v2530, %v2533
    %v2552 = vsel %vm2546, %v2539, 920167782
    %v2553 = vsel %vm2545, %v2536, %v2552
    %v2554 = vsel %vm2544, %v2551, %v2553
    %v2555 = vsel %vm2543, %v2533, %v2536
    %v2556 = vsel %vm2546, %v2542, 1326507024
    %v2557 = vsel %vm2545, %v2539, %v2556
    %v2558 = vsel %vm2544, %v2555, %v2557
    %v2559 = vshll.u32 %v2519, 8
    %v2560 = vand.u32 %v2559, 65535
    %v2561 = vshrl.u32 %v2559, 16
    %v2562 = vand.u32 %v2558, 65535
    %v2563 = vshrl.u32 %v2558, 16
    %v2564 = vmul.u32 %v2560, %v2562
    %v2565 = vmul.u32 %v2560, %v2563
    %v2566 = vmul.u32 %v2561, %v2562
    %v2567 = vmul.u32 %v2561, %v2563
    %v2568 = vshll.u32 %v2565, 16
    %v2569 = vshrl.u32 %v2565, 16
    %v2570 = vshll.u32 %v2566, 16
    %v2571 = vshrl.u32 %v2566, 16
    %vm2572 = vc.u32 %v2564, %v2568
    %v2573 = vsel %vm2572, 1, 0
    %v2574 = vadd.s32 %v2564, %v2568
    %v2575 = vadd.s32 %v2567, %v2573
    %vm2576 = vc.u32 %v2574, %v2570
    %v2577 = vsel %vm2576, 1, 0
    %v2578 = vadd.s32 %v2574, %v2570
    %v2579 = vadd.s32 %v2575, %v2577
    %v2580 = vadd.s32 %v2579, %v2569
    %v2581 = vadd.s32 %v2580, %v2571
    %v2582 = vand.u32 %v2559, 65535
    %v2583 = vshrl.u32 %v2559, 16
    %v2584 = vand.u32 %v2554, 65535
    %v2585 = vshrl.u32 %v2554, 16
    %v2586 = vmul.u32 %v2582, %v2584
    %v2587 = vmul.u32 %v2582, %v2585
    %v2588 = vmul.u32 %v2583, %v2584
    %v2589 = vmul.u32 %v2583, %v2585
    %v2590 = vshll.u32 %v2587, 16
    %v2591 = vshrl.u32 %v2587, 16
    %v2592 = vshll.u32 %v2588, 16
    %v2593 = vshrl.u32 %v2588, 16
    %vm2594 = vc.u32 %v2586, %v2590
    %v2595 = vsel %vm2594, 1, 0
    %v2596 = vadd.s32 %v2586, %v2590
    %v2597 = vadd.s32 %v2589, %v2595
    %vm2598 = vc.u32 %v2596, %v2592
    %v2599 = vsel %vm2598, 1, 0
    %v2600 = vadd.s32 %v2596, %v2592
    %v2601 = vadd.s32 %v2597, %v2599
    %v2602 = vadd.s32 %v2601, %v2591
    %v2603 = vadd.s32 %v2602, %v2593
    %v2604 = vmul.u32 %v2559, %v2550
    %v2605 = vadd.s32 %v2581, %v2600
    %vm2606 = vc.u32 %v2581, %v2600
    %v2607 = vadd.s32 %v2603, 1
    %v2608 = vsel %vm2606, %v2607, %v2603
    %v2609 = vadd.s32 %v2604, %v2608
    %v2610 = vadd.s32 %v2609, 536870912
    %v2611 = vshrl.u32 %v2610, 30
    %v2612 = vshll.u32 %v2611, 30
    %v2613 = vsub.s32 %v2609, %v2612
    %vm2614 = vcmp.lt.s32.totalorder %v2613, 0
    %v2615 = vsub.s32 0, %v2613
    %v2616 = vsel %vm2614, %v2615, %v2613
    %v2617 = vclz %v2616
    %v2618 = vsub.s32 %v2617, 2
    %vm2619 = vcmp.gt.s32.totalorder 0, %v2618
    %v2620 = vsel %vm2619, 0, %v2618
    %v2621 = vsub.s32 32, %v2620
    %v2622 = vshll.u32 %v2613, %v2620
    %v2623 = vshrl.u32 %v2605, %v2621
    %v2624 = vor.u32 %v2622, %v2623
    %v2625 = vsub.s32 4294967266, %v2620
    %v2626 = vadd.s32 %v2625, 127
    %v2627 = vshll.u32 %v2626, 23
    %v2628 = vor.u32 4788187, %v2627
    %v2629 = vand.u32 2147483647, %v2628
    %v2631 = vcvt.s32.f32 %v2624
    %v2632 = vmul.f32 %v2631, %v2629
    %v2633 = vxor.u32 %v2632, 2147483648
    %v2634 = vsel %vm2513, %v2633, %v2632
    %v2635 = vsub.s32 4, %v2611
    %v2636 = vsel %vm2513, %v2635, %v2611
    %v2637 = vsel %vm2512, %v2439, %v2634
    %v2638 = vsel %vm2512, 0, %v2636
    %v2639 = vmul.f32 %v2637, %v2637
    %v2640 = vmul.f32 %v2639, -0.001358992
    %v2641 = vadd.f32 %v2640, 0.041655596
    %v2642 = vmul.f32 %v2639, %v2641
    %v2643 = vadd.f32 %v2642, -0.4999988
    %v2644 = vmul.f32 %v2639, %v2643
    %v2645 = vadd.f32 1.0, %v2644
    %v2646 = vmul.f32 %v2637, %v2637
    %v2647 = vmul.f32 %v2646, -0.00019511016
    %v2648 = vadd.f32 %v2647, 0.008332121
    %v2649 = vmul.f32 %v2646, %v2648
    %v2650 = vadd.f32 %v2649, -0.16666654
    %v2651 = vmul.f32 %v2646, %v2650
    %v2652 = vadd.f32 %v2651, 1.0
    %v2653 = vmul.f32 %v2652, %v2637
    %vm2654 = vweird.f32 %v2439
    %v2655 = vand.u32 %v2638, 3
    %vm2656 = vcmp.lt.s32.totalorder %v2655, 2
    %vm2657 = vcmp.eq.s32.totalorder %v2655, 0
    %v2658 = vxor.u32 %v2653, 2147483648
    %v2659 = vsel %vm2657, %v2645, %v2658
    %vm2660 = vcmp.eq.s32.totalorder %v2655, 2
    %v2661 = vxor.u32 %v2645, 2147483648
    %v2662 = vsel %vm2660, %v2661, %v2653
    %v2663 = vsel %vm2656, %v2659, %v2662
    %v2664 = vsel %vm2654, nan, %v2663
    %v2665 = vand.u32 2147483647, %v2454
    %vm2666 = vcmp.le.f32.partialorder %v2665, 0.7853982
    %vm2667 = vcmp.lt.s32.totalorder %v2454, 0
    %v2668 = vand.u32 %v2454, 2139095040
    %v2669 = vshrl.u32 %v2668, 23
    %v2670 = vsub.s32 %v2669, 127
    %v2671 = vand.u32 2147483647, %v2454
    %v2672 = vand.u32 %v2671, 8388607
    %v2673 = vor.u32 %v2672, 8388608
    %v2674 = vsub.s32 0, %v2673
    %v2675 = vadd.s32 %v2670, 1
    %vm2676 = vcmp.gt.s32.totalorder %v2675, 0
    %v2677 = vsel %vm2676, %v2675, 0
    %v2678 = vshrl.u32 %v2677, 5
    %v2679 = vand.u32 %v2677, 31
    %v2680 = vsub.s32 32, %v2679
    %v2681 = vshrl.u32 683565275, %v2680
    %v2682 = vshll.u32 683565275, %v2679
    %v2683 = vshrl.u32 2475754826, %v2680
    %v2684 = vor.u32 %v2682, %v2683
    %v2685 = vshll.u32 2475754826, %v2679
    %v2686 = vshrl.u32 2131351028, %v2680
    %v2687 = vor.u32 %v2685, %v2686
    %v2688 = vshll.u32 2131351028, %v2679
    %v2689 = vshrl.u32 2102212464, %v2680
    %v2690 = vor.u32 %v2688, %v2689
    %v2691 = vshll.u32 2102212464, %v2679
    %v2692 = vshrl.u32 920167782, %v2680
    %v2693 = vor.u32 %v2691, %v2692
    %v2694 = vshll.u32 920167782, %v2679
    %v2695 = vshrl.u32 1326507024, %v2680
    %v2696 = vor.u32 %v2694, %v2695
    %vm2697 = vcmp.lt.s32.totalorder %v2678, 1
    %vm2698 = vcmp.lt.s32.totalorder %v2678, 2
    %vm2699 = vcmp.lt.s32.totalorder %v2678, 3
    %vm2700 = vcmp.lt.s32.totalorder %v2678, 4
    %v2701 = vsel %vm2697, %v2681, %v2684
    %v2702 = vsel %vm2700, %v2690, 2102212464
    %v2703 = vsel %vm2699, %v2687, %v2702
    %v2704 = vsel %vm2698, %v2701, %v2703
    %v2705 = vsel %vm2697, %v2684, %v2687
    %v2706 = vsel %vm2700, %v2693, 920167782
    %v2707 = vsel %vm2699, %v2690, %v2706
    %v2708 = vsel %vm2698, %v2705, %v2707
    %v2709 = vsel %vm2697, %v2687, %v2690
    %v2710 = vsel %vm2700, %v2696, 1326507024
    %v2711 = vsel %vm2699, %v2693, %v2710
    %v2712 = vsel %vm2698, %v2709, %v2711
    %v2713 = vshll.u32 %v2673, 8
    %v2714 = vand.u32 %v2713, 65535
    %v2715 = vshrl.u32 %v2713, 16
    %v2716 = vand.u32 %v2712, 65535
    %v2717 = vshrl.u32 %v2712, 16
    %v2718 = vmul.u32 %v2714, %v2716
    %v2719 = vmul.u32 %v2714, %v2717
    %v2720 = vmul.u32 %v2715, %v2716
    %v2721 = vmul.u32 %v2715, %v2717
    %v2722 = vshll.u32 %v2719, 16
    %v2723 = vshrl.u32 %v2719, 16
    %v2724 = vshll.u32 %v2720, 16
    %v2725 = vshrl.u32 %v2720, 16
    %vm2726 = vc.u32 %v2718, %v2722
    %v2727 = vsel %vm2726, 1, 0
    %v2728 = vadd.s32 %v2718, %v2722
    %v2729 = vadd.s32 %v2721, %v2727
    %vm2730 = vc.u32 %v2728, %v2724
    %v2731 = vsel %vm2730, 1, 0
    %v2732 = vadd.s32 %v2728, %v2724
    %v2733 = vadd.s32 %v2729, %v2731
    %v2734 = vadd.s32 %v2733, %v2723
    %v2735 = vadd.s32 %v2734, %v2725
    %v2736 = vand.u32 %v2713, 65535
    %v2737 = vshrl.u32 %v2713, 16
    %v2738 = vand.u32 %v2708, 65535
    %v2739 = vshrl.u32 %v2708, 16
    %v2740 = vmul.u32 %v2736, %v2738
    %v2741 = vmul.u32 %v2736, %v2739
    %v2742 = vmul.u32 %v2737, %v2738
    %v2743 = vmul.u32 %v2737, %v2739
    %v2744 = vshll.u32 %v2741, 16
    %v2745 = vshrl.u32 %v2741, 16
    %v2746 = vshll.u32 %v2742, 16
    %v2747 = vshrl.u32 %v2742, 16
    %vm2748 = vc.u32 %v2740, %v2744
    %v2749 = vsel %vm2748, 1, 0
    %v2750 = vadd.s32 %v2740, %v2744
    %v2751 = vadd.s32 %v2743, %v2749
    %vm2752 = vc.u32 %v2750, %v2746
    %v2753 = vsel %vm2752, 1, 0
    %v2754 = vadd.s32 %v2750, %v2746
    %v2755 = vadd.s32 %v2751, %v2753
    %v2756 = vadd.s32 %v2755, %v2745
    %v2757 = vadd.s32 %v2756, %v2747
    %v2758 = vmul.u32 %v2713, %v2704
    %v2759 = vadd.s32 %v2735, %v2754
    %vm2760 = vc.u32 %v2735, %v2754
    %v2761 = vadd.s32 %v2757, 1
    %v2762 = vsel %vm2760, %v2761, %v2757
    %v2763 = vadd.s32 %v2758, %v2762
    %v2764 = vadd.s32 %v2763, 536870912
    %v2765 = vshrl.u32 %v2764, 30
    %v2766 = vshll.u32 %v2765, 30
    %v2767 = vsub.s32 %v2763, %v2766
    %vm2768 = vcmp.lt.s32.totalorder %v2767, 0
    %v2769 = vsub.s32 0, %v2767
    %v2770 = vsel %vm2768, %v2769, %v2767
    %v2771 = vclz %v2770
    %v2772 = vsub.s32 %v2771, 2
    %vm2773 = vcmp.gt.s32.totalorder 0, %v2772
    %v2774 = vsel %vm2773, 0, %v2772
    %v2775 = vsub.s32 32, %v2774
    %v2776 = vshll.u32 %v2767, %v2774
    %v2777 = vshrl.u32 %v2759, %v2775
    %v2778 = vor.u32 %v2776, %v2777
    %v2779 = vsub.s32 4294967266, %v2774
    %v2780 = vadd.s32 %v2779, 127
    %v2781 = vshll.u32 %v2780, 23
    %v2782 = vor.u32 4788187, %v2781
    %v2783 = vand.u32 2147483647, %v2782
    %v2785 = vcvt.s32.f32 %v2778
    %v2786 = vmul.f32 %v2785, %v2783
    %v2787 = vxor.u32 %v2786, 2147483648
    %v2788 = vsel %vm2667, %v2787, %v2786
    %v2789 = vsub.s32 4, %v2765
    %v2790 = vsel %vm2667, %v2789, %v2765
    %v2791 = vsel %vm2666, %v2454, %v2788
    %v2792 = vsel %vm2666, 0, %v2790
    %v2793 = vmul.f32 %v2791, %v2791
    %v2794 = vmul.f32 %v2793, -0.001358992
    %v2795 = vadd.f32 %v2794, 0.041655596
    %v2796 = vmul.f32 %v2793, %v2795
    %v2797 = vadd.f32 %v2796, -0.4999988
    %v2798 = vmul.f32 %v2793, %v2797
    %v2799 = vadd.f32 1.0, %v2798
    %v2800 = vmul.f32 %v2791, %v2791
    %v2801 = vmul.f32 %v2800, -0.00019511016
    %v2802 = vadd.f32 %v2801, 0.008332121
    %v2803 = vmul.f32 %v2800, %v2802
    %v2804 = vadd.f32 %v2803, -0.16666654
    %v2805 = vmul.f32 %v2800, %v2804
    %v2806 = vadd.f32 %v2805, 1.0
    %v2807 = vmul.f32 %v2806, %v2791
    %vm2808 = vweird.f32 %v2454
    %v2809 = vand.u32 %v2792, 3
    %vm2810 = vcmp.lt.s32.totalorder %v2809, 2
    %vm2811 = vcmp.eq.s32.totalorder %v2809, 0
    %v2812 = vxor.u32 %v2807, 2147483648
    %v2813 = vsel %vm2811, %v2799, %v2812
    %vm2814 = vcmp.eq.s32.totalorder %v2809, 2
    %v2815 = vxor.u32 %v2799, 2147483648
    %v2816 = vsel %vm2814, %v2815, %v2807
    %v2817 = vsel %vm2810, %v2813, %v2816
    %v2818 = vsel %vm2808, nan, %v2817
    %v2819 = vand.u32 2147483647, %v2469
    %vm2820 = vcmp.le.f32.partialorder %v2819, 0.7853982
    %vm2821 = vcmp.lt.s32.totalorder %v2469, 0
    %v2822 = vand.u32 %v2469, 2139095040
    %v2823 = vshrl.u32 %v2822, 23
    %v2824 = vsub.s32 %v2823, 127
    %v2825 = vand.u32 2147483647, %v2469
    %v2826 = vand.u32 %v2825, 8388607
    %v2827 = vor.u32 %v2826, 8388608
    %v2828 = vsub.s32 0, %v2827
    %v2829 = vadd.s32 %v2824, 1
    %vm2830 = vcmp.gt.s32.totalorder %v2829, 0
    %v2831 = vsel %vm2830, %v2829, 0
    %v2832 = vshrl.u32 %v2831, 5
    %v2833 = vand.u32 %v2831, 31
    %v2834 = vsub.s32 32, %v2833
    %v2835 = vshrl.u32 683565275, %v2834
    %v2836 = vshll.u32 683565275, %v2833
    %v2837 = vshrl.u32 2475754826, %v2834
    %v2838 = vor.u32 %v2836, %v2837
    %v2839 = vshll.u32 2475754826, %v2833
    %v2840 = vshrl.u32 2131351028, %v2834
    %v2841 = vor.u32 %v2839, %v2840
    %v2842 = vshll.u32 2131351028, %v2833
    %v2843 = vshrl.u32 2102212464, %v2834
    %v2844 = vor.u32 %v2842, %v2843
    %v2845 = vshll.u32 2102212464, %v2833
    %v2846 = vshrl.u32 920167782, %v2834
    %v2847 = vor.u32 %v2845, %v2846
    %v2848 = vshll.u32 920167782, %v2833
    %v2849 = vshrl.u32 1326507024, %v2834
    %v2850 = vor.u32 %v2848, %v2849
    %vm2851 = vcmp.lt.s32.totalorder %v2832, 1
    %vm2852 = vcmp.lt.s32.totalorder %v2832, 2
    %vm2853 = vcmp.lt.s32.totalorder %v2832, 3
    %vm2854 = vcmp.lt.s32.totalorder %v2832, 4
    %v2855 = vsel %vm2851, %v2835, %v2838
    %v2856 = vsel %vm2854, %v2844, 2102212464
    %v2857 = vsel %vm2853, %v2841, %v2856
    %v2858 = vsel %vm2852, %v2855, %v2857
    %v2859 = vsel %vm2851, %v2838, %v2841
    %v2860 = vsel %vm2854, %v2847, 920167782
    %v2861 = vsel %vm2853, %v2844, %v2860
    %v2862 = vsel %vm2852, %v2859, %v2861
    %v2863 = vsel %vm2851, %v2841, %v2844
    %v2864 = vsel %vm2854, %v2850, 1326507024
    %v2865 = vsel %vm2853, %v2847, %v2864
    %v2866 = vsel %vm2852, %v2863, %v2865
    %v2867 = vshll.u32 %v2827, 8
    %v2868 = vand.u32 %v2867, 65535
    %v2869 = vshrl.u32 %v2867, 16
    %v2870 = vand.u32 %v2866, 65535
    %v2871 = vshrl.u32 %v2866, 16
    %v2872 = vmul.u32 %v2868, %v2870
    %v2873 = vmul.u32 %v2868, %v2871
    %v2874 = vmul.u32 %v2869, %v2870
    %v2875 = vmul.u32 %v2869, %v2871
    %v2876 = vshll.u32 %v2873, 16
    %v2877 = vshrl.u32 %v2873, 16
    %v2878 = vshll.u32 %v2874, 16
    %v2879 = vshrl.u32 %v2874, 16
    %vm2880 = vc.u32 %v2872, %v2876
    %v2881 = vsel %vm2880, 1, 0
    %v2882 = vadd.s32 %v2872, %v2876
    %v2883 = vadd.s32 %v2875, %v2881
    %vm2884 = vc.u32 %v2882, %v2878
    %v2885 = vsel %vm2884, 1, 0
    %v2886 = vadd.s32 %v2882, %v2878
    %v2887 = vadd.s32 %v2883, %v2885
    %v2888 = vadd.s32 %v2887, %v2877
    %v2889 = vadd.s32 %v2888, %v2879
    %v2890 = vand.u32 %v2867, 65535
    %v2891 = vshrl.u32 %v2867, 16
    %v2892 = vand.u32 %v2862, 65535
    %v2893 = vshrl.u32 %v2862, 16
    %v2894 = vmul.u32 %v2890, %v2892
    %v2895 = vmul.u32 %v2890, %v2893
    %v2896 = vmul.u32 %v2891, %v2892
    %v2897 = vmul.u32 %v2891, %v2893
    %v2898 = vshll.u32 %v2895, 16
    %v2899 = vshrl.u32 %v2895, 16
    %v2900 = vshll.u32 %v2896, 16
    %v2901 = vshrl.u32 %v2896, 16
    %vm2902 = vc.u32 %v2894, %v2898
    %v2903 = vsel %vm2902, 1, 0
    %v2904 = vadd.s32 %v2894, %v2898
    %v2905 = vadd.s32 %v2897, %v2903
    %vm2906 = vc.u32 %v2904, %v2900
    %v2907 = vsel %vm2906, 1, 0
    %v2908 = vadd.s32 %v2904, %v2900
    %v2909 = vadd.s32 %v2905, %v2907
    %v2910 = vadd.s32 %v2909, %v2899
    %v2911 = vadd.s32 %v2910, %v2901
    %v2912 = vmul.u32 %v2867, %v2858
    %v2913 = vadd.s32 %v2889, %v2908
    %vm2914 = vc.u32 %v2889, %v2908
    %v2915 = vadd.s32 %v2911, 1
    %v2916 = vsel %vm2914, %v2915, %v2911
    %v2917 = vadd.s32 %v2912, %v2916
    %v2918 = vadd.s32 %v2917, 536870912
    %v2919 = vshrl.u32 %v2918, 30
    %v2920 = vshll.u32 %v2919, 30
    %v2921 = vsub.s32 %v2917, %v2920
    %vm2922 = vcmp.lt.s32.totalorder %v2921, 0
    %v2923 = vsub.s32 0, %v2921
    %v2924 = vsel %vm2922, %v2923, %v2921
    %v2925 = vclz %v2924
    %v2926 = vsub.s32 %v2925, 2
    %vm2927 = vcmp.gt.s32.totalorder 0, %v2926
    %v2928 = vsel %vm2927, 0, %v2926
    %v2929 = vsub.s32 32, %v2928
    %v2930 = vshll.u32 %v2921, %v2928
    %v2931 = vshrl.u32 %v2913, %v2929
    %v2932 = vor.u32 %v2930, %v2931
    %v2933 = vsub.s32 4294967266, %v2928
    %v2934 = vadd.s32 %v2933, 127
    %v2935 = vshll.u32 %v2934, 23
    %v2936 = vor.u32 4788187, %v2935
    %v2937 = vand.u32 2147483647, %v2936
    %v2939 = vcvt.s32.f32 %v2932
    %v2940 = vmul.f32 %v2939, %v2937
    %v2941 = vxor.u32 %v2940, 2147483648
    %v2942 = vsel %vm2821, %v2941, %v2940
    %v2943 = vsub.s32 4, %v2919
    %v2944 = vsel %vm2821, %v2943, %v2919
    %v2945 = vsel %vm2820, %v2469, %v2942
    %v2946 = vsel %vm2820, 0, %v2944
    %v2947 = vmul.f32 %v2945, %v2945
    %v2948 = vmul.f32 %v2947, -0.001358992
    %v2949 = vadd.f32 %v2948, 0.041655596
    %v2950 = vmul.f32 %v2947, %v2949
    %v2951 = vadd.f32 %v2950, -0.4999988
    %v2952 = vmul.f32 %v2947, %v2951
    %v2953 = vadd.f32 1.0, %v2952
    %v2954 = vmul.f32 %v2945, %v2945
    %v2955 = vmul.f32 %v2954, -0.00019511016
    %v2956 = vadd.f32 %v2955, 0.008332121
    %v2957 = vmul.f32 %v2954, %v2956
    %v2958 = vadd.f32 %v2957, -0.16666654
    %v2959 = vmul.f32 %v2954, %v2958
    %v2960 = vadd.f32 %v2959, 1.0
    %v2961 = vmul.f32 %v2960, %v2945
    %vm2962 = vweird.f32 %v2469
    %v2963 = vand.u32 %v2946, 3
    %vm2964 = vcmp.lt.s32.totalorder %v2963, 2
    %vm2965 = vcmp.eq.s32.totalorder %v2963, 0
    %v2966 = vxor.u32 %v2961, 2147483648
    %v2967 = vsel %vm2965, %v2953, %v2966
    %vm2968 = vcmp.eq.s32.totalorder %v2963, 2
    %v2969 = vxor.u32 %v2953, 2147483648
    %v2970 = vsel %vm2968, %v2969, %v2961
    %v2971 = vsel %vm2964, %v2967, %v2970
    %v2972 = vsel %vm2962, nan, %v2971
    %v2973 = vand.u32 2147483647, %v2484
    %vm2974 = vcmp.le.f32.partialorder %v2973, 0.7853982
    %vm2975 = vcmp.lt.s32.totalorder %v2484, 0
    %v2976 = vand.u32 %v2484, 2139095040
    %v2977 = vshrl.u32 %v2976, 23
    %v2978 = vsub.s32 %v2977, 127
    %v2979 = vand.u32 2147483647, %v2484
    %v2980 = vand.u32 %v2979, 8388607
    %v2981 = vor.u32 %v2980, 8388608
    %v2982 = vsub.s32 0, %v2981
    %v2983 = vadd.s32 %v2978, 1
    %vm2984 = vcmp.gt.s32.totalorder %v2983, 0
    %v2985 = vsel %vm2984, %v2983, 0
    %v2986 = vshrl.u32 %v2985, 5
    %v2987 = vand.u32 %v2985, 31
    %v2988 = vsub.s32 32, %v2987
    %v2989 = vshrl.u32 683565275, %v2988
    %v2990 = vshll.u32 683565275, %v2987
    %v2991 = vshrl.u32 2475754826, %v2988
    %v2992 = vor.u32 %v2990, %v2991
    %v2993 = vshll.u32 2475754826, %v2987
    %v2994 = vshrl.u32 2131351028, %v2988
    %v2995 = vor.u32 %v2993, %v2994
    %v2996 = vshll.u32 2131351028, %v2987
    %v2997 = vshrl.u32 2102212464, %v2988
    %v2998 = vor.u32 %v2996, %v2997
    %v2999 = vshll.u32 2102212464, %v2987
    %v3000 = vshrl.u32 920167782, %v2988
    %v3001 = vor.u32 %v2999, %v3000
    %v3002 = vshll.u32 920167782, %v2987
    %v3003 = vshrl.u32 1326507024, %v2988
    %v3004 = vor.u32 %v3002, %v3003
    %vm3005 = vcmp.lt.s32.totalorder %v2986, 1
    %vm3006 = vcmp.lt.s32.totalorder %v2986, 2
    %vm3007 = vcmp.lt.s32.totalorder %v2986, 3
    %vm3008 = vcmp.lt.s32.totalorder %v2986, 4
    %v3009 = vsel %vm3005, %v2989, %v2992
    %v3010 = vsel %vm3008, %v2998, 2102212464
    %v3011 = vsel %vm3007, %v2995, %v3010
    %v3012 = vsel %vm3006, %v3009, %v3011
    %v3013 = vsel %vm3005, %v2992, %v2995
    %v3014 = vsel %vm3008, %v3001, 920167782
    %v3015 = vsel %vm3007, %v2998, %v3014
    %v3016 = vsel %vm3006, %v3013, %v3015
    %v3017 = vsel %vm3005, %v2995, %v2998
    %v3018 = vsel %vm3008, %v3004, 1326507024
    %v3019 = vsel %vm3007, %v3001, %v3018
    %v3020 = vsel %vm3006, %v3017, %v3019
    %v3021 = vshll.u32 %v2981, 8
    %v3022 = vand.u32 %v3021, 65535
    %v3023 = vshrl.u32 %v3021, 16
    %v3024 = vand.u32 %v3020, 65535
    %v3025 = vshrl.u32 %v3020, 16
    %v3026 = vmul.u32 %v3022, %v3024
    %v3027 = vmul.u32 %v3022, %v3025
    %v3028 = vmul.u32 %v3023, %v3024
    %v3029 = vmul.u32 %v3023, %v3025
    %v3030 = vshll.u32 %v3027, 16
    %v3031 = vshrl.u32 %v3027, 16
    %v3032 = vshll.u32 %v3028, 16
    %v3033 = vshrl.u32 %v3028, 16
    %vm3034 = vc.u32 %v3026, %v3030
    %v3035 = vsel %vm3034, 1, 0
    %v3036 = vadd.s32 %v3026, %v3030
    %v3037 = vadd.s32 %v3029, %v3035
    %vm3038 = vc.u32 %v3036, %v3032
    %v3039 = vsel %vm3038, 1, 0
    %v3040 = vadd.s32 %v3036, %v3032
    %v3041 = vadd.s32 %v3037, %v3039
    %v3042 = vadd.s32 %v3041, %v3031
    %v3043 = vadd.s32 %v3042, %v3033
    %v3044 = vand.u32 %v3021, 65535
    %v3045 = vshrl.u32 %v3021, 16
    %v3046 = vand.u32 %v3016, 65535
    %v3047 = vshrl.u32 %v3016, 16
    %v3048 = vmul.u32 %v3044, %v3046
    %v3049 = vmul.u32 %v3044, %v3047
    %v3050 = vmul.u32 %v3045, %v3046
    %v3051 = vmul.u32 %v3045, %v3047
    %v3052 = vshll.u32 %v3049, 16
    %v3053 = vshrl.u32 %v3049, 16
    %v3054 = vshll.u32 %v3050, 16
    %v3055 = vshrl.u32 %v3050, 16
    %vm3056 = vc.u32 %v3048, %v3052
    %v3057 = vsel %vm3056, 1, 0
    %v3058 = vadd.s32 %v3048, %v3052
    %v3059 = vadd.s32 %v3051, %v3057
    %vm3060 = vc.u32 %v3058, %v3054
    %v3061 = vsel %vm3060, 1, 0
    %v3062 = vadd.s32 %v3058, %v3054
    %v3063 = vadd.s32 %v3059, %v3061
    %v3064 = vadd.s32 %v3063, %v3053
    %v3065 = vadd.s32 %v3064, %v3055
    %v3066 = vmul.u32 %v3021, %v3012
    %v3067 = vadd.s32 %v3043, %v3062
    %vm3068 = vc.u32 %v3043, %v3062
    %v3069 = vadd.s32 %v3065, 1
    %v3070 = vsel %vm3068, %v3069, %v3065
    %v3071 = vadd.s32 %v3066, %v3070
    %v3072 = vadd.s32 %v3071, 536870912
    %v3073 = vshrl.u32 %v3072, 30
    %v3074 = vshll.u32 %v3073, 30
    %v3075 = vsub.s32 %v3071, %v3074
    %vm3076 = vcmp.lt.s32.totalorder %v3075, 0
    %v3077 = vsub.s32 0, %v3075
    %v3078 = vsel %vm3076, %v3077, %v3075
    %v3079 = vclz %v3078
    %v3080 = vsub.s32 %v3079, 2
    %vm3081 = vcmp.gt.s32.totalorder 0, %v3080
    %v3082 = vsel %vm3081, 0, %v3080
    %v3083 = vsub.s32 32, %v3082
    %v3084 = vshll.u32 %v3075, %v3082
    %v3085 = vshrl.u32 %v3067, %v3083
    %v3086 = vor.u32 %v3084, %v3085
    %v3087 = vsub.s32 4294967266, %v3082
    %v3088 = vadd.s32 %v3087, 127
    %v3089 = vshll.u32 %v3088, 23
    %v3090 = vor.u32 4788187, %v3089
    %v3091 = vand.u32 2147483647, %v3090
    %v3093 = vcvt.s32.f32 %v3086
    %v3094 = vmul.f32 %v3093, %v3091
    %v3095 = vxor.u32 %v3094, 2147483648
    %v3096 = vsel %vm2975, %v3095, %v3094
    %v3097 = vsub.s32 4, %v3073
    %v3098 = vsel %vm2975, %v3097, %v3073
    %v3099 = vsel %vm2974, %v2484, %v3096
    %v3100 = vsel %vm2974, 0, %v3098
    %v3101 = vmul.f32 %v3099, %v3099
    %v3102 = vmul.f32 %v3101, -0.001358992
    %v3103 = vadd.f32 %v3102, 0.041655596
    %v3104 = vmul.f32 %v3101, %v3103
    %v3105 = vadd.f32 %v3104, -0.4999988
    %v3106 = vmul.f32 %v3101, %v3105
    %v3107 = vadd.f32 1.0, %v3106
    %v3108 = vmul.f32 %v3099, %v3099
    %v3109 = vmul.f32 %v3108, -0.00019511016
    %v3110 = vadd.f32 %v3109, 0.008332121
    %v3111 = vmul.f32 %v3108, %v3110
    %v3112 = vadd.f32 %v3111, -0.16666654
    %v3113 = vmul.f32 %v3108, %v3112
    %v3114 = vadd.f32 %v3113, 1.0
    %v3115 = vmul.f32 %v3114, %v3099
    %vm3116 = vweird.f32 %v2484
    %v3117 = vand.u32 %v3100, 3
    %vm3118 = vcmp.lt.s32.totalorder %v3117, 2
    %vm3119 = vcmp.eq.s32.totalorder %v3117, 0
    %v3120 = vxor.u32 %v3115, 2147483648
    %v3121 = vsel %vm3119, %v3107, %v3120
    %vm3122 = vcmp.eq.s32.totalorder %v3117, 2
    %v3123 = vxor.u32 %v3107, 2147483648
    %v3124 = vsel %vm3122, %v3123, %v3115
    %v3125 = vsel %vm3118, %v3121, %v3124
    %v3126 = vsel %vm3116, nan, %v3125
    %v3127 = vmul.f32 %v2504, %v2664
    %v3128 = vmul.f32 %v2506, %v2818
    %v3129 = vmul.f32 %v2508, %v2972
    %v3130 = vmul.f32 %v2510, %v3126
    %v3131 = vand.u32 2147483647, %v2439
    %vm3132 = vcmp.le.f32.partialorder %v3131, 0.7853982
    %vm3133 = vcmp.lt.s32.totalorder %v2439, 0
    %v3134 = vand.u32 %v2439, 2139095040
    %v3135 = vshrl.u32 %v3134, 23
    %v3136 = vsub.s32 %v3135, 127
    %v3137 = vand.u32 2147483647, %v2439
    %v3138 = vand.u32 %v3137, 8388607
    %v3139 = vor.u32 %v3138, 8388608
    %v3140 = vsub.s32 0, %v3139
    %v3141 = vadd.s32 %v3136, 1
    %vm3142 = vcmp.gt.s32.totalorder %v3141, 0
    %v3143 = vsel %vm3142, %v3141, 0
    %v3144 = vshrl.u32 %v3143, 5
    %v3145 = vand.u32 %v3143, 31
    %v3146 = vsub.s32 32, %v3145
    %v3147 = vshrl.u32 683565275, %v3146
    %v3148 = vshll.u32 683565275, %v3145
    %v3149 = vshrl.u32 2475754826, %v3146
    %v3150 = vor.u32 %v3148, %v3149
    %v3151 = vshll.u32 2475754826, %v3145
    %v3152 = vshrl.u32 2131351028, %v3146
    %v3153 = vor.u32 %v3151, %v3152
    %v3154 = vshll.u32 2131351028, %v3145
    %v3155 = vshrl.u32 2102212464, %v3146
    %v3156 = vor.u32 %v3154, %v3155
    %v3157 = vshll.u32 2102212464, %v3145
    %v3158 = vshrl.u32 920167782, %v3146
    %v3159 = vor.u32 %v3157, %v3158
    %v3160 = vshll.u32 920167782, %v3145
    %v3161 = vshrl.u32 1326507024, %v3146
    %v3162 = vor.u32 %v3160, %v3161
    %vm3163 = vcmp.lt.s32.totalorder %v3144, 1
    %vm3164 = vcmp.lt.s32.totalorder %v3144, 2
    %vm3165 = vcmp.lt.s32.totalorder %v3144, 3
    %vm3166 = vcmp.lt.s32.totalorder %v3144, 4
    %v3167 = vsel %vm3163, %v3147, %v3150
    %v3168 = vsel %vm3166, %v3156, 2102212464
    %v3169 = vsel %vm3165, %v3153, %v3168
    %v3170 = vsel %vm3164, %v3167, %v3169
    %v3171 = vsel %vm3163, %v3150, %v3153
    %v3172 = vsel %vm3166, %v3159, 920167782
    %v3173 = vsel %vm3165, %v3156, %v3172
    %v3174 = vsel %vm3164, %v3171, %v3173
    %v3175 = vsel %vm3163, %v3153, %v3156
    %v3176 = vsel %vm3166, %v3162, 1326507024
    %v3177 = vsel %vm3165, %v3159, %v3176
    %v3178 = vsel %vm3164, %v3175, %v3177
    %v3179 = vshll.u32 %v3139, 8
    %v3180 = vand.u32 %v3179, 65535
    %v3181 = vshrl.u32 %v3179, 16
    %v3182 = vand.u32 %v3178, 65535
    %v3183 = vshrl.u32 %v3178, 16
    %v3184 = vmul.u32 %v3180, %v3182
    %v3185 = vmul.u32 %v3180, %v3183
    %v3186 = vmul.u32 %v3181, %v3182
    %v3187 = vmul.u32 %v3181, %v3183
    %v3188 = vshll.u32 %v3185, 16
    %v3189 = vshrl.u32 %v3185, 16
    %v3190 = vshll.u32 %v3186, 16
    %v3191 = vshrl.u32 %v3186, 16
    %vm3192 = vc.u32 %v3184, %v3188
    %v3193 = vsel %vm3192, 1, 0
    %v3194 = vadd.s32 %v3184, %v3188
    %v3195 = vadd.s32 %v3187, %v3193
    %vm3196 = vc.u32 %v3194, %v3190
    %v3197 = vsel %vm3196, 1, 0
    %v3198 = vadd.s32 %v3194, %v3190
    %v3199 = vadd.s32 %v3195, %v3197
    %v3200 = vadd.s32 %v3199, %v3189
    %v3201 = vadd.s32 %v3200, %v3191
    %v3202 = vand.u32 %v3179, 65535
    %v3203 = vshrl.u32 %v3179, 16
    %v3204 = vand.u32 %v3174, 65535
    %v3205 = vshrl.u32 %v3174, 16
    %v3206 = vmul.u32 %v3202, %v3204
    %v3207 = vmul.u32 %v3202, %v3205
    %v3208 = vmul.u32 %v3203, %v3204
    %v3209 = vmul.u32 %v3203, %v3205
    %v3210 = vshll.u32 %v3207, 16
    %v3211 = vshrl.u32 %v3207, 16
    %v3212 = vshll.u32 %v3208, 16
    %v3213 = vshrl.u32 %v3208, 16
    %vm3214 = vc.u32 %v3206, %v3210
    %v3215 = vsel %vm3214, 1, 0
    %v3216 = vadd.s32 %v3206, %v3210
    %v3217 = vadd.s32 %v3209, %v3215
    %vm3218 = vc.u32 %v3216, %v3212
    %v3219 = vsel %vm3218, 1, 0
    %v3220 = vadd.s32 %v3216, %v3212
    %v3221 = vadd.s32 %v3217, %v3219
    %v3222 = vadd.s32 %v3221, %v3211
    %v3223 = vadd.s32 %v3222, %v3213
    %v3224 = vmul.u32 %v3179, %v3170
    %v3225 = vadd.s32 %v3201, %v3220
    %vm3226 = vc.u32 %v3201, %v3220
    %v3227 = vadd.s32 %v3223, 1
    %v3228 = vsel %vm3226, %v3227, %v3223
    %v3229 = vadd.s32 %v3224, %v3228
    %v3230 = vadd.s32 %v3229, 536870912
    %v3231 = vshrl.u32 %v3230, 30
    %v3232 = vshll.u32 %v3231, 30
    %v3233 = vsub.s32 %v3229, %v3232
    %vm3234 = vcmp.lt.s32.totalorder %v3233, 0
    %v3235 = vsub.s32 0, %v3233
    %v3236 = vsel %vm3234, %v3235, %v3233
    %v3237 = vclz %v3236
    %v3238 = vsub.s32 %v3237, 2
    %vm3239 = vcmp.gt.s32.totalorder 0, %v3238
    %v3240 = vsel %vm3239, 0, %v3238
    %v3241 = vsub.s32 32, %v3240
    %v3242 = vshll.u32 %v3233, %v3240
    %v3243 = vshrl.u32 %v3225, %v3241
    %v3244 = vor.u32 %v3242, %v3243
    %v3245 = vsub.s32 4294967266, %v3240
    %v3246 = vadd.s32 %v3245, 127
    %v3247 = vshll.u32 %v3246, 23
    %v3248 = vor.u32 4788187, %v3247
    %v3249 = vand.u32 2147483647, %v3248
    %v3251 = vcvt.s32.f32 %v3244
    %v3252 = vmul.f32 %v3251, %v3249
    %v3253 = vxor.u32 %v3252, 2147483648
    %v3254 = vsel %vm3133, %v3253, %v3252
    %v3255 = vsub.s32 4, %v3231
    %v3256 = vsel %vm3133, %v3255, %v3231
    %v3257 = vsel %vm3132, %v2439, %v3254
    %v3258 = vsel %vm3132, 0, %v3256
    %v3259 = vmul.f32 %v3257, %v3257
    %v3260 = vmul.f32 %v3259, -0.001358992
    %v3261 = vadd.f32 %v3260, 0.041655596
    %v3262 = vmul.f32 %v3259, %v3261
    %v3263 = vadd.f32 %v3262, -0.4999988
    %v3264 = vmul.f32 %v3259, %v3263
    %v3265 = vadd.f32 1.0, %v3264
    %v3266 = vmul.f32 %v3257, %v3257
    %v3267 = vmul.f32 %v3266, -0.00019511016
    %v3268 = vadd.f32 %v3267, 0.008332121
    %v3269 = vmul.f32 %v3266, %v3268
    %v3270 = vadd.f32 %v3269, -0.16666654
    %v3271 = vmul.f32 %v3266, %v3270
    %v3272 = vadd.f32 %v3271, 1.0
    %v3273 = vmul.f32 %v3272, %v3257
    %vm3274 = vweird.f32 %v2439
    %v3275 = vadd.s32 %v3258, 3
    %v3276 = vand.u32 %v3275, 3
    %vm3277 = vcmp.lt.s32.totalorder %v3276, 2
    %vm3278 = vcmp.eq.s32.totalorder %v3276, 0
    %v3279 = vxor.u32 %v3273, 2147483648
    %v3280 = vsel %vm3278, %v3265, %v3279
    %vm3281 = vcmp.eq.s32.totalorder %v3276, 2
    %v3282 = vxor.u32 %v3265, 2147483648
    %v3283 = vsel %vm3281, %v3282, %v3273
    %v3284 = vsel %vm3277, %v3280, %v3283
    %v3285 = vsel %vm3274, nan, %v3284
    %v3286 = vand.u32 2147483647, %v2454
    %vm3287 = vcmp.le.f32.partialorder %v3286, 0.7853982
    %vm3288 = vcmp.lt.s32.totalorder %v2454, 0
    %v3289 = vand.u32 %v2454, 2139095040
    %v3290 = vshrl.u32 %v3289, 23
    %v3291 = vsub.s32 %v3290, 127
    %v3292 = vand.u32 2147483647, %v2454
    %v3293 = vand.u32 %v3292, 8388607
    %v3294 = vor.u32 %v3293, 8388608
    %v3295 = vsub.s32 0, %v3294
    %v3296 = vadd.s32 %v3291, 1
    %vm3297 = vcmp.gt.s32.totalorder %v3296, 0
    %v3298 = vsel %vm3297, %v3296, 0
    %v3299 = vshrl.u32 %v3298, 5
    %v3300 = vand.u32 %v3298, 31
    %v3301 = vsub.s32 32, %v3300
    %v3302 = vshrl.u32 683565275, %v3301
    %v3303 = vshll.u32 683565275, %v3300
    %v3304 = vshrl.u32 2475754826, %v3301
    %v3305 = vor.u32 %v3303, %v3304
    %v3306 = vshll.u32 2475754826, %v3300
    %v3307 = vshrl.u32 2131351028, %v3301
    %v3308 = vor.u32 %v3306, %v3307
    %v3309 = vshll.u32 2131351028, %v3300
    %v3310 = vshrl.u32 2102212464, %v3301
    %v3311 = vor.u32 %v3309, %v3310
    %v3312 = vshll.u32 2102212464, %v3300
    %v3313 = vshrl.u32 920167782, %v3301
    %v3314 = vor.u32 %v3312, %v3313
    %v3315 = vshll.u32 920167782, %v3300
    %v3316 = vshrl.u32 1326507024, %v3301
    %v3317 = vor.u32 %v3315, %v3316
    %vm3318 = vcmp.lt.s32.totalorder %v3299, 1
    %vm3319 = vcmp.lt.s32.totalorder %v3299, 2
    %vm3320 = vcmp.lt.s32.totalorder %v3299, 3
    %vm3321 = vcmp.lt.s32.totalorder %v3299, 4
    %v3322 = vsel %vm3318, %v3302, %v3305
    %v3323 = vsel %vm3321, %v3311, 2102212464
    %v3324 = vsel %vm3320, %v3308, %v3323
    %v3325 = vsel %vm3319, %v3322, %v3324
    %v3326 = vsel %vm3318, %v3305, %v3308
    %v3327 = vsel %vm3321, %v3314, 920167782
    %v3328 = vsel %vm3320, %v3311, %v3327
    %v3329 = vsel %vm3319, %v3326, %v3328
    %v3330 = vsel %vm3318, %v3308, %v3311
    %v3331 = vsel %vm3321, %v3317, 1326507024
    %v3332 = vsel %vm3320, %v3314, %v3331
    %v3333 = vsel %vm3319, %v3330, %v3332
    %v3334 = vshll.u32 %v3294, 8
    %v3335 = vand.u32 %v3334, 65535
    %v3336 = vshrl.u32 %v3334, 16
    %v3337 = vand.u32 %v3333, 65535
    %v3338 = vshrl.u32 %v3333, 16
    %v3339 = vmul.u32 %v3335, %v3337
    %v3340 = vmul.u32 %v3335, %v3338
    %v3341 = vmul.u32 %v3336, %v3337
    %v3342 = vmul.u32 %v3336, %v3338
    %v3343 = vshll.u32 %v3340, 16
    %v3344 = vshrl.u32 %v3340, 16
    %v3345 = vshll.u32 %v3341, 16
    %v3346 = vshrl.u32 %v3341, 16
    %vm3347 = vc.u32 %v3339, %v3343
    %v3348 = vsel %vm3347, 1, 0
    %v3349 = vadd.s32 %v3339, %v3343
    %v3350 = vadd.s32 %v3342, %v3348
    %vm3351 = vc.u32 %v3349, %v3345
    %v3352 = vsel %vm3351, 1, 0
    %v3353 = vadd.s32 %v3349, %v3345
    %v3354 = vadd.s32 %v3350, %v3352
    %v3355 = vadd.s32 %v3354, %v3344
    %v3356 = vadd.s32 %v3355, %v3346
    %v3357 = vand.u32 %v3334, 65535
    %v3358 = vshrl.u32 %v3334, 16
    %v3359 = vand.u32 %v3329, 65535
    %v3360 = vshrl.u32 %v3329, 16
    %v3361 = vmul.u32 %v3357, %v3359
    %v3362 = vmul.u32 %v3357, %v3360
    %v3363 = vmul.u32 %v3358, %v3359
    %v3364 = vmul.u32 %v3358, %v3360
    %v3365 = vshll.u32 %v3362, 16
    %v3366 = vshrl.u32 %v3362, 16
    %v3367 = vshll.u32 %v3363, 16
    %v3368 = vshrl.u32 %v3363, 16
    %vm3369 = vc.u32 %v3361, %v3365
    %v3370 = vsel %vm3369, 1, 0
    %v3371 = vadd.s32 %v3361, %v3365
    %v3372 = vadd.s32 %v3364, %v3370
    %vm3373 = vc.u32 %v3371, %v3367
    %v3374 = vsel %vm3373, 1, 0
    %v3375 = vadd.s32 %v3371, %v3367
    %v3376 = vadd.s32 %v3372, %v3374
    %v3377 = vadd.s32 %v3376, %v3366
    %v3378 = vadd.s32 %v3377, %v3368
    %v3379 = vmul.u32 %v3334, %v3325
    %v3380 = vadd.s32 %v3356, %v3375
    %vm3381 = vc.u32 %v3356, %v3375
    %v3382 = vadd.s32 %v3378, 1
    %v3383 = vsel %vm3381, %v3382, %v3378
    %v3384 = vadd.s32 %v3379, %v3383
    %v3385 = vadd.s32 %v3384, 536870912
    %v3386 = vshrl.u32 %v3385, 30
    %v3387 = vshll.u32 %v3386, 30
    %v3388 = vsub.s32 %v3384, %v3387
    %vm3389 = vcmp.lt.s32.totalorder %v3388, 0
    %v3390 = vsub.s32 0, %v3388
    %v3391 = vsel %vm3389, %v3390, %v3388
    %v3392 = vclz %v3391
    %v3393 = vsub.s32 %v3392, 2
    %vm3394 = vcmp.gt.s32.totalorder 0, %v3393
    %v3395 = vsel %vm3394, 0, %v3393
    %v3396 = vsub.s32 32, %v3395
    %v3397 = vshll.u32 %v3388, %v3395
    %v3398 = vshrl.u32 %v3380, %v3396
    %v3399 = vor.u32 %v3397, %v3398
    %v3400 = vsub.s32 4294967266, %v3395
    %v3401 = vadd.s32 %v3400, 127
    %v3402 = vshll.u32 %v3401, 23
    %v3403 = vor.u32 4788187, %v3402
    %v3404 = vand.u32 2147483647, %v3403
    %v3406 = vcvt.s32.f32 %v3399
    %v3407 = vmul.f32 %v3406, %v3404
    %v3408 = vxor.u32 %v3407, 2147483648
    %v3409 = vsel %vm3288, %v3408, %v3407
    %v3410 = vsub.s32 4, %v3386
    %v3411 = vsel %vm3288, %v3410, %v3386
    %v3412 = vsel %vm3287, %v2454, %v3409
    %v3413 = vsel %vm3287, 0, %v3411
    %v3414 = vmul.f32 %v3412, %v3412
    %v3415 = vmul.f32 %v3414, -0.001358992
    %v3416 = vadd.f32 %v3415, 0.041655596
    %v3417 = vmul.f32 %v3414, %v3416
    %v3418 = vadd.f32 %v3417, -0.4999988
    %v3419 = vmul.f32 %v3414, %v3418
    %v3420 = vadd.f32 1.0, %v3419
    %v3421 = vmul.f32 %v3412, %v3412
    %v3422 = vmul.f32 %v3421, -0.00019511016
    %v3423 = vadd.f32 %v3422, 0.008332121
    %v3424 = vmul.f32 %v3421, %v3423
    %v3425 = vadd.f32 %v3424, -0.16666654
    %v3426 = vmul.f32 %v3421, %v3425
    %v3427 = vadd.f32 %v3426, 1.0
    %v3428 = vmul.f32 %v3427, %v3412
    %vm3429 = vweird.f32 %v2454
    %v3430 = vadd.s32 %v3413, 3
    %v3431 = vand.u32 %v3430, 3
    %vm3432 = vcmp.lt.s32.totalorder %v3431, 2
    %vm3433 = vcmp.eq.s32.totalorder %v3431, 0
    %v3434 = vxor.u32 %v3428, 2147483648
    %v3435 = vsel %vm3433, %v3420, %v3434
    %vm3436 = vcmp.eq.s32.totalorder %v3431, 2
    %v3437 = vxor.u32 %v3420, 2147483648
    %v3438 = vsel %vm3436, %v3437, %v3428
    %v3439 = vsel %vm3432, %v3435, %v3438
    %v3440 = vsel %vm3429, nan, %v3439
    %v3441 = vand.u32 2147483647, %v2469
    %vm3442 = vcmp.le.f32.partialorder %v3441, 0.7853982
    %vm3443 = vcmp.lt.s32.totalorder %v2469, 0
    %v3444 = vand.u32 %v2469, 2139095040
    %v3445 = vshrl.u32 %v3444, 23
    %v3446 = vsub.s32 %v3445, 127
    %v3447 = vand.u32 2147483647, %v2469
    %v3448 = vand.u32 %v3447, 8388607
    %v3449 = vor.u32 %v3448, 8388608
    %v3450 = vsub.s32 0, %v3449
    %v3451 = vadd.s32 %v3446, 1
    %vm3452 = vcmp.gt.s32.totalorder %v3451, 0
    %v3453 = vsel %vm3452, %v3451, 0
    %v3454 = vshrl.u32 %v3453, 5
    %v3455 = vand.u32 %v3453, 31
    %v3456 = vsub.s32 32, %v3455
    %v3457 = vshrl.u32 683565275, %v3456
    %v3458 = vshll.u32 683565275, %v3455
    %v3459 = vshrl.u32 2475754826, %v3456
    %v3460 = vor.u32 %v3458, %v3459
    %v3461 = vshll.u32 2475754826, %v3455
    %v3462 = vshrl.u32 2131351028, %v3456
    %v3463 = vor.u32 %v3461, %v3462
    %v3464 = vshll.u32 2131351028, %v3455
    %v3465 = vshrl.u32 2102212464, %v3456
    %v3466 = vor.u32 %v3464, %v3465
    %v3467 = vshll.u32 2102212464, %v3455
    %v3468 = vshrl.u32 920167782, %v3456
    %v3469 = vor.u32 %v3467, %v3468
    %v3470 = vshll.u32 920167782, %v3455
    %v3471 = vshrl.u32 1326507024, %v3456
    %v3472 = vor.u32 %v3470, %v3471
    %vm3473 = vcmp.lt.s32.totalorder %v3454, 1
    %vm3474 = vcmp.lt.s32.totalorder %v3454, 2
    %vm3475 = vcmp.lt.s32.totalorder %v3454, 3
    %vm3476 = vcmp.lt.s32.totalorder %v3454, 4
    %v3477 = vsel %vm3473, %v3457, %v3460
    %v3478 = vsel %vm3476, %v3466, 2102212464
    %v3479 = vsel %vm3475, %v3463, %v3478
    %v3480 = vsel %vm3474, %v3477, %v3479
    %v3481 = vsel %vm3473, %v3460, %v3463
    %v3482 = vsel %vm3476, %v3469, 920167782
    %v3483 = vsel %vm3475, %v3466, %v3482
    %v3484 = vsel %vm3474, %v3481, %v3483
    %v3485 = vsel %vm3473, %v3463, %v3466
    %v3486 = vsel %vm3476, %v3472, 1326507024
    %v3487 = vsel %vm3475, %v3469, %v3486
    %v3488 = vsel %vm3474, %v3485, %v3487
    %v3489 = vshll.u32 %v3449, 8
    %v3490 = vand.u32 %v3489, 65535
    %v3491 = vshrl.u32 %v3489, 16
    %v3492 = vand.u32 %v3488, 65535
    %v3493 = vshrl.u32 %v3488, 16
    %v3494 = vmul.u32 %v3490, %v3492
    %v3495 = vmul.u32 %v3490, %v3493
    %v3496 = vmul.u32 %v3491, %v3492
    %v3497 = vmul.u32 %v3491, %v3493
    %v3498 = vshll.u32 %v3495, 16
    %v3499 = vshrl.u32 %v3495, 16
    %v3500 = vshll.u32 %v3496, 16
    %v3501 = vshrl.u32 %v3496, 16
    %vm3502 = vc.u32 %v3494, %v3498
    %v3503 = vsel %vm3502, 1, 0
    %v3504 = vadd.s32 %v3494, %v3498
    %v3505 = vadd.s32 %v3497, %v3503
    %vm3506 = vc.u32 %v3504, %v3500
    %v3507 = vsel %vm3506, 1, 0
    %v3508 = vadd.s32 %v3504, %v3500
    %v3509 = vadd.s32 %v3505, %v3507
    %v3510 = vadd.s32 %v3509, %v3499
    %v3511 = vadd.s32 %v3510, %v3501
    %v3512 = vand.u32 %v3489, 65535
    %v3513 = vshrl.u32 %v3489, 16
    %v3514 = vand.u32 %v3484, 65535
    %v3515 = vshrl.u32 %v3484, 16
    %v3516 = vmul.u32 %v3512, %v3514
    %v3517 = vmul.u32 %v3512, %v3515
    %v3518 = vmul.u32 %v3513, %v3514
    %v3519 = vmul.u32 %v3513, %v3515
    %v3520 = vshll.u32 %v3517, 16
    %v3521 = vshrl.u32 %v3517, 16
    %v3522 = vshll.u32 %v3518, 16
    %v3523 = vshrl.u32 %v3518, 16
    %vm3524 = vc.u32 %v3516, %v3520
    %v3525 = vsel %vm3524, 1, 0
    %v3526 = vadd.s32 %v3516, %v3520
    %v3527 = vadd.s32 %v3519, %v3525
    %vm3528 = vc.u32 %v3526, %v3522
    %v3529 = vsel %vm3528, 1, 0
    %v3530 = vadd.s32 %v3526, %v3522
    %v3531 = vadd.s32 %v3527, %v3529
    %v3532 = vadd.s32 %v3531, %v3521
    %v3533 = vadd.s32 %v3532, %v3523
    %v3534 = vmul.u32 %v3489, %v3480
    %v3535 = vadd.s32 %v3511, %v3530
    %vm3536 = vc.u32 %v3511, %v3530
    %v3537 = vadd.s32 %v3533, 1
    %v3538 = vsel %vm3536, %v3537, %v3533
    %v3539 = vadd.s32 %v3534, %v3538
    %v3540 = vadd.s32 %v3539, 536870912
    %v3541 = vshrl.u32 %v3540, 30
    %v3542 = vshll.u32 %v3541, 30
    %v3543 = vsub.s32 %v3539, %v3542
    %vm3544 = vcmp.lt.s32.totalorder %v3543, 0
    %v3545 = vsub.s32 0, %v3543
    %v3546 = vsel %vm3544, %v3545, %v3543
    %v3547 = vclz %v3546
    %v3548 = vsub.s32 %v3547, 2
    %vm3549 = vcmp.gt.s32.totalorder 0, %v3548
    %v3550 = vsel %vm3549, 0, %v3548
    %v3551 = vsub.s32 32, %v3550
    %v3552 = vshll.u32 %v3543, %v3550
    %v3553 = vshrl.u32 %v3535, %v3551
    %v3554 = vor.u32 %v3552, %v3553
    %v3555 = vsub.s32 4294967266, %v3550
    %v3556 = vadd.s32 %v3555, 127
    %v3557 = vshll.u32 %v3556, 23
    %v3558 = vor.u32 4788187, %v3557
    %v3559 = vand.u32 2147483647, %v3558
    %v3561 = vcvt.s32.f32 %v3554
    %v3562 = vmul.f32 %v3561, %v3559
    %v3563 = vxor.u32 %v3562, 2147483648
    %v3564 = vsel %vm3443, %v3563, %v3562
    %v3565 = vsub.s32 4, %v3541
    %v3566 = vsel %vm3443, %v3565, %v3541
    %v3567 = vsel %vm3442, %v2469, %v3564
    %v3568 = vsel %vm3442, 0, %v3566
    %v3569 = vmul.f32 %v3567, %v3567
    %v3570 = vmul.f32 %v3569, -0.001358992
    %v3571 = vadd.f32 %v3570, 0.041655596
    %v3572 = vmul.f32 %v3569, %v3571
    %v3573 = vadd.f32 %v3572, -0.4999988
    %v3574 = vmul.f32 %v3569, %v3573
    %v3575 = vadd.f32 1.0, %v3574
    %v3576 = vmul.f32 %v3567, %v3567
    %v3577 = vmul.f32 %v3576, -0.00019511016
    %v3578 = vadd.f32 %v3577, 0.008332121
    %v3579 = vmul.f32 %v3576, %v3578
    %v3580 = vadd.f32 %v3579, -0.16666654
    %v3581 = vmul.f32 %v3576, %v3580
    %v3582 = vadd.f32 %v3581, 1.0
    %v3583 = vmul.f32 %v3582, %v3567
    %vm3584 = vweird.f32 %v2469
    %v3585 = vadd.s32 %v3568, 3
    %v3586 = vand.u32 %v3585, 3
    %vm3587 = vcmp.lt.s32.totalorder %v3586, 2
    %vm3588 = vcmp.eq.s32.totalorder %v3586, 0
    %v3589 = vxor.u32 %v3583, 2147483648
    %v3590 = vsel %vm3588, %v3575, %v3589
    %vm3591 = vcmp.eq.s32.totalorder %v3586, 2
    %v3592 = vxor.u32 %v3575, 2147483648
    %v3593 = vsel %vm3591, %v3592, %v3583
    %v3594 = vsel %vm3587, %v3590, %v3593
    %v3595 = vsel %vm3584, nan, %v3594
    %v3596 = vand.u32 2147483647, %v2484
    %vm3597 = vcmp.le.f32.partialorder %v3596, 0.7853982
    %vm3598 = vcmp.lt.s32.totalorder %v2484, 0
    %v3599 = vand.u32 %v2484, 2139095040
    %v3600 = vshrl.u32 %v3599, 23
    %v3601 = vsub.s32 %v3600, 127
    %v3602 = vand.u32 2147483647, %v2484
    %v3603 = vand.u32 %v3602, 8388607
    %v3604 = vor.u32 %v3603, 8388608
    %v3605 = vsub.s32 0, %v3604
    %v3606 = vadd.s32 %v3601, 1
    %vm3607 = vcmp.gt.s32.totalorder %v3606, 0
    %v3608 = vsel %vm3607, %v3606, 0
    %v3609 = vshrl.u32 %v3608, 5
    %v3610 = vand.u32 %v3608, 31
    %v3611 = vsub.s32 32, %v3610
    %v3612 = vshrl.u32 683565275, %v3611
    %v3613 = vshll.u32 683565275, %v3610
    %v3614 = vshrl.u32 2475754826, %v3611
    %v3615 = vor.u32 %v3613, %v3614
    %v3616 = vshll.u32 2475754826, %v3610
    %v3617 = vshrl.u32 2131351028, %v3611
    %v3618 = vor.u32 %v3616, %v3617
    %v3619 = vshll.u32 2131351028, %v3610
    %v3620 = vshrl.u32 2102212464, %v3611
    %v3621 = vor.u32 %v3619, %v3620
    %v3622 = vshll.u32 2102212464, %v3610
    %v3623 = vshrl.u32 920167782, %v3611
    %v3624 = vor.u32 %v3622, %v3623
    %v3625 = vshll.u32 920167782, %v3610
    %v3626 = vshrl.u32 1326507024, %v3611
    %v3627 = vor.u32 %v3625, %v3626
    %vm3628 = vcmp.lt.s32.totalorder %v3609, 1
    %vm3629 = vcmp.lt.s32.totalorder %v3609, 2
    %vm3630 = vcmp.lt.s32.totalorder %v3609, 3
    %vm3631 = vcmp.lt.s32.totalorder %v3609, 4
    %v3632 = vsel %vm3628, %v3612, %v3615
    %v3633 = vsel %vm3631, %v3621, 2102212464
    %v3634 = vsel %vm3630, %v3618, %v3633
    %v3635 = vsel %vm3629, %v3632, %v3634
    %v3636 = vsel %vm3628, %v3615, %v3618
    %v3637 = vsel %vm3631, %v3624, 920167782
    %v3638 = vsel %vm3630, %v3621, %v3637
    %v3639 = vsel %vm3629, %v3636, %v3638
    %v3640 = vsel %vm3628, %v3618, %v3621
    %v3641 = vsel %vm3631, %v3627, 1326507024
    %v3642 = vsel %vm3630, %v3624, %v3641
    %v3643 = vsel %vm3629, %v3640, %v3642
    %v3644 = vshll.u32 %v3604, 8
    %v3645 = vand.u32 %v3644, 65535
    %v3646 = vshrl.u32 %v3644, 16
    %v3647 = vand.u32 %v3643, 65535
    %v3648 = vshrl.u32 %v3643, 16
    %v3649 = vmul.u32 %v3645, %v3647
    %v3650 = vmul.u32 %v3645, %v3648
    %v3651 = vmul.u32 %v3646, %v3647
    %v3652 = vmul.u32 %v3646, %v3648
    %v3653 = vshll.u32 %v3650, 16
    %v3654 = vshrl.u32 %v3650, 16
    %v3655 = vshll.u32 %v3651, 16
    %v3656 = vshrl.u32 %v3651, 16
    %vm3657 = vc.u32 %v3649, %v3653
    %v3658 = vsel %vm3657, 1, 0
    %v3659 = vadd.s32 %v3649, %v3653
    %v3660 = vadd.s32 %v3652, %v3658
    %vm3661 = vc.u32 %v3659, %v3655
    %v3662 = vsel %vm3661, 1, 0
    %v3663 = vadd.s32 %v3659, %v3655
    %v3664 = vadd.s32 %v3660, %v3662
    %v3665 = vadd.s32 %v3664, %v3654
    %v3666 = vadd.s32 %v3665, %v3656
    %v3667 = vand.u32 %v3644, 65535
    %v3668 = vshrl.u32 %v3644, 16
    %v3669 = vand.u32 %v3639, 65535
    %v3670 = vshrl.u32 %v3639, 16
    %v3671 = vmul.u32 %v3667, %v3669
    %v3672 = vmul.u32 %v3667, %v3670
    %v3673 = vmul.u32 %v3668, %v3669
    %v3674 = vmul.u32 %v3668, %v3670
    %v3675 = vshll.u32 %v3672, 16
    %v3676 = vshrl.u32 %v3672, 16
    %v3677 = vshll.u32 %v3673, 16
    %v3678 = vshrl.u32 %v3673, 16
    %vm3679 = vc.u32 %v3671, %v3675
    %v3680 = vsel %vm3679, 1, 0
    %v3681 = vadd.s32 %v3671, %v3675
    %v3682 = vadd.s32 %v3674, %v3680
    %vm3683 = vc.u32 %v3681, %v3677
    %v3684 = vsel %vm3683, 1, 0
    %v3685 = vadd.s32 %v3681, %v3677
    %v3686 = vadd.s32 %v3682, %v3684
    %v3687 = vadd.s32 %v3686, %v3676
    %v3688 = vadd.s32 %v3687, %v3678
    %v3689 = vmul.u32 %v3644, %v3635
    %v3690 = vadd.s32 %v3666, %v3685
    %vm3691 = vc.u32 %v3666, %v3685
    %v3692 = vadd.s32 %v3688, 1
    %v3693 = vsel %vm3691, %v3692, %v3688
    %v3694 = vadd.s32 %v3689, %v3693
    %v3695 = vadd.s32 %v3694, 536870912
    %v3696 = vshrl.u32 %v3695, 30
    %v3697 = vshll.u32 %v3696, 30
    %v3698 = vsub.s32 %v3694, %v3697
    %vm3699 = vcmp.lt.s32.totalorder %v3698, 0
    %v3700 = vsub.s32 0, %v3698
    %v3701 = vsel %vm3699, %v3700, %v3698
    %v3702 = vclz %v3701
    %v3703 = vsub.s32 %v3702, 2
    %vm3704 = vcmp.gt.s32.totalorder 0, %v3703
    %v3705 = vsel %vm3704, 0, %v3703
    %v3706 = vsub.s32 32, %v3705
    %v3707 = vshll.u32 %v3698, %v3705
    %v3708 = vshrl.u32 %v3690, %v3706
    %v3709 = vor.u32 %v3707, %v3708
    %v3710 = vsub.s32 4294967266, %v3705
    %v3711 = vadd.s32 %v3710, 127
    %v3712 = vshll.u32 %v3711, 23
    %v3713 = vor.u32 4788187, %v3712
    %v3714 = vand.u32 2147483647, %v3713
    %v3716 = vcvt.s32.f32 %v3709
    %v3717 = vmul.f32 %v3716, %v3714
    %v3718 = vxor.u32 %v3717, 2147483648
    %v3719 = vsel %vm3598, %v3718, %v3717
    %v3720 = vsub.s32 4, %v3696
    %v3721 = vsel %vm3598, %v3720, %v3696
    %v3722 = vsel %vm3597, %v2484, %v3719
    %v3723 = vsel %vm3597, 0, %v3721
    %v3724 = vmul.f32 %v3722, %v3722
    %v3725 = vmul.f32 %v3724, -0.001358992
    %v3726 = vadd.f32 %v3725, 0.041655596
    %v3727 = vmul.f32 %v3724, %v3726
    %v3728 = vadd.f32 %v3727, -0.4999988
    %v3729 = vmul.f32 %v3724, %v3728
    %v3730 = vadd.f32 1.0, %v3729
    %v3731 = vmul.f32 %v3722, %v3722
    %v3732 = vmul.f32 %v3731, -0.00019511016
    %v3733 = vadd.f32 %v3732, 0.008332121
    %v3734 = vmul.f32 %v3731, %v3733
    %v3735 = vadd.f32 %v3734, -0.16666654
    %v3736 = vmul.f32 %v3731, %v3735
    %v3737 = vadd.f32 %v3736, 1.0
    %v3738 = vmul.f32 %v3737, %v3722
    %vm3739 = vweird.f32 %v2484
    %v3740 = vadd.s32 %v3723, 3
    %v3741 = vand.u32 %v3740, 3
    %vm3742 = vcmp.lt.s32.totalorder %v3741, 2
    %vm3743 = vcmp.eq.s32.totalorder %v3741, 0
    %v3744 = vxor.u32 %v3738, 2147483648
    %v3745 = vsel %vm3743, %v3730, %v3744
    %vm3746 = vcmp.eq.s32.totalorder %v3741, 2
    %v3747 = vxor.u32 %v3730, 2147483648
    %v3748 = vsel %vm3746, %v3747, %v3738
    %v3749 = vsel %vm3742, %v3745, %v3748
    %v3750 = vsel %vm3739, nan, %v3749
    %v3751 = vmul.f32 %v2504, %v3285
    %v3752 = vmul.f32 %v2506, %v3440
    %v3753 = vmul.f32 %v2508, %v3595
    %v3754 = vmul.f32 %v2510, %v3750
    %v3755 = vsel %vm669, %v3127, 0.0
    %3756 = vadd.xlane.f32.xlu0 %v3755
    %v3757 = vpop.xlane.xlu0 %3756
    %v3758 = vsel %vm669, %v3128, 0.0
    %3759 = vadd.xlane.f32.xlu0 %v3758
    %v3760 = vpop.xlane.xlu0 %3759
    %v3761 = vsel %vm669, %v3129, 0.0
    %3762 = vadd.xlane.f32.xlu0 %v3761
    %v3763 = vpop.xlane.xlu0 %3762
    %v3764 = vsel %vm669, %v3130, 0.0
    %3765 = vadd.xlane.f32.xlu0 %v3764
    %v3766 = vpop.xlane.xlu0 %3765
    %v3767 = vsel %vm669, %v3751, 0.0
    %3768 = vadd.xlane.f32.xlu0 %v3767
    %v3769 = vpop.xlane.xlu0 %3768
    %v3770 = vsel %vm669, %v3752, 0.0
    %3771 = vadd.xlane.f32.xlu0 %v3770
    %v3772 = vpop.xlane.xlu0 %3771
    %v3773 = vsel %vm669, %v3753, 0.0
    %3774 = vadd.xlane.f32.xlu0 %v3773
    %v3775 = vpop.xlane.xlu0 %3774
    %v3776 = vsel %vm669, %v3754, 0.0
    %3777 = vadd.xlane.f32.xlu0 %v3776
    %v3778 = vpop.xlane.xlu0 %3777
    %v3779 = vmul.f32 %v3757, %v3757
    %v3780 = vmul.f32 %v3760, %v3760
    %v3781 = vmul.f32 %v3763, %v3763
    %v3782 = vmul.f32 %v3766, %v3766
    %v3783 = vmul.f32 %v3769, %v3769
    %v3784 = vmul.f32 %v3772, %v3772
    %v3785 = vmul.f32 %v3775, %v3775
    %v3786 = vmul.f32 %v3778, %v3778
    %v3787 = vadd.f32 %v3779, %v3783
    %v3788 = vadd.f32 %v3780, %v3784
    %v3789 = vadd.f32 %v3781, %v3785
    %v3790 = vadd.f32 %v3782, %v3786
    %v3791 = vadd.f32 %v3787, 1e-12
    %v3792 = vadd.f32 %v3788, 1e-12
    %v3793 = vadd.f32 %v3789, 1e-12
    %v3794 = vadd.f32 %v3790, 1e-12
    %v3795 = vrcp.pop %v3791
    %v3796 = vmul.f32 %v3791, %v3795
    %v3797 = vsub.f32 1.0, %v3796
    %v3798 = vmul.f32 %v3795, %v3797
    %v3799 = vadd.f32 %v3795, %v3798
    %vm3800 = vweird.f32 %v3791
    %vm3801 = vweird.f32 %v3795
    %vm3802 = vmor %vm3800, %vm3801
    %v3803 = vsel %vm3802, %v3795, %v3799
    %v3804 = vand.u32 2147483647, %v3791
    %vm3805 = vcmp.eq.f32.partialorder %v3804, 8.507059e+37
    %v3806 = vand.u32 %v3791, 2147483648
    %v3807 = vor.u32 1.1754944e-38, %v3806
    %v3808 = vsel %vm3805, %v3807, %v3803
    %v3809 = vmul.f32 1.0, %v3808
    %v3810 = vrcp.pop %v3792
    %v3811 = vmul.f32 %v3792, %v3810
    %v3812 = vsub.f32 1.0, %v3811
    %v3813 = vmul.f32 %v3810, %v3812
    %v3814 = vadd.f32 %v3810, %v3813
    %vm3815 = vweird.f32 %v3792
    %vm3816 = vweird.f32 %v3810
    %vm3817 = vmor %vm3815, %vm3816
    %v3818 = vsel %vm3817, %v3810, %v3814
    %v3819 = vand.u32 2147483647, %v3792
    %vm3820 = vcmp.eq.f32.partialorder %v3819, 8.507059e+37
    %v3821 = vand.u32 %v3792, 2147483648
    %v3822 = vor.u32 1.1754944e-38, %v3821
    %v3823 = vsel %vm3820, %v3822, %v3818
    %v3824 = vmul.f32 1.0, %v3823
    %v3825 = vrcp.pop %v3793
    %v3826 = vmul.f32 %v3793, %v3825
    %v3827 = vsub.f32 1.0, %v3826
    %v3828 = vmul.f32 %v3825, %v3827
    %v3829 = vadd.f32 %v3825, %v3828
    %vm3830 = vweird.f32 %v3793
    %vm3831 = vweird.f32 %v3825
    %vm3832 = vmor %vm3830, %vm3831
    %v3833 = vsel %vm3832, %v3825, %v3829
    %v3834 = vand.u32 2147483647, %v3793
    %vm3835 = vcmp.eq.f32.partialorder %v3834, 8.507059e+37
    %v3836 = vand.u32 %v3793, 2147483648
    %v3837 = vor.u32 1.1754944e-38, %v3836
    %v3838 = vsel %vm3835, %v3837, %v3833
    %v3839 = vmul.f32 1.0, %v3838
    %v3840 = vrcp.pop %v3794
    %v3841 = vmul.f32 %v3794, %v3840
    %v3842 = vsub.f32 1.0, %v3841
    %v3843 = vmul.f32 %v3840, %v3842
    %v3844 = vadd.f32 %v3840, %v3843
    %vm3845 = vweird.f32 %v3794
    %vm3846 = vweird.f32 %v3840
    %vm3847 = vmor %vm3845, %vm3846
    %v3848 = vsel %vm3847, %v3840, %v3844
    %v3849 = vand.u32 2147483647, %v3794
    %vm3850 = vcmp.eq.f32.partialorder %v3849, 8.507059e+37
    %v3851 = vand.u32 %v3794, 2147483648
    %v3852 = vor.u32 1.1754944e-38, %v3851
    %v3853 = vsel %vm3850, %v3852, %v3848
    %v3854 = vmul.f32 1.0, %v3853
    %v3855 = vmul.f32 %v3127, %v3757
    %v3856 = vmul.f32 %v3128, %v3760
    %v3857 = vmul.f32 %v3129, %v3763
    %v3858 = vmul.f32 %v3130, %v3766
    %v3859 = vmul.f32 %v3751, %v3769
    %v3860 = vmul.f32 %v3752, %v3772
    %v3861 = vmul.f32 %v3753, %v3775
    %v3862 = vmul.f32 %v3754, %v3778
    %v3863 = vadd.f32 %v3855, %v3859
    %v3864 = vadd.f32 %v3856, %v3860
    %v3865 = vadd.f32 %v3857, %v3861
    %v3866 = vadd.f32 %v3858, %v3862
    %v3867 = vmul.f32 %v3863, %v3809
    %v3868 = vmul.f32 %v3864, %v3824
    %v3869 = vmul.f32 %v3865, %v3839
    %v3870 = vmul.f32 %v3866, %v3854
    %v3871 = vpack.c.bf16 %v3867, %v3867
    %v3872 = vpack.c.bf16 %v3868, %v3868
    %v3873 = vpack.c.bf16 %v3869, %v3869
    %v3874 = vpack.c.bf16 %v3870, %v3870
    %v3875 = vmul.f32 %v3751, %v3757
    %v3876 = vmul.f32 %v3752, %v3760
    %v3877 = vmul.f32 %v3753, %v3763
    %v3878 = vmul.f32 %v3754, %v3766
    %v3879 = vmul.f32 %v3127, %v3769
    %v3880 = vmul.f32 %v3128, %v3772
    %v3881 = vmul.f32 %v3129, %v3775
    %v3882 = vmul.f32 %v3130, %v3778
    %v3883 = vsub.f32 %v3875, %v3879
    %v3884 = vsub.f32 %v3876, %v3880
    %v3885 = vsub.f32 %v3877, %v3881
    %v3886 = vsub.f32 %v3878, %v3882
    %v3887 = vmul.f32 %v3883, %v3809
    %v3888 = vmul.f32 %v3884, %v3824
    %v3889 = vmul.f32 %v3885, %v3839
    %v3890 = vmul.f32 %v3886, %v3854
    %v3891 = vpack.c.bf16 %v3887, %v3887
    %v3892 = vpack.c.bf16 %v3888, %v3888
    %v3893 = vpack.c.bf16 %v3889, %v3889
    %v3894 = vpack.c.bf16 %v3890, %v3890
    %v3896 = vsel %vm669, %v3891, 0
    %v3898 = vsel %vm2081, %v2329, 0
    %3900 = vmatpush.bf16.msra.mxu0 0
    %3901 = vmatpush.bf16.msra.mxu0 0
    %3902 = vmatpush.bf16.msra.mxu0 0
    %3903 = vmatpush.bf16.msra.mxu0 0
    %3904 = vmatpush.bf16.msra.mxu0 0
    %3905 = vmatpush.bf16.msra.mxu0 0
    %3906 = vmatpush.bf16.msra.mxu0 0
    %3907 = vmatpush.bf16.msra.mxu0 %v3898
    %3908 = vmatmul.bf16.gmra.mxu0 %v3896
    %v3909 = vpop.f32.mrf.mxu0
    %v3910 = vadd.f32 0.0, %v3909
    %v3911 = vpop.f32.mrf.mxu0
    %3912 = vdwg.mxu0
    %v3914 = vsel %vm669, %v3892, 0
    %v3916 = vsel %vm2081, %v2332, 0
    %3918 = vmatpush.bf16.msra.mxu0 0
    %3919 = vmatpush.bf16.msra.mxu0 0
    %3920 = vmatpush.bf16.msra.mxu0 0
    %3921 = vmatpush.bf16.msra.mxu0 0
    %3922 = vmatpush.bf16.msra.mxu0 0
    %3923 = vmatpush.bf16.msra.mxu0 0
    %3924 = vmatpush.bf16.msra.mxu0 0
    %3925 = vmatpush.bf16.msra.mxu0 %v3916
    %3926 = vmatmul.bf16.gmra.mxu0 %v3914
    %v3927 = vpop.f32.mrf.mxu0
    %v3928 = vadd.f32 0.0, %v3927
    %v3929 = vpop.f32.mrf.mxu0
    %3930 = vdwg.mxu0
    %v3932 = vsel %vm669, %v3893, 0
    %v3934 = vsel %vm2081, %v2335, 0
    %3936 = vmatpush.bf16.msra.mxu0 0
    %3937 = vmatpush.bf16.msra.mxu0 0
    %3938 = vmatpush.bf16.msra.mxu0 0
    %3939 = vmatpush.bf16.msra.mxu0 0
    %3940 = vmatpush.bf16.msra.mxu0 0
    %3941 = vmatpush.bf16.msra.mxu0 0
    %3942 = vmatpush.bf16.msra.mxu0 0
    %3943 = vmatpush.bf16.msra.mxu0 %v3934
    %3944 = vmatmul.bf16.gmra.mxu0 %v3932
    %v3945 = vpop.f32.mrf.mxu0
    %v3946 = vadd.f32 0.0, %v3945
    %v3947 = vpop.f32.mrf.mxu0
    %3948 = vdwg.mxu0
    %v3950 = vsel %vm669, %v3894, 0
    %v3952 = vsel %vm2081, %v2338, 0
    %3954 = vmatpush.bf16.msra.mxu0 0
    %3955 = vmatpush.bf16.msra.mxu0 0
    %3956 = vmatpush.bf16.msra.mxu0 0
    %3957 = vmatpush.bf16.msra.mxu0 0
    %3958 = vmatpush.bf16.msra.mxu0 0
    %3959 = vmatpush.bf16.msra.mxu0 0
    %3960 = vmatpush.bf16.msra.mxu0 0
    %3961 = vmatpush.bf16.msra.mxu0 %v3952
    %3962 = vmatmul.bf16.gmra.mxu0 %v3950
    %v3963 = vpop.f32.mrf.mxu0
    %v3964 = vadd.f32 0.0, %v3963
    %v3965 = vpop.f32.mrf.mxu0
    %3966 = vdwg.mxu0
    %3967 = vrot.lane.b32.xlu0 %v423, 96
    %v3968 = vpop.permute.xlu0 %3967
    %v3969 = vrot.slane %v3968, 4
    %v3971 = vsel %vm669, %v3871, 0
    %v3974 = vsel %vm2081, %v3969, 0
    %3976 = vmatpush.bf16.msra.mxu0 0
    %3977 = vmatpush.bf16.msra.mxu0 0
    %3978 = vmatpush.bf16.msra.mxu0 0
    %3979 = vmatpush.bf16.msra.mxu0 0
    %3980 = vmatpush.bf16.msra.mxu0 0
    %3981 = vmatpush.bf16.msra.mxu0 0
    %3982 = vmatpush.bf16.msra.mxu0 0
    %3983 = vmatpush.bf16.msra.mxu0 %v3974
    %3984 = vmatmul.bf16.gmra.mxu0 %v3971
    %v3985 = vpop.f32.mrf.mxu0
    %v3986 = vadd.f32 %v3910, %v3985
    %v3987 = vpop.f32.mrf.mxu0
    %3988 = vdwg.mxu0
    %3989 = vrot.lane.b32.xlu0 %v425, 96
    %v3990 = vpop.permute.xlu0 %3989
    %v3991 = vrot.slane %v3990, 4
    %v3993 = vsel %vm669, %v3872, 0
    %v3996 = vsel %vm2081, %v3991, 0
    %3998 = vmatpush.bf16.msra.mxu0 0
    %3999 = vmatpush.bf16.msra.mxu0 0
    %4000 = vmatpush.bf16.msra.mxu0 0
    %4001 = vmatpush.bf16.msra.mxu0 0
    %4002 = vmatpush.bf16.msra.mxu0 0
    %4003 = vmatpush.bf16.msra.mxu0 0
    %4004 = vmatpush.bf16.msra.mxu0 0
    %4005 = vmatpush.bf16.msra.mxu0 %v3996
    %4006 = vmatmul.bf16.gmra.mxu0 %v3993
    %v4007 = vpop.f32.mrf.mxu0
    %v4008 = vadd.f32 %v3928, %v4007
    %v4009 = vpop.f32.mrf.mxu0
    %4010 = vdwg.mxu0
    %4011 = vrot.lane.b32.xlu0 %v427, 96
    %v4012 = vpop.permute.xlu0 %4011
    %v4013 = vrot.slane %v4012, 4
    %v4015 = vsel %vm669, %v3873, 0
    %v4018 = vsel %vm2081, %v4013, 0
    %4020 = vmatpush.bf16.msra.mxu0 0
    %4021 = vmatpush.bf16.msra.mxu0 0
    %4022 = vmatpush.bf16.msra.mxu0 0
    %4023 = vmatpush.bf16.msra.mxu0 0
    %4024 = vmatpush.bf16.msra.mxu0 0
    %4025 = vmatpush.bf16.msra.mxu0 0
    %4026 = vmatpush.bf16.msra.mxu0 0
    %4027 = vmatpush.bf16.msra.mxu0 %v4018
    %4028 = vmatmul.bf16.gmra.mxu0 %v4015
    %v4029 = vpop.f32.mrf.mxu0
    %v4030 = vadd.f32 %v3946, %v4029
    %v4031 = vpop.f32.mrf.mxu0
    %4032 = vdwg.mxu0
    %4033 = vrot.lane.b32.xlu0 %v429, 96
    %v4034 = vpop.permute.xlu0 %4033
    %v4035 = vrot.slane %v4034, 4
    %v4037 = vsel %vm669, %v3874, 0
    %v4040 = vsel %vm2081, %v4035, 0
    %4042 = vmatpush.bf16.msra.mxu0 0
    %4043 = vmatpush.bf16.msra.mxu0 0
    %4044 = vmatpush.bf16.msra.mxu0 0
    %4045 = vmatpush.bf16.msra.mxu0 0
    %4046 = vmatpush.bf16.msra.mxu0 0
    %4047 = vmatpush.bf16.msra.mxu0 0
    %4048 = vmatpush.bf16.msra.mxu0 0
    %4049 = vmatpush.bf16.msra.mxu0 %v4040
    %4050 = vmatmul.bf16.gmra.mxu0 %v4037
    %v4051 = vpop.f32.mrf.mxu0
    %v4052 = vadd.f32 %v3964, %v4051
    %v4053 = vpop.f32.mrf.mxu0
    %4054 = vdwg.mxu0
    %4055 = vrot.lane.b32.xlu0 %v423, 16
    %v4056 = vpop.permute.xlu0 %4055
    %4057 = vrot.lane.b32.xlu0 %v425, 16
    %v4058 = vpop.permute.xlu0 %4057
    %4059 = vrot.lane.b32.xlu0 %v427, 16
    %v4060 = vpop.permute.xlu0 %4059
    %4061 = vrot.lane.b32.xlu0 %v429, 16
    %v4062 = vpop.permute.xlu0 %4061
    %v4063 = vrot.slane %v4056, 4
    %v4064 = vrot.slane %v4058, 4
    %v4065 = vrot.slane %v4060, 4
    %v4066 = vrot.slane %v4062, 4
    %v4071 = vunpack.c.l.bf16 %v4063
    %v4072 = vunpack.c.l.bf16 %v4064
    %v4073 = vunpack.c.l.bf16 %v4065
    %v4074 = vunpack.c.l.bf16 %v4066
    %v4075 = vsub.f32 0.0, %v4071
    %v4076 = vsub.f32 0.0, %v4072
    %v4077 = vsub.f32 0.0, %v4073
    %v4078 = vsub.f32 0.0, %v4074
    %v4079 = vpack.c.bf16 %v4075, %v4075
    %v4080 = vpack.c.bf16 %v4076, %v4076
    %v4081 = vpack.c.bf16 %v4077, %v4077
    %v4082 = vpack.c.bf16 %v4078, %v4078
    %4083 = vrot.lane.b32.xlu0 %v2267, 48
    %v4084 = vpop.permute.xlu0 %4083
    %4085 = vrot.lane.b32.xlu0 %v2268, 48
    %v4086 = vpop.permute.xlu0 %4085
    %4087 = vrot.lane.b32.xlu0 %v2269, 48
    %v4088 = vpop.permute.xlu0 %4087
    %4089 = vrot.lane.b32.xlu0 %v2270, 48
    %v4090 = vpop.permute.xlu0 %4089
    %v4093 = vsel %vm483, %v4079, %v4084
    %v4096 = vsel %vm483, %v4080, %v4086
    %v4099 = vsel %vm483, %v4081, %v4088
    %v4102 = vsel %vm483, %v4082, %v4090
    %v4103 = vunpack.c.l.bf16 %v424
    %v4104 = vunpack.c.l.bf16 %v426
    %v4105 = vunpack.c.l.bf16 %v428
    %v4106 = vunpack.c.l.bf16 %v430
    %v4107 = vsub.f32 0.0, %v4103
    %v4108 = vsub.f32 0.0, %v4104
    %v4109 = vsub.f32 0.0, %v4105
    %v4110 = vsub.f32 0.0, %v4106
    %v4111 = vpack.c.bf16 %v4107, %v4107
    %v4112 = vpack.c.bf16 %v4108, %v4108
    %v4113 = vpack.c.bf16 %v4109, %v4109
    %v4114 = vpack.c.bf16 %v4110, %v4110
    %v4119 = vunpack.c.l.b16 %v4111
    %v4120 = vunpack.c.l.b16 %v4112
    %v4121 = vunpack.c.l.b16 %v4113
    %v4122 = vunpack.c.l.b16 %v4114
    %v4123 = vpack.c.b16 %v4119, %v4119
    %v4124 = vpack.c.b16 %v4120, %v4120
    %v4125 = vpack.c.b16 %v4121, %v4121
    %v4126 = vpack.c.b16 %v4122, %v4122
    %4127 = vrot.lane.b32.xlu0 %v4123, 112
    %v4128 = vpop.permute.xlu0 %4127
    %4129 = vrot.lane.b32.xlu0 %v4124, 112
    %v4130 = vpop.permute.xlu0 %4129
    %4131 = vrot.lane.b32.xlu0 %v4125, 112
    %v4132 = vpop.permute.xlu0 %4131
    %4133 = vrot.lane.b32.xlu0 %v4126, 112
    %v4134 = vpop.permute.xlu0 %4133
    %v4139 = vunpack.c.l.b16 %v424
    %v4140 = vunpack.c.l.b16 %v426
    %v4141 = vunpack.c.l.b16 %v428
    %v4142 = vunpack.c.l.b16 %v430
    %v4143 = vpack.c.b16 %v4139, %v4139
    %v4144 = vpack.c.b16 %v4140, %v4140
    %v4145 = vpack.c.b16 %v4141, %v4141
    %v4146 = vpack.c.b16 %v4142, %v4142
    %4147 = vrot.lane.b32.xlu0 %v4143, 16
    %v4148 = vpop.permute.xlu0 %4147
    %4149 = vrot.lane.b32.xlu0 %v4144, 16
    %v4150 = vpop.permute.xlu0 %4149
    %4151 = vrot.lane.b32.xlu0 %v4145, 16
    %v4152 = vpop.permute.xlu0 %4151
    %4153 = vrot.lane.b32.xlu0 %v4146, 16
    %v4154 = vpop.permute.xlu0 %4153
    %v4157 = vsel %vm483, %v4128, %v4148
    %v4160 = vsel %vm483, %v4130, %v4150
    %v4163 = vsel %vm483, %v4132, %v4152
    %v4166 = vsel %vm483, %v4134, %v4154
    %4167 = vrot.lane.b32.xlu0 %v423, 64
    %v4168 = vpop.permute.xlu0 %4167
    %v4169 = vrot.slane %v4168, 4
    %4170 = vrot.lane.b32.xlu0 %v423, 32
    %v4171 = vpop.permute.xlu0 %4170
    %v4172 = vrot.slane %v4171, 4
    %v4174 = vsel %vm526, %v4169, 0
    %v4177 = vsel %vm526, %v4172, 0
    %4179 = vmatpush.bf16.xpose.msra.mxu0 0
    %4180 = vmatpush.bf16.xpose.msra.mxu0 0
    %4181 = vmatpush.bf16.xpose.msra.mxu0 0
    %4182 = vmatpush.bf16.xpose.msra.mxu0 0
    %4183 = vmatpush.bf16.xpose.msra.mxu0 0
    %4184 = vmatpush.bf16.xpose.msra.mxu0 0
    %4185 = vmatpush.bf16.xpose.msra.mxu0 0
    %4186 = vmatpush.bf16.xpose.msra.mxu0 %v4177
    %4187 = vmatmul.bf16.gmra.mxu0 %v4174
    %v4188 = vpop.f32.mrf.mxu0
    %v4189 = vadd.f32 0.0, %v4188
    %v4190 = vpop.f32.mrf.mxu0
    %4191 = vdwg.mxu0
    %4192 = vrot.lane.b32.xlu0 %v425, 64
    %v4193 = vpop.permute.xlu0 %4192
    %v4194 = vrot.slane %v4193, 4
    %4195 = vrot.lane.b32.xlu0 %v425, 32
    %v4196 = vpop.permute.xlu0 %4195
    %v4197 = vrot.slane %v4196, 4
    %v4199 = vsel %vm526, %v4194, 0
    %v4202 = vsel %vm526, %v4197, 0
    %4204 = vmatpush.bf16.xpose.msra.mxu0 0
    %4205 = vmatpush.bf16.xpose.msra.mxu0 0
    %4206 = vmatpush.bf16.xpose.msra.mxu0 0
    %4207 = vmatpush.bf16.xpose.msra.mxu0 0
    %4208 = vmatpush.bf16.xpose.msra.mxu0 0
    %4209 = vmatpush.bf16.xpose.msra.mxu0 0
    %4210 = vmatpush.bf16.xpose.msra.mxu0 0
    %4211 = vmatpush.bf16.xpose.msra.mxu0 %v4202
    %4212 = vmatmul.bf16.gmra.mxu0 %v4199
    %v4213 = vpop.f32.mrf.mxu0
    %v4214 = vadd.f32 0.0, %v4213
    %v4215 = vpop.f32.mrf.mxu0
    %4216 = vdwg.mxu0
    %4217 = vrot.lane.b32.xlu0 %v427, 64
    %v4218 = vpop.permute.xlu0 %4217
    %v4219 = vrot.slane %v4218, 4
    %4220 = vrot.lane.b32.xlu0 %v427, 32
    %v4221 = vpop.permute.xlu0 %4220
    %v4222 = vrot.slane %v4221, 4
    %v4224 = vsel %vm526, %v4219, 0
    %v4227 = vsel %vm526, %v4222, 0
    %4229 = vmatpush.bf16.xpose.msra.mxu0 0
    %4230 = vmatpush.bf16.xpose.msra.mxu0 0
    %4231 = vmatpush.bf16.xpose.msra.mxu0 0
    %4232 = vmatpush.bf16.xpose.msra.mxu0 0
    %4233 = vmatpush.bf16.xpose.msra.mxu0 0
    %4234 = vmatpush.bf16.xpose.msra.mxu0 0
    %4235 = vmatpush.bf16.xpose.msra.mxu0 0
    %4236 = vmatpush.bf16.xpose.msra.mxu0 %v4227
    %4237 = vmatmul.bf16.gmra.mxu0 %v4224
    %v4238 = vpop.f32.mrf.mxu0
    %v4239 = vadd.f32 0.0, %v4238
    %v4240 = vpop.f32.mrf.mxu0
    %4241 = vdwg.mxu0
    %4242 = vrot.lane.b32.xlu0 %v429, 64
    %v4243 = vpop.permute.xlu0 %4242
    %v4244 = vrot.slane %v4243, 4
    %4245 = vrot.lane.b32.xlu0 %v429, 32
    %v4246 = vpop.permute.xlu0 %4245
    %v4247 = vrot.slane %v4246, 4
    %v4249 = vsel %vm526, %v4244, 0
    %v4252 = vsel %vm526, %v4247, 0
    %4254 = vmatpush.bf16.xpose.msra.mxu0 0
    %4255 = vmatpush.bf16.xpose.msra.mxu0 0
    %4256 = vmatpush.bf16.xpose.msra.mxu0 0
    %4257 = vmatpush.bf16.xpose.msra.mxu0 0
    %4258 = vmatpush.bf16.xpose.msra.mxu0 0
    %4259 = vmatpush.bf16.xpose.msra.mxu0 0
    %4260 = vmatpush.bf16.xpose.msra.mxu0 0
    %4261 = vmatpush.bf16.xpose.msra.mxu0 %v4252
    %4262 = vmatmul.bf16.gmra.mxu0 %v4249
    %v4263 = vpop.f32.mrf.mxu0
    %v4264 = vadd.f32 0.0, %v4263
    %v4265 = vpop.f32.mrf.mxu0
    %4266 = vdwg.mxu0
    %v4267 = vsel %vm526, %v4093, 0
    %4269 = vmatpush.bf16.xpose.msra.mxu0 0
    %4270 = vmatpush.bf16.xpose.msra.mxu0 0
    %4271 = vmatpush.bf16.xpose.msra.mxu0 0
    %4272 = vmatpush.bf16.xpose.msra.mxu0 0
    %4273 = vmatpush.bf16.xpose.msra.mxu0 0
    %4274 = vmatpush.bf16.xpose.msra.mxu0 0
    %4275 = vmatpush.bf16.xpose.msra.mxu0 0
    %4276 = vmatpush.bf16.xpose.msra.mxu0 %v4267
    %4277 = vmatmul.bf16.gmra.mxu0 %v4174
    %v4278 = vpop.f32.mrf.mxu0
    %v4279 = vadd.f32 0.0, %v4278
    %v4280 = vpop.f32.mrf.mxu0
    %4281 = vdwg.mxu0
    %v4282 = vsel %vm526, %v4096, 0
    %4284 = vmatpush.bf16.xpose.msra.mxu0 0
    %4285 = vmatpush.bf16.xpose.msra.mxu0 0
    %4286 = vmatpush.bf16.xpose.msra.mxu0 0
    %4287 = vmatpush.bf16.xpose.msra.mxu0 0
    %4288 = vmatpush.bf16.xpose.msra.mxu0 0
    %4289 = vmatpush.bf16.xpose.msra.mxu0 0
    %4290 = vmatpush.bf16.xpose.msra.mxu0 0
    %4291 = vmatpush.bf16.xpose.msra.mxu0 %v4282
    %4292 = vmatmul.bf16.gmra.mxu0 %v4199
    %v4293 = vpop.f32.mrf.mxu0
    %v4294 = vadd.f32 0.0, %v4293
    %v4295 = vpop.f32.mrf.mxu0
    %4296 = vdwg.mxu0
    %v4297 = vsel %vm526, %v4099, 0
    %4299 = vmatpush.bf16.xpose.msra.mxu0 0
    %4300 = vmatpush.bf16.xpose.msra.mxu0 0
    %4301 = vmatpush.bf16.xpose.msra.mxu0 0
    %4302 = vmatpush.bf16.xpose.msra.mxu0 0
    %4303 = vmatpush.bf16.xpose.msra.mxu0 0
    %4304 = vmatpush.bf16.xpose.msra.mxu0 0
    %4305 = vmatpush.bf16.xpose.msra.mxu0 0
    %4306 = vmatpush.bf16.xpose.msra.mxu0 %v4297
    %4307 = vmatmul.bf16.gmra.mxu0 %v4224
    %v4308 = vpop.f32.mrf.mxu0
    %v4309 = vadd.f32 0.0, %v4308
    %v4310 = vpop.f32.mrf.mxu0
    %4311 = vdwg.mxu0
    %v4312 = vsel %vm526, %v4102, 0
    %4314 = vmatpush.bf16.xpose.msra.mxu0 0
    %4315 = vmatpush.bf16.xpose.msra.mxu0 0
    %4316 = vmatpush.bf16.xpose.msra.mxu0 0
    %4317 = vmatpush.bf16.xpose.msra.mxu0 0
    %4318 = vmatpush.bf16.xpose.msra.mxu0 0
    %4319 = vmatpush.bf16.xpose.msra.mxu0 0
    %4320 = vmatpush.bf16.xpose.msra.mxu0 0
    %4321 = vmatpush.bf16.xpose.msra.mxu0 %v4312
    %4322 = vmatmul.bf16.gmra.mxu0 %v4249
    %v4323 = vpop.f32.mrf.mxu0
    %v4324 = vadd.f32 0.0, %v4323
    %v4325 = vpop.f32.mrf.mxu0
    %4326 = vdwg.mxu0
    %v4327 = vsel %vm669, %v4189, -inf
    %4328 = vmax.xlane.f32.xlu0 %v4327
    %v4329 = vpop.xlane.xlu0 %4328
    %v4330 = vsel %vm669, %v4214, -inf
    %4331 = vmax.xlane.f32.xlu0 %v4330
    %v4332 = vpop.xlane.xlu0 %4331
    %v4333 = vsel %vm669, %v4239, -inf
    %4334 = vmax.xlane.f32.xlu0 %v4333
    %v4335 = vpop.xlane.xlu0 %4334
    %v4336 = vsel %vm669, %v4264, -inf
    %4337 = vmax.xlane.f32.xlu0 %v4336
    %v4338 = vpop.xlane.xlu0 %4337
    %v4339 = vsub.f32 %v4189, %v4329
    %v4340 = vsub.f32 %v4214, %v4332
    %v4341 = vsub.f32 %v4239, %v4335
    %v4342 = vsub.f32 %v4264, %v4338
    %v4343 = vmul.f32 %v4339, 1.442695
    %v4344 = vpow.pop %v4343
    %v4345 = vmul.f32 %v4340, 1.442695
    %v4346 = vpow.pop %v4345
    %v4347 = vmul.f32 %v4341, 1.442695
    %v4348 = vpow.pop %v4347
    %v4349 = vmul.f32 %v4342, 1.442695
    %v4350 = vpow.pop %v4349
    %v4351 = vand.u32 2147483647, %v4279
    %vm4352 = vcmp.le.f32.partialorder %v4351, 0.7853982
    %vm4353 = vcmp.lt.s32.totalorder %v4279, 0
    %v4354 = vand.u32 %v4279, 2139095040
    %v4355 = vshrl.u32 %v4354, 23
    %v4356 = vsub.s32 %v4355, 127
    %v4357 = vand.u32 2147483647, %v4279
    %v4358 = vand.u32 %v4357, 8388607
    %v4359 = vor.u32 %v4358, 8388608
    %v4360 = vsub.s32 0, %v4359
    %v4361 = vadd.s32 %v4356, 1
    %vm4362 = vcmp.gt.s32.totalorder %v4361, 0
    %v4363 = vsel %vm4362, %v4361, 0
    %v4364 = vshrl.u32 %v4363, 5
    %v4365 = vand.u32 %v4363, 31
    %v4366 = vsub.s32 32, %v4365
    %v4367 = vshrl.u32 683565275, %v4366
    %v4368 = vshll.u32 683565275, %v4365
    %v4369 = vshrl.u32 2475754826, %v4366
    %v4370 = vor.u32 %v4368, %v4369
    %v4371 = vshll.u32 2475754826, %v4365
    %v4372 = vshrl.u32 2131351028, %v4366
    %v4373 = vor.u32 %v4371, %v4372
    %v4374 = vshll.u32 2131351028, %v4365
    %v4375 = vshrl.u32 2102212464, %v4366
    %v4376 = vor.u32 %v4374, %v4375
    %v4377 = vshll.u32 2102212464, %v4365
    %v4378 = vshrl.u32 920167782, %v4366
    %v4379 = vor.u32 %v4377, %v4378
    %v4380 = vshll.u32 920167782, %v4365
    %v4381 = vshrl.u32 1326507024, %v4366
    %v4382 = vor.u32 %v4380, %v4381
    %vm4383 = vcmp.lt.s32.totalorder %v4364, 1
    %vm4384 = vcmp.lt.s32.totalorder %v4364, 2
    %vm4385 = vcmp.lt.s32.totalorder %v4364, 3
    %vm4386 = vcmp.lt.s32.totalorder %v4364, 4
    %v4387 = vsel %vm4383, %v4367, %v4370
    %v4388 = vsel %vm4386, %v4376, 2102212464
    %v4389 = vsel %vm4385, %v4373, %v4388
    %v4390 = vsel %vm4384, %v4387, %v4389
    %v4391 = vsel %vm4383, %v4370, %v4373
    %v4392 = vsel %vm4386, %v4379, 920167782
    %v4393 = vsel %vm4385, %v4376, %v4392
    %v4394 = vsel %vm4384, %v4391, %v4393
    %v4395 = vsel %vm4383, %v4373, %v4376
    %v4396 = vsel %vm4386, %v4382, 1326507024
    %v4397 = vsel %vm4385, %v4379, %v4396
    %v4398 = vsel %vm4384, %v4395, %v4397
    %v4399 = vshll.u32 %v4359, 8
    %v4400 = vand.u32 %v4399, 65535
    %v4401 = vshrl.u32 %v4399, 16
    %v4402 = vand.u32 %v4398, 65535
    %v4403 = vshrl.u32 %v4398, 16
    %v4404 = vmul.u32 %v4400, %v4402
    %v4405 = vmul.u32 %v4400, %v4403
    %v4406 = vmul.u32 %v4401, %v4402
    %v4407 = vmul.u32 %v4401, %v4403
    %v4408 = vshll.u32 %v4405, 16
    %v4409 = vshrl.u32 %v4405, 16
    %v4410 = vshll.u32 %v4406, 16
    %v4411 = vshrl.u32 %v4406, 16
    %vm4412 = vc.u32 %v4404, %v4408
    %v4413 = vsel %vm4412, 1, 0
    %v4414 = vadd.s32 %v4404, %v4408
    %v4415 = vadd.s32 %v4407, %v4413
    %vm4416 = vc.u32 %v4414, %v4410
    %v4417 = vsel %vm4416, 1, 0
    %v4418 = vadd.s32 %v4414, %v4410
    %v4419 = vadd.s32 %v4415, %v4417
    %v4420 = vadd.s32 %v4419, %v4409
    %v4421 = vadd.s32 %v4420, %v4411
    %v4422 = vand.u32 %v4399, 65535
    %v4423 = vshrl.u32 %v4399, 16
    %v4424 = vand.u32 %v4394, 65535
    %v4425 = vshrl.u32 %v4394, 16
    %v4426 = vmul.u32 %v4422, %v4424
    %v4427 = vmul.u32 %v4422, %v4425
    %v4428 = vmul.u32 %v4423, %v4424
    %v4429 = vmul.u32 %v4423, %v4425
    %v4430 = vshll.u32 %v4427, 16
    %v4431 = vshrl.u32 %v4427, 16
    %v4432 = vshll.u32 %v4428, 16
    %v4433 = vshrl.u32 %v4428, 16
    %vm4434 = vc.u32 %v4426, %v4430
    %v4435 = vsel %vm4434, 1, 0
    %v4436 = vadd.s32 %v4426, %v4430
    %v4437 = vadd.s32 %v4429, %v4435
    %vm4438 = vc.u32 %v4436, %v4432
    %v4439 = vsel %vm4438, 1, 0
    %v4440 = vadd.s32 %v4436, %v4432
    %v4441 = vadd.s32 %v4437, %v4439
    %v4442 = vadd.s32 %v4441, %v4431
    %v4443 = vadd.s32 %v4442, %v4433
    %v4444 = vmul.u32 %v4399, %v4390
    %v4445 = vadd.s32 %v4421, %v4440
    %vm4446 = vc.u32 %v4421, %v4440
    %v4447 = vadd.s32 %v4443, 1
    %v4448 = vsel %vm4446, %v4447, %v4443
    %v4449 = vadd.s32 %v4444, %v4448
    %v4450 = vadd.s32 %v4449, 536870912
    %v4451 = vshrl.u32 %v4450, 30
    %v4452 = vshll.u32 %v4451, 30
    %v4453 = vsub.s32 %v4449, %v4452
    %vm4454 = vcmp.lt.s32.totalorder %v4453, 0
    %v4455 = vsub.s32 0, %v4453
    %v4456 = vsel %vm4454, %v4455, %v4453
    %v4457 = vclz %v4456
    %v4458 = vsub.s32 %v4457, 2
    %vm4459 = vcmp.gt.s32.totalorder 0, %v4458
    %v4460 = vsel %vm4459, 0, %v4458
    %v4461 = vsub.s32 32, %v4460
    %v4462 = vshll.u32 %v4453, %v4460
    %v4463 = vshrl.u32 %v4445, %v4461
    %v4464 = vor.u32 %v4462, %v4463
    %v4465 = vsub.s32 4294967266, %v4460
    %v4466 = vadd.s32 %v4465, 127
    %v4467 = vshll.u32 %v4466, 23
    %v4468 = vor.u32 4788187, %v4467
    %v4469 = vand.u32 2147483647, %v4468
    %v4471 = vcvt.s32.f32 %v4464
    %v4472 = vmul.f32 %v4471, %v4469
    %v4473 = vxor.u32 %v4472, 2147483648
    %v4474 = vsel %vm4353, %v4473, %v4472
    %v4475 = vsub.s32 4, %v4451
    %v4476 = vsel %vm4353, %v4475, %v4451
    %v4477 = vsel %vm4352, %v4279, %v4474
    %v4478 = vsel %vm4352, 0, %v4476
    %v4479 = vmul.f32 %v4477, %v4477
    %v4480 = vmul.f32 %v4479, -0.001358992
    %v4481 = vadd.f32 %v4480, 0.041655596
    %v4482 = vmul.f32 %v4479, %v4481
    %v4483 = vadd.f32 %v4482, -0.4999988
    %v4484 = vmul.f32 %v4479, %v4483
    %v4485 = vadd.f32 1.0, %v4484
    %v4486 = vmul.f32 %v4477, %v4477
    %v4487 = vmul.f32 %v4486, -0.00019511016
    %v4488 = vadd.f32 %v4487, 0.008332121
    %v4489 = vmul.f32 %v4486, %v4488
    %v4490 = vadd.f32 %v4489, -0.16666654
    %v4491 = vmul.f32 %v4486, %v4490
    %v4492 = vadd.f32 %v4491, 1.0
    %v4493 = vmul.f32 %v4492, %v4477
    %vm4494 = vweird.f32 %v4279
    %v4495 = vand.u32 %v4478, 3
    %vm4496 = vcmp.lt.s32.totalorder %v4495, 2
    %vm4497 = vcmp.eq.s32.totalorder %v4495, 0
    %v4498 = vxor.u32 %v4493, 2147483648
    %v4499 = vsel %vm4497, %v4485, %v4498
    %vm4500 = vcmp.eq.s32.totalorder %v4495, 2
    %v4501 = vxor.u32 %v4485, 2147483648
    %v4502 = vsel %vm4500, %v4501, %v4493
    %v4503 = vsel %vm4496, %v4499, %v4502
    %v4504 = vsel %vm4494, nan, %v4503
    %v4505 = vand.u32 2147483647, %v4294
    %vm4506 = vcmp.le.f32.partialorder %v4505, 0.7853982
    %vm4507 = vcmp.lt.s32.totalorder %v4294, 0
    %v4508 = vand.u32 %v4294, 2139095040
    %v4509 = vshrl.u32 %v4508, 23
    %v4510 = vsub.s32 %v4509, 127
    %v4511 = vand.u32 2147483647, %v4294
    %v4512 = vand.u32 %v4511, 8388607
    %v4513 = vor.u32 %v4512, 8388608
    %v4514 = vsub.s32 0, %v4513
    %v4515 = vadd.s32 %v4510, 1
    %vm4516 = vcmp.gt.s32.totalorder %v4515, 0
    %v4517 = vsel %vm4516, %v4515, 0
    %v4518 = vshrl.u32 %v4517, 5
    %v4519 = vand.u32 %v4517, 31
    %v4520 = vsub.s32 32, %v4519
    %v4521 = vshrl.u32 683565275, %v4520
    %v4522 = vshll.u32 683565275, %v4519
    %v4523 = vshrl.u32 2475754826, %v4520
    %v4524 = vor.u32 %v4522, %v4523
    %v4525 = vshll.u32 2475754826, %v4519
    %v4526 = vshrl.u32 2131351028, %v4520
    %v4527 = vor.u32 %v4525, %v4526
    %v4528 = vshll.u32 2131351028, %v4519
    %v4529 = vshrl.u32 2102212464, %v4520
    %v4530 = vor.u32 %v4528, %v4529
    %v4531 = vshll.u32 2102212464, %v4519
    %v4532 = vshrl.u32 920167782, %v4520
    %v4533 = vor.u32 %v4531, %v4532
    %v4534 = vshll.u32 920167782, %v4519
    %v4535 = vshrl.u32 1326507024, %v4520
    %v4536 = vor.u32 %v4534, %v4535
    %vm4537 = vcmp.lt.s32.totalorder %v4518, 1
    %vm4538 = vcmp.lt.s32.totalorder %v4518, 2
    %vm4539 = vcmp.lt.s32.totalorder %v4518, 3
    %vm4540 = vcmp.lt.s32.totalorder %v4518, 4
    %v4541 = vsel %vm4537, %v4521, %v4524
    %v4542 = vsel %vm4540, %v4530, 2102212464
    %v4543 = vsel %vm4539, %v4527, %v4542
    %v4544 = vsel %vm4538, %v4541, %v4543
    %v4545 = vsel %vm4537, %v4524, %v4527
    %v4546 = vsel %vm4540, %v4533, 920167782
    %v4547 = vsel %vm4539, %v4530, %v4546
    %v4548 = vsel %vm4538, %v4545, %v4547
    %v4549 = vsel %vm4537, %v4527, %v4530
    %v4550 = vsel %vm4540, %v4536, 1326507024
    %v4551 = vsel %vm4539, %v4533, %v4550
    %v4552 = vsel %vm4538, %v4549, %v4551
    %v4553 = vshll.u32 %v4513, 8
    %v4554 = vand.u32 %v4553, 65535
    %v4555 = vshrl.u32 %v4553, 16
    %v4556 = vand.u32 %v4552, 65535
    %v4557 = vshrl.u32 %v4552, 16
    %v4558 = vmul.u32 %v4554, %v4556
    %v4559 = vmul.u32 %v4554, %v4557
    %v4560 = vmul.u32 %v4555, %v4556
    %v4561 = vmul.u32 %v4555, %v4557
    %v4562 = vshll.u32 %v4559, 16
    %v4563 = vshrl.u32 %v4559, 16
    %v4564 = vshll.u32 %v4560, 16
    %v4565 = vshrl.u32 %v4560, 16
    %vm4566 = vc.u32 %v4558, %v4562
    %v4567 = vsel %vm4566, 1, 0
    %v4568 = vadd.s32 %v4558, %v4562
    %v4569 = vadd.s32 %v4561, %v4567
    %vm4570 = vc.u32 %v4568, %v4564
    %v4571 = vsel %vm4570, 1, 0
    %v4572 = vadd.s32 %v4568, %v4564
    %v4573 = vadd.s32 %v4569, %v4571
    %v4574 = vadd.s32 %v4573, %v4563
    %v4575 = vadd.s32 %v4574, %v4565
    %v4576 = vand.u32 %v4553, 65535
    %v4577 = vshrl.u32 %v4553, 16
    %v4578 = vand.u32 %v4548, 65535
    %v4579 = vshrl.u32 %v4548, 16
    %v4580 = vmul.u32 %v4576, %v4578
    %v4581 = vmul.u32 %v4576, %v4579
    %v4582 = vmul.u32 %v4577, %v4578
    %v4583 = vmul.u32 %v4577, %v4579
    %v4584 = vshll.u32 %v4581, 16
    %v4585 = vshrl.u32 %v4581, 16
    %v4586 = vshll.u32 %v4582, 16
    %v4587 = vshrl.u32 %v4582, 16
    %vm4588 = vc.u32 %v4580, %v4584
    %v4589 = vsel %vm4588, 1, 0
    %v4590 = vadd.s32 %v4580, %v4584
    %v4591 = vadd.s32 %v4583, %v4589
    %vm4592 = vc.u32 %v4590, %v4586
    %v4593 = vsel %vm4592, 1, 0
    %v4594 = vadd.s32 %v4590, %v4586
    %v4595 = vadd.s32 %v4591, %v4593
    %v4596 = vadd.s32 %v4595, %v4585
    %v4597 = vadd.s32 %v4596, %v4587
    %v4598 = vmul.u32 %v4553, %v4544
    %v4599 = vadd.s32 %v4575, %v4594
    %vm4600 = vc.u32 %v4575, %v4594
    %v4601 = vadd.s32 %v4597, 1
    %v4602 = vsel %vm4600, %v4601, %v4597
    %v4603 = vadd.s32 %v4598, %v4602
    %v4604 = vadd.s32 %v4603, 536870912
    %v4605 = vshrl.u32 %v4604, 30
    %v4606 = vshll.u32 %v4605, 30
    %v4607 = vsub.s32 %v4603, %v4606
    %vm4608 = vcmp.lt.s32.totalorder %v4607, 0
    %v4609 = vsub.s32 0, %v4607
    %v4610 = vsel %vm4608, %v4609, %v4607
    %v4611 = vclz %v4610
    %v4612 = vsub.s32 %v4611, 2
    %vm4613 = vcmp.gt.s32.totalorder 0, %v4612
    %v4614 = vsel %vm4613, 0, %v4612
    %v4615 = vsub.s32 32, %v4614
    %v4616 = vshll.u32 %v4607, %v4614
    %v4617 = vshrl.u32 %v4599, %v4615
    %v4618 = vor.u32 %v4616, %v4617
    %v4619 = vsub.s32 4294967266, %v4614
    %v4620 = vadd.s32 %v4619, 127
    %v4621 = vshll.u32 %v4620, 23
    %v4622 = vor.u32 4788187, %v4621
    %v4623 = vand.u32 2147483647, %v4622
    %v4625 = vcvt.s32.f32 %v4618
    %v4626 = vmul.f32 %v4625, %v4623
    %v4627 = vxor.u32 %v4626, 2147483648
    %v4628 = vsel %vm4507, %v4627, %v4626
    %v4629 = vsub.s32 4, %v4605
    %v4630 = vsel %vm4507, %v4629, %v4605
    %v4631 = vsel %vm4506, %v4294, %v4628
    %v4632 = vsel %vm4506, 0, %v4630
    %v4633 = vmul.f32 %v4631, %v4631
    %v4634 = vmul.f32 %v4633, -0.001358992
    %v4635 = vadd.f32 %v4634, 0.041655596
    %v4636 = vmul.f32 %v4633, %v4635
    %v4637 = vadd.f32 %v4636, -0.4999988
    %v4638 = vmul.f32 %v4633, %v4637
    %v4639 = vadd.f32 1.0, %v4638
    %v4640 = vmul.f32 %v4631, %v4631
    %v4641 = vmul.f32 %v4640, -0.00019511016
    %v4642 = vadd.f32 %v4641, 0.008332121
    %v4643 = vmul.f32 %v4640, %v4642
    %v4644 = vadd.f32 %v4643, -0.16666654
    %v4645 = vmul.f32 %v4640, %v4644
    %v4646 = vadd.f32 %v4645, 1.0
    %v4647 = vmul.f32 %v4646, %v4631
    %vm4648 = vweird.f32 %v4294
    %v4649 = vand.u32 %v4632, 3
    %vm4650 = vcmp.lt.s32.totalorder %v4649, 2
    %vm4651 = vcmp.eq.s32.totalorder %v4649, 0
    %v4652 = vxor.u32 %v4647, 2147483648
    %v4653 = vsel %vm4651, %v4639, %v4652
    %vm4654 = vcmp.eq.s32.totalorder %v4649, 2
    %v4655 = vxor.u32 %v4639, 2147483648
    %v4656 = vsel %vm4654, %v4655, %v4647
    %v4657 = vsel %vm4650, %v4653, %v4656
    %v4658 = vsel %vm4648, nan, %v4657
    %v4659 = vand.u32 2147483647, %v4309
    %vm4660 = vcmp.le.f32.partialorder %v4659, 0.7853982
    %vm4661 = vcmp.lt.s32.totalorder %v4309, 0
    %v4662 = vand.u32 %v4309, 2139095040
    %v4663 = vshrl.u32 %v4662, 23
    %v4664 = vsub.s32 %v4663, 127
    %v4665 = vand.u32 2147483647, %v4309
    %v4666 = vand.u32 %v4665, 8388607
    %v4667 = vor.u32 %v4666, 8388608
    %v4668 = vsub.s32 0, %v4667
    %v4669 = vadd.s32 %v4664, 1
    %vm4670 = vcmp.gt.s32.totalorder %v4669, 0
    %v4671 = vsel %vm4670, %v4669, 0
    %v4672 = vshrl.u32 %v4671, 5
    %v4673 = vand.u32 %v4671, 31
    %v4674 = vsub.s32 32, %v4673
    %v4675 = vshrl.u32 683565275, %v4674
    %v4676 = vshll.u32 683565275, %v4673
    %v4677 = vshrl.u32 2475754826, %v4674
    %v4678 = vor.u32 %v4676, %v4677
    %v4679 = vshll.u32 2475754826, %v4673
    %v4680 = vshrl.u32 2131351028, %v4674
    %v4681 = vor.u32 %v4679, %v4680
    %v4682 = vshll.u32 2131351028, %v4673
    %v4683 = vshrl.u32 2102212464, %v4674
    %v4684 = vor.u32 %v4682, %v4683
    %v4685 = vshll.u32 2102212464, %v4673
    %v4686 = vshrl.u32 920167782, %v4674
    %v4687 = vor.u32 %v4685, %v4686
    %v4688 = vshll.u32 920167782, %v4673
    %v4689 = vshrl.u32 1326507024, %v4674
    %v4690 = vor.u32 %v4688, %v4689
    %vm4691 = vcmp.lt.s32.totalorder %v4672, 1
    %vm4692 = vcmp.lt.s32.totalorder %v4672, 2
    %vm4693 = vcmp.lt.s32.totalorder %v4672, 3
    %vm4694 = vcmp.lt.s32.totalorder %v4672, 4
    %v4695 = vsel %vm4691, %v4675, %v4678
    %v4696 = vsel %vm4694, %v4684, 2102212464
    %v4697 = vsel %vm4693, %v4681, %v4696
    %v4698 = vsel %vm4692, %v4695, %v4697
    %v4699 = vsel %vm4691, %v4678, %v4681
    %v4700 = vsel %vm4694, %v4687, 920167782
    %v4701 = vsel %vm4693, %v4684, %v4700
    %v4702 = vsel %vm4692, %v4699, %v4701
    %v4703 = vsel %vm4691, %v4681, %v4684
    %v4704 = vsel %vm4694, %v4690, 1326507024
    %v4705 = vsel %vm4693, %v4687, %v4704
    %v4706 = vsel %vm4692, %v4703, %v4705
    %v4707 = vshll.u32 %v4667, 8
    %v4708 = vand.u32 %v4707, 65535
    %v4709 = vshrl.u32 %v4707, 16
    %v4710 = vand.u32 %v4706, 65535
    %v4711 = vshrl.u32 %v4706, 16
    %v4712 = vmul.u32 %v4708, %v4710
    %v4713 = vmul.u32 %v4708, %v4711
    %v4714 = vmul.u32 %v4709, %v4710
    %v4715 = vmul.u32 %v4709, %v4711
    %v4716 = vshll.u32 %v4713, 16
    %v4717 = vshrl.u32 %v4713, 16
    %v4718 = vshll.u32 %v4714, 16
    %v4719 = vshrl.u32 %v4714, 16
    %vm4720 = vc.u32 %v4712, %v4716
    %v4721 = vsel %vm4720, 1, 0
    %v4722 = vadd.s32 %v4712, %v4716
    %v4723 = vadd.s32 %v4715, %v4721
    %vm4724 = vc.u32 %v4722, %v4718
    %v4725 = vsel %vm4724, 1, 0
    %v4726 = vadd.s32 %v4722, %v4718
    %v4727 = vadd.s32 %v4723, %v4725
    %v4728 = vadd.s32 %v4727, %v4717
    %v4729 = vadd.s32 %v4728, %v4719
    %v4730 = vand.u32 %v4707, 65535
    %v4731 = vshrl.u32 %v4707, 16
    %v4732 = vand.u32 %v4702, 65535
    %v4733 = vshrl.u32 %v4702, 16
    %v4734 = vmul.u32 %v4730, %v4732
    %v4735 = vmul.u32 %v4730, %v4733
    %v4736 = vmul.u32 %v4731, %v4732
    %v4737 = vmul.u32 %v4731, %v4733
    %v4738 = vshll.u32 %v4735, 16
    %v4739 = vshrl.u32 %v4735, 16
    %v4740 = vshll.u32 %v4736, 16
    %v4741 = vshrl.u32 %v4736, 16
    %vm4742 = vc.u32 %v4734, %v4738
    %v4743 = vsel %vm4742, 1, 0
    %v4744 = vadd.s32 %v4734, %v4738
    %v4745 = vadd.s32 %v4737, %v4743
    %vm4746 = vc.u32 %v4744, %v4740
    %v4747 = vsel %vm4746, 1, 0
    %v4748 = vadd.s32 %v4744, %v4740
    %v4749 = vadd.s32 %v4745, %v4747
    %v4750 = vadd.s32 %v4749, %v4739
    %v4751 = vadd.s32 %v4750, %v4741
    %v4752 = vmul.u32 %v4707, %v4698
    %v4753 = vadd.s32 %v4729, %v4748
    %vm4754 = vc.u32 %v4729, %v4748
    %v4755 = vadd.s32 %v4751, 1
    %v4756 = vsel %vm4754, %v4755, %v4751
    %v4757 = vadd.s32 %v4752, %v4756
    %v4758 = vadd.s32 %v4757, 536870912
    %v4759 = vshrl.u32 %v4758, 30
    %v4760 = vshll.u32 %v4759, 30
    %v4761 = vsub.s32 %v4757, %v4760
    %vm4762 = vcmp.lt.s32.totalorder %v4761, 0
    %v4763 = vsub.s32 0, %v4761
    %v4764 = vsel %vm4762, %v4763, %v4761
    %v4765 = vclz %v4764
    %v4766 = vsub.s32 %v4765, 2
    %vm4767 = vcmp.gt.s32.totalorder 0, %v4766
    %v4768 = vsel %vm4767, 0, %v4766
    %v4769 = vsub.s32 32, %v4768
    %v4770 = vshll.u32 %v4761, %v4768
    %v4771 = vshrl.u32 %v4753, %v4769
    %v4772 = vor.u32 %v4770, %v4771
    %v4773 = vsub.s32 4294967266, %v4768
    %v4774 = vadd.s32 %v4773, 127
    %v4775 = vshll.u32 %v4774, 23
    %v4776 = vor.u32 4788187, %v4775
    %v4777 = vand.u32 2147483647, %v4776
    %v4779 = vcvt.s32.f32 %v4772
    %v4780 = vmul.f32 %v4779, %v4777
    %v4781 = vxor.u32 %v4780, 2147483648
    %v4782 = vsel %vm4661, %v4781, %v4780
    %v4783 = vsub.s32 4, %v4759
    %v4784 = vsel %vm4661, %v4783, %v4759
    %v4785 = vsel %vm4660, %v4309, %v4782
    %v4786 = vsel %vm4660, 0, %v4784
    %v4787 = vmul.f32 %v4785, %v4785
    %v4788 = vmul.f32 %v4787, -0.001358992
    %v4789 = vadd.f32 %v4788, 0.041655596
    %v4790 = vmul.f32 %v4787, %v4789
    %v4791 = vadd.f32 %v4790, -0.4999988
    %v4792 = vmul.f32 %v4787, %v4791
    %v4793 = vadd.f32 1.0, %v4792
    %v4794 = vmul.f32 %v4785, %v4785
    %v4795 = vmul.f32 %v4794, -0.00019511016
    %v4796 = vadd.f32 %v4795, 0.008332121
    %v4797 = vmul.f32 %v4794, %v4796
    %v4798 = vadd.f32 %v4797, -0.16666654
    %v4799 = vmul.f32 %v4794, %v4798
    %v4800 = vadd.f32 %v4799, 1.0
    %v4801 = vmul.f32 %v4800, %v4785
    %vm4802 = vweird.f32 %v4309
    %v4803 = vand.u32 %v4786, 3
    %vm4804 = vcmp.lt.s32.totalorder %v4803, 2
    %vm4805 = vcmp.eq.s32.totalorder %v4803, 0
    %v4806 = vxor.u32 %v4801, 2147483648
    %v4807 = vsel %vm4805, %v4793, %v4806
    %vm4808 = vcmp.eq.s32.totalorder %v4803, 2
    %v4809 = vxor.u32 %v4793, 2147483648
    %v4810 = vsel %vm4808, %v4809, %v4801
    %v4811 = vsel %vm4804, %v4807, %v4810
    %v4812 = vsel %vm4802, nan, %v4811
    %v4813 = vand.u32 2147483647, %v4324
    %vm4814 = vcmp.le.f32.partialorder %v4813, 0.7853982
    %vm4815 = vcmp.lt.s32.totalorder %v4324, 0
    %v4816 = vand.u32 %v4324, 2139095040
    %v4817 = vshrl.u32 %v4816, 23
    %v4818 = vsub.s32 %v4817, 127
    %v4819 = vand.u32 2147483647, %v4324
    %v4820 = vand.u32 %v4819, 8388607
    %v4821 = vor.u32 %v4820, 8388608
    %v4822 = vsub.s32 0, %v4821
    %v4823 = vadd.s32 %v4818, 1
    %vm4824 = vcmp.gt.s32.totalorder %v4823, 0
    %v4825 = vsel %vm4824, %v4823, 0
    %v4826 = vshrl.u32 %v4825, 5
    %v4827 = vand.u32 %v4825, 31
    %v4828 = vsub.s32 32, %v4827
    %v4829 = vshrl.u32 683565275, %v4828
    %v4830 = vshll.u32 683565275, %v4827
    %v4831 = vshrl.u32 2475754826, %v4828
    %v4832 = vor.u32 %v4830, %v4831
    %v4833 = vshll.u32 2475754826, %v4827
    %v4834 = vshrl.u32 2131351028, %v4828
    %v4835 = vor.u32 %v4833, %v4834
    %v4836 = vshll.u32 2131351028, %v4827
    %v4837 = vshrl.u32 2102212464, %v4828
    %v4838 = vor.u32 %v4836, %v4837
    %v4839 = vshll.u32 2102212464, %v4827
    %v4840 = vshrl.u32 920167782, %v4828
    %v4841 = vor.u32 %v4839, %v4840
    %v4842 = vshll.u32 920167782, %v4827
    %v4843 = vshrl.u32 1326507024, %v4828
    %v4844 = vor.u32 %v4842, %v4843
    %vm4845 = vcmp.lt.s32.totalorder %v4826, 1
    %vm4846 = vcmp.lt.s32.totalorder %v4826, 2
    %vm4847 = vcmp.lt.s32.totalorder %v4826, 3
    %vm4848 = vcmp.lt.s32.totalorder %v4826, 4
    %v4849 = vsel %vm4845, %v4829, %v4832
    %v4850 = vsel %vm4848, %v4838, 2102212464
    %v4851 = vsel %vm4847, %v4835, %v4850
    %v4852 = vsel %vm4846, %v4849, %v4851
    %v4853 = vsel %vm4845, %v4832, %v4835
    %v4854 = vsel %vm4848, %v4841, 920167782
    %v4855 = vsel %vm4847, %v4838, %v4854
    %v4856 = vsel %vm4846, %v4853, %v4855
    %v4857 = vsel %vm4845, %v4835, %v4838
    %v4858 = vsel %vm4848, %v4844, 1326507024
    %v4859 = vsel %vm4847, %v4841, %v4858
    %v4860 = vsel %vm4846, %v4857, %v4859
    %v4861 = vshll.u32 %v4821, 8
    %v4862 = vand.u32 %v4861, 65535
    %v4863 = vshrl.u32 %v4861, 16
    %v4864 = vand.u32 %v4860, 65535
    %v4865 = vshrl.u32 %v4860, 16
    %v4866 = vmul.u32 %v4862, %v4864
    %v4867 = vmul.u32 %v4862, %v4865
    %v4868 = vmul.u32 %v4863, %v4864
    %v4869 = vmul.u32 %v4863, %v4865
    %v4870 = vshll.u32 %v4867, 16
    %v4871 = vshrl.u32 %v4867, 16
    %v4872 = vshll.u32 %v4868, 16
    %v4873 = vshrl.u32 %v4868, 16
    %vm4874 = vc.u32 %v4866, %v4870
    %v4875 = vsel %vm4874, 1, 0
    %v4876 = vadd.s32 %v4866, %v4870
    %v4877 = vadd.s32 %v4869, %v4875
    %vm4878 = vc.u32 %v4876, %v4872
    %v4879 = vsel %vm4878, 1, 0
    %v4880 = vadd.s32 %v4876, %v4872
    %v4881 = vadd.s32 %v4877, %v4879
    %v4882 = vadd.s32 %v4881, %v4871
    %v4883 = vadd.s32 %v4882, %v4873
    %v4884 = vand.u32 %v4861, 65535
    %v4885 = vshrl.u32 %v4861, 16
    %v4886 = vand.u32 %v4856, 65535
    %v4887 = vshrl.u32 %v4856, 16
    %v4888 = vmul.u32 %v4884, %v4886
    %v4889 = vmul.u32 %v4884, %v4887
    %v4890 = vmul.u32 %v4885, %v4886
    %v4891 = vmul.u32 %v4885, %v4887
    %v4892 = vshll.u32 %v4889, 16
    %v4893 = vshrl.u32 %v4889, 16
    %v4894 = vshll.u32 %v4890, 16
    %v4895 = vshrl.u32 %v4890, 16
    %vm4896 = vc.u32 %v4888, %v4892
    %v4897 = vsel %vm4896, 1, 0
    %v4898 = vadd.s32 %v4888, %v4892
    %v4899 = vadd.s32 %v4891, %v4897
    %vm4900 = vc.u32 %v4898, %v4894
    %v4901 = vsel %vm4900, 1, 0
    %v4902 = vadd.s32 %v4898, %v4894
    %v4903 = vadd.s32 %v4899, %v4901
    %v4904 = vadd.s32 %v4903, %v4893
    %v4905 = vadd.s32 %v4904, %v4895
    %v4906 = vmul.u32 %v4861, %v4852
    %v4907 = vadd.s32 %v4883, %v4902
    %vm4908 = vc.u32 %v4883, %v4902
    %v4909 = vadd.s32 %v4905, 1
    %v4910 = vsel %vm4908, %v4909, %v4905
    %v4911 = vadd.s32 %v4906, %v4910
    %v4912 = vadd.s32 %v4911, 536870912
    %v4913 = vshrl.u32 %v4912, 30
    %v4914 = vshll.u32 %v4913, 30
    %v4915 = vsub.s32 %v4911, %v4914
    %vm4916 = vcmp.lt.s32.totalorder %v4915, 0
    %v4917 = vsub.s32 0, %v4915
    %v4918 = vsel %vm4916, %v4917, %v4915
    %v4919 = vclz %v4918
    %v4920 = vsub.s32 %v4919, 2
    %vm4921 = vcmp.gt.s32.totalorder 0, %v4920
    %v4922 = vsel %vm4921, 0, %v4920
    %v4923 = vsub.s32 32, %v4922
    %v4924 = vshll.u32 %v4915, %v4922
    %v4925 = vshrl.u32 %v4907, %v4923
    %v4926 = vor.u32 %v4924, %v4925
    %v4927 = vsub.s32 4294967266, %v4922
    %v4928 = vadd.s32 %v4927, 127
    %v4929 = vshll.u32 %v4928, 23
    %v4930 = vor.u32 4788187, %v4929
    %v4931 = vand.u32 2147483647, %v4930
    %v4933 = vcvt.s32.f32 %v4926
    %v4934 = vmul.f32 %v4933, %v4931
    %v4935 = vxor.u32 %v4934, 2147483648
    %v4936 = vsel %vm4815, %v4935, %v4934
    %v4937 = vsub.s32 4, %v4913
    %v4938 = vsel %vm4815, %v4937, %v4913
    %v4939 = vsel %vm4814, %v4324, %v4936
    %v4940 = vsel %vm4814, 0, %v4938
    %v4941 = vmul.f32 %v4939, %v4939
    %v4942 = vmul.f32 %v4941, -0.001358992
    %v4943 = vadd.f32 %v4942, 0.041655596
    %v4944 = vmul.f32 %v4941, %v4943
    %v4945 = vadd.f32 %v4944, -0.4999988
    %v4946 = vmul.f32 %v4941, %v4945
    %v4947 = vadd.f32 1.0, %v4946
    %v4948 = vmul.f32 %v4939, %v4939
    %v4949 = vmul.f32 %v4948, -0.00019511016
    %v4950 = vadd.f32 %v4949, 0.008332121
    %v4951 = vmul.f32 %v4948, %v4950
    %v4952 = vadd.f32 %v4951, -0.16666654
    %v4953 = vmul.f32 %v4948, %v4952
    %v4954 = vadd.f32 %v4953, 1.0
    %v4955 = vmul.f32 %v4954, %v4939
    %vm4956 = vweird.f32 %v4324
    %v4957 = vand.u32 %v4940, 3
    %vm4958 = vcmp.lt.s32.totalorder %v4957, 2
    %vm4959 = vcmp.eq.s32.totalorder %v4957, 0
    %v4960 = vxor.u32 %v4955, 2147483648
    %v4961 = vsel %vm4959, %v4947, %v4960
    %vm4962 = vcmp.eq.s32.totalorder %v4957, 2
    %v4963 = vxor.u32 %v4947, 2147483648
    %v4964 = vsel %vm4962, %v4963, %v4955
    %v4965 = vsel %vm4958, %v4961, %v4964
    %v4966 = vsel %vm4956, nan, %v4965
    %v4967 = vmul.f32 %v4344, %v4504
    %v4968 = vmul.f32 %v4346, %v4658
    %v4969 = vmul.f32 %v4348, %v4812
    %v4970 = vmul.f32 %v4350, %v4966
    %v4971 = vand.u32 2147483647, %v4279
    %vm4972 = vcmp.le.f32.partialorder %v4971, 0.7853982
    %vm4973 = vcmp.lt.s32.totalorder %v4279, 0
    %v4974 = vand.u32 %v4279, 2139095040
    %v4975 = vshrl.u32 %v4974, 23
    %v4976 = vsub.s32 %v4975, 127
    %v4977 = vand.u32 2147483647, %v4279
    %v4978 = vand.u32 %v4977, 8388607
    %v4979 = vor.u32 %v4978, 8388608
    %v4980 = vsub.s32 0, %v4979
    %v4981 = vadd.s32 %v4976, 1
    %vm4982 = vcmp.gt.s32.totalorder %v4981, 0
    %v4983 = vsel %vm4982, %v4981, 0
    %v4984 = vshrl.u32 %v4983, 5
    %v4985 = vand.u32 %v4983, 31
    %v4986 = vsub.s32 32, %v4985
    %v4987 = vshrl.u32 683565275, %v4986
    %v4988 = vshll.u32 683565275, %v4985
    %v4989 = vshrl.u32 2475754826, %v4986
    %v4990 = vor.u32 %v4988, %v4989
    %v4991 = vshll.u32 2475754826, %v4985
    %v4992 = vshrl.u32 2131351028, %v4986
    %v4993 = vor.u32 %v4991, %v4992
    %v4994 = vshll.u32 2131351028, %v4985
    %v4995 = vshrl.u32 2102212464, %v4986
    %v4996 = vor.u32 %v4994, %v4995
    %v4997 = vshll.u32 2102212464, %v4985
    %v4998 = vshrl.u32 920167782, %v4986
    %v4999 = vor.u32 %v4997, %v4998
    %v5000 = vshll.u32 920167782, %v4985
    %v5001 = vshrl.u32 1326507024, %v4986
    %v5002 = vor.u32 %v5000, %v5001
    %vm5003 = vcmp.lt.s32.totalorder %v4984, 1
    %vm5004 = vcmp.lt.s32.totalorder %v4984, 2
    %vm5005 = vcmp.lt.s32.totalorder %v4984, 3
    %vm5006 = vcmp.lt.s32.totalorder %v4984, 4
    %v5007 = vsel %vm5003, %v4987, %v4990
    %v5008 = vsel %vm5006, %v4996, 2102212464
    %v5009 = vsel %vm5005, %v4993, %v5008
    %v5010 = vsel %vm5004, %v5007, %v5009
    %v5011 = vsel %vm5003, %v4990, %v4993
    %v5012 = vsel %vm5006, %v4999, 920167782
    %v5013 = vsel %vm5005, %v4996, %v5012
    %v5014 = vsel %vm5004, %v5011, %v5013
    %v5015 = vsel %vm5003, %v4993, %v4996
    %v5016 = vsel %vm5006, %v5002, 1326507024
    %v5017 = vsel %vm5005, %v4999, %v5016
    %v5018 = vsel %vm5004, %v5015, %v5017
    %v5019 = vshll.u32 %v4979, 8
    %v5020 = vand.u32 %v5019, 65535
    %v5021 = vshrl.u32 %v5019, 16
    %v5022 = vand.u32 %v5018, 65535
    %v5023 = vshrl.u32 %v5018, 16
    %v5024 = vmul.u32 %v5020, %v5022
    %v5025 = vmul.u32 %v5020, %v5023
    %v5026 = vmul.u32 %v5021, %v5022
    %v5027 = vmul.u32 %v5021, %v5023
    %v5028 = vshll.u32 %v5025, 16
    %v5029 = vshrl.u32 %v5025, 16
    %v5030 = vshll.u32 %v5026, 16
    %v5031 = vshrl.u32 %v5026, 16
    %vm5032 = vc.u32 %v5024, %v5028
    %v5033 = vsel %vm5032, 1, 0
    %v5034 = vadd.s32 %v5024, %v5028
    %v5035 = vadd.s32 %v5027, %v5033
    %vm5036 = vc.u32 %v5034, %v5030
    %v5037 = vsel %vm5036, 1, 0
    %v5038 = vadd.s32 %v5034, %v5030
    %v5039 = vadd.s32 %v5035, %v5037
    %v5040 = vadd.s32 %v5039, %v5029
    %v5041 = vadd.s32 %v5040, %v5031
    %v5042 = vand.u32 %v5019, 65535
    %v5043 = vshrl.u32 %v5019, 16
    %v5044 = vand.u32 %v5014, 65535
    %v5045 = vshrl.u32 %v5014, 16
    %v5046 = vmul.u32 %v5042, %v5044
    %v5047 = vmul.u32 %v5042, %v5045
    %v5048 = vmul.u32 %v5043, %v5044
    %v5049 = vmul.u32 %v5043, %v5045
    %v5050 = vshll.u32 %v5047, 16
    %v5051 = vshrl.u32 %v5047, 16
    %v5052 = vshll.u32 %v5048, 16
    %v5053 = vshrl.u32 %v5048, 16
    %vm5054 = vc.u32 %v5046, %v5050
    %v5055 = vsel %vm5054, 1, 0
    %v5056 = vadd.s32 %v5046, %v5050
    %v5057 = vadd.s32 %v5049, %v5055
    %vm5058 = vc.u32 %v5056, %v5052
    %v5059 = vsel %vm5058, 1, 0
    %v5060 = vadd.s32 %v5056, %v5052
    %v5061 = vadd.s32 %v5057, %v5059
    %v5062 = vadd.s32 %v5061, %v5051
    %v5063 = vadd.s32 %v5062, %v5053
    %v5064 = vmul.u32 %v5019, %v5010
    %v5065 = vadd.s32 %v5041, %v5060
    %vm5066 = vc.u32 %v5041, %v5060
    %v5067 = vadd.s32 %v5063, 1
    %v5068 = vsel %vm5066, %v5067, %v5063
    %v5069 = vadd.s32 %v5064, %v5068
    %v5070 = vadd.s32 %v5069, 536870912
    %v5071 = vshrl.u32 %v5070, 30
    %v5072 = vshll.u32 %v5071, 30
    %v5073 = vsub.s32 %v5069, %v5072
    %vm5074 = vcmp.lt.s32.totalorder %v5073, 0
    %v5075 = vsub.s32 0, %v5073
    %v5076 = vsel %vm5074, %v5075, %v5073
    %v5077 = vclz %v5076
    %v5078 = vsub.s32 %v5077, 2
    %vm5079 = vcmp.gt.s32.totalorder 0, %v5078
    %v5080 = vsel %vm5079, 0, %v5078
    %v5081 = vsub.s32 32, %v5080
    %v5082 = vshll.u32 %v5073, %v5080
    %v5083 = vshrl.u32 %v5065, %v5081
    %v5084 = vor.u32 %v5082, %v5083
    %v5085 = vsub.s32 4294967266, %v5080
    %v5086 = vadd.s32 %v5085, 127
    %v5087 = vshll.u32 %v5086, 23
    %v5088 = vor.u32 4788187, %v5087
    %v5089 = vand.u32 2147483647, %v5088
    %v5091 = vcvt.s32.f32 %v5084
    %v5092 = vmul.f32 %v5091, %v5089
    %v5093 = vxor.u32 %v5092, 2147483648
    %v5094 = vsel %vm4973, %v5093, %v5092
    %v5095 = vsub.s32 4, %v5071
    %v5096 = vsel %vm4973, %v5095, %v5071
    %v5097 = vsel %vm4972, %v4279, %v5094
    %v5098 = vsel %vm4972, 0, %v5096
    %v5099 = vmul.f32 %v5097, %v5097
    %v5100 = vmul.f32 %v5099, -0.001358992
    %v5101 = vadd.f32 %v5100, 0.041655596
    %v5102 = vmul.f32 %v5099, %v5101
    %v5103 = vadd.f32 %v5102, -0.4999988
    %v5104 = vmul.f32 %v5099, %v5103
    %v5105 = vadd.f32 1.0, %v5104
    %v5106 = vmul.f32 %v5097, %v5097
    %v5107 = vmul.f32 %v5106, -0.00019511016
    %v5108 = vadd.f32 %v5107, 0.008332121
    %v5109 = vmul.f32 %v5106, %v5108
    %v5110 = vadd.f32 %v5109, -0.16666654
    %v5111 = vmul.f32 %v5106, %v5110
    %v5112 = vadd.f32 %v5111, 1.0
    %v5113 = vmul.f32 %v5112, %v5097
    %vm5114 = vweird.f32 %v4279
    %v5115 = vadd.s32 %v5098, 3
    %v5116 = vand.u32 %v5115, 3
    %vm5117 = vcmp.lt.s32.totalorder %v5116, 2
    %vm5118 = vcmp.eq.s32.totalorder %v5116, 0
    %v5119 = vxor.u32 %v5113, 2147483648
    %v5120 = vsel %vm5118, %v5105, %v5119
    %vm5121 = vcmp.eq.s32.totalorder %v5116, 2
    %v5122 = vxor.u32 %v5105, 2147483648
    %v5123 = vsel %vm5121, %v5122, %v5113
    %v5124 = vsel %vm5117, %v5120, %v5123
    %v5125 = vsel %vm5114, nan, %v5124
    %v5126 = vand.u32 2147483647, %v4294
    %vm5127 = vcmp.le.f32.partialorder %v5126, 0.7853982
    %vm5128 = vcmp.lt.s32.totalorder %v4294, 0
    %v5129 = vand.u32 %v4294, 2139095040
    %v5130 = vshrl.u32 %v5129, 23
    %v5131 = vsub.s32 %v5130, 127
    %v5132 = vand.u32 2147483647, %v4294
    %v5133 = vand.u32 %v5132, 8388607
    %v5134 = vor.u32 %v5133, 8388608
    %v5135 = vsub.s32 0, %v5134
    %v5136 = vadd.s32 %v5131, 1
    %vm5137 = vcmp.gt.s32.totalorder %v5136, 0
    %v5138 = vsel %vm5137, %v5136, 0
    %v5139 = vshrl.u32 %v5138, 5
    %v5140 = vand.u32 %v5138, 31
    %v5141 = vsub.s32 32, %v5140
    %v5142 = vshrl.u32 683565275, %v5141
    %v5143 = vshll.u32 683565275, %v5140
    %v5144 = vshrl.u32 2475754826, %v5141
    %v5145 = vor.u32 %v5143, %v5144
    %v5146 = vshll.u32 2475754826, %v5140
    %v5147 = vshrl.u32 2131351028, %v5141
    %v5148 = vor.u32 %v5146, %v5147
    %v5149 = vshll.u32 2131351028, %v5140
    %v5150 = vshrl.u32 2102212464, %v5141
    %v5151 = vor.u32 %v5149, %v5150
    %v5152 = vshll.u32 2102212464, %v5140
    %v5153 = vshrl.u32 920167782, %v5141
    %v5154 = vor.u32 %v5152, %v5153
    %v5155 = vshll.u32 920167782, %v5140
    %v5156 = vshrl.u32 1326507024, %v5141
    %v5157 = vor.u32 %v5155, %v5156
    %vm5158 = vcmp.lt.s32.totalorder %v5139, 1
    %vm5159 = vcmp.lt.s32.totalorder %v5139, 2
    %vm5160 = vcmp.lt.s32.totalorder %v5139, 3
    %vm5161 = vcmp.lt.s32.totalorder %v5139, 4
    %v5162 = vsel %vm5158, %v5142, %v5145
    %v5163 = vsel %vm5161, %v5151, 2102212464
    %v5164 = vsel %vm5160, %v5148, %v5163
    %v5165 = vsel %vm5159, %v5162, %v5164
    %v5166 = vsel %vm5158, %v5145, %v5148
    %v5167 = vsel %vm5161, %v5154, 920167782
    %v5168 = vsel %vm5160, %v5151, %v5167
    %v5169 = vsel %vm5159, %v5166, %v5168
    %v5170 = vsel %vm5158, %v5148, %v5151
    %v5171 = vsel %vm5161, %v5157, 1326507024
    %v5172 = vsel %vm5160, %v5154, %v5171
    %v5173 = vsel %vm5159, %v5170, %v5172
    %v5174 = vshll.u32 %v5134, 8
    %v5175 = vand.u32 %v5174, 65535
    %v5176 = vshrl.u32 %v5174, 16
    %v5177 = vand.u32 %v5173, 65535
    %v5178 = vshrl.u32 %v5173, 16
    %v5179 = vmul.u32 %v5175, %v5177
    %v5180 = vmul.u32 %v5175, %v5178
    %v5181 = vmul.u32 %v5176, %v5177
    %v5182 = vmul.u32 %v5176, %v5178
    %v5183 = vshll.u32 %v5180, 16
    %v5184 = vshrl.u32 %v5180, 16
    %v5185 = vshll.u32 %v5181, 16
    %v5186 = vshrl.u32 %v5181, 16
    %vm5187 = vc.u32 %v5179, %v5183
    %v5188 = vsel %vm5187, 1, 0
    %v5189 = vadd.s32 %v5179, %v5183
    %v5190 = vadd.s32 %v5182, %v5188
    %vm5191 = vc.u32 %v5189, %v5185
    %v5192 = vsel %vm5191, 1, 0
    %v5193 = vadd.s32 %v5189, %v5185
    %v5194 = vadd.s32 %v5190, %v5192
    %v5195 = vadd.s32 %v5194, %v5184
    %v5196 = vadd.s32 %v5195, %v5186
    %v5197 = vand.u32 %v5174, 65535
    %v5198 = vshrl.u32 %v5174, 16
    %v5199 = vand.u32 %v5169, 65535
    %v5200 = vshrl.u32 %v5169, 16
    %v5201 = vmul.u32 %v5197, %v5199
    %v5202 = vmul.u32 %v5197, %v5200
    %v5203 = vmul.u32 %v5198, %v5199
    %v5204 = vmul.u32 %v5198, %v5200
    %v5205 = vshll.u32 %v5202, 16
    %v5206 = vshrl.u32 %v5202, 16
    %v5207 = vshll.u32 %v5203, 16
    %v5208 = vshrl.u32 %v5203, 16
    %vm5209 = vc.u32 %v5201, %v5205
    %v5210 = vsel %vm5209, 1, 0
    %v5211 = vadd.s32 %v5201, %v5205
    %v5212 = vadd.s32 %v5204, %v5210
    %vm5213 = vc.u32 %v5211, %v5207
    %v5214 = vsel %vm5213, 1, 0
    %v5215 = vadd.s32 %v5211, %v5207
    %v5216 = vadd.s32 %v5212, %v5214
    %v5217 = vadd.s32 %v5216, %v5206
    %v5218 = vadd.s32 %v5217, %v5208
    %v5219 = vmul.u32 %v5174, %v5165
    %v5220 = vadd.s32 %v5196, %v5215
    %vm5221 = vc.u32 %v5196, %v5215
    %v5222 = vadd.s32 %v5218, 1
    %v5223 = vsel %vm5221, %v5222, %v5218
    %v5224 = vadd.s32 %v5219, %v5223
    %v5225 = vadd.s32 %v5224, 536870912
    %v5226 = vshrl.u32 %v5225, 30
    %v5227 = vshll.u32 %v5226, 30
    %v5228 = vsub.s32 %v5224, %v5227
    %vm5229 = vcmp.lt.s32.totalorder %v5228, 0
    %v5230 = vsub.s32 0, %v5228
    %v5231 = vsel %vm5229, %v5230, %v5228
    %v5232 = vclz %v5231
    %v5233 = vsub.s32 %v5232, 2
    %vm5234 = vcmp.gt.s32.totalorder 0, %v5233
    %v5235 = vsel %vm5234, 0, %v5233
    %v5236 = vsub.s32 32, %v5235
    %v5237 = vshll.u32 %v5228, %v5235
    %v5238 = vshrl.u32 %v5220, %v5236
    %v5239 = vor.u32 %v5237, %v5238
    %v5240 = vsub.s32 4294967266, %v5235
    %v5241 = vadd.s32 %v5240, 127
    %v5242 = vshll.u32 %v5241, 23
    %v5243 = vor.u32 4788187, %v5242
    %v5244 = vand.u32 2147483647, %v5243
    %v5246 = vcvt.s32.f32 %v5239
    %v5247 = vmul.f32 %v5246, %v5244
    %v5248 = vxor.u32 %v5247, 2147483648
    %v5249 = vsel %vm5128, %v5248, %v5247
    %v5250 = vsub.s32 4, %v5226
    %v5251 = vsel %vm5128, %v5250, %v5226
    %v5252 = vsel %vm5127, %v4294, %v5249
    %v5253 = vsel %vm5127, 0, %v5251
    %v5254 = vmul.f32 %v5252, %v5252
    %v5255 = vmul.f32 %v5254, -0.001358992
    %v5256 = vadd.f32 %v5255, 0.041655596
    %v5257 = vmul.f32 %v5254, %v5256
    %v5258 = vadd.f32 %v5257, -0.4999988
    %v5259 = vmul.f32 %v5254, %v5258
    %v5260 = vadd.f32 1.0, %v5259
    %v5261 = vmul.f32 %v5252, %v5252
    %v5262 = vmul.f32 %v5261, -0.00019511016
    %v5263 = vadd.f32 %v5262, 0.008332121
    %v5264 = vmul.f32 %v5261, %v5263
    %v5265 = vadd.f32 %v5264, -0.16666654
    %v5266 = vmul.f32 %v5261, %v5265
    %v5267 = vadd.f32 %v5266, 1.0
    %v5268 = vmul.f32 %v5267, %v5252
    %vm5269 = vweird.f32 %v4294
    %v5270 = vadd.s32 %v5253, 3
    %v5271 = vand.u32 %v5270, 3
    %vm5272 = vcmp.lt.s32.totalorder %v5271, 2
    %vm5273 = vcmp.eq.s32.totalorder %v5271, 0
    %v5274 = vxor.u32 %v5268, 2147483648
    %v5275 = vsel %vm5273, %v5260, %v5274
    %vm5276 = vcmp.eq.s32.totalorder %v5271, 2
    %v5277 = vxor.u32 %v5260, 2147483648
    %v5278 = vsel %vm5276, %v5277, %v5268
    %v5279 = vsel %vm5272, %v5275, %v5278
    %v5280 = vsel %vm5269, nan, %v5279
    %v5281 = vand.u32 2147483647, %v4309
    %vm5282 = vcmp.le.f32.partialorder %v5281, 0.7853982
    %vm5283 = vcmp.lt.s32.totalorder %v4309, 0
    %v5284 = vand.u32 %v4309, 2139095040
    %v5285 = vshrl.u32 %v5284, 23
    %v5286 = vsub.s32 %v5285, 127
    %v5287 = vand.u32 2147483647, %v4309
    %v5288 = vand.u32 %v5287, 8388607
    %v5289 = vor.u32 %v5288, 8388608
    %v5290 = vsub.s32 0, %v5289
    %v5291 = vadd.s32 %v5286, 1
    %vm5292 = vcmp.gt.s32.totalorder %v5291, 0
    %v5293 = vsel %vm5292, %v5291, 0
    %v5294 = vshrl.u32 %v5293, 5
    %v5295 = vand.u32 %v5293, 31
    %v5296 = vsub.s32 32, %v5295
    %v5297 = vshrl.u32 683565275, %v5296
    %v5298 = vshll.u32 683565275, %v5295
    %v5299 = vshrl.u32 2475754826, %v5296
    %v5300 = vor.u32 %v5298, %v5299
    %v5301 = vshll.u32 2475754826, %v5295
    %v5302 = vshrl.u32 2131351028, %v5296
    %v5303 = vor.u32 %v5301, %v5302
    %v5304 = vshll.u32 2131351028, %v5295
    %v5305 = vshrl.u32 2102212464, %v5296
    %v5306 = vor.u32 %v5304, %v5305
    %v5307 = vshll.u32 2102212464, %v5295
    %v5308 = vshrl.u32 920167782, %v5296
    %v5309 = vor.u32 %v5307, %v5308
    %v5310 = vshll.u32 920167782, %v5295
    %v5311 = vshrl.u32 1326507024, %v5296
    %v5312 = vor.u32 %v5310, %v5311
    %vm5313 = vcmp.lt.s32.totalorder %v5294, 1
    %vm5314 = vcmp.lt.s32.totalorder %v5294, 2
    %vm5315 = vcmp.lt.s32.totalorder %v5294, 3
    %vm5316 = vcmp.lt.s32.totalorder %v5294, 4
    %v5317 = vsel %vm5313, %v5297, %v5300
    %v5318 = vsel %vm5316, %v5306, 2102212464
    %v5319 = vsel %vm5315, %v5303, %v5318
    %v5320 = vsel %vm5314, %v5317, %v5319
    %v5321 = vsel %vm5313, %v5300, %v5303
    %v5322 = vsel %vm5316, %v5309, 920167782
    %v5323 = vsel %vm5315, %v5306, %v5322
    %v5324 = vsel %vm5314, %v5321, %v5323
    %v5325 = vsel %vm5313, %v5303, %v5306
    %v5326 = vsel %vm5316, %v5312, 1326507024
    %v5327 = vsel %vm5315, %v5309, %v5326
    %v5328 = vsel %vm5314, %v5325, %v5327
    %v5329 = vshll.u32 %v5289, 8
    %v5330 = vand.u32 %v5329, 65535
    %v5331 = vshrl.u32 %v5329, 16
    %v5332 = vand.u32 %v5328, 65535
    %v5333 = vshrl.u32 %v5328, 16
    %v5334 = vmul.u32 %v5330, %v5332
    %v5335 = vmul.u32 %v5330, %v5333
    %v5336 = vmul.u32 %v5331, %v5332
    %v5337 = vmul.u32 %v5331, %v5333
    %v5338 = vshll.u32 %v5335, 16
    %v5339 = vshrl.u32 %v5335, 16
    %v5340 = vshll.u32 %v5336, 16
    %v5341 = vshrl.u32 %v5336, 16
    %vm5342 = vc.u32 %v5334, %v5338
    %v5343 = vsel %vm5342, 1, 0
    %v5344 = vadd.s32 %v5334, %v5338
    %v5345 = vadd.s32 %v5337, %v5343
    %vm5346 = vc.u32 %v5344, %v5340
    %v5347 = vsel %vm5346, 1, 0
    %v5348 = vadd.s32 %v5344, %v5340
    %v5349 = vadd.s32 %v5345, %v5347
    %v5350 = vadd.s32 %v5349, %v5339
    %v5351 = vadd.s32 %v5350, %v5341
    %v5352 = vand.u32 %v5329, 65535
    %v5353 = vshrl.u32 %v5329, 16
    %v5354 = vand.u32 %v5324, 65535
    %v5355 = vshrl.u32 %v5324, 16
    %v5356 = vmul.u32 %v5352, %v5354
    %v5357 = vmul.u32 %v5352, %v5355
    %v5358 = vmul.u32 %v5353, %v5354
    %v5359 = vmul.u32 %v5353, %v5355
    %v5360 = vshll.u32 %v5357, 16
    %v5361 = vshrl.u32 %v5357, 16
    %v5362 = vshll.u32 %v5358, 16
    %v5363 = vshrl.u32 %v5358, 16
    %vm5364 = vc.u32 %v5356, %v5360
    %v5365 = vsel %vm5364, 1, 0
    %v5366 = vadd.s32 %v5356, %v5360
    %v5367 = vadd.s32 %v5359, %v5365
    %vm5368 = vc.u32 %v5366, %v5362
    %v5369 = vsel %vm5368, 1, 0
    %v5370 = vadd.s32 %v5366, %v5362
    %v5371 = vadd.s32 %v5367, %v5369
    %v5372 = vadd.s32 %v5371, %v5361
    %v5373 = vadd.s32 %v5372, %v5363
    %v5374 = vmul.u32 %v5329, %v5320
    %v5375 = vadd.s32 %v5351, %v5370
    %vm5376 = vc.u32 %v5351, %v5370
    %v5377 = vadd.s32 %v5373, 1
    %v5378 = vsel %vm5376, %v5377, %v5373
    %v5379 = vadd.s32 %v5374, %v5378
    %v5380 = vadd.s32 %v5379, 536870912
    %v5381 = vshrl.u32 %v5380, 30
    %v5382 = vshll.u32 %v5381, 30
    %v5383 = vsub.s32 %v5379, %v5382
    %vm5384 = vcmp.lt.s32.totalorder %v5383, 0
    %v5385 = vsub.s32 0, %v5383
    %v5386 = vsel %vm5384, %v5385, %v5383
    %v5387 = vclz %v5386
    %v5388 = vsub.s32 %v5387, 2
    %vm5389 = vcmp.gt.s32.totalorder 0, %v5388
    %v5390 = vsel %vm5389, 0, %v5388
    %v5391 = vsub.s32 32, %v5390
    %v5392 = vshll.u32 %v5383, %v5390
    %v5393 = vshrl.u32 %v5375, %v5391
    %v5394 = vor.u32 %v5392, %v5393
    %v5395 = vsub.s32 4294967266, %v5390
    %v5396 = vadd.s32 %v5395, 127
    %v5397 = vshll.u32 %v5396, 23
    %v5398 = vor.u32 4788187, %v5397
    %v5399 = vand.u32 2147483647, %v5398
    %v5401 = vcvt.s32.f32 %v5394
    %v5402 = vmul.f32 %v5401, %v5399
    %v5403 = vxor.u32 %v5402, 2147483648
    %v5404 = vsel %vm5283, %v5403, %v5402
    %v5405 = vsub.s32 4, %v5381
    %v5406 = vsel %vm5283, %v5405, %v5381
    %v5407 = vsel %vm5282, %v4309, %v5404
    %v5408 = vsel %vm5282, 0, %v5406
    %v5409 = vmul.f32 %v5407, %v5407
    %v5410 = vmul.f32 %v5409, -0.001358992
    %v5411 = vadd.f32 %v5410, 0.041655596
    %v5412 = vmul.f32 %v5409, %v5411
    %v5413 = vadd.f32 %v5412, -0.4999988
    %v5414 = vmul.f32 %v5409, %v5413
    %v5415 = vadd.f32 1.0, %v5414
    %v5416 = vmul.f32 %v5407, %v5407
    %v5417 = vmul.f32 %v5416, -0.00019511016
    %v5418 = vadd.f32 %v5417, 0.008332121
    %v5419 = vmul.f32 %v5416, %v5418
    %v5420 = vadd.f32 %v5419, -0.16666654
    %v5421 = vmul.f32 %v5416, %v5420
    %v5422 = vadd.f32 %v5421, 1.0
    %v5423 = vmul.f32 %v5422, %v5407
    %vm5424 = vweird.f32 %v4309
    %v5425 = vadd.s32 %v5408, 3
    %v5426 = vand.u32 %v5425, 3
    %vm5427 = vcmp.lt.s32.totalorder %v5426, 2
    %vm5428 = vcmp.eq.s32.totalorder %v5426, 0
    %v5429 = vxor.u32 %v5423, 2147483648
    %v5430 = vsel %vm5428, %v5415, %v5429
    %vm5431 = vcmp.eq.s32.totalorder %v5426, 2
    %v5432 = vxor.u32 %v5415, 2147483648
    %v5433 = vsel %vm5431, %v5432, %v5423
    %v5434 = vsel %vm5427, %v5430, %v5433
    %v5435 = vsel %vm5424, nan, %v5434
    %v5436 = vand.u32 2147483647, %v4324
    %vm5437 = vcmp.le.f32.partialorder %v5436, 0.7853982
    %vm5438 = vcmp.lt.s32.totalorder %v4324, 0
    %v5439 = vand.u32 %v4324, 2139095040
    %v5440 = vshrl.u32 %v5439, 23
    %v5441 = vsub.s32 %v5440, 127
    %v5442 = vand.u32 2147483647, %v4324
    %v5443 = vand.u32 %v5442, 8388607
    %v5444 = vor.u32 %v5443, 8388608
    %v5445 = vsub.s32 0, %v5444
    %v5446 = vadd.s32 %v5441, 1
    %vm5447 = vcmp.gt.s32.totalorder %v5446, 0
    %v5448 = vsel %vm5447, %v5446, 0
    %v5449 = vshrl.u32 %v5448, 5
    %v5450 = vand.u32 %v5448, 31
    %v5451 = vsub.s32 32, %v5450
    %v5452 = vshrl.u32 683565275, %v5451
    %v5453 = vshll.u32 683565275, %v5450
    %v5454 = vshrl.u32 2475754826, %v5451
    %v5455 = vor.u32 %v5453, %v5454
    %v5456 = vshll.u32 2475754826, %v5450
    %v5457 = vshrl.u32 2131351028, %v5451
    %v5458 = vor.u32 %v5456, %v5457
    %v5459 = vshll.u32 2131351028, %v5450
    %v5460 = vshrl.u32 2102212464, %v5451
    %v5461 = vor.u32 %v5459, %v5460
    %v5462 = vshll.u32 2102212464, %v5450
    %v5463 = vshrl.u32 920167782, %v5451
    %v5464 = vor.u32 %v5462, %v5463
    %v5465 = vshll.u32 920167782, %v5450
    %v5466 = vshrl.u32 1326507024, %v5451
    %v5467 = vor.u32 %v5465, %v5466
    %vm5468 = vcmp.lt.s32.totalorder %v5449, 1
    %vm5469 = vcmp.lt.s32.totalorder %v5449, 2
    %vm5470 = vcmp.lt.s32.totalorder %v5449, 3
    %vm5471 = vcmp.lt.s32.totalorder %v5449, 4
    %v5472 = vsel %vm5468, %v5452, %v5455
    %v5473 = vsel %vm5471, %v5461, 2102212464
    %v5474 = vsel %vm5470, %v5458, %v5473
    %v5475 = vsel %vm5469, %v5472, %v5474
    %v5476 = vsel %vm5468, %v5455, %v5458
    %v5477 = vsel %vm5471, %v5464, 920167782
    %v5478 = vsel %vm5470, %v5461, %v5477
    %v5479 = vsel %vm5469, %v5476, %v5478
    %v5480 = vsel %vm5468, %v5458, %v5461
    %v5481 = vsel %vm5471, %v5467, 1326507024
    %v5482 = vsel %vm5470, %v5464, %v5481
    %v5483 = vsel %vm5469, %v5480, %v5482
    %v5484 = vshll.u32 %v5444, 8
    %v5485 = vand.u32 %v5484, 65535
    %v5486 = vshrl.u32 %v5484, 16
    %v5487 = vand.u32 %v5483, 65535
    %v5488 = vshrl.u32 %v5483, 16
    %v5489 = vmul.u32 %v5485, %v5487
    %v5490 = vmul.u32 %v5485, %v5488
    %v5491 = vmul.u32 %v5486, %v5487
    %v5492 = vmul.u32 %v5486, %v5488
    %v5493 = vshll.u32 %v5490, 16
    %v5494 = vshrl.u32 %v5490, 16
    %v5495 = vshll.u32 %v5491, 16
    %v5496 = vshrl.u32 %v5491, 16
    %vm5497 = vc.u32 %v5489, %v5493
    %v5498 = vsel %vm5497, 1, 0
    %v5499 = vadd.s32 %v5489, %v5493
    %v5500 = vadd.s32 %v5492, %v5498
    %vm5501 = vc.u32 %v5499, %v5495
    %v5502 = vsel %vm5501, 1, 0
    %v5503 = vadd.s32 %v5499, %v5495
    %v5504 = vadd.s32 %v5500, %v5502
    %v5505 = vadd.s32 %v5504, %v5494
    %v5506 = vadd.s32 %v5505, %v5496
    %v5507 = vand.u32 %v5484, 65535
    %v5508 = vshrl.u32 %v5484, 16
    %v5509 = vand.u32 %v5479, 65535
    %v5510 = vshrl.u32 %v5479, 16
    %v5511 = vmul.u32 %v5507, %v5509
    %v5512 = vmul.u32 %v5507, %v5510
    %v5513 = vmul.u32 %v5508, %v5509
    %v5514 = vmul.u32 %v5508, %v5510
    %v5515 = vshll.u32 %v5512, 16
    %v5516 = vshrl.u32 %v5512, 16
    %v5517 = vshll.u32 %v5513, 16
    %v5518 = vshrl.u32 %v5513, 16
    %vm5519 = vc.u32 %v5511, %v5515
    %v5520 = vsel %vm5519, 1, 0
    %v5521 = vadd.s32 %v5511, %v5515
    %v5522 = vadd.s32 %v5514, %v5520
    %vm5523 = vc.u32 %v5521, %v5517
    %v5524 = vsel %vm5523, 1, 0
    %v5525 = vadd.s32 %v5521, %v5517
    %v5526 = vadd.s32 %v5522, %v5524
    %v5527 = vadd.s32 %v5526, %v5516
    %v5528 = vadd.s32 %v5527, %v5518
    %v5529 = vmul.u32 %v5484, %v5475
    %v5530 = vadd.s32 %v5506, %v5525
    %vm5531 = vc.u32 %v5506, %v5525
    %v5532 = vadd.s32 %v5528, 1
    %v5533 = vsel %vm5531, %v5532, %v5528
    %v5534 = vadd.s32 %v5529, %v5533
    %v5535 = vadd.s32 %v5534, 536870912
    %v5536 = vshrl.u32 %v5535, 30
    %v5537 = vshll.u32 %v5536, 30
    %v5538 = vsub.s32 %v5534, %v5537
    %vm5539 = vcmp.lt.s32.totalorder %v5538, 0
    %v5540 = vsub.s32 0, %v5538
    %v5541 = vsel %vm5539, %v5540, %v5538
    %v5542 = vclz %v5541
    %v5543 = vsub.s32 %v5542, 2
    %vm5544 = vcmp.gt.s32.totalorder 0, %v5543
    %v5545 = vsel %vm5544, 0, %v5543
    %v5546 = vsub.s32 32, %v5545
    %v5547 = vshll.u32 %v5538, %v5545
    %v5548 = vshrl.u32 %v5530, %v5546
    %v5549 = vor.u32 %v5547, %v5548
    %v5550 = vsub.s32 4294967266, %v5545
    %v5551 = vadd.s32 %v5550, 127
    %v5552 = vshll.u32 %v5551, 23
    %v5553 = vor.u32 4788187, %v5552
    %v5554 = vand.u32 2147483647, %v5553
    %v5556 = vcvt.s32.f32 %v5549
    %v5557 = vmul.f32 %v5556, %v5554
    %v5558 = vxor.u32 %v5557, 2147483648
    %v5559 = vsel %vm5438, %v5558, %v5557
    %v5560 = vsub.s32 4, %v5536
    %v5561 = vsel %vm5438, %v5560, %v5536
    %v5562 = vsel %vm5437, %v4324, %v5559
    %v5563 = vsel %vm5437, 0, %v5561
    %v5564 = vmul.f32 %v5562, %v5562
    %v5565 = vmul.f32 %v5564, -0.001358992
    %v5566 = vadd.f32 %v5565, 0.041655596
    %v5567 = vmul.f32 %v5564, %v5566
    %v5568 = vadd.f32 %v5567, -0.4999988
    %v5569 = vmul.f32 %v5564, %v5568
    %v5570 = vadd.f32 1.0, %v5569
    %v5571 = vmul.f32 %v5562, %v5562
    %v5572 = vmul.f32 %v5571, -0.00019511016
    %v5573 = vadd.f32 %v5572, 0.008332121
    %v5574 = vmul.f32 %v5571, %v5573
    %v5575 = vadd.f32 %v5574, -0.16666654
    %v5576 = vmul.f32 %v5571, %v5575
    %v5577 = vadd.f32 %v5576, 1.0
    %v5578 = vmul.f32 %v5577, %v5562
    %vm5579 = vweird.f32 %v4324
    %v5580 = vadd.s32 %v5563, 3
    %v5581 = vand.u32 %v5580, 3
    %vm5582 = vcmp.lt.s32.totalorder %v5581, 2
    %vm5583 = vcmp.eq.s32.totalorder %v5581, 0
    %v5584 = vxor.u32 %v5578, 2147483648
    %v5585 = vsel %vm5583, %v5570, %v5584
    %vm5586 = vcmp.eq.s32.totalorder %v5581, 2
    %v5587 = vxor.u32 %v5570, 2147483648
    %v5588 = vsel %vm5586, %v5587, %v5578
    %v5589 = vsel %vm5582, %v5585, %v5588
    %v5590 = vsel %vm5579, nan, %v5589
    %v5591 = vmul.f32 %v4344, %v5125
    %v5592 = vmul.f32 %v4346, %v5280
    %v5593 = vmul.f32 %v4348, %v5435
    %v5594 = vmul.f32 %v4350, %v5590
    %v5595 = vsel %vm669, %v4967, 0.0
    %5596 = vadd.xlane.f32.xlu0 %v5595
    %v5597 = vpop.xlane.xlu0 %5596
    %v5598 = vsel %vm669, %v4968, 0.0
    %5599 = vadd.xlane.f32.xlu0 %v5598
    %v5600 = vpop.xlane.xlu0 %5599
    %v5601 = vsel %vm669, %v4969, 0.0
    %5602 = vadd.xlane.f32.xlu0 %v5601
    %v5603 = vpop.xlane.xlu0 %5602
    %v5604 = vsel %vm669, %v4970, 0.0
    %5605 = vadd.xlane.f32.xlu0 %v5604
    %v5606 = vpop.xlane.xlu0 %5605
    %v5607 = vsel %vm669, %v5591, 0.0
    %5608 = vadd.xlane.f32.xlu0 %v5607
    %v5609 = vpop.xlane.xlu0 %5608
    %v5610 = vsel %vm669, %v5592, 0.0
    %5611 = vadd.xlane.f32.xlu0 %v5610
    %v5612 = vpop.xlane.xlu0 %5611
    %v5613 = vsel %vm669, %v5593, 0.0
    %5614 = vadd.xlane.f32.xlu0 %v5613
    %v5615 = vpop.xlane.xlu0 %5614
    %v5616 = vsel %vm669, %v5594, 0.0
    %5617 = vadd.xlane.f32.xlu0 %v5616
    %v5618 = vpop.xlane.xlu0 %5617
    %v5619 = vmul.f32 %v5597, %v5597
    %v5620 = vmul.f32 %v5600, %v5600
    %v5621 = vmul.f32 %v5603, %v5603
    %v5622 = vmul.f32 %v5606, %v5606
    %v5623 = vmul.f32 %v5609, %v5609
    %v5624 = vmul.f32 %v5612, %v5612
    %v5625 = vmul.f32 %v5615, %v5615
    %v5626 = vmul.f32 %v5618, %v5618
    %v5627 = vadd.f32 %v5619, %v5623
    %v5628 = vadd.f32 %v5620, %v5624
    %v5629 = vadd.f32 %v5621, %v5625
    %v5630 = vadd.f32 %v5622, %v5626
    %v5631 = vadd.f32 %v5627, 1e-12
    %v5632 = vadd.f32 %v5628, 1e-12
    %v5633 = vadd.f32 %v5629, 1e-12
    %v5634 = vadd.f32 %v5630, 1e-12
    %v5635 = vrcp.pop %v5631
    %v5636 = vmul.f32 %v5631, %v5635
    %v5637 = vsub.f32 1.0, %v5636
    %v5638 = vmul.f32 %v5635, %v5637
    %v5639 = vadd.f32 %v5635, %v5638
    %vm5640 = vweird.f32 %v5631
    %vm5641 = vweird.f32 %v5635
    %vm5642 = vmor %vm5640, %vm5641
    %v5643 = vsel %vm5642, %v5635, %v5639
    %v5644 = vand.u32 2147483647, %v5631
    %vm5645 = vcmp.eq.f32.partialorder %v5644, 8.507059e+37
    %v5646 = vand.u32 %v5631, 2147483648
    %v5647 = vor.u32 1.1754944e-38, %v5646
    %v5648 = vsel %vm5645, %v5647, %v5643
    %v5649 = vmul.f32 1.0, %v5648
    %v5650 = vrcp.pop %v5632
    %v5651 = vmul.f32 %v5632, %v5650
    %v5652 = vsub.f32 1.0, %v5651
    %v5653 = vmul.f32 %v5650, %v5652
    %v5654 = vadd.f32 %v5650, %v5653
    %vm5655 = vweird.f32 %v5632
    %vm5656 = vweird.f32 %v5650
    %vm5657 = vmor %vm5655, %vm5656
    %v5658 = vsel %vm5657, %v5650, %v5654
    %v5659 = vand.u32 2147483647, %v5632
    %vm5660 = vcmp.eq.f32.partialorder %v5659, 8.507059e+37
    %v5661 = vand.u32 %v5632, 2147483648
    %v5662 = vor.u32 1.1754944e-38, %v5661
    %v5663 = vsel %vm5660, %v5662, %v5658
    %v5664 = vmul.f32 1.0, %v5663
    %v5665 = vrcp.pop %v5633
    %v5666 = vmul.f32 %v5633, %v5665
    %v5667 = vsub.f32 1.0, %v5666
    %v5668 = vmul.f32 %v5665, %v5667
    %v5669 = vadd.f32 %v5665, %v5668
    %vm5670 = vweird.f32 %v5633
    %vm5671 = vweird.f32 %v5665
    %vm5672 = vmor %vm5670, %vm5671
    %v5673 = vsel %vm5672, %v5665, %v5669
    %v5674 = vand.u32 2147483647, %v5633
    %vm5675 = vcmp.eq.f32.partialorder %v5674, 8.507059e+37
    %v5676 = vand.u32 %v5633, 2147483648
    %v5677 = vor.u32 1.1754944e-38, %v5676
    %v5678 = vsel %vm5675, %v5677, %v5673
    %v5679 = vmul.f32 1.0, %v5678
    %v5680 = vrcp.pop %v5634
    %v5681 = vmul.f32 %v5634, %v5680
    %v5682 = vsub.f32 1.0, %v5681
    %v5683 = vmul.f32 %v5680, %v5682
    %v5684 = vadd.f32 %v5680, %v5683
    %vm5685 = vweird.f32 %v5634
    %vm5686 = vweird.f32 %v5680
    %vm5687 = vmor %vm5685, %vm5686
    %v5688 = vsel %vm5687, %v5680, %v5684
    %v5689 = vand.u32 2147483647, %v5634
    %vm5690 = vcmp.eq.f32.partialorder %v5689, 8.507059e+37
    %v5691 = vand.u32 %v5634, 2147483648
    %v5692 = vor.u32 1.1754944e-38, %v5691
    %v5693 = vsel %vm5690, %v5692, %v5688
    %v5694 = vmul.f32 1.0, %v5693
    %v5695 = vmul.f32 %v4967, %v5597
    %v5696 = vmul.f32 %v4968, %v5600
    %v5697 = vmul.f32 %v4969, %v5603
    %v5698 = vmul.f32 %v4970, %v5606
    %v5699 = vmul.f32 %v5591, %v5609
    %v5700 = vmul.f32 %v5592, %v5612
    %v5701 = vmul.f32 %v5593, %v5615
    %v5702 = vmul.f32 %v5594, %v5618
    %v5703 = vadd.f32 %v5695, %v5699
    %v5704 = vadd.f32 %v5696, %v5700
    %v5705 = vadd.f32 %v5697, %v5701
    %v5706 = vadd.f32 %v5698, %v5702
    %v5707 = vmul.f32 %v5703, %v5649
    %v5708 = vmul.f32 %v5704, %v5664
    %v5709 = vmul.f32 %v5705, %v5679
    %v5710 = vmul.f32 %v5706, %v5694
    %v5711 = vpack.c.bf16 %v5707, %v5707
    %v5712 = vpack.c.bf16 %v5708, %v5708
    %v5713 = vpack.c.bf16 %v5709, %v5709
    %v5714 = vpack.c.bf16 %v5710, %v5710
    %v5715 = vmul.f32 %v5591, %v5597
    %v5716 = vmul.f32 %v5592, %v5600
    %v5717 = vmul.f32 %v5593, %v5603
    %v5718 = vmul.f32 %v5594, %v5606
    %v5719 = vmul.f32 %v4967, %v5609
    %v5720 = vmul.f32 %v4968, %v5612
    %v5721 = vmul.f32 %v4969, %v5615
    %v5722 = vmul.f32 %v4970, %v5618
    %v5723 = vsub.f32 %v5715, %v5719
    %v5724 = vsub.f32 %v5716, %v5720
    %v5725 = vsub.f32 %v5717, %v5721
    %v5726 = vsub.f32 %v5718, %v5722
    %v5727 = vmul.f32 %v5723, %v5649
    %v5728 = vmul.f32 %v5724, %v5664
    %v5729 = vmul.f32 %v5725, %v5679
    %v5730 = vmul.f32 %v5726, %v5694
    %v5731 = vpack.c.bf16 %v5727, %v5727
    %v5732 = vpack.c.bf16 %v5728, %v5728
    %v5733 = vpack.c.bf16 %v5729, %v5729
    %v5734 = vpack.c.bf16 %v5730, %v5730
    %v5736 = vsel %vm669, %v5731, 0
    %v5738 = vsel %vm2081, %v4157, 0
    %5740 = vmatpush.bf16.msra.mxu0 0
    %5741 = vmatpush.bf16.msra.mxu0 0
    %5742 = vmatpush.bf16.msra.mxu0 0
    %5743 = vmatpush.bf16.msra.mxu0 0
    %5744 = vmatpush.bf16.msra.mxu0 0
    %5745 = vmatpush.bf16.msra.mxu0 0
    %5746 = vmatpush.bf16.msra.mxu0 0
    %5747 = vmatpush.bf16.msra.mxu0 %v5738
    %5748 = vmatmul.bf16.gmra.mxu0 %v5736
    %v5749 = vpop.f32.mrf.mxu0
    %v5750 = vadd.f32 0.0, %v5749
    %v5751 = vpop.f32.mrf.mxu0
    %5752 = vdwg.mxu0
    %v5754 = vsel %vm669, %v5732, 0
    %v5756 = vsel %vm2081, %v4160, 0
    %5758 = vmatpush.bf16.msra.mxu0 0
    %5759 = vmatpush.bf16.msra.mxu0 0
    %5760 = vmatpush.bf16.msra.mxu0 0
    %5761 = vmatpush.bf16.msra.mxu0 0
    %5762 = vmatpush.bf16.msra.mxu0 0
    %5763 = vmatpush.bf16.msra.mxu0 0
    %5764 = vmatpush.bf16.msra.mxu0 0
    %5765 = vmatpush.bf16.msra.mxu0 %v5756
    %5766 = vmatmul.bf16.gmra.mxu0 %v5754
    %v5767 = vpop.f32.mrf.mxu0
    %v5768 = vadd.f32 0.0, %v5767
    %v5769 = vpop.f32.mrf.mxu0
    %5770 = vdwg.mxu0
    %v5772 = vsel %vm669, %v5733, 0
    %v5774 = vsel %vm2081, %v4163, 0
    %5776 = vmatpush.bf16.msra.mxu0 0
    %5777 = vmatpush.bf16.msra.mxu0 0
    %5778 = vmatpush.bf16.msra.mxu0 0
    %5779 = vmatpush.bf16.msra.mxu0 0
    %5780 = vmatpush.bf16.msra.mxu0 0
    %5781 = vmatpush.bf16.msra.mxu0 0
    %5782 = vmatpush.bf16.msra.mxu0 0
    %5783 = vmatpush.bf16.msra.mxu0 %v5774
    %5784 = vmatmul.bf16.gmra.mxu0 %v5772
    %v5785 = vpop.f32.mrf.mxu0
    %v5786 = vadd.f32 0.0, %v5785
    %v5787 = vpop.f32.mrf.mxu0
    %5788 = vdwg.mxu0
    %v5790 = vsel %vm669, %v5734, 0
    %v5792 = vsel %vm2081, %v4166, 0
    %5794 = vmatpush.bf16.msra.mxu0 0
    %5795 = vmatpush.bf16.msra.mxu0 0
    %5796 = vmatpush.bf16.msra.mxu0 0
    %5797 = vmatpush.bf16.msra.mxu0 0
    %5798 = vmatpush.bf16.msra.mxu0 0
    %5799 = vmatpush.bf16.msra.mxu0 0
    %5800 = vmatpush.bf16.msra.mxu0 0
    %5801 = vmatpush.bf16.msra.mxu0 %v5792
    %5802 = vmatmul.bf16.gmra.mxu0 %v5790
    %v5803 = vpop.f32.mrf.mxu0
    %v5804 = vadd.f32 0.0, %v5803
    %v5805 = vpop.f32.mrf.mxu0
    %5806 = vdwg.mxu0
    %v5808 = vsel %vm669, %v5711, 0
    %v5811 = vsel %vm2081, %v424, 0
    %5813 = vmatpush.bf16.msra.mxu0 0
    %5814 = vmatpush.bf16.msra.mxu0 0
    %5815 = vmatpush.bf16.msra.mxu0 0
    %5816 = vmatpush.bf16.msra.mxu0 0
    %5817 = vmatpush.bf16.msra.mxu0 0
    %5818 = vmatpush.bf16.msra.mxu0 0
    %5819 = vmatpush.bf16.msra.mxu0 0
    %5820 = vmatpush.bf16.msra.mxu0 %v5811
    %5821 = vmatmul.bf16.gmra.mxu0 %v5808
    %v5822 = vpop.f32.mrf.mxu0
    %v5823 = vadd.f32 %v5750, %v5822
    %v5824 = vpop.f32.mrf.mxu0
    %5825 = vdwg.mxu0
    %v5827 = vsel %vm669, %v5712, 0
    %v5830 = vsel %vm2081, %v426, 0
    %5832 = vmatpush.bf16.msra.mxu0 0
    %5833 = vmatpush.bf16.msra.mxu0 0
    %5834 = vmatpush.bf16.msra.mxu0 0
    %5835 = vmatpush.bf16.msra.mxu0 0
    %5836 = vmatpush.bf16.msra.mxu0 0
    %5837 = vmatpush.bf16.msra.mxu0 0
    %5838 = vmatpush.bf16.msra.mxu0 0
    %5839 = vmatpush.bf16.msra.mxu0 %v5830
    %5840 = vmatmul.bf16.gmra.mxu0 %v5827
    %v5841 = vpop.f32.mrf.mxu0
    %v5842 = vadd.f32 %v5768, %v5841
    %v5843 = vpop.f32.mrf.mxu0
    %5844 = vdwg.mxu0
    %v5846 = vsel %vm669, %v5713, 0
    %v5849 = vsel %vm2081, %v428, 0
    %5851 = vmatpush.bf16.msra.mxu0 0
    %5852 = vmatpush.bf16.msra.mxu0 0
    %5853 = vmatpush.bf16.msra.mxu0 0
    %5854 = vmatpush.bf16.msra.mxu0 0
    %5855 = vmatpush.bf16.msra.mxu0 0
    %5856 = vmatpush.bf16.msra.mxu0 0
    %5857 = vmatpush.bf16.msra.mxu0 0
    %5858 = vmatpush.bf16.msra.mxu0 %v5849
    %5859 = vmatmul.bf16.gmra.mxu0 %v5846
    %v5860 = vpop.f32.mrf.mxu0
    %v5861 = vadd.f32 %v5786, %v5860
    %v5862 = vpop.f32.mrf.mxu0
    %5863 = vdwg.mxu0
    %v5865 = vsel %vm669, %v5714, 0
    %v5868 = vsel %vm2081, %v430, 0
    %5870 = vmatpush.bf16.msra.mxu0 0
    %5871 = vmatpush.bf16.msra.mxu0 0
    %5872 = vmatpush.bf16.msra.mxu0 0
    %5873 = vmatpush.bf16.msra.mxu0 0
    %5874 = vmatpush.bf16.msra.mxu0 0
    %5875 = vmatpush.bf16.msra.mxu0 0
    %5876 = vmatpush.bf16.msra.mxu0 0
    %5877 = vmatpush.bf16.msra.mxu0 %v5868
    %5878 = vmatmul.bf16.gmra.mxu0 %v5865
    %v5879 = vpop.f32.mrf.mxu0
    %v5880 = vadd.f32 %v5804, %v5879
    %v5881 = vpop.f32.mrf.mxu0
    %5882 = vdwg.mxu0
    %5883 = vrot.lane.b32.xlu0 %v4123, 48
    %v5884 = vpop.permute.xlu0 %5883
    %5885 = vrot.lane.b32.xlu0 %v4124, 48
    %v5886 = vpop.permute.xlu0 %5885
    %5887 = vrot.lane.b32.xlu0 %v4125, 48
    %v5888 = vpop.permute.xlu0 %5887
    %5889 = vrot.lane.b32.xlu0 %v4126, 48
    %v5890 = vpop.permute.xlu0 %5889
    %5891 = vrot.lane.b32.xlu0 %v4143, 80
    %v5892 = vpop.permute.xlu0 %5891
    %5893 = vrot.lane.b32.xlu0 %v4144, 80
    %v5894 = vpop.permute.xlu0 %5893
    %5895 = vrot.lane.b32.xlu0 %v4145, 80
    %v5896 = vpop.permute.xlu0 %5895
    %5897 = vrot.lane.b32.xlu0 %v4146, 80
    %v5898 = vpop.permute.xlu0 %5897
    %v5901 = vsel %vm483, %v5884, %v5892
    %v5904 = vsel %vm483, %v5886, %v5894
    %v5907 = vsel %vm483, %v5888, %v5896
    %v5910 = vsel %vm483, %v5890, %v5898
    %5911 = vrot.lane.b32.xlu0 %v4123, 16
    %v5912 = vpop.permute.xlu0 %5911
    %5913 = vrot.lane.b32.xlu0 %v4124, 16
    %v5914 = vpop.permute.xlu0 %5913
    %5915 = vrot.lane.b32.xlu0 %v4125, 16
    %v5916 = vpop.permute.xlu0 %5915
    %5917 = vrot.lane.b32.xlu0 %v4126, 16
    %v5918 = vpop.permute.xlu0 %5917
    %5919 = vrot.lane.b32.xlu0 %v4143, 48
    %v5920 = vpop.permute.xlu0 %5919
    %5921 = vrot.lane.b32.xlu0 %v4144, 48
    %v5922 = vpop.permute.xlu0 %5921
    %5923 = vrot.lane.b32.xlu0 %v4145, 48
    %v5924 = vpop.permute.xlu0 %5923
    %5925 = vrot.lane.b32.xlu0 %v4146, 48
    %v5926 = vpop.permute.xlu0 %5925
    %v5929 = vsel %vm483, %v5912, %v5920
    %v5932 = vsel %vm483, %v5914, %v5922
    %v5935 = vsel %vm483, %v5916, %v5924
    %v5938 = vsel %vm483, %v5918, %v5926
    %5939 = vrot.lane.b32.xlu0 %v4143, 96
    %v5940 = vpop.permute.xlu0 %5939
    %5941 = vrot.lane.b32.xlu0 %v4143, 64
    %v5942 = vpop.permute.xlu0 %5941
    %v5944 = vsel %vm526, %v5940, 0
    %v5947 = vsel %vm526, %v5942, 0
    %5949 = vmatpush.bf16.xpose.msra.mxu0 0
    %5950 = vmatpush.bf16.xpose.msra.mxu0 0
    %5951 = vmatpush.bf16.xpose.msra.mxu0 0
    %5952 = vmatpush.bf16.xpose.msra.mxu0 0
    %5953 = vmatpush.bf16.xpose.msra.mxu0 0
    %5954 = vmatpush.bf16.xpose.msra.mxu0 0
    %5955 = vmatpush.bf16.xpose.msra.mxu0 0
    %5956 = vmatpush.bf16.xpose.msra.mxu0 %v5947
    %5957 = vmatmul.bf16.gmra.mxu0 %v5944
    %v5958 = vpop.f32.mrf.mxu0
    %v5959 = vadd.f32 0.0, %v5958
    %v5960 = vpop.f32.mrf.mxu0
    %5961 = vdwg.mxu0
    %5962 = vrot.lane.b32.xlu0 %v4144, 96
    %v5963 = vpop.permute.xlu0 %5962
    %5964 = vrot.lane.b32.xlu0 %v4144, 64
    %v5965 = vpop.permute.xlu0 %5964
    %v5967 = vsel %vm526, %v5963, 0
    %v5970 = vsel %vm526, %v5965, 0
    %5972 = vmatpush.bf16.xpose.msra.mxu0 0
    %5973 = vmatpush.bf16.xpose.msra.mxu0 0
    %5974 = vmatpush.bf16.xpose.msra.mxu0 0
    %5975 = vmatpush.bf16.xpose.msra.mxu0 0
    %5976 = vmatpush.bf16.xpose.msra.mxu0 0
    %5977 = vmatpush.bf16.xpose.msra.mxu0 0
    %5978 = vmatpush.bf16.xpose.msra.mxu0 0
    %5979 = vmatpush.bf16.xpose.msra.mxu0 %v5970
    %5980 = vmatmul.bf16.gmra.mxu0 %v5967
    %v5981 = vpop.f32.mrf.mxu0
    %v5982 = vadd.f32 0.0, %v5981
    %v5983 = vpop.f32.mrf.mxu0
    %5984 = vdwg.mxu0
    %5985 = vrot.lane.b32.xlu0 %v4145, 96
    %v5986 = vpop.permute.xlu0 %5985
    %5987 = vrot.lane.b32.xlu0 %v4145, 64
    %v5988 = vpop.permute.xlu0 %5987
    %v5990 = vsel %vm526, %v5986, 0
    %v5993 = vsel %vm526, %v5988, 0
    %5995 = vmatpush.bf16.xpose.msra.mxu0 0
    %5996 = vmatpush.bf16.xpose.msra.mxu0 0
    %5997 = vmatpush.bf16.xpose.msra.mxu0 0
    %5998 = vmatpush.bf16.xpose.msra.mxu0 0
    %5999 = vmatpush.bf16.xpose.msra.mxu0 0
    %6000 = vmatpush.bf16.xpose.msra.mxu0 0
    %6001 = vmatpush.bf16.xpose.msra.mxu0 0
    %6002 = vmatpush.bf16.xpose.msra.mxu0 %v5993
    %6003 = vmatmul.bf16.gmra.mxu0 %v5990
    %v6004 = vpop.f32.mrf.mxu0
    %v6005 = vadd.f32 0.0, %v6004
    %v6006 = vpop.f32.mrf.mxu0
    %6007 = vdwg.mxu0
    %6008 = vrot.lane.b32.xlu0 %v4146, 96
    %v6009 = vpop.permute.xlu0 %6008
    %6010 = vrot.lane.b32.xlu0 %v4146, 64
    %v6011 = vpop.permute.xlu0 %6010
    %v6013 = vsel %vm526, %v6009, 0
    %v6016 = vsel %vm526, %v6011, 0
    %6018 = vmatpush.bf16.xpose.msra.mxu0 0
    %6019 = vmatpush.bf16.xpose.msra.mxu0 0
    %6020 = vmatpush.bf16.xpose.msra.mxu0 0
    %6021 = vmatpush.bf16.xpose.msra.mxu0 0
    %6022 = vmatpush.bf16.xpose.msra.mxu0 0
    %6023 = vmatpush.bf16.xpose.msra.mxu0 0
    %6024 = vmatpush.bf16.xpose.msra.mxu0 0
    %6025 = vmatpush.bf16.xpose.msra.mxu0 %v6016
    %6026 = vmatmul.bf16.gmra.mxu0 %v6013
    %v6027 = vpop.f32.mrf.mxu0
    %v6028 = vadd.f32 0.0, %v6027
    %v6029 = vpop.f32.mrf.mxu0
    %6030 = vdwg.mxu0
    %v6031 = vsel %vm526, %v5901, 0
    %6033 = vmatpush.bf16.xpose.msra.mxu0 0
    %6034 = vmatpush.bf16.xpose.msra.mxu0 0
    %6035 = vmatpush.bf16.xpose.msra.mxu0 0
    %6036 = vmatpush.bf16.xpose.msra.mxu0 0
    %6037 = vmatpush.bf16.xpose.msra.mxu0 0
    %6038 = vmatpush.bf16.xpose.msra.mxu0 0
    %6039 = vmatpush.bf16.xpose.msra.mxu0 0
    %6040 = vmatpush.bf16.xpose.msra.mxu0 %v6031
    %6041 = vmatmul.bf16.gmra.mxu0 %v5944
    %v6042 = vpop.f32.mrf.mxu0
    %v6043 = vadd.f32 0.0, %v6042
    %v6044 = vpop.f32.mrf.mxu0
    %6045 = vdwg.mxu0
    %v6046 = vsel %vm526, %v5904, 0
    %6048 = vmatpush.bf16.xpose.msra.mxu0 0
    %6049 = vmatpush.bf16.xpose.msra.mxu0 0
    %6050 = vmatpush.bf16.xpose.msra.mxu0 0
    %6051 = vmatpush.bf16.xpose.msra.mxu0 0
    %6052 = vmatpush.bf16.xpose.msra.mxu0 0
    %6053 = vmatpush.bf16.xpose.msra.mxu0 0
    %6054 = vmatpush.bf16.xpose.msra.mxu0 0
    %6055 = vmatpush.bf16.xpose.msra.mxu0 %v6046
    %6056 = vmatmul.bf16.gmra.mxu0 %v5967
    %v6057 = vpop.f32.mrf.mxu0
    %v6058 = vadd.f32 0.0, %v6057
    %v6059 = vpop.f32.mrf.mxu0
    %6060 = vdwg.mxu0
    %v6061 = vsel %vm526, %v5907, 0
    %6063 = vmatpush.bf16.xpose.msra.mxu0 0
    %6064 = vmatpush.bf16.xpose.msra.mxu0 0
    %6065 = vmatpush.bf16.xpose.msra.mxu0 0
    %6066 = vmatpush.bf16.xpose.msra.mxu0 0
    %6067 = vmatpush.bf16.xpose.msra.mxu0 0
    %6068 = vmatpush.bf16.xpose.msra.mxu0 0
    %6069 = vmatpush.bf16.xpose.msra.mxu0 0
    %6070 = vmatpush.bf16.xpose.msra.mxu0 %v6061
    %6071 = vmatmul.bf16.gmra.mxu0 %v5990
    %v6072 = vpop.f32.mrf.mxu0
    %v6073 = vadd.f32 0.0, %v6072
    %v6074 = vpop.f32.mrf.mxu0
    %6075 = vdwg.mxu0
    %v6076 = vsel %vm526, %v5910, 0
    %6078 = vmatpush.bf16.xpose.msra.mxu0 0
    %6079 = vmatpush.bf16.xpose.msra.mxu0 0
    %6080 = vmatpush.bf16.xpose.msra.mxu0 0
    %6081 = vmatpush.bf16.xpose.msra.mxu0 0
    %6082 = vmatpush.bf16.xpose.msra.mxu0 0
    %6083 = vmatpush.bf16.xpose.msra.mxu0 0
    %6084 = vmatpush.bf16.xpose.msra.mxu0 0
    %6085 = vmatpush.bf16.xpose.msra.mxu0 %v6076
    %6086 = vmatmul.bf16.gmra.mxu0 %v6013
    %v6087 = vpop.f32.mrf.mxu0
    %v6088 = vadd.f32 0.0, %v6087
    %v6089 = vpop.f32.mrf.mxu0
    %6090 = vdwg.mxu0
    %v6091 = vsel %vm669, %v5959, -inf
    %6092 = vmax.xlane.f32.xlu0 %v6091
    %v6093 = vpop.xlane.xlu0 %6092
    %v6094 = vsel %vm669, %v5982, -inf
    %6095 = vmax.xlane.f32.xlu0 %v6094
    %v6096 = vpop.xlane.xlu0 %6095
    %v6097 = vsel %vm669, %v6005, -inf
    %6098 = vmax.xlane.f32.xlu0 %v6097
    %v6099 = vpop.xlane.xlu0 %6098
    %v6100 = vsel %vm669, %v6028, -inf
    %6101 = vmax.xlane.f32.xlu0 %v6100
    %v6102 = vpop.xlane.xlu0 %6101
    %v6103 = vsub.f32 %v5959, %v6093
    %v6104 = vsub.f32 %v5982, %v6096
    %v6105 = vsub.f32 %v6005, %v6099
    %v6106 = vsub.f32 %v6028, %v6102
    %v6107 = vmul.f32 %v6103, 1.442695
    %v6108 = vpow.pop %v6107
    %v6109 = vmul.f32 %v6104, 1.442695
    %v6110 = vpow.pop %v6109
    %v6111 = vmul.f32 %v6105, 1.442695
    %v6112 = vpow.pop %v6111
    %v6113 = vmul.f32 %v6106, 1.442695
    %v6114 = vpow.pop %v6113
    %v6115 = vand.u32 2147483647, %v6043
    %vm6116 = vcmp.le.f32.partialorder %v6115, 0.7853982
    %vm6117 = vcmp.lt.s32.totalorder %v6043, 0
    %v6118 = vand.u32 %v6043, 2139095040
    %v6119 = vshrl.u32 %v6118, 23
    %v6120 = vsub.s32 %v6119, 127
    %v6121 = vand.u32 2147483647, %v6043
    %v6122 = vand.u32 %v6121, 8388607
    %v6123 = vor.u32 %v6122, 8388608
    %v6124 = vsub.s32 0, %v6123
    %v6125 = vadd.s32 %v6120, 1
    %vm6126 = vcmp.gt.s32.totalorder %v6125, 0
    %v6127 = vsel %vm6126, %v6125, 0
    %v6128 = vshrl.u32 %v6127, 5
    %v6129 = vand.u32 %v6127, 31
    %v6130 = vsub.s32 32, %v6129
    %v6131 = vshrl.u32 683565275, %v6130
    %v6132 = vshll.u32 683565275, %v6129
    %v6133 = vshrl.u32 2475754826, %v6130
    %v6134 = vor.u32 %v6132, %v6133
    %v6135 = vshll.u32 2475754826, %v6129
    %v6136 = vshrl.u32 2131351028, %v6130
    %v6137 = vor.u32 %v6135, %v6136
    %v6138 = vshll.u32 2131351028, %v6129
    %v6139 = vshrl.u32 2102212464, %v6130
    %v6140 = vor.u32 %v6138, %v6139
    %v6141 = vshll.u32 2102212464, %v6129
    %v6142 = vshrl.u32 920167782, %v6130
    %v6143 = vor.u32 %v6141, %v6142
    %v6144 = vshll.u32 920167782, %v6129
    %v6145 = vshrl.u32 1326507024, %v6130
    %v6146 = vor.u32 %v6144, %v6145
    %vm6147 = vcmp.lt.s32.totalorder %v6128, 1
    %vm6148 = vcmp.lt.s32.totalorder %v6128, 2
    %vm6149 = vcmp.lt.s32.totalorder %v6128, 3
    %vm6150 = vcmp.lt.s32.totalorder %v6128, 4
    %v6151 = vsel %vm6147, %v6131, %v6134
    %v6152 = vsel %vm6150, %v6140, 2102212464
    %v6153 = vsel %vm6149, %v6137, %v6152
    %v6154 = vsel %vm6148, %v6151, %v6153
    %v6155 = vsel %vm6147, %v6134, %v6137
    %v6156 = vsel %vm6150, %v6143, 920167782
    %v6157 = vsel %vm6149, %v6140, %v6156
    %v6158 = vsel %vm6148, %v6155, %v6157
    %v6159 = vsel %vm6147, %v6137, %v6140
    %v6160 = vsel %vm6150, %v6146, 1326507024
    %v6161 = vsel %vm6149, %v6143, %v6160
    %v6162 = vsel %vm6148, %v6159, %v6161
    %v6163 = vshll.u32 %v6123, 8
    %v6164 = vand.u32 %v6163, 65535
    %v6165 = vshrl.u32 %v6163, 16
    %v6166 = vand.u32 %v6162, 65535
    %v6167 = vshrl.u32 %v6162, 16
    %v6168 = vmul.u32 %v6164, %v6166
    %v6169 = vmul.u32 %v6164, %v6167
    %v6170 = vmul.u32 %v6165, %v6166
    %v6171 = vmul.u32 %v6165, %v6167
    %v6172 = vshll.u32 %v6169, 16
    %v6173 = vshrl.u32 %v6169, 16
    %v6174 = vshll.u32 %v6170, 16
    %v6175 = vshrl.u32 %v6170, 16
    %vm6176 = vc.u32 %v6168, %v6172
    %v6177 = vsel %vm6176, 1, 0
    %v6178 = vadd.s32 %v6168, %v6172
    %v6179 = vadd.s32 %v6171, %v6177
    %vm6180 = vc.u32 %v6178, %v6174
    %v6181 = vsel %vm6180, 1, 0
    %v6182 = vadd.s32 %v6178, %v6174
    %v6183 = vadd.s32 %v6179, %v6181
    %v6184 = vadd.s32 %v6183, %v6173
    %v6185 = vadd.s32 %v6184, %v6175
    %v6186 = vand.u32 %v6163, 65535
    %v6187 = vshrl.u32 %v6163, 16
    %v6188 = vand.u32 %v6158, 65535
    %v6189 = vshrl.u32 %v6158, 16
    %v6190 = vmul.u32 %v6186, %v6188
    %v6191 = vmul.u32 %v6186, %v6189
    %v6192 = vmul.u32 %v6187, %v6188
    %v6193 = vmul.u32 %v6187, %v6189
    %v6194 = vshll.u32 %v6191, 16
    %v6195 = vshrl.u32 %v6191, 16
    %v6196 = vshll.u32 %v6192, 16
    %v6197 = vshrl.u32 %v6192, 16
    %vm6198 = vc.u32 %v6190, %v6194
    %v6199 = vsel %vm6198, 1, 0
    %v6200 = vadd.s32 %v6190, %v6194
    %v6201 = vadd.s32 %v6193, %v6199
    %vm6202 = vc.u32 %v6200, %v6196
    %v6203 = vsel %vm6202, 1, 0
    %v6204 = vadd.s32 %v6200, %v6196
    %v6205 = vadd.s32 %v6201, %v6203
    %v6206 = vadd.s32 %v6205, %v6195
    %v6207 = vadd.s32 %v6206, %v6197
    %v6208 = vmul.u32 %v6163, %v6154
    %v6209 = vadd.s32 %v6185, %v6204
    %vm6210 = vc.u32 %v6185, %v6204
    %v6211 = vadd.s32 %v6207, 1
    %v6212 = vsel %vm6210, %v6211, %v6207
    %v6213 = vadd.s32 %v6208, %v6212
    %v6214 = vadd.s32 %v6213, 536870912
    %v6215 = vshrl.u32 %v6214, 30
    %v6216 = vshll.u32 %v6215, 30
    %v6217 = vsub.s32 %v6213, %v6216
    %vm6218 = vcmp.lt.s32.totalorder %v6217, 0
    %v6219 = vsub.s32 0, %v6217
    %v6220 = vsel %vm6218, %v6219, %v6217
    %v6221 = vclz %v6220
    %v6222 = vsub.s32 %v6221, 2
    %vm6223 = vcmp.gt.s32.totalorder 0, %v6222
    %v6224 = vsel %vm6223, 0, %v6222
    %v6225 = vsub.s32 32, %v6224
    %v6226 = vshll.u32 %v6217, %v6224
    %v6227 = vshrl.u32 %v6209, %v6225
    %v6228 = vor.u32 %v6226, %v6227
    %v6229 = vsub.s32 4294967266, %v6224
    %v6230 = vadd.s32 %v6229, 127
    %v6231 = vshll.u32 %v6230, 23
    %v6232 = vor.u32 4788187, %v6231
    %v6233 = vand.u32 2147483647, %v6232
    %v6235 = vcvt.s32.f32 %v6228
    %v6236 = vmul.f32 %v6235, %v6233
    %v6237 = vxor.u32 %v6236, 2147483648
    %v6238 = vsel %vm6117, %v6237, %v6236
    %v6239 = vsub.s32 4, %v6215
    %v6240 = vsel %vm6117, %v6239, %v6215
    %v6241 = vsel %vm6116, %v6043, %v6238
    %v6242 = vsel %vm6116, 0, %v6240
    %v6243 = vmul.f32 %v6241, %v6241
    %v6244 = vmul.f32 %v6243, -0.001358992
    %v6245 = vadd.f32 %v6244, 0.041655596
    %v6246 = vmul.f32 %v6243, %v6245
    %v6247 = vadd.f32 %v6246, -0.4999988
    %v6248 = vmul.f32 %v6243, %v6247
    %v6249 = vadd.f32 1.0, %v6248
    %v6250 = vmul.f32 %v6241, %v6241
    %v6251 = vmul.f32 %v6250, -0.00019511016
    %v6252 = vadd.f32 %v6251, 0.008332121
    %v6253 = vmul.f32 %v6250, %v6252
    %v6254 = vadd.f32 %v6253, -0.16666654
    %v6255 = vmul.f32 %v6250, %v6254
    %v6256 = vadd.f32 %v6255, 1.0
    %v6257 = vmul.f32 %v6256, %v6241
    %vm6258 = vweird.f32 %v6043
    %v6259 = vand.u32 %v6242, 3
    %vm6260 = vcmp.lt.s32.totalorder %v6259, 2
    %vm6261 = vcmp.eq.s32.totalorder %v6259, 0
    %v6262 = vxor.u32 %v6257, 2147483648
    %v6263 = vsel %vm6261, %v6249, %v6262
    %vm6264 = vcmp.eq.s32.totalorder %v6259, 2
    %v6265 = vxor.u32 %v6249, 2147483648
    %v6266 = vsel %vm6264, %v6265, %v6257
    %v6267 = vsel %vm6260, %v6263, %v6266
    %v6268 = vsel %vm6258, nan, %v6267
    %v6269 = vand.u32 2147483647, %v6058
    %vm6270 = vcmp.le.f32.partialorder %v6269, 0.7853982
    %vm6271 = vcmp.lt.s32.totalorder %v6058, 0
    %v6272 = vand.u32 %v6058, 2139095040
    %v6273 = vshrl.u32 %v6272, 23
    %v6274 = vsub.s32 %v6273, 127
    %v6275 = vand.u32 2147483647, %v6058
    %v6276 = vand.u32 %v6275, 8388607
    %v6277 = vor.u32 %v6276, 8388608
    %v6278 = vsub.s32 0, %v6277
    %v6279 = vadd.s32 %v6274, 1
    %vm6280 = vcmp.gt.s32.totalorder %v6279, 0
    %v6281 = vsel %vm6280, %v6279, 0
    %v6282 = vshrl.u32 %v6281, 5
    %v6283 = vand.u32 %v6281, 31
    %v6284 = vsub.s32 32, %v6283
    %v6285 = vshrl.u32 683565275, %v6284
    %v6286 = vshll.u32 683565275, %v6283
    %v6287 = vshrl.u32 2475754826, %v6284
    %v6288 = vor.u32 %v6286, %v6287
    %v6289 = vshll.u32 2475754826, %v6283
    %v6290 = vshrl.u32 2131351028, %v6284
    %v6291 = vor.u32 %v6289, %v6290
    %v6292 = vshll.u32 2131351028, %v6283
    %v6293 = vshrl.u32 2102212464, %v6284
    %v6294 = vor.u32 %v6292, %v6293
    %v6295 = vshll.u32 2102212464, %v6283
    %v6296 = vshrl.u32 920167782, %v6284
    %v6297 = vor.u32 %v6295, %v6296
    %v6298 = vshll.u32 920167782, %v6283
    %v6299 = vshrl.u32 1326507024, %v6284
    %v6300 = vor.u32 %v6298, %v6299
    %vm6301 = vcmp.lt.s32.totalorder %v6282, 1
    %vm6302 = vcmp.lt.s32.totalorder %v6282, 2
    %vm6303 = vcmp.lt.s32.totalorder %v6282, 3
    %vm6304 = vcmp.lt.s32.totalorder %v6282, 4
    %v6305 = vsel %vm6301, %v6285, %v6288
    %v6306 = vsel %vm6304, %v6294, 2102212464
    %v6307 = vsel %vm6303, %v6291, %v6306
    %v6308 = vsel %vm6302, %v6305, %v6307
    %v6309 = vsel %vm6301, %v6288, %v6291
    %v6310 = vsel %vm6304, %v6297, 920167782
    %v6311 = vsel %vm6303, %v6294, %v6310
    %v6312 = vsel %vm6302, %v6309, %v6311
    %v6313 = vsel %vm6301, %v6291, %v6294
    %v6314 = vsel %vm6304, %v6300, 1326507024
    %v6315 = vsel %vm6303, %v6297, %v6314
    %v6316 = vsel %vm6302, %v6313, %v6315
    %v6317 = vshll.u32 %v6277, 8
    %v6318 = vand.u32 %v6317, 65535
    %v6319 = vshrl.u32 %v6317, 16
    %v6320 = vand.u32 %v6316, 65535
    %v6321 = vshrl.u32 %v6316, 16
    %v6322 = vmul.u32 %v6318, %v6320
    %v6323 = vmul.u32 %v6318, %v6321
    %v6324 = vmul.u32 %v6319, %v6320
    %v6325 = vmul.u32 %v6319, %v6321
    %v6326 = vshll.u32 %v6323, 16
    %v6327 = vshrl.u32 %v6323, 16
    %v6328 = vshll.u32 %v6324, 16
    %v6329 = vshrl.u32 %v6324, 16
    %vm6330 = vc.u32 %v6322, %v6326
    %v6331 = vsel %vm6330, 1, 0
    %v6332 = vadd.s32 %v6322, %v6326
    %v6333 = vadd.s32 %v6325, %v6331
    %vm6334 = vc.u32 %v6332, %v6328
    %v6335 = vsel %vm6334, 1, 0
    %v6336 = vadd.s32 %v6332, %v6328
    %v6337 = vadd.s32 %v6333, %v6335
    %v6338 = vadd.s32 %v6337, %v6327
    %v6339 = vadd.s32 %v6338, %v6329
    %v6340 = vand.u32 %v6317, 65535
    %v6341 = vshrl.u32 %v6317, 16
    %v6342 = vand.u32 %v6312, 65535
    %v6343 = vshrl.u32 %v6312, 16
    %v6344 = vmul.u32 %v6340, %v6342
    %v6345 = vmul.u32 %v6340, %v6343
    %v6346 = vmul.u32 %v6341, %v6342
    %v6347 = vmul.u32 %v6341, %v6343
    %v6348 = vshll.u32 %v6345, 16
    %v6349 = vshrl.u32 %v6345, 16
    %v6350 = vshll.u32 %v6346, 16
    %v6351 = vshrl.u32 %v6346, 16
    %vm6352 = vc.u32 %v6344, %v6348
    %v6353 = vsel %vm6352, 1, 0
    %v6354 = vadd.s32 %v6344, %v6348
    %v6355 = vadd.s32 %v6347, %v6353
    %vm6356 = vc.u32 %v6354, %v6350
    %v6357 = vsel %vm6356, 1, 0
    %v6358 = vadd.s32 %v6354, %v6350
    %v6359 = vadd.s32 %v6355, %v6357
    %v6360 = vadd.s32 %v6359, %v6349
    %v6361 = vadd.s32 %v6360, %v6351
    %v6362 = vmul.u32 %v6317, %v6308
    %v6363 = vadd.s32 %v6339, %v6358
    %vm6364 = vc.u32 %v6339, %v6358
    %v6365 = vadd.s32 %v6361, 1
    %v6366 = vsel %vm6364, %v6365, %v6361
    %v6367 = vadd.s32 %v6362, %v6366
    %v6368 = vadd.s32 %v6367, 536870912
    %v6369 = vshrl.u32 %v6368, 30
    %v6370 = vshll.u32 %v6369, 30
    %v6371 = vsub.s32 %v6367, %v6370
    %vm6372 = vcmp.lt.s32.totalorder %v6371, 0
    %v6373 = vsub.s32 0, %v6371
    %v6374 = vsel %vm6372, %v6373, %v6371
    %v6375 = vclz %v6374
    %v6376 = vsub.s32 %v6375, 2
    %vm6377 = vcmp.gt.s32.totalorder 0, %v6376
    %v6378 = vsel %vm6377, 0, %v6376
    %v6379 = vsub.s32 32, %v6378
    %v6380 = vshll.u32 %v6371, %v6378
    %v6381 = vshrl.u32 %v6363, %v6379
    %v6382 = vor.u32 %v6380, %v6381
    %v6383 = vsub.s32 4294967266, %v6378
    %v6384 = vadd.s32 %v6383, 127
    %v6385 = vshll.u32 %v6384, 23
    %v6386 = vor.u32 4788187, %v6385
    %v6387 = vand.u32 2147483647, %v6386
    %v6389 = vcvt.s32.f32 %v6382
    %v6390 = vmul.f32 %v6389, %v6387
    %v6391 = vxor.u32 %v6390, 2147483648
    %v6392 = vsel %vm6271, %v6391, %v6390
    %v6393 = vsub.s32 4, %v6369
    %v6394 = vsel %vm6271, %v6393, %v6369
    %v6395 = vsel %vm6270, %v6058, %v6392
    %v6396 = vsel %vm6270, 0, %v6394
    %v6397 = vmul.f32 %v6395, %v6395
    %v6398 = vmul.f32 %v6397, -0.001358992
    %v6399 = vadd.f32 %v6398, 0.041655596
    %v6400 = vmul.f32 %v6397, %v6399
    %v6401 = vadd.f32 %v6400, -0.4999988
    %v6402 = vmul.f32 %v6397, %v6401
    %v6403 = vadd.f32 1.0, %v6402
    %v6404 = vmul.f32 %v6395, %v6395
    %v6405 = vmul.f32 %v6404, -0.00019511016
    %v6406 = vadd.f32 %v6405, 0.008332121
    %v6407 = vmul.f32 %v6404, %v6406
    %v6408 = vadd.f32 %v6407, -0.16666654
    %v6409 = vmul.f32 %v6404, %v6408
    %v6410 = vadd.f32 %v6409, 1.0
    %v6411 = vmul.f32 %v6410, %v6395
    %vm6412 = vweird.f32 %v6058
    %v6413 = vand.u32 %v6396, 3
    %vm6414 = vcmp.lt.s32.totalorder %v6413, 2
    %vm6415 = vcmp.eq.s32.totalorder %v6413, 0
    %v6416 = vxor.u32 %v6411, 2147483648
    %v6417 = vsel %vm6415, %v6403, %v6416
    %vm6418 = vcmp.eq.s32.totalorder %v6413, 2
    %v6419 = vxor.u32 %v6403, 2147483648
    %v6420 = vsel %vm6418, %v6419, %v6411
    %v6421 = vsel %vm6414, %v6417, %v6420
    %v6422 = vsel %vm6412, nan, %v6421
    %v6423 = vand.u32 2147483647, %v6073
    %vm6424 = vcmp.le.f32.partialorder %v6423, 0.7853982
    %vm6425 = vcmp.lt.s32.totalorder %v6073, 0
    %v6426 = vand.u32 %v6073, 2139095040
    %v6427 = vshrl.u32 %v6426, 23
    %v6428 = vsub.s32 %v6427, 127
    %v6429 = vand.u32 2147483647, %v6073
    %v6430 = vand.u32 %v6429, 8388607
    %v6431 = vor.u32 %v6430, 8388608
    %v6432 = vsub.s32 0, %v6431
    %v6433 = vadd.s32 %v6428, 1
    %vm6434 = vcmp.gt.s32.totalorder %v6433, 0
    %v6435 = vsel %vm6434, %v6433, 0
    %v6436 = vshrl.u32 %v6435, 5
    %v6437 = vand.u32 %v6435, 31
    %v6438 = vsub.s32 32, %v6437
    %v6439 = vshrl.u32 683565275, %v6438
    %v6440 = vshll.u32 683565275, %v6437
    %v6441 = vshrl.u32 2475754826, %v6438
    %v6442 = vor.u32 %v6440, %v6441
    %v6443 = vshll.u32 2475754826, %v6437
    %v6444 = vshrl.u32 2131351028, %v6438
    %v6445 = vor.u32 %v6443, %v6444
    %v6446 = vshll.u32 2131351028, %v6437
    %v6447 = vshrl.u32 2102212464, %v6438
    %v6448 = vor.u32 %v6446, %v6447
    %v6449 = vshll.u32 2102212464, %v6437
    %v6450 = vshrl.u32 920167782, %v6438
    %v6451 = vor.u32 %v6449, %v6450
    %v6452 = vshll.u32 920167782, %v6437
    %v6453 = vshrl.u32 1326507024, %v6438
    %v6454 = vor.u32 %v6452, %v6453
    %vm6455 = vcmp.lt.s32.totalorder %v6436, 1
    %vm6456 = vcmp.lt.s32.totalorder %v6436, 2
    %vm6457 = vcmp.lt.s32.totalorder %v6436, 3
    %vm6458 = vcmp.lt.s32.totalorder %v6436, 4
    %v6459 = vsel %vm6455, %v6439, %v6442
    %v6460 = vsel %vm6458, %v6448, 2102212464
    %v6461 = vsel %vm6457, %v6445, %v6460
    %v6462 = vsel %vm6456, %v6459, %v6461
    %v6463 = vsel %vm6455, %v6442, %v6445
    %v6464 = vsel %vm6458, %v6451, 920167782
    %v6465 = vsel %vm6457, %v6448, %v6464
    %v6466 = vsel %vm6456, %v6463, %v6465
    %v6467 = vsel %vm6455, %v6445, %v6448
    %v6468 = vsel %vm6458, %v6454, 1326507024
    %v6469 = vsel %vm6457, %v6451, %v6468
    %v6470 = vsel %vm6456, %v6467, %v6469
    %v6471 = vshll.u32 %v6431, 8
    %v6472 = vand.u32 %v6471, 65535
    %v6473 = vshrl.u32 %v6471, 16
    %v6474 = vand.u32 %v6470, 65535
    %v6475 = vshrl.u32 %v6470, 16
    %v6476 = vmul.u32 %v6472, %v6474
    %v6477 = vmul.u32 %v6472, %v6475
    %v6478 = vmul.u32 %v6473, %v6474
    %v6479 = vmul.u32 %v6473, %v6475
    %v6480 = vshll.u32 %v6477, 16
    %v6481 = vshrl.u32 %v6477, 16
    %v6482 = vshll.u32 %v6478, 16
    %v6483 = vshrl.u32 %v6478, 16
    %vm6484 = vc.u32 %v6476, %v6480
    %v6485 = vsel %vm6484, 1, 0
    %v6486 = vadd.s32 %v6476, %v6480
    %v6487 = vadd.s32 %v6479, %v6485
    %vm6488 = vc.u32 %v6486, %v6482
    %v6489 = vsel %vm6488, 1, 0
    %v6490 = vadd.s32 %v6486, %v6482
    %v6491 = vadd.s32 %v6487, %v6489
    %v6492 = vadd.s32 %v6491, %v6481
    %v6493 = vadd.s32 %v6492, %v6483
    %v6494 = vand.u32 %v6471, 65535
    %v6495 = vshrl.u32 %v6471, 16
    %v6496 = vand.u32 %v6466, 65535
    %v6497 = vshrl.u32 %v6466, 16
    %v6498 = vmul.u32 %v6494, %v6496
    %v6499 = vmul.u32 %v6494, %v6497
    %v6500 = vmul.u32 %v6495, %v6496
    %v6501 = vmul.u32 %v6495, %v6497
    %v6502 = vshll.u32 %v6499, 16
    %v6503 = vshrl.u32 %v6499, 16
    %v6504 = vshll.u32 %v6500, 16
    %v6505 = vshrl.u32 %v6500, 16
    %vm6506 = vc.u32 %v6498, %v6502
    %v6507 = vsel %vm6506, 1, 0
    %v6508 = vadd.s32 %v6498, %v6502
    %v6509 = vadd.s32 %v6501, %v6507
    %vm6510 = vc.u32 %v6508, %v6504
    %v6511 = vsel %vm6510, 1, 0
    %v6512 = vadd.s32 %v6508, %v6504
    %v6513 = vadd.s32 %v6509, %v6511
    %v6514 = vadd.s32 %v6513, %v6503
    %v6515 = vadd.s32 %v6514, %v6505
    %v6516 = vmul.u32 %v6471, %v6462
    %v6517 = vadd.s32 %v6493, %v6512
    %vm6518 = vc.u32 %v6493, %v6512
    %v6519 = vadd.s32 %v6515, 1
    %v6520 = vsel %vm6518, %v6519, %v6515
    %v6521 = vadd.s32 %v6516, %v6520
    %v6522 = vadd.s32 %v6521, 536870912
    %v6523 = vshrl.u32 %v6522, 30
    %v6524 = vshll.u32 %v6523, 30
    %v6525 = vsub.s32 %v6521, %v6524
    %vm6526 = vcmp.lt.s32.totalorder %v6525, 0
    %v6527 = vsub.s32 0, %v6525
    %v6528 = vsel %vm6526, %v6527, %v6525
    %v6529 = vclz %v6528
    %v6530 = vsub.s32 %v6529, 2
    %vm6531 = vcmp.gt.s32.totalorder 0, %v6530
    %v6532 = vsel %vm6531, 0, %v6530
    %v6533 = vsub.s32 32, %v6532
    %v6534 = vshll.u32 %v6525, %v6532
    %v6535 = vshrl.u32 %v6517, %v6533
    %v6536 = vor.u32 %v6534, %v6535
    %v6537 = vsub.s32 4294967266, %v6532
    %v6538 = vadd.s32 %v6537, 127
    %v6539 = vshll.u32 %v6538, 23
    %v6540 = vor.u32 4788187, %v6539
    %v6541 = vand.u32 2147483647, %v6540
    %v6543 = vcvt.s32.f32 %v6536
    %v6544 = vmul.f32 %v6543, %v6541
    %v6545 = vxor.u32 %v6544, 2147483648
    %v6546 = vsel %vm6425, %v6545, %v6544
    %v6547 = vsub.s32 4, %v6523
    %v6548 = vsel %vm6425, %v6547, %v6523
    %v6549 = vsel %vm6424, %v6073, %v6546
    %v6550 = vsel %vm6424, 0, %v6548
    %v6551 = vmul.f32 %v6549, %v6549
    %v6552 = vmul.f32 %v6551, -0.001358992
    %v6553 = vadd.f32 %v6552, 0.041655596
    %v6554 = vmul.f32 %v6551, %v6553
    %v6555 = vadd.f32 %v6554, -0.4999988
    %v6556 = vmul.f32 %v6551, %v6555
    %v6557 = vadd.f32 1.0, %v6556
    %v6558 = vmul.f32 %v6549, %v6549
    %v6559 = vmul.f32 %v6558, -0.00019511016
    %v6560 = vadd.f32 %v6559, 0.008332121
    %v6561 = vmul.f32 %v6558, %v6560
    %v6562 = vadd.f32 %v6561, -0.16666654
    %v6563 = vmul.f32 %v6558, %v6562
    %v6564 = vadd.f32 %v6563, 1.0
    %v6565 = vmul.f32 %v6564, %v6549
    %vm6566 = vweird.f32 %v6073
    %v6567 = vand.u32 %v6550, 3
    %vm6568 = vcmp.lt.s32.totalorder %v6567, 2
    %vm6569 = vcmp.eq.s32.totalorder %v6567, 0
    %v6570 = vxor.u32 %v6565, 2147483648
    %v6571 = vsel %vm6569, %v6557, %v6570
    %vm6572 = vcmp.eq.s32.totalorder %v6567, 2
    %v6573 = vxor.u32 %v6557, 2147483648
    %v6574 = vsel %vm6572, %v6573, %v6565
    %v6575 = vsel %vm6568, %v6571, %v6574
    %v6576 = vsel %vm6566, nan, %v6575
    %v6577 = vand.u32 2147483647, %v6088
    %vm6578 = vcmp.le.f32.partialorder %v6577, 0.7853982
    %vm6579 = vcmp.lt.s32.totalorder %v6088, 0
    %v6580 = vand.u32 %v6088, 2139095040
    %v6581 = vshrl.u32 %v6580, 23
    %v6582 = vsub.s32 %v6581, 127
    %v6583 = vand.u32 2147483647, %v6088
    %v6584 = vand.u32 %v6583, 8388607
    %v6585 = vor.u32 %v6584, 8388608
    %v6586 = vsub.s32 0, %v6585
    %v6587 = vadd.s32 %v6582, 1
    %vm6588 = vcmp.gt.s32.totalorder %v6587, 0
    %v6589 = vsel %vm6588, %v6587, 0
    %v6590 = vshrl.u32 %v6589, 5
    %v6591 = vand.u32 %v6589, 31
    %v6592 = vsub.s32 32, %v6591
    %v6593 = vshrl.u32 683565275, %v6592
    %v6594 = vshll.u32 683565275, %v6591
    %v6595 = vshrl.u32 2475754826, %v6592
    %v6596 = vor.u32 %v6594, %v6595
    %v6597 = vshll.u32 2475754826, %v6591
    %v6598 = vshrl.u32 2131351028, %v6592
    %v6599 = vor.u32 %v6597, %v6598
    %v6600 = vshll.u32 2131351028, %v6591
    %v6601 = vshrl.u32 2102212464, %v6592
    %v6602 = vor.u32 %v6600, %v6601
    %v6603 = vshll.u32 2102212464, %v6591
    %v6604 = vshrl.u32 920167782, %v6592
    %v6605 = vor.u32 %v6603, %v6604
    %v6606 = vshll.u32 920167782, %v6591
    %v6607 = vshrl.u32 1326507024, %v6592
    %v6608 = vor.u32 %v6606, %v6607
    %vm6609 = vcmp.lt.s32.totalorder %v6590, 1
    %vm6610 = vcmp.lt.s32.totalorder %v6590, 2
    %vm6611 = vcmp.lt.s32.totalorder %v6590, 3
    %vm6612 = vcmp.lt.s32.totalorder %v6590, 4
    %v6613 = vsel %vm6609, %v6593, %v6596
    %v6614 = vsel %vm6612, %v6602, 2102212464
    %v6615 = vsel %vm6611, %v6599, %v6614
    %v6616 = vsel %vm6610, %v6613, %v6615
    %v6617 = vsel %vm6609, %v6596, %v6599
    %v6618 = vsel %vm6612, %v6605, 920167782
    %v6619 = vsel %vm6611, %v6602, %v6618
    %v6620 = vsel %vm6610, %v6617, %v6619
    %v6621 = vsel %vm6609, %v6599, %v6602
    %v6622 = vsel %vm6612, %v6608, 1326507024
    %v6623 = vsel %vm6611, %v6605, %v6622
    %v6624 = vsel %vm6610, %v6621, %v6623
    %v6625 = vshll.u32 %v6585, 8
    %v6626 = vand.u32 %v6625, 65535
    %v6627 = vshrl.u32 %v6625, 16
    %v6628 = vand.u32 %v6624, 65535
    %v6629 = vshrl.u32 %v6624, 16
    %v6630 = vmul.u32 %v6626, %v6628
    %v6631 = vmul.u32 %v6626, %v6629
    %v6632 = vmul.u32 %v6627, %v6628
    %v6633 = vmul.u32 %v6627, %v6629
    %v6634 = vshll.u32 %v6631, 16
    %v6635 = vshrl.u32 %v6631, 16
    %v6636 = vshll.u32 %v6632, 16
    %v6637 = vshrl.u32 %v6632, 16
    %vm6638 = vc.u32 %v6630, %v6634
    %v6639 = vsel %vm6638, 1, 0
    %v6640 = vadd.s32 %v6630, %v6634
    %v6641 = vadd.s32 %v6633, %v6639
    %vm6642 = vc.u32 %v6640, %v6636
    %v6643 = vsel %vm6642, 1, 0
    %v6644 = vadd.s32 %v6640, %v6636
    %v6645 = vadd.s32 %v6641, %v6643
    %v6646 = vadd.s32 %v6645, %v6635
    %v6647 = vadd.s32 %v6646, %v6637
    %v6648 = vand.u32 %v6625, 65535
    %v6649 = vshrl.u32 %v6625, 16
    %v6650 = vand.u32 %v6620, 65535
    %v6651 = vshrl.u32 %v6620, 16
    %v6652 = vmul.u32 %v6648, %v6650
    %v6653 = vmul.u32 %v6648, %v6651
    %v6654 = vmul.u32 %v6649, %v6650
    %v6655 = vmul.u32 %v6649, %v6651
    %v6656 = vshll.u32 %v6653, 16
    %v6657 = vshrl.u32 %v6653, 16
    %v6658 = vshll.u32 %v6654, 16
    %v6659 = vshrl.u32 %v6654, 16
    %vm6660 = vc.u32 %v6652, %v6656
    %v6661 = vsel %vm6660, 1, 0
    %v6662 = vadd.s32 %v6652, %v6656
    %v6663 = vadd.s32 %v6655, %v6661
    %vm6664 = vc.u32 %v6662, %v6658
    %v6665 = vsel %vm6664, 1, 0
    %v6666 = vadd.s32 %v6662, %v6658
    %v6667 = vadd.s32 %v6663, %v6665
    %v6668 = vadd.s32 %v6667, %v6657
    %v6669 = vadd.s32 %v6668, %v6659
    %v6670 = vmul.u32 %v6625, %v6616
    %v6671 = vadd.s32 %v6647, %v6666
    %vm6672 = vc.u32 %v6647, %v6666
    %v6673 = vadd.s32 %v6669, 1
    %v6674 = vsel %vm6672, %v6673, %v6669
    %v6675 = vadd.s32 %v6670, %v6674
    %v6676 = vadd.s32 %v6675, 536870912
    %v6677 = vshrl.u32 %v6676, 30
    %v6678 = vshll.u32 %v6677, 30
    %v6679 = vsub.s32 %v6675, %v6678
    %vm6680 = vcmp.lt.s32.totalorder %v6679, 0
    %v6681 = vsub.s32 0, %v6679
    %v6682 = vsel %vm6680, %v6681, %v6679
    %v6683 = vclz %v6682
    %v6684 = vsub.s32 %v6683, 2
    %vm6685 = vcmp.gt.s32.totalorder 0, %v6684
    %v6686 = vsel %vm6685, 0, %v6684
    %v6687 = vsub.s32 32, %v6686
    %v6688 = vshll.u32 %v6679, %v6686
    %v6689 = vshrl.u32 %v6671, %v6687
    %v6690 = vor.u32 %v6688, %v6689
    %v6691 = vsub.s32 4294967266, %v6686
    %v6692 = vadd.s32 %v6691, 127
    %v6693 = vshll.u32 %v6692, 23
    %v6694 = vor.u32 4788187, %v6693
    %v6695 = vand.u32 2147483647, %v6694
    %v6697 = vcvt.s32.f32 %v6690
    %v6698 = vmul.f32 %v6697, %v6695
    %v6699 = vxor.u32 %v6698, 2147483648
    %v6700 = vsel %vm6579, %v6699, %v6698
    %v6701 = vsub.s32 4, %v6677
    %v6702 = vsel %vm6579, %v6701, %v6677
    %v6703 = vsel %vm6578, %v6088, %v6700
    %v6704 = vsel %vm6578, 0, %v6702
    %v6705 = vmul.f32 %v6703, %v6703
    %v6706 = vmul.f32 %v6705, -0.001358992
    %v6707 = vadd.f32 %v6706, 0.041655596
    %v6708 = vmul.f32 %v6705, %v6707
    %v6709 = vadd.f32 %v6708, -0.4999988
    %v6710 = vmul.f32 %v6705, %v6709
    %v6711 = vadd.f32 1.0, %v6710
    %v6712 = vmul.f32 %v6703, %v6703
    %v6713 = vmul.f32 %v6712, -0.00019511016
    %v6714 = vadd.f32 %v6713, 0.008332121
    %v6715 = vmul.f32 %v6712, %v6714
    %v6716 = vadd.f32 %v6715, -0.16666654
    %v6717 = vmul.f32 %v6712, %v6716
    %v6718 = vadd.f32 %v6717, 1.0
    %v6719 = vmul.f32 %v6718, %v6703
    %vm6720 = vweird.f32 %v6088
    %v6721 = vand.u32 %v6704, 3
    %vm6722 = vcmp.lt.s32.totalorder %v6721, 2
    %vm6723 = vcmp.eq.s32.totalorder %v6721, 0
    %v6724 = vxor.u32 %v6719, 2147483648
    %v6725 = vsel %vm6723, %v6711, %v6724
    %vm6726 = vcmp.eq.s32.totalorder %v6721, 2
    %v6727 = vxor.u32 %v6711, 2147483648
    %v6728 = vsel %vm6726, %v6727, %v6719
    %v6729 = vsel %vm6722, %v6725, %v6728
    %v6730 = vsel %vm6720, nan, %v6729
    %v6731 = vmul.f32 %v6108, %v6268
    %v6732 = vmul.f32 %v6110, %v6422
    %v6733 = vmul.f32 %v6112, %v6576
    %v6734 = vmul.f32 %v6114, %v6730
    %v6735 = vand.u32 2147483647, %v6043
    %vm6736 = vcmp.le.f32.partialorder %v6735, 0.7853982
    %vm6737 = vcmp.lt.s32.totalorder %v6043, 0
    %v6738 = vand.u32 %v6043, 2139095040
    %v6739 = vshrl.u32 %v6738, 23
    %v6740 = vsub.s32 %v6739, 127
    %v6741 = vand.u32 2147483647, %v6043
    %v6742 = vand.u32 %v6741, 8388607
    %v6743 = vor.u32 %v6742, 8388608
    %v6744 = vsub.s32 0, %v6743
    %v6745 = vadd.s32 %v6740, 1
    %vm6746 = vcmp.gt.s32.totalorder %v6745, 0
    %v6747 = vsel %vm6746, %v6745, 0
    %v6748 = vshrl.u32 %v6747, 5
    %v6749 = vand.u32 %v6747, 31
    %v6750 = vsub.s32 32, %v6749
    %v6751 = vshrl.u32 683565275, %v6750
    %v6752 = vshll.u32 683565275, %v6749
    %v6753 = vshrl.u32 2475754826, %v6750
    %v6754 = vor.u32 %v6752, %v6753
    %v6755 = vshll.u32 2475754826, %v6749
    %v6756 = vshrl.u32 2131351028, %v6750
    %v6757 = vor.u32 %v6755, %v6756
    %v6758 = vshll.u32 2131351028, %v6749
    %v6759 = vshrl.u32 2102212464, %v6750
    %v6760 = vor.u32 %v6758, %v6759
    %v6761 = vshll.u32 2102212464, %v6749
    %v6762 = vshrl.u32 920167782, %v6750
    %v6763 = vor.u32 %v6761, %v6762
    %v6764 = vshll.u32 920167782, %v6749
    %v6765 = vshrl.u32 1326507024, %v6750
    %v6766 = vor.u32 %v6764, %v6765
    %vm6767 = vcmp.lt.s32.totalorder %v6748, 1
    %vm6768 = vcmp.lt.s32.totalorder %v6748, 2
    %vm6769 = vcmp.lt.s32.totalorder %v6748, 3
    %vm6770 = vcmp.lt.s32.totalorder %v6748, 4
    %v6771 = vsel %vm6767, %v6751, %v6754
    %v6772 = vsel %vm6770, %v6760, 2102212464
    %v6773 = vsel %vm6769, %v6757, %v6772
    %v6774 = vsel %vm6768, %v6771, %v6773
    %v6775 = vsel %vm6767, %v6754, %v6757
    %v6776 = vsel %vm6770, %v6763, 920167782
    %v6777 = vsel %vm6769, %v6760, %v6776
    %v6778 = vsel %vm6768, %v6775, %v6777
    %v6779 = vsel %vm6767, %v6757, %v6760
    %v6780 = vsel %vm6770, %v6766, 1326507024
    %v6781 = vsel %vm6769, %v6763, %v6780
    %v6782 = vsel %vm6768, %v6779, %v6781
    %v6783 = vshll.u32 %v6743, 8
    %v6784 = vand.u32 %v6783, 65535
    %v6785 = vshrl.u32 %v6783, 16
    %v6786 = vand.u32 %v6782, 65535
    %v6787 = vshrl.u32 %v6782, 16
    %v6788 = vmul.u32 %v6784, %v6786
    %v6789 = vmul.u32 %v6784, %v6787
    %v6790 = vmul.u32 %v6785, %v6786
    %v6791 = vmul.u32 %v6785, %v6787
    %v6792 = vshll.u32 %v6789, 16
    %v6793 = vshrl.u32 %v6789, 16
    %v6794 = vshll.u32 %v6790, 16
    %v6795 = vshrl.u32 %v6790, 16
    %vm6796 = vc.u32 %v6788, %v6792
    %v6797 = vsel %vm6796, 1, 0
    %v6798 = vadd.s32 %v6788, %v6792
    %v6799 = vadd.s32 %v6791, %v6797
    %vm6800 = vc.u32 %v6798, %v6794
    %v6801 = vsel %vm6800, 1, 0
    %v6802 = vadd.s32 %v6798, %v6794
    %v6803 = vadd.s32 %v6799, %v6801
    %v6804 = vadd.s32 %v6803, %v6793
    %v6805 = vadd.s32 %v6804, %v6795
    %v6806 = vand.u32 %v6783, 65535
    %v6807 = vshrl.u32 %v6783, 16
    %v6808 = vand.u32 %v6778, 65535
    %v6809 = vshrl.u32 %v6778, 16
    %v6810 = vmul.u32 %v6806, %v6808
    %v6811 = vmul.u32 %v6806, %v6809
    %v6812 = vmul.u32 %v6807, %v6808
    %v6813 = vmul.u32 %v6807, %v6809
    %v6814 = vshll.u32 %v6811, 16
    %v6815 = vshrl.u32 %v6811, 16
    %v6816 = vshll.u32 %v6812, 16
    %v6817 = vshrl.u32 %v6812, 16
    %vm6818 = vc.u32 %v6810, %v6814
    %v6819 = vsel %vm6818, 1, 0
    %v6820 = vadd.s32 %v6810, %v6814
    %v6821 = vadd.s32 %v6813, %v6819
    %vm6822 = vc.u32 %v6820, %v6816
    %v6823 = vsel %vm6822, 1, 0
    %v6824 = vadd.s32 %v6820, %v6816
    %v6825 = vadd.s32 %v6821, %v6823
    %v6826 = vadd.s32 %v6825, %v6815
    %v6827 = vadd.s32 %v6826, %v6817
    %v6828 = vmul.u32 %v6783, %v6774
    %v6829 = vadd.s32 %v6805, %v6824
    %vm6830 = vc.u32 %v6805, %v6824
    %v6831 = vadd.s32 %v6827, 1
    %v6832 = vsel %vm6830, %v6831, %v6827
    %v6833 = vadd.s32 %v6828, %v6832
    %v6834 = vadd.s32 %v6833, 536870912
    %v6835 = vshrl.u32 %v6834, 30
    %v6836 = vshll.u32 %v6835, 30
    %v6837 = vsub.s32 %v6833, %v6836
    %vm6838 = vcmp.lt.s32.totalorder %v6837, 0
    %v6839 = vsub.s32 0, %v6837
    %v6840 = vsel %vm6838, %v6839, %v6837
    %v6841 = vclz %v6840
    %v6842 = vsub.s32 %v6841, 2
    %vm6843 = vcmp.gt.s32.totalorder 0, %v6842
    %v6844 = vsel %vm6843, 0, %v6842
    %v6845 = vsub.s32 32, %v6844
    %v6846 = vshll.u32 %v6837, %v6844
    %v6847 = vshrl.u32 %v6829, %v6845
    %v6848 = vor.u32 %v6846, %v6847
    %v6849 = vsub.s32 4294967266, %v6844
    %v6850 = vadd.s32 %v6849, 127
    %v6851 = vshll.u32 %v6850, 23
    %v6852 = vor.u32 4788187, %v6851
    %v6853 = vand.u32 2147483647, %v6852
    %v6855 = vcvt.s32.f32 %v6848
    %v6856 = vmul.f32 %v6855, %v6853
    %v6857 = vxor.u32 %v6856, 2147483648
    %v6858 = vsel %vm6737, %v6857, %v6856
    %v6859 = vsub.s32 4, %v6835
    %v6860 = vsel %vm6737, %v6859, %v6835
    %v6861 = vsel %vm6736, %v6043, %v6858
    %v6862 = vsel %vm6736, 0, %v6860
    %v6863 = vmul.f32 %v6861, %v6861
    %v6864 = vmul.f32 %v6863, -0.001358992
    %v6865 = vadd.f32 %v6864, 0.041655596
    %v6866 = vmul.f32 %v6863, %v6865
    %v6867 = vadd.f32 %v6866, -0.4999988
    %v6868 = vmul.f32 %v6863, %v6867
    %v6869 = vadd.f32 1.0, %v6868
    %v6870 = vmul.f32 %v6861, %v6861
    %v6871 = vmul.f32 %v6870, -0.00019511016
    %v6872 = vadd.f32 %v6871, 0.008332121
    %v6873 = vmul.f32 %v6870, %v6872
    %v6874 = vadd.f32 %v6873, -0.16666654
    %v6875 = vmul.f32 %v6870, %v6874
    %v6876 = vadd.f32 %v6875, 1.0
    %v6877 = vmul.f32 %v6876, %v6861
    %vm6878 = vweird.f32 %v6043
    %v6879 = vadd.s32 %v6862, 3
    %v6880 = vand.u32 %v6879, 3
    %vm6881 = vcmp.lt.s32.totalorder %v6880, 2
    %vm6882 = vcmp.eq.s32.totalorder %v6880, 0
    %v6883 = vxor.u32 %v6877, 2147483648
    %v6884 = vsel %vm6882, %v6869, %v6883
    %vm6885 = vcmp.eq.s32.totalorder %v6880, 2
    %v6886 = vxor.u32 %v6869, 2147483648
    %v6887 = vsel %vm6885, %v6886, %v6877
    %v6888 = vsel %vm6881, %v6884, %v6887
    %v6889 = vsel %vm6878, nan, %v6888
    %v6890 = vand.u32 2147483647, %v6058
    %vm6891 = vcmp.le.f32.partialorder %v6890, 0.7853982
    %vm6892 = vcmp.lt.s32.totalorder %v6058, 0
    %v6893 = vand.u32 %v6058, 2139095040
    %v6894 = vshrl.u32 %v6893, 23
    %v6895 = vsub.s32 %v6894, 127
    %v6896 = vand.u32 2147483647, %v6058
    %v6897 = vand.u32 %v6896, 8388607
    %v6898 = vor.u32 %v6897, 8388608
    %v6899 = vsub.s32 0, %v6898
    %v6900 = vadd.s32 %v6895, 1
    %vm6901 = vcmp.gt.s32.totalorder %v6900, 0
    %v6902 = vsel %vm6901, %v6900, 0
    %v6903 = vshrl.u32 %v6902, 5
    %v6904 = vand.u32 %v6902, 31
    %v6905 = vsub.s32 32, %v6904
    %v6906 = vshrl.u32 683565275, %v6905
    %v6907 = vshll.u32 683565275, %v6904
    %v6908 = vshrl.u32 2475754826, %v6905
    %v6909 = vor.u32 %v6907, %v6908
    %v6910 = vshll.u32 2475754826, %v6904
    %v6911 = vshrl.u32 2131351028, %v6905
    %v6912 = vor.u32 %v6910, %v6911
    %v6913 = vshll.u32 2131351028, %v6904
    %v6914 = vshrl.u32 2102212464, %v6905
    %v6915 = vor.u32 %v6913, %v6914
    %v6916 = vshll.u32 2102212464, %v6904
    %v6917 = vshrl.u32 920167782, %v6905
    %v6918 = vor.u32 %v6916, %v6917
    %v6919 = vshll.u32 920167782, %v6904
    %v6920 = vshrl.u32 1326507024, %v6905
    %v6921 = vor.u32 %v6919, %v6920
    %vm6922 = vcmp.lt.s32.totalorder %v6903, 1
    %vm6923 = vcmp.lt.s32.totalorder %v6903, 2
    %vm6924 = vcmp.lt.s32.totalorder %v6903, 3
    %vm6925 = vcmp.lt.s32.totalorder %v6903, 4
    %v6926 = vsel %vm6922, %v6906, %v6909
    %v6927 = vsel %vm6925, %v6915, 2102212464
    %v6928 = vsel %vm6924, %v6912, %v6927
    %v6929 = vsel %vm6923, %v6926, %v6928
    %v6930 = vsel %vm6922, %v6909, %v6912
    %v6931 = vsel %vm6925, %v6918, 920167782
    %v6932 = vsel %vm6924, %v6915, %v6931
    %v6933 = vsel %vm6923, %v6930, %v6932
    %v6934 = vsel %vm6922, %v6912, %v6915
    %v6935 = vsel %vm6925, %v6921, 1326507024
    %v6936 = vsel %vm6924, %v6918, %v6935
    %v6937 = vsel %vm6923, %v6934, %v6936
    %v6938 = vshll.u32 %v6898, 8
    %v6939 = vand.u32 %v6938, 65535
    %v6940 = vshrl.u32 %v6938, 16
    %v6941 = vand.u32 %v6937, 65535
    %v6942 = vshrl.u32 %v6937, 16
    %v6943 = vmul.u32 %v6939, %v6941
    %v6944 = vmul.u32 %v6939, %v6942
    %v6945 = vmul.u32 %v6940, %v6941
    %v6946 = vmul.u32 %v6940, %v6942
    %v6947 = vshll.u32 %v6944, 16
    %v6948 = vshrl.u32 %v6944, 16
    %v6949 = vshll.u32 %v6945, 16
    %v6950 = vshrl.u32 %v6945, 16
    %vm6951 = vc.u32 %v6943, %v6947
    %v6952 = vsel %vm6951, 1, 0
    %v6953 = vadd.s32 %v6943, %v6947
    %v6954 = vadd.s32 %v6946, %v6952
    %vm6955 = vc.u32 %v6953, %v6949
    %v6956 = vsel %vm6955, 1, 0
    %v6957 = vadd.s32 %v6953, %v6949
    %v6958 = vadd.s32 %v6954, %v6956
    %v6959 = vadd.s32 %v6958, %v6948
    %v6960 = vadd.s32 %v6959, %v6950
    %v6961 = vand.u32 %v6938, 65535
    %v6962 = vshrl.u32 %v6938, 16
    %v6963 = vand.u32 %v6933, 65535
    %v6964 = vshrl.u32 %v6933, 16
    %v6965 = vmul.u32 %v6961, %v6963
    %v6966 = vmul.u32 %v6961, %v6964
    %v6967 = vmul.u32 %v6962, %v6963
    %v6968 = vmul.u32 %v6962, %v6964
    %v6969 = vshll.u32 %v6966, 16
    %v6970 = vshrl.u32 %v6966, 16
    %v6971 = vshll.u32 %v6967, 16
    %v6972 = vshrl.u32 %v6967, 16
    %vm6973 = vc.u32 %v6965, %v6969
    %v6974 = vsel %vm6973, 1, 0
    %v6975 = vadd.s32 %v6965, %v6969
    %v6976 = vadd.s32 %v6968, %v6974
    %vm6977 = vc.u32 %v6975, %v6971
    %v6978 = vsel %vm6977, 1, 0
    %v6979 = vadd.s32 %v6975, %v6971
    %v6980 = vadd.s32 %v6976, %v6978
    %v6981 = vadd.s32 %v6980, %v6970
    %v6982 = vadd.s32 %v6981, %v6972
    %v6983 = vmul.u32 %v6938, %v6929
    %v6984 = vadd.s32 %v6960, %v6979
    %vm6985 = vc.u32 %v6960, %v6979
    %v6986 = vadd.s32 %v6982, 1
    %v6987 = vsel %vm6985, %v6986, %v6982
    %v6988 = vadd.s32 %v6983, %v6987
    %v6989 = vadd.s32 %v6988, 536870912
    %v6990 = vshrl.u32 %v6989, 30
    %v6991 = vshll.u32 %v6990, 30
    %v6992 = vsub.s32 %v6988, %v6991
    %vm6993 = vcmp.lt.s32.totalorder %v6992, 0
    %v6994 = vsub.s32 0, %v6992
    %v6995 = vsel %vm6993, %v6994, %v6992
    %v6996 = vclz %v6995
    %v6997 = vsub.s32 %v6996, 2
    %vm6998 = vcmp.gt.s32.totalorder 0, %v6997
    %v6999 = vsel %vm6998, 0, %v6997
    %v7000 = vsub.s32 32, %v6999
    %v7001 = vshll.u32 %v6992, %v6999
    %v7002 = vshrl.u32 %v6984, %v7000
    %v7003 = vor.u32 %v7001, %v7002
    %v7004 = vsub.s32 4294967266, %v6999
    %v7005 = vadd.s32 %v7004, 127
    %v7006 = vshll.u32 %v7005, 23
    %v7007 = vor.u32 4788187, %v7006
    %v7008 = vand.u32 2147483647, %v7007
    %v7010 = vcvt.s32.f32 %v7003
    %v7011 = vmul.f32 %v7010, %v7008
    %v7012 = vxor.u32 %v7011, 2147483648
    %v7013 = vsel %vm6892, %v7012, %v7011
    %v7014 = vsub.s32 4, %v6990
    %v7015 = vsel %vm6892, %v7014, %v6990
    %v7016 = vsel %vm6891, %v6058, %v7013
    %v7017 = vsel %vm6891, 0, %v7015
    %v7018 = vmul.f32 %v7016, %v7016
    %v7019 = vmul.f32 %v7018, -0.001358992
    %v7020 = vadd.f32 %v7019, 0.041655596
    %v7021 = vmul.f32 %v7018, %v7020
    %v7022 = vadd.f32 %v7021, -0.4999988
    %v7023 = vmul.f32 %v7018, %v7022
    %v7024 = vadd.f32 1.0, %v7023
    %v7025 = vmul.f32 %v7016, %v7016
    %v7026 = vmul.f32 %v7025, -0.00019511016
    %v7027 = vadd.f32 %v7026, 0.008332121
    %v7028 = vmul.f32 %v7025, %v7027
    %v7029 = vadd.f32 %v7028, -0.16666654
    %v7030 = vmul.f32 %v7025, %v7029
    %v7031 = vadd.f32 %v7030, 1.0
    %v7032 = vmul.f32 %v7031, %v7016
    %vm7033 = vweird.f32 %v6058
    %v7034 = vadd.s32 %v7017, 3
    %v7035 = vand.u32 %v7034, 3
    %vm7036 = vcmp.lt.s32.totalorder %v7035, 2
    %vm7037 = vcmp.eq.s32.totalorder %v7035, 0
    %v7038 = vxor.u32 %v7032, 2147483648
    %v7039 = vsel %vm7037, %v7024, %v7038
    %vm7040 = vcmp.eq.s32.totalorder %v7035, 2
    %v7041 = vxor.u32 %v7024, 2147483648
    %v7042 = vsel %vm7040, %v7041, %v7032
    %v7043 = vsel %vm7036, %v7039, %v7042
    %v7044 = vsel %vm7033, nan, %v7043
    %v7045 = vand.u32 2147483647, %v6073
    %vm7046 = vcmp.le.f32.partialorder %v7045, 0.7853982
    %vm7047 = vcmp.lt.s32.totalorder %v6073, 0
    %v7048 = vand.u32 %v6073, 2139095040
    %v7049 = vshrl.u32 %v7048, 23
    %v7050 = vsub.s32 %v7049, 127
    %v7051 = vand.u32 2147483647, %v6073
    %v7052 = vand.u32 %v7051, 8388607
    %v7053 = vor.u32 %v7052, 8388608
    %v7054 = vsub.s32 0, %v7053
    %v7055 = vadd.s32 %v7050, 1
    %vm7056 = vcmp.gt.s32.totalorder %v7055, 0
    %v7057 = vsel %vm7056, %v7055, 0
    %v7058 = vshrl.u32 %v7057, 5
    %v7059 = vand.u32 %v7057, 31
    %v7060 = vsub.s32 32, %v7059
    %v7061 = vshrl.u32 683565275, %v7060
    %v7062 = vshll.u32 683565275, %v7059
    %v7063 = vshrl.u32 2475754826, %v7060
    %v7064 = vor.u32 %v7062, %v7063
    %v7065 = vshll.u32 2475754826, %v7059
    %v7066 = vshrl.u32 2131351028, %v7060
    %v7067 = vor.u32 %v7065, %v7066
    %v7068 = vshll.u32 2131351028, %v7059
    %v7069 = vshrl.u32 2102212464, %v7060
    %v7070 = vor.u32 %v7068, %v7069
    %v7071 = vshll.u32 2102212464, %v7059
    %v7072 = vshrl.u32 920167782, %v7060
    %v7073 = vor.u32 %v7071, %v7072
    %v7074 = vshll.u32 920167782, %v7059
    %v7075 = vshrl.u32 1326507024, %v7060
    %v7076 = vor.u32 %v7074, %v7075
    %vm7077 = vcmp.lt.s32.totalorder %v7058, 1
    %vm7078 = vcmp.lt.s32.totalorder %v7058, 2
    %vm7079 = vcmp.lt.s32.totalorder %v7058, 3
    %vm7080 = vcmp.lt.s32.totalorder %v7058, 4
    %v7081 = vsel %vm7077, %v7061, %v7064
    %v7082 = vsel %vm7080, %v7070, 2102212464
    %v7083 = vsel %vm7079, %v7067, %v7082
    %v7084 = vsel %vm7078, %v7081, %v7083
    %v7085 = vsel %vm7077, %v7064, %v7067
    %v7086 = vsel %vm7080, %v7073, 920167782
    %v7087 = vsel %vm7079, %v7070, %v7086
    %v7088 = vsel %vm7078, %v7085, %v7087
    %v7089 = vsel %vm7077, %v7067, %v7070
    %v7090 = vsel %vm7080, %v7076, 1326507024
    %v7091 = vsel %vm7079, %v7073, %v7090
    %v7092 = vsel %vm7078, %v7089, %v7091
    %v7093 = vshll.u32 %v7053, 8
    %v7094 = vand.u32 %v7093, 65535
    %v7095 = vshrl.u32 %v7093, 16
    %v7096 = vand.u32 %v7092, 65535
    %v7097 = vshrl.u32 %v7092, 16
    %v7098 = vmul.u32 %v7094, %v7096
    %v7099 = vmul.u32 %v7094, %v7097
    %v7100 = vmul.u32 %v7095, %v7096
    %v7101 = vmul.u32 %v7095, %v7097
    %v7102 = vshll.u32 %v7099, 16
    %v7103 = vshrl.u32 %v7099, 16
    %v7104 = vshll.u32 %v7100, 16
    %v7105 = vshrl.u32 %v7100, 16
    %vm7106 = vc.u32 %v7098, %v7102
    %v7107 = vsel %vm7106, 1, 0
    %v7108 = vadd.s32 %v7098, %v7102
    %v7109 = vadd.s32 %v7101, %v7107
    %vm7110 = vc.u32 %v7108, %v7104
    %v7111 = vsel %vm7110, 1, 0
    %v7112 = vadd.s32 %v7108, %v7104
    %v7113 = vadd.s32 %v7109, %v7111
    %v7114 = vadd.s32 %v7113, %v7103
    %v7115 = vadd.s32 %v7114, %v7105
    %v7116 = vand.u32 %v7093, 65535
    %v7117 = vshrl.u32 %v7093, 16
    %v7118 = vand.u32 %v7088, 65535
    %v7119 = vshrl.u32 %v7088, 16
    %v7120 = vmul.u32 %v7116, %v7118
    %v7121 = vmul.u32 %v7116, %v7119
    %v7122 = vmul.u32 %v7117, %v7118
    %v7123 = vmul.u32 %v7117, %v7119
    %v7124 = vshll.u32 %v7121, 16
    %v7125 = vshrl.u32 %v7121, 16
    %v7126 = vshll.u32 %v7122, 16
    %v7127 = vshrl.u32 %v7122, 16
    %vm7128 = vc.u32 %v7120, %v7124
    %v7129 = vsel %vm7128, 1, 0
    %v7130 = vadd.s32 %v7120, %v7124
    %v7131 = vadd.s32 %v7123, %v7129
    %vm7132 = vc.u32 %v7130, %v7126
    %v7133 = vsel %vm7132, 1, 0
    %v7134 = vadd.s32 %v7130, %v7126
    %v7135 = vadd.s32 %v7131, %v7133
    %v7136 = vadd.s32 %v7135, %v7125
    %v7137 = vadd.s32 %v7136, %v7127
    %v7138 = vmul.u32 %v7093, %v7084
    %v7139 = vadd.s32 %v7115, %v7134
    %vm7140 = vc.u32 %v7115, %v7134
    %v7141 = vadd.s32 %v7137, 1
    %v7142 = vsel %vm7140, %v7141, %v7137
    %v7143 = vadd.s32 %v7138, %v7142
    %v7144 = vadd.s32 %v7143, 536870912
    %v7145 = vshrl.u32 %v7144, 30
    %v7146 = vshll.u32 %v7145, 30
    %v7147 = vsub.s32 %v7143, %v7146
    %vm7148 = vcmp.lt.s32.totalorder %v7147, 0
    %v7149 = vsub.s32 0, %v7147
    %v7150 = vsel %vm7148, %v7149, %v7147
    %v7151 = vclz %v7150
    %v7152 = vsub.s32 %v7151, 2
    %vm7153 = vcmp.gt.s32.totalorder 0, %v7152
    %v7154 = vsel %vm7153, 0, %v7152
    %v7155 = vsub.s32 32, %v7154
    %v7156 = vshll.u32 %v7147, %v7154
    %v7157 = vshrl.u32 %v7139, %v7155
    %v7158 = vor.u32 %v7156, %v7157
    %v7159 = vsub.s32 4294967266, %v7154
    %v7160 = vadd.s32 %v7159, 127
    %v7161 = vshll.u32 %v7160, 23
    %v7162 = vor.u32 4788187, %v7161
    %v7163 = vand.u32 2147483647, %v7162
    %v7165 = vcvt.s32.f32 %v7158
    %v7166 = vmul.f32 %v7165, %v7163
    %v7167 = vxor.u32 %v7166, 2147483648
    %v7168 = vsel %vm7047, %v7167, %v7166
    %v7169 = vsub.s32 4, %v7145
    %v7170 = vsel %vm7047, %v7169, %v7145
    %v7171 = vsel %vm7046, %v6073, %v7168
    %v7172 = vsel %vm7046, 0, %v7170
    %v7173 = vmul.f32 %v7171, %v7171
    %v7174 = vmul.f32 %v7173, -0.001358992
    %v7175 = vadd.f32 %v7174, 0.041655596
    %v7176 = vmul.f32 %v7173, %v7175
    %v7177 = vadd.f32 %v7176, -0.4999988
    %v7178 = vmul.f32 %v7173, %v7177
    %v7179 = vadd.f32 1.0, %v7178
    %v7180 = vmul.f32 %v7171, %v7171
    %v7181 = vmul.f32 %v7180, -0.00019511016
    %v7182 = vadd.f32 %v7181, 0.008332121
    %v7183 = vmul.f32 %v7180, %v7182
    %v7184 = vadd.f32 %v7183, -0.16666654
    %v7185 = vmul.f32 %v7180, %v7184
    %v7186 = vadd.f32 %v7185, 1.0
    %v7187 = vmul.f32 %v7186, %v7171
    %vm7188 = vweird.f32 %v6073
    %v7189 = vadd.s32 %v7172, 3
    %v7190 = vand.u32 %v7189, 3
    %vm7191 = vcmp.lt.s32.totalorder %v7190, 2
    %vm7192 = vcmp.eq.s32.totalorder %v7190, 0
    %v7193 = vxor.u32 %v7187, 2147483648
    %v7194 = vsel %vm7192, %v7179, %v7193
    %vm7195 = vcmp.eq.s32.totalorder %v7190, 2
    %v7196 = vxor.u32 %v7179, 2147483648
    %v7197 = vsel %vm7195, %v7196, %v7187
    %v7198 = vsel %vm7191, %v7194, %v7197
    %v7199 = vsel %vm7188, nan, %v7198
    %v7200 = vand.u32 2147483647, %v6088
    %vm7201 = vcmp.le.f32.partialorder %v7200, 0.7853982
    %vm7202 = vcmp.lt.s32.totalorder %v6088, 0
    %v7203 = vand.u32 %v6088, 2139095040
    %v7204 = vshrl.u32 %v7203, 23
    %v7205 = vsub.s32 %v7204, 127
    %v7206 = vand.u32 2147483647, %v6088
    %v7207 = vand.u32 %v7206, 8388607
    %v7208 = vor.u32 %v7207, 8388608
    %v7209 = vsub.s32 0, %v7208
    %v7210 = vadd.s32 %v7205, 1
    %vm7211 = vcmp.gt.s32.totalorder %v7210, 0
    %v7212 = vsel %vm7211, %v7210, 0
    %v7213 = vshrl.u32 %v7212, 5
    %v7214 = vand.u32 %v7212, 31
    %v7215 = vsub.s32 32, %v7214
    %v7216 = vshrl.u32 683565275, %v7215
    %v7217 = vshll.u32 683565275, %v7214
    %v7218 = vshrl.u32 2475754826, %v7215
    %v7219 = vor.u32 %v7217, %v7218
    %v7220 = vshll.u32 2475754826, %v7214
    %v7221 = vshrl.u32 2131351028, %v7215
    %v7222 = vor.u32 %v7220, %v7221
    %v7223 = vshll.u32 2131351028, %v7214
    %v7224 = vshrl.u32 2102212464, %v7215
    %v7225 = vor.u32 %v7223, %v7224
    %v7226 = vshll.u32 2102212464, %v7214
    %v7227 = vshrl.u32 920167782, %v7215
    %v7228 = vor.u32 %v7226, %v7227
    %v7229 = vshll.u32 920167782, %v7214
    %v7230 = vshrl.u32 1326507024, %v7215
    %v7231 = vor.u32 %v7229, %v7230
    %vm7232 = vcmp.lt.s32.totalorder %v7213, 1
    %vm7233 = vcmp.lt.s32.totalorder %v7213, 2
    %vm7234 = vcmp.lt.s32.totalorder %v7213, 3
    %vm7235 = vcmp.lt.s32.totalorder %v7213, 4
    %v7236 = vsel %vm7232, %v7216, %v7219
    %v7237 = vsel %vm7235, %v7225, 2102212464
    %v7238 = vsel %vm7234, %v7222, %v7237
    %v7239 = vsel %vm7233, %v7236, %v7238
    %v7240 = vsel %vm7232, %v7219, %v7222
    %v7241 = vsel %vm7235, %v7228, 920167782
    %v7242 = vsel %vm7234, %v7225, %v7241
    %v7243 = vsel %vm7233, %v7240, %v7242
    %v7244 = vsel %vm7232, %v7222, %v7225
    %v7245 = vsel %vm7235, %v7231, 1326507024
    %v7246 = vsel %vm7234, %v7228, %v7245
    %v7247 = vsel %vm7233, %v7244, %v7246
    %v7248 = vshll.u32 %v7208, 8
    %v7249 = vand.u32 %v7248, 65535
    %v7250 = vshrl.u32 %v7248, 16
    %v7251 = vand.u32 %v7247, 65535
    %v7252 = vshrl.u32 %v7247, 16
    %v7253 = vmul.u32 %v7249, %v7251
    %v7254 = vmul.u32 %v7249, %v7252
    %v7255 = vmul.u32 %v7250, %v7251
    %v7256 = vmul.u32 %v7250, %v7252
    %v7257 = vshll.u32 %v7254, 16
    %v7258 = vshrl.u32 %v7254, 16
    %v7259 = vshll.u32 %v7255, 16
    %v7260 = vshrl.u32 %v7255, 16
    %vm7261 = vc.u32 %v7253, %v7257
    %v7262 = vsel %vm7261, 1, 0
    %v7263 = vadd.s32 %v7253, %v7257
    %v7264 = vadd.s32 %v7256, %v7262
    %vm7265 = vc.u32 %v7263, %v7259
    %v7266 = vsel %vm7265, 1, 0
    %v7267 = vadd.s32 %v7263, %v7259
    %v7268 = vadd.s32 %v7264, %v7266
    %v7269 = vadd.s32 %v7268, %v7258
    %v7270 = vadd.s32 %v7269, %v7260
    %v7271 = vand.u32 %v7248, 65535
    %v7272 = vshrl.u32 %v7248, 16
    %v7273 = vand.u32 %v7243, 65535
    %v7274 = vshrl.u32 %v7243, 16
    %v7275 = vmul.u32 %v7271, %v7273
    %v7276 = vmul.u32 %v7271, %v7274
    %v7277 = vmul.u32 %v7272, %v7273
    %v7278 = vmul.u32 %v7272, %v7274
    %v7279 = vshll.u32 %v7276, 16
    %v7280 = vshrl.u32 %v7276, 16
    %v7281 = vshll.u32 %v7277, 16
    %v7282 = vshrl.u32 %v7277, 16
    %vm7283 = vc.u32 %v7275, %v7279
    %v7284 = vsel %vm7283, 1, 0
    %v7285 = vadd.s32 %v7275, %v7279
    %v7286 = vadd.s32 %v7278, %v7284
    %vm7287 = vc.u32 %v7285, %v7281
    %v7288 = vsel %vm7287, 1, 0
    %v7289 = vadd.s32 %v7285, %v7281
    %v7290 = vadd.s32 %v7286, %v7288
    %v7291 = vadd.s32 %v7290, %v7280
    %v7292 = vadd.s32 %v7291, %v7282
    %v7293 = vmul.u32 %v7248, %v7239
    %v7294 = vadd.s32 %v7270, %v7289
    %vm7295 = vc.u32 %v7270, %v7289
    %v7296 = vadd.s32 %v7292, 1
    %v7297 = vsel %vm7295, %v7296, %v7292
    %v7298 = vadd.s32 %v7293, %v7297
    %v7299 = vadd.s32 %v7298, 536870912
    %v7300 = vshrl.u32 %v7299, 30
    %v7301 = vshll.u32 %v7300, 30
    %v7302 = vsub.s32 %v7298, %v7301
    %vm7303 = vcmp.lt.s32.totalorder %v7302, 0
    %v7304 = vsub.s32 0, %v7302
    %v7305 = vsel %vm7303, %v7304, %v7302
    %v7306 = vclz %v7305
    %v7307 = vsub.s32 %v7306, 2
    %vm7308 = vcmp.gt.s32.totalorder 0, %v7307
    %v7309 = vsel %vm7308, 0, %v7307
    %v7310 = vsub.s32 32, %v7309
    %v7311 = vshll.u32 %v7302, %v7309
    %v7312 = vshrl.u32 %v7294, %v7310
    %v7313 = vor.u32 %v7311, %v7312
    %v7314 = vsub.s32 4294967266, %v7309
    %v7315 = vadd.s32 %v7314, 127
    %v7316 = vshll.u32 %v7315, 23
    %v7317 = vor.u32 4788187, %v7316
    %v7318 = vand.u32 2147483647, %v7317
    %v7320 = vcvt.s32.f32 %v7313
    %v7321 = vmul.f32 %v7320, %v7318
    %v7322 = vxor.u32 %v7321, 2147483648
    %v7323 = vsel %vm7202, %v7322, %v7321
    %v7324 = vsub.s32 4, %v7300
    %v7325 = vsel %vm7202, %v7324, %v7300
    %v7326 = vsel %vm7201, %v6088, %v7323
    %v7327 = vsel %vm7201, 0, %v7325
    %v7328 = vmul.f32 %v7326, %v7326
    %v7329 = vmul.f32 %v7328, -0.001358992
    %v7330 = vadd.f32 %v7329, 0.041655596
    %v7331 = vmul.f32 %v7328, %v7330
    %v7332 = vadd.f32 %v7331, -0.4999988
    %v7333 = vmul.f32 %v7328, %v7332
    %v7334 = vadd.f32 1.0, %v7333
    %v7335 = vmul.f32 %v7326, %v7326
    %v7336 = vmul.f32 %v7335, -0.00019511016
    %v7337 = vadd.f32 %v7336, 0.008332121
    %v7338 = vmul.f32 %v7335, %v7337
    %v7339 = vadd.f32 %v7338, -0.16666654
    %v7340 = vmul.f32 %v7335, %v7339
    %v7341 = vadd.f32 %v7340, 1.0
    %v7342 = vmul.f32 %v7341, %v7326
    %vm7343 = vweird.f32 %v6088
    %v7344 = vadd.s32 %v7327, 3
    %v7345 = vand.u32 %v7344, 3
    %vm7346 = vcmp.lt.s32.totalorder %v7345, 2
    %vm7347 = vcmp.eq.s32.totalorder %v7345, 0
    %v7348 = vxor.u32 %v7342, 2147483648
    %v7349 = vsel %vm7347, %v7334, %v7348
    %vm7350 = vcmp.eq.s32.totalorder %v7345, 2
    %v7351 = vxor.u32 %v7334, 2147483648
    %v7352 = vsel %vm7350, %v7351, %v7342
    %v7353 = vsel %vm7346, %v7349, %v7352
    %v7354 = vsel %vm7343, nan, %v7353
    %v7355 = vmul.f32 %v6108, %v6889
    %v7356 = vmul.f32 %v6110, %v7044
    %v7357 = vmul.f32 %v6112, %v7199
    %v7358 = vmul.f32 %v6114, %v7354
    %v7359 = vsel %vm669, %v6731, 0.0
    %7360 = vadd.xlane.f32.xlu0 %v7359
    %v7361 = vpop.xlane.xlu0 %7360
    %v7362 = vsel %vm669, %v6732, 0.0
    %7363 = vadd.xlane.f32.xlu0 %v7362
    %v7364 = vpop.xlane.xlu0 %7363
    %v7365 = vsel %vm669, %v6733, 0.0
    %7366 = vadd.xlane.f32.xlu0 %v7365
    %v7367 = vpop.xlane.xlu0 %7366
    %v7368 = vsel %vm669, %v6734, 0.0
    %7369 = vadd.xlane.f32.xlu0 %v7368
    %v7370 = vpop.xlane.xlu0 %7369
    %v7371 = vsel %vm669, %v7355, 0.0
    %7372 = vadd.xlane.f32.xlu0 %v7371
    %v7373 = vpop.xlane.xlu0 %7372
    %v7374 = vsel %vm669, %v7356, 0.0
    %7375 = vadd.xlane.f32.xlu0 %v7374
    %v7376 = vpop.xlane.xlu0 %7375
    %v7377 = vsel %vm669, %v7357, 0.0
    %7378 = vadd.xlane.f32.xlu0 %v7377
    %v7379 = vpop.xlane.xlu0 %7378
    %v7380 = vsel %vm669, %v7358, 0.0
    %7381 = vadd.xlane.f32.xlu0 %v7380
    %v7382 = vpop.xlane.xlu0 %7381
    %v7383 = vmul.f32 %v7361, %v7361
    %v7384 = vmul.f32 %v7364, %v7364
    %v7385 = vmul.f32 %v7367, %v7367
    %v7386 = vmul.f32 %v7370, %v7370
    %v7387 = vmul.f32 %v7373, %v7373
    %v7388 = vmul.f32 %v7376, %v7376
    %v7389 = vmul.f32 %v7379, %v7379
    %v7390 = vmul.f32 %v7382, %v7382
    %v7391 = vadd.f32 %v7383, %v7387
    %v7392 = vadd.f32 %v7384, %v7388
    %v7393 = vadd.f32 %v7385, %v7389
    %v7394 = vadd.f32 %v7386, %v7390
    %v7395 = vadd.f32 %v7391, 1e-12
    %v7396 = vadd.f32 %v7392, 1e-12
    %v7397 = vadd.f32 %v7393, 1e-12
    %v7398 = vadd.f32 %v7394, 1e-12
    %v7399 = vrcp.pop %v7395
    %v7400 = vmul.f32 %v7395, %v7399
    %v7401 = vsub.f32 1.0, %v7400
    %v7402 = vmul.f32 %v7399, %v7401
    %v7403 = vadd.f32 %v7399, %v7402
    %vm7404 = vweird.f32 %v7395
    %vm7405 = vweird.f32 %v7399
    %vm7406 = vmor %vm7404, %vm7405
    %v7407 = vsel %vm7406, %v7399, %v7403
    %v7408 = vand.u32 2147483647, %v7395
    %vm7409 = vcmp.eq.f32.partialorder %v7408, 8.507059e+37
    %v7410 = vand.u32 %v7395, 2147483648
    %v7411 = vor.u32 1.1754944e-38, %v7410
    %v7412 = vsel %vm7409, %v7411, %v7407
    %v7413 = vmul.f32 1.0, %v7412
    %v7414 = vrcp.pop %v7396
    %v7415 = vmul.f32 %v7396, %v7414
    %v7416 = vsub.f32 1.0, %v7415
    %v7417 = vmul.f32 %v7414, %v7416
    %v7418 = vadd.f32 %v7414, %v7417
    %vm7419 = vweird.f32 %v7396
    %vm7420 = vweird.f32 %v7414
    %vm7421 = vmor %vm7419, %vm7420
    %v7422 = vsel %vm7421, %v7414, %v7418
    %v7423 = vand.u32 2147483647, %v7396
    %vm7424 = vcmp.eq.f32.partialorder %v7423, 8.507059e+37
    %v7425 = vand.u32 %v7396, 2147483648
    %v7426 = vor.u32 1.1754944e-38, %v7425
    %v7427 = vsel %vm7424, %v7426, %v7422
    %v7428 = vmul.f32 1.0, %v7427
    %v7429 = vrcp.pop %v7397
    %v7430 = vmul.f32 %v7397, %v7429
    %v7431 = vsub.f32 1.0, %v7430
    %v7432 = vmul.f32 %v7429, %v7431
    %v7433 = vadd.f32 %v7429, %v7432
    %vm7434 = vweird.f32 %v7397
    %vm7435 = vweird.f32 %v7429
    %vm7436 = vmor %vm7434, %vm7435
    %v7437 = vsel %vm7436, %v7429, %v7433
    %v7438 = vand.u32 2147483647, %v7397
    %vm7439 = vcmp.eq.f32.partialorder %v7438, 8.507059e+37
    %v7440 = vand.u32 %v7397, 2147483648
    %v7441 = vor.u32 1.1754944e-38, %v7440
    %v7442 = vsel %vm7439, %v7441, %v7437
    %v7443 = vmul.f32 1.0, %v7442
    %v7444 = vrcp.pop %v7398
    %v7445 = vmul.f32 %v7398, %v7444
    %v7446 = vsub.f32 1.0, %v7445
    %v7447 = vmul.f32 %v7444, %v7446
    %v7448 = vadd.f32 %v7444, %v7447
    %vm7449 = vweird.f32 %v7398
    %vm7450 = vweird.f32 %v7444
    %vm7451 = vmor %vm7449, %vm7450
    %v7452 = vsel %vm7451, %v7444, %v7448
    %v7453 = vand.u32 2147483647, %v7398
    %vm7454 = vcmp.eq.f32.partialorder %v7453, 8.507059e+37
    %v7455 = vand.u32 %v7398, 2147483648
    %v7456 = vor.u32 1.1754944e-38, %v7455
    %v7457 = vsel %vm7454, %v7456, %v7452
    %v7458 = vmul.f32 1.0, %v7457
    %v7459 = vmul.f32 %v6731, %v7361
    %v7460 = vmul.f32 %v6732, %v7364
    %v7461 = vmul.f32 %v6733, %v7367
    %v7462 = vmul.f32 %v6734, %v7370
    %v7463 = vmul.f32 %v7355, %v7373
    %v7464 = vmul.f32 %v7356, %v7376
    %v7465 = vmul.f32 %v7357, %v7379
    %v7466 = vmul.f32 %v7358, %v7382
    %v7467 = vadd.f32 %v7459, %v7463
    %v7468 = vadd.f32 %v7460, %v7464
    %v7469 = vadd.f32 %v7461, %v7465
    %v7470 = vadd.f32 %v7462, %v7466
    %v7471 = vmul.f32 %v7467, %v7413
    %v7472 = vmul.f32 %v7468, %v7428
    %v7473 = vmul.f32 %v7469, %v7443
    %v7474 = vmul.f32 %v7470, %v7458
    %v7475 = vpack.c.bf16 %v7471, %v7471
    %v7476 = vpack.c.bf16 %v7472, %v7472
    %v7477 = vpack.c.bf16 %v7473, %v7473
    %v7478 = vpack.c.bf16 %v7474, %v7474
    %v7479 = vmul.f32 %v7355, %v7361
    %v7480 = vmul.f32 %v7356, %v7364
    %v7481 = vmul.f32 %v7357, %v7367
    %v7482 = vmul.f32 %v7358, %v7370
    %v7483 = vmul.f32 %v6731, %v7373
    %v7484 = vmul.f32 %v6732, %v7376
    %v7485 = vmul.f32 %v6733, %v7379
    %v7486 = vmul.f32 %v6734, %v7382
    %v7487 = vsub.f32 %v7479, %v7483
    %v7488 = vsub.f32 %v7480, %v7484
    %v7489 = vsub.f32 %v7481, %v7485
    %v7490 = vsub.f32 %v7482, %v7486
    %v7491 = vmul.f32 %v7487, %v7413
    %v7492 = vmul.f32 %v7488, %v7428
    %v7493 = vmul.f32 %v7489, %v7443
    %v7494 = vmul.f32 %v7490, %v7458
    %v7495 = vpack.c.bf16 %v7491, %v7491
    %v7496 = vpack.c.bf16 %v7492, %v7492
    %v7497 = vpack.c.bf16 %v7493, %v7493
    %v7498 = vpack.c.bf16 %v7494, %v7494
    %v7500 = vsel %vm669, %v7495, 0
    %v7502 = vsel %vm2081, %v5929, 0
    %7504 = vmatpush.bf16.msra.mxu0 0
    %7505 = vmatpush.bf16.msra.mxu0 0
    %7506 = vmatpush.bf16.msra.mxu0 0
    %7507 = vmatpush.bf16.msra.mxu0 0
    %7508 = vmatpush.bf16.msra.mxu0 0
    %7509 = vmatpush.bf16.msra.mxu0 0
    %7510 = vmatpush.bf16.msra.mxu0 0
    %7511 = vmatpush.bf16.msra.mxu0 %v7502
    %7512 = vmatmul.bf16.gmra.mxu0 %v7500
    %v7513 = vpop.f32.mrf.mxu0
    %v7514 = vadd.f32 0.0, %v7513
    %v7515 = vpop.f32.mrf.mxu0
    %7516 = vdwg.mxu0
    %v7518 = vsel %vm669, %v7496, 0
    %v7520 = vsel %vm2081, %v5932, 0
    %7522 = vmatpush.bf16.msra.mxu0 0
    %7523 = vmatpush.bf16.msra.mxu0 0
    %7524 = vmatpush.bf16.msra.mxu0 0
    %7525 = vmatpush.bf16.msra.mxu0 0
    %7526 = vmatpush.bf16.msra.mxu0 0
    %7527 = vmatpush.bf16.msra.mxu0 0
    %7528 = vmatpush.bf16.msra.mxu0 0
    %7529 = vmatpush.bf16.msra.mxu0 %v7520
    %7530 = vmatmul.bf16.gmra.mxu0 %v7518
    %v7531 = vpop.f32.mrf.mxu0
    %v7532 = vadd.f32 0.0, %v7531
    %v7533 = vpop.f32.mrf.mxu0
    %7534 = vdwg.mxu0
    %v7536 = vsel %vm669, %v7497, 0
    %v7538 = vsel %vm2081, %v5935, 0
    %7540 = vmatpush.bf16.msra.mxu0 0
    %7541 = vmatpush.bf16.msra.mxu0 0
    %7542 = vmatpush.bf16.msra.mxu0 0
    %7543 = vmatpush.bf16.msra.mxu0 0
    %7544 = vmatpush.bf16.msra.mxu0 0
    %7545 = vmatpush.bf16.msra.mxu0 0
    %7546 = vmatpush.bf16.msra.mxu0 0
    %7547 = vmatpush.bf16.msra.mxu0 %v7538
    %7548 = vmatmul.bf16.gmra.mxu0 %v7536
    %v7549 = vpop.f32.mrf.mxu0
    %v7550 = vadd.f32 0.0, %v7549
    %v7551 = vpop.f32.mrf.mxu0
    %7552 = vdwg.mxu0
    %v7554 = vsel %vm669, %v7498, 0
    %v7556 = vsel %vm2081, %v5938, 0
    %7558 = vmatpush.bf16.msra.mxu0 0
    %7559 = vmatpush.bf16.msra.mxu0 0
    %7560 = vmatpush.bf16.msra.mxu0 0
    %7561 = vmatpush.bf16.msra.mxu0 0
    %7562 = vmatpush.bf16.msra.mxu0 0
    %7563 = vmatpush.bf16.msra.mxu0 0
    %7564 = vmatpush.bf16.msra.mxu0 0
    %7565 = vmatpush.bf16.msra.mxu0 %v7556
    %7566 = vmatmul.bf16.gmra.mxu0 %v7554
    %v7567 = vpop.f32.mrf.mxu0
    %v7568 = vadd.f32 0.0, %v7567
    %v7569 = vpop.f32.mrf.mxu0
    %7570 = vdwg.mxu0
    %7571 = vrot.lane.b32.xlu0 %v4143, 32
    %v7572 = vpop.permute.xlu0 %7571
    %v7574 = vsel %vm669, %v7475, 0
    %v7577 = vsel %vm2081, %v7572, 0
    %7579 = vmatpush.bf16.msra.mxu0 0
    %7580 = vmatpush.bf16.msra.mxu0 0
    %7581 = vmatpush.bf16.msra.mxu0 0
    %7582 = vmatpush.bf16.msra.mxu0 0
    %7583 = vmatpush.bf16.msra.mxu0 0
    %7584 = vmatpush.bf16.msra.mxu0 0
    %7585 = vmatpush.bf16.msra.mxu0 0
    %7586 = vmatpush.bf16.msra.mxu0 %v7577
    %7587 = vmatmul.bf16.gmra.mxu0 %v7574
    %v7588 = vpop.f32.mrf.mxu0
    %v7589 = vadd.f32 %v7514, %v7588
    %v7590 = vpop.f32.mrf.mxu0
    %7591 = vdwg.mxu0
    %7592 = vrot.lane.b32.xlu0 %v4144, 32
    %v7593 = vpop.permute.xlu0 %7592
    %v7595 = vsel %vm669, %v7476, 0
    %v7598 = vsel %vm2081, %v7593, 0
    %7600 = vmatpush.bf16.msra.mxu0 0
    %7601 = vmatpush.bf16.msra.mxu0 0
    %7602 = vmatpush.bf16.msra.mxu0 0
    %7603 = vmatpush.bf16.msra.mxu0 0
    %7604 = vmatpush.bf16.msra.mxu0 0
    %7605 = vmatpush.bf16.msra.mxu0 0
    %7606 = vmatpush.bf16.msra.mxu0 0
    %7607 = vmatpush.bf16.msra.mxu0 %v7598
    %7608 = vmatmul.bf16.gmra.mxu0 %v7595
    %v7609 = vpop.f32.mrf.mxu0
    %v7610 = vadd.f32 %v7532, %v7609
    %v7611 = vpop.f32.mrf.mxu0
    %7612 = vdwg.mxu0
    %7613 = vrot.lane.b32.xlu0 %v4145, 32
    %v7614 = vpop.permute.xlu0 %7613
    %v7616 = vsel %vm669, %v7477, 0
    %v7619 = vsel %vm2081, %v7614, 0
    %7621 = vmatpush.bf16.msra.mxu0 0
    %7622 = vmatpush.bf16.msra.mxu0 0
    %7623 = vmatpush.bf16.msra.mxu0 0
    %7624 = vmatpush.bf16.msra.mxu0 0
    %7625 = vmatpush.bf16.msra.mxu0 0
    %7626 = vmatpush.bf16.msra.mxu0 0
    %7627 = vmatpush.bf16.msra.mxu0 0
    %7628 = vmatpush.bf16.msra.mxu0 %v7619
    %7629 = vmatmul.bf16.gmra.mxu0 %v7616
    %v7630 = vpop.f32.mrf.mxu0
    %v7631 = vadd.f32 %v7550, %v7630
    %v7632 = vpop.f32.mrf.mxu0
    %7633 = vdwg.mxu0
    %7634 = vrot.lane.b32.xlu0 %v4146, 32
    %v7635 = vpop.permute.xlu0 %7634
    %v7637 = vsel %vm669, %v7478, 0
    %v7640 = vsel %vm2081, %v7635, 0
    %7642 = vmatpush.bf16.msra.mxu0 0
    %7643 = vmatpush.bf16.msra.mxu0 0
    %7644 = vmatpush.bf16.msra.mxu0 0
    %7645 = vmatpush.bf16.msra.mxu0 0
    %7646 = vmatpush.bf16.msra.mxu0 0
    %7647 = vmatpush.bf16.msra.mxu0 0
    %7648 = vmatpush.bf16.msra.mxu0 0
    %7649 = vmatpush.bf16.msra.mxu0 %v7640
    %7650 = vmatmul.bf16.gmra.mxu0 %v7637
    %v7651 = vpop.f32.mrf.mxu0
    %v7652 = vadd.f32 %v7568, %v7651
    %v7653 = vpop.f32.mrf.mxu0
    %7654 = vdwg.mxu0
    %7659 = vrot.lane.b32.xlu0 %v3986, 32
    %v7660 = vpop.permute.xlu0 %7659
    %7661 = vrot.lane.b32.xlu0 %v4008, 32
    %v7662 = vpop.permute.xlu0 %7661
    %7663 = vrot.lane.b32.xlu0 %v4030, 32
    %v7664 = vpop.permute.xlu0 %7663
    %7665 = vrot.lane.b32.xlu0 %v4052, 32
    %v7666 = vpop.permute.xlu0 %7665
    %7675 = vrot.lane.b32.xlu0 %v5823, 64
    %v7676 = vpop.permute.xlu0 %7675
    %7677 = vrot.lane.b32.xlu0 %v5842, 64
    %v7678 = vpop.permute.xlu0 %7677
    %7679 = vrot.lane.b32.xlu0 %v5861, 64
    %v7680 = vpop.permute.xlu0 %7679
    %7681 = vrot.lane.b32.xlu0 %v5880, 64
    %v7682 = vpop.permute.xlu0 %7681
    %7691 = vrot.lane.b32.xlu0 %v7589, 96
    %v7692 = vpop.permute.xlu0 %7691
    %7693 = vrot.lane.b32.xlu0 %v7610, 96
    %v7694 = vpop.permute.xlu0 %7693
    %7695 = vrot.lane.b32.xlu0 %v7631, 96
    %v7696 = vpop.permute.xlu0 %7695
    %7697 = vrot.lane.b32.xlu0 %v7652, 96
    %v7698 = vpop.permute.xlu0 %7697
    %v7703 = vsel %vm526, %v2169, %v7660
    %v7704 = vsel %vm526, %v2190, %v7662
    %v7705 = vsel %vm526, %v2211, %v7664
    %v7706 = vsel %vm526, %v2232, %v7666
    %vm7707 = vcmask 523264
    %v7708 = vsel %vm7707, %v7703, %v7676
    %v7709 = vsel %vm7707, %v7704, %v7678
    %v7710 = vsel %vm7707, %v7705, %v7680
    %v7711 = vsel %vm7707, %v7706, %v7682
    %vm7712 = vcmask 785408
    %v7713 = vsel %vm7712, %v7708, %v7692
    %v7714 = vsel %vm7712, %v7709, %v7694
    %v7715 = vsel %vm7712, %v7710, %v7696
    %v7716 = vsel %vm7712, %v7711, %v7698
    %v7717 = vpack.c.bf16 %v7714, %v7713
    %v7718 = vpack.c.bf16 %v7716, %v7715
    %v7719 = vld [vmem:[#allocation8] sm:$0xf]
    %v7720 = vld [vmem:[#allocation8 + $0x4] sm:$0xf]
    %v7721 = vld [vmem:[#allocation8 + $0x8] sm:$0xf]
    %v7722 = vld [vmem:[#allocation8 + $0xc] sm:$0xf]
    %v7723 = vld [vmem:[#allocation8 + $0x10] sm:$0xf]
    %v7724 = vld [vmem:[#allocation8 + $0x14] sm:$0xf]
    %v7725 = vld [vmem:[#allocation8 + $0x18] sm:$0xf]
    %v7726 = vld [vmem:[#allocation8 + $0x1c] sm:$0xf]
    %v7727 = vld [vmem:[#allocation8 + $0x20] sm:$0xf]
    %v7728 = vld [vmem:[#allocation8 + $0x24] sm:$0xf]
    %v7729 = vld [vmem:[#allocation8 + $0x28] sm:$0xf]
    %v7730 = vld [vmem:[#allocation8 + $0x2c] sm:$0xf]
    %v7731 = vld [vmem:[#allocation8 + $0x30] sm:$0xf]
    %v7732 = vld [vmem:[#allocation8 + $0x34] sm:$0xf]
    %v7733 = vld [vmem:[#allocation8 + $0x38] sm:$0xf]
    %v7734 = vld [vmem:[#allocation8 + $0x3c] sm:$0xf]
    %v7735 = vld [vmem:[#allocation10] sm:$0x1]
    %v7737 = vperm.slane %v7735, 0
    %v7755 = vunpack.c.l.b16 %v7719
    %v7756 = vunpack.c.l.b16 %v7720
    %v7757 = vunpack.c.l.b16 %v7721
    %v7758 = vunpack.c.l.b16 %v7722
    %v7759 = vunpack.c.l.b16 %v7723
    %v7760 = vunpack.c.l.b16 %v7724
    %v7761 = vunpack.c.l.b16 %v7725
    %v7762 = vunpack.c.l.b16 %v7726
    %v7763 = vunpack.c.l.b16 %v7727
    %v7764 = vunpack.c.l.b16 %v7728
    %v7765 = vunpack.c.l.b16 %v7729
    %v7766 = vunpack.c.l.b16 %v7730
    %v7767 = vunpack.c.l.b16 %v7731
    %v7768 = vunpack.c.l.b16 %v7732
    %v7769 = vunpack.c.l.b16 %v7733
    %v7770 = vunpack.c.l.b16 %v7734
    %v7771 = vpack.c.b16 %v7756, %v7755
    %v7772 = vpack.c.b16 %v7758, %v7757
    %v7773 = vpack.c.b16 %v7760, %v7759
    %v7774 = vpack.c.b16 %v7762, %v7761
    %v7775 = vpack.c.b16 %v7764, %v7763
    %v7776 = vpack.c.b16 %v7766, %v7765
    %v7777 = vpack.c.b16 %v7768, %v7767
    %v7778 = vpack.c.b16 %v7770, %v7769
    %7787 = vmatpush.bf16.msra.mxu0 %v7778
    %7788 = vmatpush.bf16.msra.mxu0 %v7777
    %7789 = vmatpush.bf16.msra.mxu0 %v7776
    %7790 = vmatpush.bf16.msra.mxu0 %v7775
    %7791 = vmatpush.bf16.msra.mxu0 %v7774
    %7792 = vmatpush.bf16.msra.mxu0 %v7773
    %7793 = vmatpush.bf16.msra.mxu0 %v7772
    %7794 = vmatpush.bf16.msra.mxu0 %v7771
    %7795 = vmatmul.bf16.gmra.mxu0 %v7717
    %v7796 = vpop.f32.mrf.mxu0
    %v7797 = vadd.f32 %v7737, %v7796
    %v7798 = vpop.f32.mrf.mxu0
    %v7799 = vadd.f32 %v7737, %v7798
    %7800 = vmatmul.bf16.gmra.mxu0 %v7718
    %v7801 = vpop.f32.mrf.mxu0
    %v7802 = vadd.f32 %v7737, %v7801
    %v7803 = vpop.f32.mrf.mxu0
    %v7804 = vadd.f32 %v7737, %v7803
    %7805 = vdwg.mxu0
    %v7806 = vadd.f32 %v192, %v7797
    %v7807 = vadd.f32 %v193, %v7799
    %v7808 = vadd.f32 %v194, %v7802
    %v7809 = vadd.f32 %v195, %v7804
    %v7810 = vsel %vm7707, %v7806, 0.0
    %7811 = vadd.xlane.f32.xlu0 %v7810
    %v7812 = vpop.xlane.xlu0 %7811
    %v7813 = vsel %vm7707, %v7807, 0.0
    %7814 = vadd.xlane.f32.xlu0 %v7813
    %v7815 = vpop.xlane.xlu0 %7814
    %v7816 = vsel %vm7707, %v7808, 0.0
    %7817 = vadd.xlane.f32.xlu0 %v7816
    %v7818 = vpop.xlane.xlu0 %7817
    %v7819 = vsel %vm7707, %v7809, 0.0
    %7820 = vadd.xlane.f32.xlu0 %v7819
    %v7821 = vpop.xlane.xlu0 %7820
    %v7822 = vrcp.pop 64.0
    %v7823 = vmul.f32 64.0, %v7822
    %v7824 = vsub.f32 1.0, %v7823
    %v7825 = vmul.f32 %v7822, %v7824
    %v7826 = vadd.f32 %v7822, %v7825
    %vm7827 = vweird.f32 %v7822
    %v7828 = vsel %vm7827, %v7822, %v7826
    %v7829 = vmul.f32 %v7812, %v7828
    %v7830 = vmul.f32 %v7815, %v7828
    %v7831 = vmul.f32 %v7818, %v7828
    %v7832 = vmul.f32 %v7821, %v7828
    %7837 = vrot.lane.b32.xlu0 %v7806, 64
    %v7838 = vpop.permute.xlu0 %7837
    %7839 = vrot.lane.b32.xlu0 %v7807, 64
    %v7840 = vpop.permute.xlu0 %7839
    %7841 = vrot.lane.b32.xlu0 %v7808, 64
    %v7842 = vpop.permute.xlu0 %7841
    %7843 = vrot.lane.b32.xlu0 %v7809, 64
    %v7844 = vpop.permute.xlu0 %7843
    %v7849 = vsel %vm7707, %v7838, 0.0
    %7850 = vadd.xlane.f32.xlu0 %v7849
    %v7851 = vpop.xlane.xlu0 %7850
    %v7852 = vsel %vm7707, %v7840, 0.0
    %7853 = vadd.xlane.f32.xlu0 %v7852
    %v7854 = vpop.xlane.xlu0 %7853
    %v7855 = vsel %vm7707, %v7842, 0.0
    %7856 = vadd.xlane.f32.xlu0 %v7855
    %v7857 = vpop.xlane.xlu0 %7856
    %v7858 = vsel %vm7707, %v7844, 0.0
    %7859 = vadd.xlane.f32.xlu0 %v7858
    %v7860 = vpop.xlane.xlu0 %7859
    %v7861 = vmul.f32 %v7851, %v7828
    %v7862 = vmul.f32 %v7854, %v7828
    %v7863 = vmul.f32 %v7857, %v7828
    %v7864 = vmul.f32 %v7860, %v7828
    %v7865 = vsub.f32 %v7806, %v7829
    %v7866 = vsub.f32 %v7807, %v7830
    %v7867 = vsub.f32 %v7808, %v7831
    %v7868 = vsub.f32 %v7809, %v7832
    %v7869 = vsub.f32 %v7806, %v7861
    %v7870 = vsub.f32 %v7807, %v7862
    %v7871 = vsub.f32 %v7808, %v7863
    %v7872 = vsub.f32 %v7809, %v7864
    %v7873 = vmul.f32 %v7865, %v7865
    %v7874 = vmul.f32 %v7866, %v7866
    %v7875 = vmul.f32 %v7867, %v7867
    %v7876 = vmul.f32 %v7868, %v7868
    %v7877 = vsel %vm7707, %v7873, 0.0
    %7878 = vadd.xlane.f32.xlu0 %v7877
    %v7879 = vpop.xlane.xlu0 %7878
    %v7880 = vsel %vm7707, %v7874, 0.0
    %7881 = vadd.xlane.f32.xlu0 %v7880
    %v7882 = vpop.xlane.xlu0 %7881
    %v7883 = vsel %vm7707, %v7875, 0.0
    %7884 = vadd.xlane.f32.xlu0 %v7883
    %v7885 = vpop.xlane.xlu0 %7884
    %v7886 = vsel %vm7707, %v7876, 0.0
    %7887 = vadd.xlane.f32.xlu0 %v7886
    %v7888 = vpop.xlane.xlu0 %7887
    %v7889 = vmul.f32 %v7879, 0.015873017
    %v7890 = vmul.f32 %v7882, 0.015873017
    %v7891 = vmul.f32 %v7885, 0.015873017
    %v7892 = vmul.f32 %v7888, 0.015873017
    %v7893 = vadd.f32 %v7889, 1e-05
    %v7894 = vadd.f32 %v7890, 1e-05
    %v7895 = vadd.f32 %v7891, 1e-05
    %v7896 = vadd.f32 %v7892, 1e-05
    %7901 = vrot.lane.b32.xlu0 %v7869, 64
    %v7902 = vpop.permute.xlu0 %7901
    %7903 = vrot.lane.b32.xlu0 %v7870, 64
    %v7904 = vpop.permute.xlu0 %7903
    %7905 = vrot.lane.b32.xlu0 %v7871, 64
    %v7906 = vpop.permute.xlu0 %7905
    %7907 = vrot.lane.b32.xlu0 %v7872, 64
    %v7908 = vpop.permute.xlu0 %7907
    %v7913 = vmul.f32 %v7865, %v7902
    %v7914 = vmul.f32 %v7866, %v7904
    %v7915 = vmul.f32 %v7867, %v7906
    %v7916 = vmul.f32 %v7868, %v7908
    %v7917 = vsel %vm7707, %v7913, 0.0
    %7918 = vadd.xlane.f32.xlu0 %v7917
    %v7919 = vpop.xlane.xlu0 %7918
    %v7920 = vsel %vm7707, %v7914, 0.0
    %7921 = vadd.xlane.f32.xlu0 %v7920
    %v7922 = vpop.xlane.xlu0 %7921
    %v7923 = vsel %vm7707, %v7915, 0.0
    %7924 = vadd.xlane.f32.xlu0 %v7923
    %v7925 = vpop.xlane.xlu0 %7924
    %v7926 = vsel %vm7707, %v7916, 0.0
    %7927 = vadd.xlane.f32.xlu0 %v7926
    %v7928 = vpop.xlane.xlu0 %7927
    %v7929 = vmul.f32 %v7919, 0.015873017
    %v7930 = vmul.f32 %v7922, 0.015873017
    %v7931 = vmul.f32 %v7925, 0.015873017
    %v7932 = vmul.f32 %v7928, 0.015873017
    %v7933 = vmul.f32 %v7869, %v7869
    %v7934 = vmul.f32 %v7870, %v7870
    %v7935 = vmul.f32 %v7871, %v7871
    %v7936 = vmul.f32 %v7872, %v7872
    %7941 = vrot.lane.b32.xlu0 %v7933, 64
    %v7942 = vpop.permute.xlu0 %7941
    %7943 = vrot.lane.b32.xlu0 %v7934, 64
    %v7944 = vpop.permute.xlu0 %7943
    %7945 = vrot.lane.b32.xlu0 %v7935, 64
    %v7946 = vpop.permute.xlu0 %7945
    %7947 = vrot.lane.b32.xlu0 %v7936, 64
    %v7948 = vpop.permute.xlu0 %7947
    %v7953 = vsel %vm7707, %v7942, 0.0
    %7954 = vadd.xlane.f32.xlu0 %v7953
    %v7955 = vpop.xlane.xlu0 %7954
    %v7956 = vsel %vm7707, %v7944, 0.0
    %7957 = vadd.xlane.f32.xlu0 %v7956
    %v7958 = vpop.xlane.xlu0 %7957
    %v7959 = vsel %vm7707, %v7946, 0.0
    %7960 = vadd.xlane.f32.xlu0 %v7959
    %v7961 = vpop.xlane.xlu0 %7960
    %v7962 = vsel %vm7707, %v7948, 0.0
    %7963 = vadd.xlane.f32.xlu0 %v7962
    %v7964 = vpop.xlane.xlu0 %7963
    %v7965 = vmul.f32 %v7955, 0.015873017
    %v7966 = vmul.f32 %v7958, 0.015873017
    %v7967 = vmul.f32 %v7961, 0.015873017
    %v7968 = vmul.f32 %v7964, 0.015873017
    %v7969 = vadd.f32 %v7965, 1e-05
    %v7970 = vadd.f32 %v7966, 1e-05
    %v7971 = vadd.f32 %v7967, 1e-05
    %v7972 = vadd.f32 %v7968, 1e-05
    %v7973 = vmul.f32 %v7893, %v7969
    %v7974 = vmul.f32 %v7894, %v7970
    %v7975 = vmul.f32 %v7895, %v7971
    %v7976 = vmul.f32 %v7896, %v7972
    %v7977 = vmul.f32 %v7929, %v7929
    %v7978 = vmul.f32 %v7930, %v7930
    %v7979 = vmul.f32 %v7931, %v7931
    %v7980 = vmul.f32 %v7932, %v7932
    %v7981 = vsub.f32 %v7973, %v7977
    %v7982 = vsub.f32 %v7974, %v7978
    %v7983 = vsub.f32 %v7975, %v7979
    %v7984 = vsub.f32 %v7976, %v7980
    %v7985 = vrsqrt.pop %v7981
    %v7986 = vmul.f32 %v7985, %v7981
    %v7987 = vmul.f32 %v7986, %v7985
    %v7988 = vmul.f32 0.5, %v7987
    %v7989 = vsub.f32 1.5, %v7988
    %v7990 = vmul.f32 %v7985, %v7989
    %v7991 = vmul.f32 %v7981, %v7990
    %vm7992 = vcmp.eq.f32.partialorder %v7981, inf
    %v7993 = vsel %vm7992, %v7981, %v7991
    %vm7994 = vcmp.eq.f32.partialorder %v7981, 0.0
    %v7995 = vand.u32 %v7981, 2147483648
    %v7996 = vsel %vm7994, %v7995, %v7993
    %v7997 = vrsqrt.pop %v7982
    %v7998 = vmul.f32 %v7997, %v7982
    %v7999 = vmul.f32 %v7998, %v7997
    %v8000 = vmul.f32 0.5, %v7999
    %v8001 = vsub.f32 1.5, %v8000
    %v8002 = vmul.f32 %v7997, %v8001
    %v8003 = vmul.f32 %v7982, %v8002
    %vm8004 = vcmp.eq.f32.partialorder %v7982, inf
    %v8005 = vsel %vm8004, %v7982, %v8003
    %vm8006 = vcmp.eq.f32.partialorder %v7982, 0.0
    %v8007 = vand.u32 %v7982, 2147483648
    %v8008 = vsel %vm8006, %v8007, %v8005
    %v8009 = vrsqrt.pop %v7983
    %v8010 = vmul.f32 %v8009, %v7983
    %v8011 = vmul.f32 %v8010, %v8009
    %v8012 = vmul.f32 0.5, %v8011
    %v8013 = vsub.f32 1.5, %v8012
    %v8014 = vmul.f32 %v8009, %v8013
    %v8015 = vmul.f32 %v7983, %v8014
    %vm8016 = vcmp.eq.f32.partialorder %v7983, inf
    %v8017 = vsel %vm8016, %v7983, %v8015
    %vm8018 = vcmp.eq.f32.partialorder %v7983, 0.0
    %v8019 = vand.u32 %v7983, 2147483648
    %v8020 = vsel %vm8018, %v8019, %v8017
    %v8021 = vrsqrt.pop %v7984
    %v8022 = vmul.f32 %v8021, %v7984
    %v8023 = vmul.f32 %v8022, %v8021
    %v8024 = vmul.f32 0.5, %v8023
    %v8025 = vsub.f32 1.5, %v8024
    %v8026 = vmul.f32 %v8021, %v8025
    %v8027 = vmul.f32 %v7984, %v8026
    %vm8028 = vcmp.eq.f32.partialorder %v7984, inf
    %v8029 = vsel %vm8028, %v7984, %v8027
    %vm8030 = vcmp.eq.f32.partialorder %v7984, 0.0
    %v8031 = vand.u32 %v7984, 2147483648
    %v8032 = vsel %vm8030, %v8031, %v8029
    %v8033 = vadd.f32 %v7893, %v7969
    %v8034 = vadd.f32 %v7894, %v7970
    %v8035 = vadd.f32 %v7895, %v7971
    %v8036 = vadd.f32 %v7896, %v7972
    %v8037 = vmul.f32 %v7996, 2.0
    %v8038 = vmul.f32 %v8008, 2.0
    %v8039 = vmul.f32 %v8020, 2.0
    %v8040 = vmul.f32 %v8032, 2.0
    %v8041 = vadd.f32 %v8033, %v8037
    %v8042 = vadd.f32 %v8034, %v8038
    %v8043 = vadd.f32 %v8035, %v8039
    %v8044 = vadd.f32 %v8036, %v8040
    %v8045 = vrsqrt.pop %v8041
    %v8046 = vmul.f32 %v8045, %v8041
    %v8047 = vmul.f32 %v8046, %v8045
    %v8048 = vmul.f32 0.5, %v8047
    %v8049 = vsub.f32 1.5, %v8048
    %v8050 = vmul.f32 %v8045, %v8049
    %v8051 = vmul.f32 %v8041, %v8050
    %vm8052 = vcmp.eq.f32.partialorder %v8041, inf
    %v8053 = vsel %vm8052, %v8041, %v8051
    %vm8054 = vcmp.eq.f32.partialorder %v8041, 0.0
    %v8055 = vand.u32 %v8041, 2147483648
    %v8056 = vsel %vm8054, %v8055, %v8053
    %v8057 = vrsqrt.pop %v8042
    %v8058 = vmul.f32 %v8057, %v8042
    %v8059 = vmul.f32 %v8058, %v8057
    %v8060 = vmul.f32 0.5, %v8059
    %v8061 = vsub.f32 1.5, %v8060
    %v8062 = vmul.f32 %v8057, %v8061
    %v8063 = vmul.f32 %v8042, %v8062
    %vm8064 = vcmp.eq.f32.partialorder %v8042, inf
    %v8065 = vsel %vm8064, %v8042, %v8063
    %vm8066 = vcmp.eq.f32.partialorder %v8042, 0.0
    %v8067 = vand.u32 %v8042, 2147483648
    %v8068 = vsel %vm8066, %v8067, %v8065
    %v8069 = vrsqrt.pop %v8043
    %v8070 = vmul.f32 %v8069, %v8043
    %v8071 = vmul.f32 %v8070, %v8069
    %v8072 = vmul.f32 0.5, %v8071
    %v8073 = vsub.f32 1.5, %v8072
    %v8074 = vmul.f32 %v8069, %v8073
    %v8075 = vmul.f32 %v8043, %v8074
    %vm8076 = vcmp.eq.f32.partialorder %v8043, inf
    %v8077 = vsel %vm8076, %v8043, %v8075
    %vm8078 = vcmp.eq.f32.partialorder %v8043, 0.0
    %v8079 = vand.u32 %v8043, 2147483648
    %v8080 = vsel %vm8078, %v8079, %v8077
    %v8081 = vrsqrt.pop %v8044
    %v8082 = vmul.f32 %v8081, %v8044
    %v8083 = vmul.f32 %v8082, %v8081
    %v8084 = vmul.f32 0.5, %v8083
    %v8085 = vsub.f32 1.5, %v8084
    %v8086 = vmul.f32 %v8081, %v8085
    %v8087 = vmul.f32 %v8044, %v8086
    %vm8088 = vcmp.eq.f32.partialorder %v8044, inf
    %v8089 = vsel %vm8088, %v8044, %v8087
    %vm8090 = vcmp.eq.f32.partialorder %v8044, 0.0
    %v8091 = vand.u32 %v8044, 2147483648
    %v8092 = vsel %vm8090, %v8091, %v8089
    %v8093 = vmul.f32 %v7996, %v8056
    %v8094 = vmul.f32 %v8008, %v8068
    %v8095 = vmul.f32 %v8020, %v8080
    %v8096 = vmul.f32 %v8032, %v8092
    %v8097 = vrcp.pop %v8093
    %v8098 = vmul.f32 %v8093, %v8097
    %v8099 = vsub.f32 1.0, %v8098
    %v8100 = vmul.f32 %v8097, %v8099
    %v8101 = vadd.f32 %v8097, %v8100
    %vm8102 = vweird.f32 %v8093
    %vm8103 = vweird.f32 %v8097
    %vm8104 = vmor %vm8102, %vm8103
    %v8105 = vsel %vm8104, %v8097, %v8101
    %v8106 = vand.u32 2147483647, %v8093
    %vm8107 = vcmp.eq.f32.partialorder %v8106, 8.507059e+37
    %v8108 = vand.u32 %v8093, 2147483648
    %v8109 = vor.u32 1.1754944e-38, %v8108
    %v8110 = vsel %vm8107, %v8109, %v8105
    %v8111 = vmul.f32 1.0, %v8110
    %v8112 = vrcp.pop %v8094
    %v8113 = vmul.f32 %v8094, %v8112
    %v8114 = vsub.f32 1.0, %v8113
    %v8115 = vmul.f32 %v8112, %v8114
    %v8116 = vadd.f32 %v8112, %v8115
    %vm8117 = vweird.f32 %v8094
    %vm8118 = vweird.f32 %v8112
    %vm8119 = vmor %vm8117, %vm8118
    %v8120 = vsel %vm8119, %v8112, %v8116
    %v8121 = vand.u32 2147483647, %v8094
    %vm8122 = vcmp.eq.f32.partialorder %v8121, 8.507059e+37
    %v8123 = vand.u32 %v8094, 2147483648
    %v8124 = vor.u32 1.1754944e-38, %v8123
    %v8125 = vsel %vm8122, %v8124, %v8120
    %v8126 = vmul.f32 1.0, %v8125
    %v8127 = vrcp.pop %v8095
    %v8128 = vmul.f32 %v8095, %v8127
    %v8129 = vsub.f32 1.0, %v8128
    %v8130 = vmul.f32 %v8127, %v8129
    %v8131 = vadd.f32 %v8127, %v8130
    %vm8132 = vweird.f32 %v8095
    %vm8133 = vweird.f32 %v8127
    %vm8134 = vmor %vm8132, %vm8133
    %v8135 = vsel %vm8134, %v8127, %v8131
    %v8136 = vand.u32 2147483647, %v8095
    %vm8137 = vcmp.eq.f32.partialorder %v8136, 8.507059e+37
    %v8138 = vand.u32 %v8095, 2147483648
    %v8139 = vor.u32 1.1754944e-38, %v8138
    %v8140 = vsel %vm8137, %v8139, %v8135
    %v8141 = vmul.f32 1.0, %v8140
    %v8142 = vrcp.pop %v8096
    %v8143 = vmul.f32 %v8096, %v8142
    %v8144 = vsub.f32 1.0, %v8143
    %v8145 = vmul.f32 %v8142, %v8144
    %v8146 = vadd.f32 %v8142, %v8145
    %vm8147 = vweird.f32 %v8096
    %vm8148 = vweird.f32 %v8142
    %vm8149 = vmor %vm8147, %vm8148
    %v8150 = vsel %vm8149, %v8142, %v8146
    %v8151 = vand.u32 2147483647, %v8096
    %vm8152 = vcmp.eq.f32.partialorder %v8151, 8.507059e+37
    %v8153 = vand.u32 %v8096, 2147483648
    %v8154 = vor.u32 1.1754944e-38, %v8153
    %v8155 = vsel %vm8152, %v8154, %v8150
    %v8156 = vmul.f32 1.0, %v8155
    %v8157 = vadd.f32 %v7969, %v7996
    %v8158 = vadd.f32 %v7970, %v8008
    %v8159 = vadd.f32 %v7971, %v8020
    %v8160 = vadd.f32 %v7972, %v8032
    %v8161 = vmul.f32 %v8157, %v8111
    %v8162 = vmul.f32 %v8158, %v8126
    %v8163 = vmul.f32 %v8159, %v8141
    %v8164 = vmul.f32 %v8160, %v8156
    %v8165 = vsub.f32 0.0, %v7929
    %v8166 = vsub.f32 0.0, %v7930
    %v8167 = vsub.f32 0.0, %v7931
    %v8168 = vsub.f32 0.0, %v7932
    %v8169 = vmul.f32 %v8165, %v8111
    %v8170 = vmul.f32 %v8166, %v8126
    %v8171 = vmul.f32 %v8167, %v8141
    %v8172 = vmul.f32 %v8168, %v8156
    %v8173 = vadd.f32 %v7893, %v7996
    %v8174 = vadd.f32 %v7894, %v8008
    %v8175 = vadd.f32 %v7895, %v8020
    %v8176 = vadd.f32 %v7896, %v8032
    %v8177 = vmul.f32 %v8173, %v8111
    %v8178 = vmul.f32 %v8174, %v8126
    %v8179 = vmul.f32 %v8175, %v8141
    %v8180 = vmul.f32 %v8176, %v8156
    %v8181 = vmul.f32 %v8161, %v7865
    %v8182 = vmul.f32 %v8162, %v7866
    %v8183 = vmul.f32 %v8163, %v7867
    %v8184 = vmul.f32 %v8164, %v7868
    %v8185 = vmul.f32 %v8169, %v7869
    %v8186 = vmul.f32 %v8170, %v7870
    %v8187 = vmul.f32 %v8171, %v7871
    %v8188 = vmul.f32 %v8172, %v7872
    %8193 = vrot.lane.b32.xlu0 %v8185, 64
    %v8194 = vpop.permute.xlu0 %8193
    %8195 = vrot.lane.b32.xlu0 %v8186, 64
    %v8196 = vpop.permute.xlu0 %8195
    %8197 = vrot.lane.b32.xlu0 %v8187, 64
    %v8198 = vpop.permute.xlu0 %8197
    %8199 = vrot.lane.b32.xlu0 %v8188, 64
    %v8200 = vpop.permute.xlu0 %8199
    %v8205 = vadd.f32 %v8181, %v8194
    %v8206 = vadd.f32 %v8182, %v8196
    %v8207 = vadd.f32 %v8183, %v8198
    %v8208 = vadd.f32 %v8184, %v8200
    %v8209 = vmul.f32 %v8169, %v7865
    %v8210 = vmul.f32 %v8170, %v7866
    %v8211 = vmul.f32 %v8171, %v7867
    %v8212 = vmul.f32 %v8172, %v7868
    %v8213 = vmul.f32 %v8177, %v7869
    %v8214 = vmul.f32 %v8178, %v7870
    %v8215 = vmul.f32 %v8179, %v7871
    %v8216 = vmul.f32 %v8180, %v7872
    %8221 = vrot.lane.b32.xlu0 %v8213, 64
    %v8222 = vpop.permute.xlu0 %8221
    %8223 = vrot.lane.b32.xlu0 %v8214, 64
    %v8224 = vpop.permute.xlu0 %8223
    %8225 = vrot.lane.b32.xlu0 %v8215, 64
    %v8226 = vpop.permute.xlu0 %8225
    %8227 = vrot.lane.b32.xlu0 %v8216, 64
    %v8228 = vpop.permute.xlu0 %8227
    %v8233 = vadd.f32 %v8209, %v8222
    %v8234 = vadd.f32 %v8210, %v8224
    %v8235 = vadd.f32 %v8211, %v8226
    %v8236 = vadd.f32 %v8212, %v8228
    %v8237 = vld [vmem:[%s5] sm:$0x1]
    %v8238 = vld [vmem:[%s5 + $0x1] sm:$0x1]
    %v8239 = vld [vmem:[%s5 + $0x2] sm:$0x1]
    %v8240 = vperm.slane %v8237, 0
    %v8241 = vmul.f32 %v8240, %v8205
    %v8242 = vmul.f32 %v8240, %v8206
    %v8243 = vmul.f32 %v8240, %v8207
    %v8244 = vmul.f32 %v8240, %v8208
    %v8245 = vperm.slane %v8238, 0
    %v8246 = vmul.f32 %v8245, %v8233
    %v8247 = vmul.f32 %v8245, %v8234
    %v8248 = vmul.f32 %v8245, %v8235
    %v8249 = vmul.f32 %v8245, %v8236
    %v8250 = vadd.f32 %v8241, %v8246
    %v8251 = vadd.f32 %v8242, %v8247
    %v8252 = vadd.f32 %v8243, %v8248
    %v8253 = vadd.f32 %v8244, %v8249
    %v8254 = vld [vmem:[#allocation11] sm:$0x1]
    %v8255 = vperm.slane %v8254, 0
    %v8256 = vadd.f32 %v8250, %v8255
    %v8257 = vadd.f32 %v8251, %v8255
    %v8258 = vadd.f32 %v8252, %v8255
    %v8259 = vadd.f32 %v8253, %v8255
    %v8260 = vmul.f32 %v8245, %v8205
    %v8261 = vmul.f32 %v8245, %v8206
    %v8262 = vmul.f32 %v8245, %v8207
    %v8263 = vmul.f32 %v8245, %v8208
    %v8264 = vperm.slane %v8239, 0
    %v8265 = vmul.f32 %v8264, %v8233
    %v8266 = vmul.f32 %v8264, %v8234
    %v8267 = vmul.f32 %v8264, %v8235
    %v8268 = vmul.f32 %v8264, %v8236
    %v8269 = vadd.f32 %v8260, %v8265
    %v8270 = vadd.f32 %v8261, %v8266
    %v8271 = vadd.f32 %v8262, %v8267
    %v8272 = vadd.f32 %v8263, %v8268
    %v8273 = vld [vmem:[#allocation11 + $0x1] sm:$0x1]
    %v8274 = vperm.slane %v8273, 0
    %v8275 = vadd.f32 %v8269, %v8274
    %v8276 = vadd.f32 %v8270, %v8274
    %v8277 = vadd.f32 %v8271, %v8274
    %v8278 = vadd.f32 %v8272, %v8274
    %8283 = vrot.lane.b32.xlu0 %v8275, 64
    %v8284 = vpop.permute.xlu0 %8283
    %8285 = vrot.lane.b32.xlu0 %v8276, 64
    %v8286 = vpop.permute.xlu0 %8285
    %8287 = vrot.lane.b32.xlu0 %v8277, 64
    %v8288 = vpop.permute.xlu0 %8287
    %8289 = vrot.lane.b32.xlu0 %v8278, 64
    %v8290 = vpop.permute.xlu0 %8289
    %v8295 = vsel %vm7707, %v8256, %v8284
    %v8296 = vsel %vm7707, %v8257, %v8286
    %v8297 = vsel %vm7707, %v8258, %v8288
    %v8298 = vsel %vm7707, %v8259, %v8290
    %v8299 = vpack.c.bf16 %v8296, %v8295
    %v8300 = vpack.c.bf16 %v8298, %v8297
    %v8301 = vld [vmem:[#allocation13] sm:$0xff]
    %v8302 = vld [vmem:[#allocation13 + $0x8] sm:$0xff]
    %v8303 = vld [vmem:[#allocation13 + $0x10] sm:$0xff]
    %v8304 = vld [vmem:[#allocation13 + $0x18] sm:$0xff]
    %v8305 = vld [vmem:[#allocation13 + $0x20] sm:$0xff]
    %v8306 = vld [vmem:[#allocation13 + $0x28] sm:$0xff]
    %v8307 = vld [vmem:[#allocation13 + $0x30] sm:$0xff]
    %v8308 = vld [vmem:[#allocation13 + $0x38] sm:$0xff]
    %v8309 = vld [vmem:[#allocation13 + $0x40] sm:$0xff]
    %v8310 = vld [vmem:[#allocation13 + $0x48] sm:$0xff]
    %v8311 = vld [vmem:[#allocation13 + $0x50] sm:$0xff]
    %v8312 = vld [vmem:[#allocation13 + $0x58] sm:$0xff]
    %v8313 = vld [vmem:[#allocation13 + $0x60] sm:$0xff]
    %v8314 = vld [vmem:[#allocation13 + $0x68] sm:$0xff]
    %v8315 = vld [vmem:[#allocation13 + $0x70] sm:$0xff]
    %v8316 = vld [vmem:[#allocation13 + $0x78] sm:$0xff]
    %v8317 = vld [vmem:[#allocation14] sm:$0x3]
    %v8319 = vperm.slane %v8317, 0
    %v8320 = vperm.slane %v8317, 1
    %v8339 = vunpack.c.l.b16 %v8301
    %v8340 = vunpack.c.h.b16 %v8301
    %v8341 = vunpack.c.l.b16 %v8302
    %v8342 = vunpack.c.h.b16 %v8302
    %v8343 = vunpack.c.l.b16 %v8303
    %v8344 = vunpack.c.h.b16 %v8303
    %v8345 = vunpack.c.l.b16 %v8304
    %v8346 = vunpack.c.h.b16 %v8304
    %v8347 = vunpack.c.l.b16 %v8305
    %v8348 = vunpack.c.h.b16 %v8305
    %v8349 = vunpack.c.l.b16 %v8306
    %v8350 = vunpack.c.h.b16 %v8306
    %v8351 = vunpack.c.l.b16 %v8307
    %v8352 = vunpack.c.h.b16 %v8307
    %v8353 = vunpack.c.l.b16 %v8308
    %v8354 = vunpack.c.h.b16 %v8308
    %v8355 = vunpack.c.l.b16 %v8309
    %v8356 = vunpack.c.h.b16 %v8309
    %v8357 = vunpack.c.l.b16 %v8310
    %v8358 = vunpack.c.h.b16 %v8310
    %v8359 = vunpack.c.l.b16 %v8311
    %v8360 = vunpack.c.h.b16 %v8311
    %v8361 = vunpack.c.l.b16 %v8312
    %v8362 = vunpack.c.h.b16 %v8312
    %v8363 = vunpack.c.l.b16 %v8313
    %v8364 = vunpack.c.h.b16 %v8313
    %v8365 = vunpack.c.l.b16 %v8314
    %v8366 = vunpack.c.h.b16 %v8314
    %v8367 = vunpack.c.l.b16 %v8315
    %v8368 = vunpack.c.h.b16 %v8315
    %v8369 = vunpack.c.l.b16 %v8316
    %v8370 = vunpack.c.h.b16 %v8316
    %v8371 = vpack.c.b16 %v8341, %v8339
    %v8372 = vpack.c.b16 %v8342, %v8340
    %v8373 = vpack.c.b16 %v8345, %v8343
    %v8374 = vpack.c.b16 %v8346, %v8344
    %v8375 = vpack.c.b16 %v8349, %v8347
    %v8376 = vpack.c.b16 %v8350, %v8348
    %v8377 = vpack.c.b16 %v8353, %v8351
    %v8378 = vpack.c.b16 %v8354, %v8352
    %v8379 = vpack.c.b16 %v8357, %v8355
    %v8380 = vpack.c.b16 %v8358, %v8356
    %v8381 = vpack.c.b16 %v8361, %v8359
    %v8382 = vpack.c.b16 %v8362, %v8360
    %v8383 = vpack.c.b16 %v8365, %v8363
    %v8384 = vpack.c.b16 %v8366, %v8364
    %v8385 = vpack.c.b16 %v8369, %v8367
    %v8386 = vpack.c.b16 %v8370, %v8368
    %8403 = vmatpush.bf16.msra.mxu0 %v8385
    %8404 = vmatpush.bf16.msra.mxu0 %v8383
    %8405 = vmatpush.bf16.msra.mxu0 %v8381
    %8406 = vmatpush.bf16.msra.mxu0 %v8379
    %8407 = vmatpush.bf16.msra.mxu0 %v8377
    %8408 = vmatpush.bf16.msra.mxu0 %v8375
    %8409 = vmatpush.bf16.msra.mxu0 %v8373
    %8410 = vmatpush.bf16.msra.mxu0 %v8371
    %8411 = vmatmul.bf16.gmra.mxu0 %v8299
    %v8412 = vpop.f32.mrf.mxu0
    %v8413 = vadd.f32 %v8319, %v8412
    %v8414 = vpop.f32.mrf.mxu0
    %v8415 = vadd.f32 %v8319, %v8414
    %8416 = vmatmul.bf16.gmra.mxu0 %v8300
    %v8417 = vpop.f32.mrf.mxu0
    %v8418 = vadd.f32 %v8319, %v8417
    %v8419 = vpop.f32.mrf.mxu0
    %v8420 = vadd.f32 %v8319, %v8419
    %8421 = vdwg.mxu0
    %8422 = vmatpush.bf16.msra.mxu0 %v8386
    %8423 = vmatpush.bf16.msra.mxu0 %v8384
    %8424 = vmatpush.bf16.msra.mxu0 %v8382
    %8425 = vmatpush.bf16.msra.mxu0 %v8380
    %8426 = vmatpush.bf16.msra.mxu0 %v8378
    %8427 = vmatpush.bf16.msra.mxu0 %v8376
    %8428 = vmatpush.bf16.msra.mxu0 %v8374
    %8429 = vmatpush.bf16.msra.mxu0 %v8372
    %8430 = vmatmul.bf16.gmra.mxu0 %v8299
    %v8431 = vpop.f32.mrf.mxu0
    %v8432 = vadd.f32 %v8320, %v8431
    %v8433 = vpop.f32.mrf.mxu0
    %v8434 = vadd.f32 %v8320, %v8433
    %8435 = vmatmul.bf16.gmra.mxu0 %v8300
    %v8436 = vpop.f32.mrf.mxu0
    %v8437 = vadd.f32 %v8320, %v8436
    %v8438 = vpop.f32.mrf.mxu0
    %v8439 = vadd.f32 %v8320, %v8438
    %8440 = vdwg.mxu0
    %v8441 = vmul.f32 %v8413, 8.0
    %v8442 = vmul.f32 %v8432, 8.0
    %v8443 = vmul.f32 %v8415, 8.0
    %v8444 = vmul.f32 %v8434, 8.0
    %v8445 = vmul.f32 %v8418, 8.0
    %v8446 = vmul.f32 %v8437, 8.0
    %v8447 = vmul.f32 %v8420, 8.0
    %v8448 = vmul.f32 %v8439, 8.0
    %v8449 = vmin.f32 %v8441, 1.0
    %v8450 = vmin.f32 %v8442, 1.0
    %v8451 = vmin.f32 %v8443, 1.0
    %v8452 = vmin.f32 %v8444, 1.0
    %v8453 = vmin.f32 %v8445, 1.0
    %v8454 = vmin.f32 %v8446, 1.0
    %v8455 = vmin.f32 %v8447, 1.0
    %v8456 = vmin.f32 %v8448, 1.0
    %vm8457 = vcmp.gt.f32.partialorder %v8441, 1.0
    %vm8458 = vcmp.gt.f32.partialorder %v8442, 1.0
    %vm8459 = vcmp.gt.f32.partialorder %v8443, 1.0
    %vm8460 = vcmp.gt.f32.partialorder %v8444, 1.0
    %vm8461 = vcmp.gt.f32.partialorder %v8445, 1.0
    %vm8462 = vcmp.gt.f32.partialorder %v8446, 1.0
    %vm8463 = vcmp.gt.f32.partialorder %v8447, 1.0
    %vm8464 = vcmp.gt.f32.partialorder %v8448, 1.0
    %v8465 = vmul.f32 %v8449, 1.442695
    %v8466 = vpow.pop %v8465
    %v8467 = vmul.f32 %v8450, 1.442695
    %v8468 = vpow.pop %v8467
    %v8469 = vmul.f32 %v8451, 1.442695
    %v8470 = vpow.pop %v8469
    %v8471 = vmul.f32 %v8452, 1.442695
    %v8472 = vpow.pop %v8471
    %v8473 = vmul.f32 %v8453, 1.442695
    %v8474 = vpow.pop %v8473
    %v8475 = vmul.f32 %v8454, 1.442695
    %v8476 = vpow.pop %v8475
    %v8477 = vmul.f32 %v8455, 1.442695
    %v8478 = vpow.pop %v8477
    %v8479 = vmul.f32 %v8456, 1.442695
    %v8480 = vpow.pop %v8479
    %v8481 = vadd.f32 %v8466, 1.0
    %v8482 = vlog2.pop %v8481
    %v8483 = vmul.f32 %v8482, 0.6931472
    %v8484 = vmul.f32 -0.5, %v8466
    %v8485 = vadd.f32 %v8484, 1.0
    %v8486 = vmul.f32 %v8485, %v8466
    %v8487 = vand.u32 2147483647, %v8466
    %vm8488 = vcmp.lt.f32.partialorder %v8487, 0.0004427343
    %v8489 = vsel %vm8488, %v8486, %v8483
    %v8490 = vadd.f32 %v8468, 1.0
    %v8491 = vlog2.pop %v8490
    %v8492 = vmul.f32 %v8491, 0.6931472
    %v8493 = vmul.f32 -0.5, %v8468
    %v8494 = vadd.f32 %v8493, 1.0
    %v8495 = vmul.f32 %v8494, %v8468
    %v8496 = vand.u32 2147483647, %v8468
    %vm8497 = vcmp.lt.f32.partialorder %v8496, 0.0004427343
    %v8498 = vsel %vm8497, %v8495, %v8492
    %v8499 = vadd.f32 %v8470, 1.0
    %v8500 = vlog2.pop %v8499
    %v8501 = vmul.f32 %v8500, 0.6931472
    %v8502 = vmul.f32 -0.5, %v8470
    %v8503 = vadd.f32 %v8502, 1.0
    %v8504 = vmul.f32 %v8503, %v8470
    %v8505 = vand.u32 2147483647, %v8470
    %vm8506 = vcmp.lt.f32.partialorder %v8505, 0.0004427343
    %v8507 = vsel %vm8506, %v8504, %v8501
    %v8508 = vadd.f32 %v8472, 1.0
    %v8509 = vlog2.pop %v8508
    %v8510 = vmul.f32 %v8509, 0.6931472
    %v8511 = vmul.f32 -0.5, %v8472
    %v8512 = vadd.f32 %v8511, 1.0
    %v8513 = vmul.f32 %v8512, %v8472
    %v8514 = vand.u32 2147483647, %v8472
    %vm8515 = vcmp.lt.f32.partialorder %v8514, 0.0004427343
    %v8516 = vsel %vm8515, %v8513, %v8510
    %v8517 = vadd.f32 %v8474, 1.0
    %v8518 = vlog2.pop %v8517
    %v8519 = vmul.f32 %v8518, 0.6931472
    %v8520 = vmul.f32 -0.5, %v8474
    %v8521 = vadd.f32 %v8520, 1.0
    %v8522 = vmul.f32 %v8521, %v8474
    %v8523 = vand.u32 2147483647, %v8474
    %vm8524 = vcmp.lt.f32.partialorder %v8523, 0.0004427343
    %v8525 = vsel %vm8524, %v8522, %v8519
    %v8526 = vadd.f32 %v8476, 1.0
    %v8527 = vlog2.pop %v8526
    %v8528 = vmul.f32 %v8527, 0.6931472
    %v8529 = vmul.f32 -0.5, %v8476
    %v8530 = vadd.f32 %v8529, 1.0
    %v8531 = vmul.f32 %v8530, %v8476
    %v8532 = vand.u32 2147483647, %v8476
    %vm8533 = vcmp.lt.f32.partialorder %v8532, 0.0004427343
    %v8534 = vsel %vm8533, %v8531, %v8528
    %v8535 = vadd.f32 %v8478, 1.0
    %v8536 = vlog2.pop %v8535
    %v8537 = vmul.f32 %v8536, 0.6931472
    %v8538 = vmul.f32 -0.5, %v8478
    %v8539 = vadd.f32 %v8538, 1.0
    %v8540 = vmul.f32 %v8539, %v8478
    %v8541 = vand.u32 2147483647, %v8478
    %vm8542 = vcmp.lt.f32.partialorder %v8541, 0.0004427343
    %v8543 = vsel %vm8542, %v8540, %v8537
    %v8544 = vadd.f32 %v8480, 1.0
    %v8545 = vlog2.pop %v8544
    %v8546 = vmul.f32 %v8545, 0.6931472
    %v8547 = vmul.f32 -0.5, %v8480
    %v8548 = vadd.f32 %v8547, 1.0
    %v8549 = vmul.f32 %v8548, %v8480
    %v8550 = vand.u32 2147483647, %v8480
    %vm8551 = vcmp.lt.f32.partialorder %v8550, 0.0004427343
    %v8552 = vsel %vm8551, %v8549, %v8546
    %v8553 = vmul.f32 %v8489, 0.125
    %v8554 = vmul.f32 %v8498, 0.125
    %v8555 = vmul.f32 %v8507, 0.125
    %v8556 = vmul.f32 %v8516, 0.125
    %v8557 = vmul.f32 %v8525, 0.125
    %v8558 = vmul.f32 %v8534, 0.125
    %v8559 = vmul.f32 %v8543, 0.125
    %v8560 = vmul.f32 %v8552, 0.125
    %v8561 = vsel %vm8457, %v8413, %v8553
    %v8562 = vsel %vm8458, %v8432, %v8554
    %v8563 = vsel %vm8459, %v8415, %v8555
    %v8564 = vsel %vm8460, %v8434, %v8556
    %v8565 = vsel %vm8461, %v8418, %v8557
    %v8566 = vsel %vm8462, %v8437, %v8558
    %v8567 = vsel %vm8463, %v8420, %v8559
    %v8568 = vsel %vm8464, %v8439, %v8560
    %v8569 = vpack.c.bf16 %v8563, %v8561
    %v8570 = vpack.c.bf16 %v8564, %v8562
    %v8571 = vpack.c.bf16 %v8567, %v8565
    %v8572 = vpack.c.bf16 %v8568, %v8566
    %v8573 = vld [vmem:[#allocation16] sm:$0xf]
    %v8574 = vld [vmem:[#allocation16 + $0x4] sm:$0xf]
    %v8575 = vld [vmem:[#allocation16 + $0x8] sm:$0xf]
    %v8576 = vld [vmem:[#allocation16 + $0xc] sm:$0xf]
    %v8577 = vld [vmem:[#allocation16 + $0x10] sm:$0xf]
    %v8578 = vld [vmem:[#allocation16 + $0x14] sm:$0xf]
    %v8579 = vld [vmem:[#allocation16 + $0x18] sm:$0xf]
    %v8580 = vld [vmem:[#allocation16 + $0x1c] sm:$0xf]
    %v8581 = vld [vmem:[#allocation16 + $0x20] sm:$0xf]
    %v8582 = vld [vmem:[#allocation16 + $0x24] sm:$0xf]
    %v8583 = vld [vmem:[#allocation16 + $0x28] sm:$0xf]
    %v8584 = vld [vmem:[#allocation16 + $0x2c] sm:$0xf]
    %v8585 = vld [vmem:[#allocation16 + $0x30] sm:$0xf]
    %v8586 = vld [vmem:[#allocation16 + $0x34] sm:$0xf]
    %v8587 = vld [vmem:[#allocation16 + $0x38] sm:$0xf]
    %v8588 = vld [vmem:[#allocation16 + $0x3c] sm:$0xf]
    %v8589 = vld [vmem:[#allocation16 + $0x40] sm:$0xf]
    %v8590 = vld [vmem:[#allocation16 + $0x44] sm:$0xf]
    %v8591 = vld [vmem:[#allocation16 + $0x48] sm:$0xf]
    %v8592 = vld [vmem:[#allocation16 + $0x4c] sm:$0xf]
    %v8593 = vld [vmem:[#allocation16 + $0x50] sm:$0xf]
    %v8594 = vld [vmem:[#allocation16 + $0x54] sm:$0xf]
    %v8595 = vld [vmem:[#allocation16 + $0x58] sm:$0xf]
    %v8596 = vld [vmem:[#allocation16 + $0x5c] sm:$0xf]
    %v8597 = vld [vmem:[#allocation16 + $0x60] sm:$0xf]
    %v8598 = vld [vmem:[#allocation16 + $0x64] sm:$0xf]
    %v8599 = vld [vmem:[#allocation16 + $0x68] sm:$0xf]
    %v8600 = vld [vmem:[#allocation16 + $0x6c] sm:$0xf]
    %v8601 = vld [vmem:[#allocation16 + $0x70] sm:$0xf]
    %v8602 = vld [vmem:[#allocation16 + $0x74] sm:$0xf]
    %v8603 = vld [vmem:[#allocation16 + $0x78] sm:$0xf]
    %v8604 = vld [vmem:[#allocation16 + $0x7c] sm:$0xf]
    %v8605 = vld [vmem:[#allocation17] sm:$0x1]
    %v8607 = vperm.slane %v8605, 0
    %v8641 = vunpack.c.l.b16 %v8573
    %v8642 = vunpack.c.l.b16 %v8574
    %v8643 = vunpack.c.l.b16 %v8575
    %v8644 = vunpack.c.l.b16 %v8576
    %v8645 = vunpack.c.l.b16 %v8577
    %v8646 = vunpack.c.l.b16 %v8578
    %v8647 = vunpack.c.l.b16 %v8579
    %v8648 = vunpack.c.l.b16 %v8580
    %v8649 = vunpack.c.l.b16 %v8581
    %v8650 = vunpack.c.l.b16 %v8582
    %v8651 = vunpack.c.l.b16 %v8583
    %v8652 = vunpack.c.l.b16 %v8584
    %v8653 = vunpack.c.l.b16 %v8585
    %v8654 = vunpack.c.l.b16 %v8586
    %v8655 = vunpack.c.l.b16 %v8587
    %v8656 = vunpack.c.l.b16 %v8588
    %v8657 = vunpack.c.l.b16 %v8589
    %v8658 = vunpack.c.l.b16 %v8590
    %v8659 = vunpack.c.l.b16 %v8591
    %v8660 = vunpack.c.l.b16 %v8592
    %v8661 = vunpack.c.l.b16 %v8593
    %v8662 = vunpack.c.l.b16 %v8594
    %v8663 = vunpack.c.l.b16 %v8595
    %v8664 = vunpack.c.l.b16 %v8596
    %v8665 = vunpack.c.l.b16 %v8597
    %v8666 = vunpack.c.l.b16 %v8598
    %v8667 = vunpack.c.l.b16 %v8599
    %v8668 = vunpack.c.l.b16 %v8600
    %v8669 = vunpack.c.l.b16 %v8601
    %v8670 = vunpack.c.l.b16 %v8602
    %v8671 = vunpack.c.l.b16 %v8603
    %v8672 = vunpack.c.l.b16 %v8604
    %v8673 = vpack.c.b16 %v8642, %v8641
    %v8674 = vpack.c.b16 %v8644, %v8643
    %v8675 = vpack.c.b16 %v8646, %v8645
    %v8676 = vpack.c.b16 %v8648, %v8647
    %v8677 = vpack.c.b16 %v8650, %v8649
    %v8678 = vpack.c.b16 %v8652, %v8651
    %v8679 = vpack.c.b16 %v8654, %v8653
    %v8680 = vpack.c.b16 %v8656, %v8655
    %v8681 = vpack.c.b16 %v8658, %v8657
    %v8682 = vpack.c.b16 %v8660, %v8659
    %v8683 = vpack.c.b16 %v8662, %v8661
    %v8684 = vpack.c.b16 %v8664, %v8663
    %v8685 = vpack.c.b16 %v8666, %v8665
    %v8686 = vpack.c.b16 %v8668, %v8667
    %v8687 = vpack.c.b16 %v8670, %v8669
    %v8688 = vpack.c.b16 %v8672, %v8671
    %8705 = vmatpush.bf16.msra.mxu0 %v8680
    %8706 = vmatpush.bf16.msra.mxu0 %v8679
    %8707 = vmatpush.bf16.msra.mxu0 %v8678
    %8708 = vmatpush.bf16.msra.mxu0 %v8677
    %8709 = vmatpush.bf16.msra.mxu0 %v8676
    %8710 = vmatpush.bf16.msra.mxu0 %v8675
    %8711 = vmatpush.bf16.msra.mxu0 %v8674
    %8712 = vmatpush.bf16.msra.mxu0 %v8673
    %8713 = vmatmul.bf16.gmra.mxu0 %v8569
    %v8714 = vpop.f32.mrf.mxu0
    %v8715 = vadd.f32 %v8607, %v8714
    %v8716 = vpop.f32.mrf.mxu0
    %v8717 = vadd.f32 %v8607, %v8716
    %8718 = vmatmul.bf16.gmra.mxu0 %v8571
    %v8719 = vpop.f32.mrf.mxu0
    %v8720 = vadd.f32 %v8607, %v8719
    %v8721 = vpop.f32.mrf.mxu0
    %v8722 = vadd.f32 %v8607, %v8721
    %8723 = vdwg.mxu0
    %8724 = vmatpush.bf16.msra.mxu0 %v8688
    %8725 = vmatpush.bf16.msra.mxu0 %v8687
    %8726 = vmatpush.bf16.msra.mxu0 %v8686
    %8727 = vmatpush.bf16.msra.mxu0 %v8685
    %8728 = vmatpush.bf16.msra.mxu0 %v8684
    %8729 = vmatpush.bf16.msra.mxu0 %v8683
    %8730 = vmatpush.bf16.msra.mxu0 %v8682
    %8731 = vmatpush.bf16.msra.mxu0 %v8681
    %8732 = vmatmul.bf16.gmra.mxu0 %v8570
    %v8733 = vpop.f32.mrf.mxu0
    %v8734 = vadd.f32 %v8715, %v8733
    %v8735 = vpop.f32.mrf.mxu0
    %v8736 = vadd.f32 %v8717, %v8735
    %8737 = vmatmul.bf16.gmra.mxu0 %v8572
    %v8738 = vpop.f32.mrf.mxu0
    %v8739 = vadd.f32 %v8720, %v8738
    %v8740 = vpop.f32.mrf.mxu0
    %v8741 = vadd.f32 %v8722, %v8740
    %8742 = vdwg.mxu0
    %v8743 = vadd.f32 %v8295, %v8734
    %v8744 = vadd.f32 %v8296, %v8736
    %v8745 = vadd.f32 %v8297, %v8739
    %v8746 = vadd.f32 %v8298, %v8741
    %v8747 = vsel %vm7707, %v8743, 0.0
    %8748 = vadd.xlane.f32.xlu0 %v8747
    %v8749 = vpop.xlane.xlu0 %8748
    %v8750 = vsel %vm7707, %v8744, 0.0
    %8751 = vadd.xlane.f32.xlu0 %v8750
    %v8752 = vpop.xlane.xlu0 %8751
    %v8753 = vsel %vm7707, %v8745, 0.0
    %8754 = vadd.xlane.f32.xlu0 %v8753
    %v8755 = vpop.xlane.xlu0 %8754
    %v8756 = vsel %vm7707, %v8746, 0.0
    %8757 = vadd.xlane.f32.xlu0 %v8756
    %v8758 = vpop.xlane.xlu0 %8757
    %v8759 = vmul.f32 %v8749, %v7828
    %v8760 = vmul.f32 %v8752, %v7828
    %v8761 = vmul.f32 %v8755, %v7828
    %v8762 = vmul.f32 %v8758, %v7828
    %8767 = vrot.lane.b32.xlu0 %v8743, 64
    %v8768 = vpop.permute.xlu0 %8767
    %8769 = vrot.lane.b32.xlu0 %v8744, 64
    %v8770 = vpop.permute.xlu0 %8769
    %8771 = vrot.lane.b32.xlu0 %v8745, 64
    %v8772 = vpop.permute.xlu0 %8771
    %8773 = vrot.lane.b32.xlu0 %v8746, 64
    %v8774 = vpop.permute.xlu0 %8773
    %v8779 = vsel %vm7707, %v8768, 0.0
    %8780 = vadd.xlane.f32.xlu0 %v8779
    %v8781 = vpop.xlane.xlu0 %8780
    %v8782 = vsel %vm7707, %v8770, 0.0
    %8783 = vadd.xlane.f32.xlu0 %v8782
    %v8784 = vpop.xlane.xlu0 %8783
    %v8785 = vsel %vm7707, %v8772, 0.0
    %8786 = vadd.xlane.f32.xlu0 %v8785
    %v8787 = vpop.xlane.xlu0 %8786
    %v8788 = vsel %vm7707, %v8774, 0.0
    %8789 = vadd.xlane.f32.xlu0 %v8788
    %v8790 = vpop.xlane.xlu0 %8789
    %v8791 = vmul.f32 %v8781, %v7828
    %v8792 = vmul.f32 %v8784, %v7828
    %v8793 = vmul.f32 %v8787, %v7828
    %v8794 = vmul.f32 %v8790, %v7828
    %v8795 = vsub.f32 %v8743, %v8759
    %v8796 = vsub.f32 %v8744, %v8760
    %v8797 = vsub.f32 %v8745, %v8761
    %v8798 = vsub.f32 %v8746, %v8762
    %v8799 = vsub.f32 %v8743, %v8791
    %v8800 = vsub.f32 %v8744, %v8792
    %v8801 = vsub.f32 %v8745, %v8793
    %v8802 = vsub.f32 %v8746, %v8794
    %v8803 = vmul.f32 %v8795, %v8795
    %v8804 = vmul.f32 %v8796, %v8796
    %v8805 = vmul.f32 %v8797, %v8797
    %v8806 = vmul.f32 %v8798, %v8798
    %v8807 = vsel %vm7707, %v8803, 0.0
    %8808 = vadd.xlane.f32.xlu0 %v8807
    %v8809 = vpop.xlane.xlu0 %8808
    %v8810 = vsel %vm7707, %v8804, 0.0
    %8811 = vadd.xlane.f32.xlu0 %v8810
    %v8812 = vpop.xlane.xlu0 %8811
    %v8813 = vsel %vm7707, %v8805, 0.0
    %8814 = vadd.xlane.f32.xlu0 %v8813
    %v8815 = vpop.xlane.xlu0 %8814
    %v8816 = vsel %vm7707, %v8806, 0.0
    %8817 = vadd.xlane.f32.xlu0 %v8816
    %v8818 = vpop.xlane.xlu0 %8817
    %v8819 = vmul.f32 %v8809, 0.015873017
    %v8820 = vmul.f32 %v8812, 0.015873017
    %v8821 = vmul.f32 %v8815, 0.015873017
    %v8822 = vmul.f32 %v8818, 0.015873017
    %v8823 = vadd.f32 %v8819, 1e-05
    %v8824 = vadd.f32 %v8820, 1e-05
    %v8825 = vadd.f32 %v8821, 1e-05
    %v8826 = vadd.f32 %v8822, 1e-05
    %8831 = vrot.lane.b32.xlu0 %v8799, 64
    %v8832 = vpop.permute.xlu0 %8831
    %8833 = vrot.lane.b32.xlu0 %v8800, 64
    %v8834 = vpop.permute.xlu0 %8833
    %8835 = vrot.lane.b32.xlu0 %v8801, 64
    %v8836 = vpop.permute.xlu0 %8835
    %8837 = vrot.lane.b32.xlu0 %v8802, 64
    %v8838 = vpop.permute.xlu0 %8837
    %v8843 = vmul.f32 %v8795, %v8832
    %v8844 = vmul.f32 %v8796, %v8834
    %v8845 = vmul.f32 %v8797, %v8836
    %v8846 = vmul.f32 %v8798, %v8838
    %v8847 = vsel %vm7707, %v8843, 0.0
    %8848 = vadd.xlane.f32.xlu0 %v8847
    %v8849 = vpop.xlane.xlu0 %8848
    %v8850 = vsel %vm7707, %v8844, 0.0
    %8851 = vadd.xlane.f32.xlu0 %v8850
    %v8852 = vpop.xlane.xlu0 %8851
    %v8853 = vsel %vm7707, %v8845, 0.0
    %8854 = vadd.xlane.f32.xlu0 %v8853
    %v8855 = vpop.xlane.xlu0 %8854
    %v8856 = vsel %vm7707, %v8846, 0.0
    %8857 = vadd.xlane.f32.xlu0 %v8856
    %v8858 = vpop.xlane.xlu0 %8857
    %v8859 = vmul.f32 %v8849, 0.015873017
    %v8860 = vmul.f32 %v8852, 0.015873017
    %v8861 = vmul.f32 %v8855, 0.015873017
    %v8862 = vmul.f32 %v8858, 0.015873017
    %v8863 = vmul.f32 %v8799, %v8799
    %v8864 = vmul.f32 %v8800, %v8800
    %v8865 = vmul.f32 %v8801, %v8801
    %v8866 = vmul.f32 %v8802, %v8802
    %8871 = vrot.lane.b32.xlu0 %v8863, 64
    %v8872 = vpop.permute.xlu0 %8871
    %8873 = vrot.lane.b32.xlu0 %v8864, 64
    %v8874 = vpop.permute.xlu0 %8873
    %8875 = vrot.lane.b32.xlu0 %v8865, 64
    %v8876 = vpop.permute.xlu0 %8875
    %8877 = vrot.lane.b32.xlu0 %v8866, 64
    %v8878 = vpop.permute.xlu0 %8877
    %v8883 = vsel %vm7707, %v8872, 0.0
    %8884 = vadd.xlane.f32.xlu0 %v8883
    %v8885 = vpop.xlane.xlu0 %8884
    %v8886 = vsel %vm7707, %v8874, 0.0
    %8887 = vadd.xlane.f32.xlu0 %v8886
    %v8888 = vpop.xlane.xlu0 %8887
    %v8889 = vsel %vm7707, %v8876, 0.0
    %8890 = vadd.xlane.f32.xlu0 %v8889
    %v8891 = vpop.xlane.xlu0 %8890
    %v8892 = vsel %vm7707, %v8878, 0.0
    %8893 = vadd.xlane.f32.xlu0 %v8892
    %v8894 = vpop.xlane.xlu0 %8893
    %v8895 = vmul.f32 %v8885, 0.015873017
    %v8896 = vmul.f32 %v8888, 0.015873017
    %v8897 = vmul.f32 %v8891, 0.015873017
    %v8898 = vmul.f32 %v8894, 0.015873017
    %v8899 = vadd.f32 %v8895, 1e-05
    %v8900 = vadd.f32 %v8896, 1e-05
    %v8901 = vadd.f32 %v8897, 1e-05
    %v8902 = vadd.f32 %v8898, 1e-05
    %v8903 = vmul.f32 %v8823, %v8899
    %v8904 = vmul.f32 %v8824, %v8900
    %v8905 = vmul.f32 %v8825, %v8901
    %v8906 = vmul.f32 %v8826, %v8902
    %v8907 = vmul.f32 %v8859, %v8859
    %v8908 = vmul.f32 %v8860, %v8860
    %v8909 = vmul.f32 %v8861, %v8861
    %v8910 = vmul.f32 %v8862, %v8862
    %v8911 = vsub.f32 %v8903, %v8907
    %v8912 = vsub.f32 %v8904, %v8908
    %v8913 = vsub.f32 %v8905, %v8909
    %v8914 = vsub.f32 %v8906, %v8910
    %v8915 = vrsqrt.pop %v8911
    %v8916 = vmul.f32 %v8915, %v8911
    %v8917 = vmul.f32 %v8916, %v8915
    %v8918 = vmul.f32 0.5, %v8917
    %v8919 = vsub.f32 1.5, %v8918
    %v8920 = vmul.f32 %v8915, %v8919
    %v8921 = vmul.f32 %v8911, %v8920
    %vm8922 = vcmp.eq.f32.partialorder %v8911, inf
    %v8923 = vsel %vm8922, %v8911, %v8921
    %vm8924 = vcmp.eq.f32.partialorder %v8911, 0.0
    %v8925 = vand.u32 %v8911, 2147483648
    %v8926 = vsel %vm8924, %v8925, %v8923
    %v8927 = vrsqrt.pop %v8912
    %v8928 = vmul.f32 %v8927, %v8912
    %v8929 = vmul.f32 %v8928, %v8927
    %v8930 = vmul.f32 0.5, %v8929
    %v8931 = vsub.f32 1.5, %v8930
    %v8932 = vmul.f32 %v8927, %v8931
    %v8933 = vmul.f32 %v8912, %v8932
    %vm8934 = vcmp.eq.f32.partialorder %v8912, inf
    %v8935 = vsel %vm8934, %v8912, %v8933
    %vm8936 = vcmp.eq.f32.partialorder %v8912, 0.0
    %v8937 = vand.u32 %v8912, 2147483648
    %v8938 = vsel %vm8936, %v8937, %v8935
    %v8939 = vrsqrt.pop %v8913
    %v8940 = vmul.f32 %v8939, %v8913
    %v8941 = vmul.f32 %v8940, %v8939
    %v8942 = vmul.f32 0.5, %v8941
    %v8943 = vsub.f32 1.5, %v8942
    %v8944 = vmul.f32 %v8939, %v8943
    %v8945 = vmul.f32 %v8913, %v8944
    %vm8946 = vcmp.eq.f32.partialorder %v8913, inf
    %v8947 = vsel %vm8946, %v8913, %v8945
    %vm8948 = vcmp.eq.f32.partialorder %v8913, 0.0
    %v8949 = vand.u32 %v8913, 2147483648
    %v8950 = vsel %vm8948, %v8949, %v8947
    %v8951 = vrsqrt.pop %v8914
    %v8952 = vmul.f32 %v8951, %v8914
    %v8953 = vmul.f32 %v8952, %v8951
    %v8954 = vmul.f32 0.5, %v8953
    %v8955 = vsub.f32 1.5, %v8954
    %v8956 = vmul.f32 %v8951, %v8955
    %v8957 = vmul.f32 %v8914, %v8956
    %vm8958 = vcmp.eq.f32.partialorder %v8914, inf
    %v8959 = vsel %vm8958, %v8914, %v8957
    %vm8960 = vcmp.eq.f32.partialorder %v8914, 0.0
    %v8961 = vand.u32 %v8914, 2147483648
    %v8962 = vsel %vm8960, %v8961, %v8959
    %v8963 = vadd.f32 %v8823, %v8899
    %v8964 = vadd.f32 %v8824, %v8900
    %v8965 = vadd.f32 %v8825, %v8901
    %v8966 = vadd.f32 %v8826, %v8902
    %v8967 = vmul.f32 %v8926, 2.0
    %v8968 = vmul.f32 %v8938, 2.0
    %v8969 = vmul.f32 %v8950, 2.0
    %v8970 = vmul.f32 %v8962, 2.0
    %v8971 = vadd.f32 %v8963, %v8967
    %v8972 = vadd.f32 %v8964, %v8968
    %v8973 = vadd.f32 %v8965, %v8969
    %v8974 = vadd.f32 %v8966, %v8970
    %v8975 = vrsqrt.pop %v8971
    %v8976 = vmul.f32 %v8975, %v8971
    %v8977 = vmul.f32 %v8976, %v8975
    %v8978 = vmul.f32 0.5, %v8977
    %v8979 = vsub.f32 1.5, %v8978
    %v8980 = vmul.f32 %v8975, %v8979
    %v8981 = vmul.f32 %v8971, %v8980
    %vm8982 = vcmp.eq.f32.partialorder %v8971, inf
    %v8983 = vsel %vm8982, %v8971, %v8981
    %vm8984 = vcmp.eq.f32.partialorder %v8971, 0.0
    %v8985 = vand.u32 %v8971, 2147483648
    %v8986 = vsel %vm8984, %v8985, %v8983
    %v8987 = vrsqrt.pop %v8972
    %v8988 = vmul.f32 %v8987, %v8972
    %v8989 = vmul.f32 %v8988, %v8987
    %v8990 = vmul.f32 0.5, %v8989
    %v8991 = vsub.f32 1.5, %v8990
    %v8992 = vmul.f32 %v8987, %v8991
    %v8993 = vmul.f32 %v8972, %v8992
    %vm8994 = vcmp.eq.f32.partialorder %v8972, inf
    %v8995 = vsel %vm8994, %v8972, %v8993
    %vm8996 = vcmp.eq.f32.partialorder %v8972, 0.0
    %v8997 = vand.u32 %v8972, 2147483648
    %v8998 = vsel %vm8996, %v8997, %v8995
    %v8999 = vrsqrt.pop %v8973
    %v9000 = vmul.f32 %v8999, %v8973
    %v9001 = vmul.f32 %v9000, %v8999
    %v9002 = vmul.f32 0.5, %v9001
    %v9003 = vsub.f32 1.5, %v9002
    %v9004 = vmul.f32 %v8999, %v9003
    %v9005 = vmul.f32 %v8973, %v9004
    %vm9006 = vcmp.eq.f32.partialorder %v8973, inf
    %v9007 = vsel %vm9006, %v8973, %v9005
    %vm9008 = vcmp.eq.f32.partialorder %v8973, 0.0
    %v9009 = vand.u32 %v8973, 2147483648
    %v9010 = vsel %vm9008, %v9009, %v9007
    %v9011 = vrsqrt.pop %v8974
    %v9012 = vmul.f32 %v9011, %v8974
    %v9013 = vmul.f32 %v9012, %v9011
    %v9014 = vmul.f32 0.5, %v9013
    %v9015 = vsub.f32 1.5, %v9014
    %v9016 = vmul.f32 %v9011, %v9015
    %v9017 = vmul.f32 %v8974, %v9016
    %vm9018 = vcmp.eq.f32.partialorder %v8974, inf
    %v9019 = vsel %vm9018, %v8974, %v9017
    %vm9020 = vcmp.eq.f32.partialorder %v8974, 0.0
    %v9021 = vand.u32 %v8974, 2147483648
    %v9022 = vsel %vm9020, %v9021, %v9019
    %v9023 = vmul.f32 %v8926, %v8986
    %v9024 = vmul.f32 %v8938, %v8998
    %v9025 = vmul.f32 %v8950, %v9010
    %v9026 = vmul.f32 %v8962, %v9022
    %v9027 = vrcp.pop %v9023
    %v9028 = vmul.f32 %v9023, %v9027
    %v9029 = vsub.f32 1.0, %v9028
    %v9030 = vmul.f32 %v9027, %v9029
    %v9031 = vadd.f32 %v9027, %v9030
    %vm9032 = vweird.f32 %v9023
    %vm9033 = vweird.f32 %v9027
    %vm9034 = vmor %vm9032, %vm9033
    %v9035 = vsel %vm9034, %v9027, %v9031
    %v9036 = vand.u32 2147483647, %v9023
    %vm9037 = vcmp.eq.f32.partialorder %v9036, 8.507059e+37
    %v9038 = vand.u32 %v9023, 2147483648
    %v9039 = vor.u32 1.1754944e-38, %v9038
    %v9040 = vsel %vm9037, %v9039, %v9035
    %v9041 = vmul.f32 1.0, %v9040
    %v9042 = vrcp.pop %v9024
    %v9043 = vmul.f32 %v9024, %v9042
    %v9044 = vsub.f32 1.0, %v9043
    %v9045 = vmul.f32 %v9042, %v9044
    %v9046 = vadd.f32 %v9042, %v9045
    %vm9047 = vweird.f32 %v9024
    %vm9048 = vweird.f32 %v9042
    %vm9049 = vmor %vm9047, %vm9048
    %v9050 = vsel %vm9049, %v9042, %v9046
    %v9051 = vand.u32 2147483647, %v9024
    %vm9052 = vcmp.eq.f32.partialorder %v9051, 8.507059e+37
    %v9053 = vand.u32 %v9024, 2147483648
    %v9054 = vor.u32 1.1754944e-38, %v9053
    %v9055 = vsel %vm9052, %v9054, %v9050
    %v9056 = vmul.f32 1.0, %v9055
    %v9057 = vrcp.pop %v9025
    %v9058 = vmul.f32 %v9025, %v9057
    %v9059 = vsub.f32 1.0, %v9058
    %v9060 = vmul.f32 %v9057, %v9059
    %v9061 = vadd.f32 %v9057, %v9060
    %vm9062 = vweird.f32 %v9025
    %vm9063 = vweird.f32 %v9057
    %vm9064 = vmor %vm9062, %vm9063
    %v9065 = vsel %vm9064, %v9057, %v9061
    %v9066 = vand.u32 2147483647, %v9025
    %vm9067 = vcmp.eq.f32.partialorder %v9066, 8.507059e+37
    %v9068 = vand.u32 %v9025, 2147483648
    %v9069 = vor.u32 1.1754944e-38, %v9068
    %v9070 = vsel %vm9067, %v9069, %v9065
    %v9071 = vmul.f32 1.0, %v9070
    %v9072 = vrcp.pop %v9026
    %v9073 = vmul.f32 %v9026, %v9072
    %v9074 = vsub.f32 1.0, %v9073
    %v9075 = vmul.f32 %v9072, %v9074
    %v9076 = vadd.f32 %v9072, %v9075
    %vm9077 = vweird.f32 %v9026
    %vm9078 = vweird.f32 %v9072
    %vm9079 = vmor %vm9077, %vm9078
    %v9080 = vsel %vm9079, %v9072, %v9076
    %v9081 = vand.u32 2147483647, %v9026
    %vm9082 = vcmp.eq.f32.partialorder %v9081, 8.507059e+37
    %v9083 = vand.u32 %v9026, 2147483648
    %v9084 = vor.u32 1.1754944e-38, %v9083
    %v9085 = vsel %vm9082, %v9084, %v9080
    %v9086 = vmul.f32 1.0, %v9085
    %v9087 = vadd.f32 %v8899, %v8926
    %v9088 = vadd.f32 %v8900, %v8938
    %v9089 = vadd.f32 %v8901, %v8950
    %v9090 = vadd.f32 %v8902, %v8962
    %v9091 = vmul.f32 %v9087, %v9041
    %v9092 = vmul.f32 %v9088, %v9056
    %v9093 = vmul.f32 %v9089, %v9071
    %v9094 = vmul.f32 %v9090, %v9086
    %v9095 = vsub.f32 0.0, %v8859
    %v9096 = vsub.f32 0.0, %v8860
    %v9097 = vsub.f32 0.0, %v8861
    %v9098 = vsub.f32 0.0, %v8862
    %v9099 = vmul.f32 %v9095, %v9041
    %v9100 = vmul.f32 %v9096, %v9056
    %v9101 = vmul.f32 %v9097, %v9071
    %v9102 = vmul.f32 %v9098, %v9086
    %v9103 = vadd.f32 %v8823, %v8926
    %v9104 = vadd.f32 %v8824, %v8938
    %v9105 = vadd.f32 %v8825, %v8950
    %v9106 = vadd.f32 %v8826, %v8962
    %v9107 = vmul.f32 %v9103, %v9041
    %v9108 = vmul.f32 %v9104, %v9056
    %v9109 = vmul.f32 %v9105, %v9071
    %v9110 = vmul.f32 %v9106, %v9086
    %v9111 = vmul.f32 %v9091, %v8795
    %v9112 = vmul.f32 %v9092, %v8796
    %v9113 = vmul.f32 %v9093, %v8797
    %v9114 = vmul.f32 %v9094, %v8798
    %v9115 = vmul.f32 %v9099, %v8799
    %v9116 = vmul.f32 %v9100, %v8800
    %v9117 = vmul.f32 %v9101, %v8801
    %v9118 = vmul.f32 %v9102, %v8802
    %9123 = vrot.lane.b32.xlu0 %v9115, 64
    %v9124 = vpop.permute.xlu0 %9123
    %9125 = vrot.lane.b32.xlu0 %v9116, 64
    %v9126 = vpop.permute.xlu0 %9125
    %9127 = vrot.lane.b32.xlu0 %v9117, 64
    %v9128 = vpop.permute.xlu0 %9127
    %9129 = vrot.lane.b32.xlu0 %v9118, 64
    %v9130 = vpop.permute.xlu0 %9129
    %v9135 = vadd.f32 %v9111, %v9124
    %v9136 = vadd.f32 %v9112, %v9126
    %v9137 = vadd.f32 %v9113, %v9128
    %v9138 = vadd.f32 %v9114, %v9130
    %v9139 = vmul.f32 %v9099, %v8795
    %v9140 = vmul.f32 %v9100, %v8796
    %v9141 = vmul.f32 %v9101, %v8797
    %v9142 = vmul.f32 %v9102, %v8798
    %v9143 = vmul.f32 %v9107, %v8799
    %v9144 = vmul.f32 %v9108, %v8800
    %v9145 = vmul.f32 %v9109, %v8801
    %v9146 = vmul.f32 %v9110, %v8802
    %9151 = vrot.lane.b32.xlu0 %v9143, 64
    %v9152 = vpop.permute.xlu0 %9151
    %9153 = vrot.lane.b32.xlu0 %v9144, 64
    %v9154 = vpop.permute.xlu0 %9153
    %9155 = vrot.lane.b32.xlu0 %v9145, 64
    %v9156 = vpop.permute.xlu0 %9155
    %9157 = vrot.lane.b32.xlu0 %v9146, 64
    %v9158 = vpop.permute.xlu0 %9157
    %v9163 = vadd.f32 %v9139, %v9152
    %v9164 = vadd.f32 %v9140, %v9154
    %v9165 = vadd.f32 %v9141, %v9156
    %v9166 = vadd.f32 %v9142, %v9158
    %v9167 = vld [vmem:[%s11] sm:$0x1]
    %v9168 = vld [vmem:[%s11 + $0x1] sm:$0x1]
    %v9169 = vld [vmem:[%s11 + $0x2] sm:$0x1]
    %v9170 = vperm.slane %v9167, 0
    %v9171 = vmul.f32 %v9170, %v9135
    %v9172 = vmul.f32 %v9170, %v9136
    %v9173 = vmul.f32 %v9170, %v9137
    %v9174 = vmul.f32 %v9170, %v9138
    %v9175 = vperm.slane %v9168, 0
    %v9176 = vmul.f32 %v9175, %v9163
    %v9177 = vmul.f32 %v9175, %v9164
    %v9178 = vmul.f32 %v9175, %v9165
    %v9179 = vmul.f32 %v9175, %v9166
    %v9180 = vadd.f32 %v9171, %v9176
    %v9181 = vadd.f32 %v9172, %v9177
    %v9182 = vadd.f32 %v9173, %v9178
    %v9183 = vadd.f32 %v9174, %v9179
    %v9184 = vld [vmem:[%s12] sm:$0x1]
    %v9185 = vperm.slane %v9184, 0
    %v9186 = vadd.f32 %v9180, %v9185
    %v9187 = vadd.f32 %v9181, %v9185
    %v9188 = vadd.f32 %v9182, %v9185
    %v9189 = vadd.f32 %v9183, %v9185
    %v9190 = vmul.f32 %v9175, %v9135
    %v9191 = vmul.f32 %v9175, %v9136
    %v9192 = vmul.f32 %v9175, %v9137
    %v9193 = vmul.f32 %v9175, %v9138
    %v9194 = vperm.slane %v9169, 0
    %v9195 = vmul.f32 %v9194, %v9163
    %v9196 = vmul.f32 %v9194, %v9164
    %v9197 = vmul.f32 %v9194, %v9165
    %v9198 = vmul.f32 %v9194, %v9166
    %v9199 = vadd.f32 %v9190, %v9195
    %v9200 = vadd.f32 %v9191, %v9196
    %v9201 = vadd.f32 %v9192, %v9197
    %v9202 = vadd.f32 %v9193, %v9198
    %v9203 = vld [vmem:[%s12 + $0x1] sm:$0x1]
    %v9204 = vperm.slane %v9203, 0
    %v9205 = vadd.f32 %v9199, %v9204
    %v9206 = vadd.f32 %v9200, %v9204
    %v9207 = vadd.f32 %v9201, %v9204
    %v9208 = vadd.f32 %v9202, %v9204
    %9209 = vst.msk [vmem:[#allocation19] sm:$0xff] %vm7707, %v9186
    %9210 = vst.msk [vmem:[#allocation19 + $0x8] sm:$0xff] %vm7707, %v9187
    %9211 = vst.msk [vmem:[#allocation19 + $0x10] sm:$0xff] %vm7707, %v9188
    %9212 = vst.msk [vmem:[#allocation19 + $0x18] sm:$0xff] %vm7707, %v9189
    %9217 = vrot.lane.b32.xlu0 %v9205, 64
    %v9218 = vpop.permute.xlu0 %9217
    %9219 = vrot.lane.b32.xlu0 %v9206, 64
    %v9220 = vpop.permute.xlu0 %9219
    %9221 = vrot.lane.b32.xlu0 %v9207, 64
    %v9222 = vpop.permute.xlu0 %9221
    %9223 = vrot.lane.b32.xlu0 %v9208, 64
    %v9224 = vpop.permute.xlu0 %9223
    %vm9229 = vcmask 1048064
    %9230 = vst.msk [vmem:[#allocation19] sm:$0xff] %vm9229, %v9218
    %9231 = vst.msk [vmem:[#allocation19 + $0x8] sm:$0xff] %vm9229, %v9220
    %9232 = vst.msk [vmem:[#allocation19 + $0x10] sm:$0xff] %vm9229, %v9222
    %9233 = vst.msk [vmem:[#allocation19 + $0x18] sm:$0xff] %vm9229, %v9224
    // Predicated region
    $region94: #{tpu_custom_call.1} parent=1 // pred_check
      _
    $region95: #{tpu_custom_call.1} parent=1 // pred_check_branch
      %9235 = sbr.rel (0) target = $region97
    $region96: #{tpu_custom_call.1} parent=1 // pred_region
      %9237 = vsyncadd [#allocation4], 0
      %s9238 = sshll.u32 [#allocation19], 4
      %s9239 = int_to_ptr.vmem [resolvable:$true] %s9238
      %s9240 = sshll.u32 %s13, 4
      %s9241 = int_to_ptr.hbm [resolvable:$true] %s9240
      %9246 = dma.vmem_to_hbm [thread:$0]  %s9239, 512, %s9241, [#allocation4], 128, 128, 8
    $region97: #{tpu_custom_call.1} parent=1 // pred_fallthru
      _
    // Predicated region
    $region98: #{tpu_custom_call.1} parent=1 // pred_check
      _
    $region99: #{tpu_custom_call.1} parent=1 // pred_check_branch
      %9248 = sbr.rel (0) target = $region101
    $region100: #{tpu_custom_call.1} parent=1 // pred_region
      %9250 = dma.done [#allocation4], 512
    $region101: #{tpu_custom_call.1} parent=1 // pred_fallthru
      _
    %9251 = vsyncpa [#allocation3], 1
    %9252 = vsyncpa [#allocation6], 1
    %9253 = vsyncpa [#allocation9], 1
    %9254 = vsyncpa [#allocation12], 1
    %9255 = vsyncpa [#allocation15], 1
    %9256 = vsyncpa [#allocation18], 1
    %9257 = vsyncpa [#allocation4], 1

</llo_original>
